<compile_context>
chip_gen: v5e
topology: v5e:2x2
jax: 0.10.0
libtpu: 0.0.40
codegen_flags: <defaults>
</compile_context>

<pallas_src>
import functools

import jax
import jax.numpy as jnp
import numpy as np
from jax import lax
from jax.experimental import pallas as pl
from jax.experimental.pallas import tpu as pltpu

WINDOWS = (3, 5, 7)
KMAX = max(WINDOWS)        # every conv kernel is zero-extended (centred) to this
C1 = 256                   # conv1 out-channels per window (fixed in the module)
C2 = 128                   # conv2 out-channels per window (fixed in the module)
LANE = 128                 # lane-dense output width

VMEM_SPEC = pl.BlockSpec(memory_space=pltpu.MemorySpace.VMEM)


# ---------------------------------------------------------------------------
# Single fused kernel: conv1 -> relu6 -> conv2 -> relu6 -> maxpool(T) -> fc1
#                      -> relu -> fc2
# ---------------------------------------------------------------------------
def fused_cnn_kernel(x_ref, w1_ref, b1_ref, w2_ref, b2_ref,
                     wf1_ref, bf1_ref, wf2_ref, bf2_ref,
                     feat_ref, y_ref,
                     p1_ref, p2_ref):
    # x_ref  : (T*B, F)            time-major rows (row = t*B + b)
    # w1_ref : (KMAX, F, 3*C1)     fused conv1 taps, b1_ref (1, 3*C1)
    # w2_ref : (KMAX, 3*C1, 3*C2)  fused conv2 taps, b2_ref (1, 3*C2)
    # wf1_ref: (3*C2, LANE)        fc1 weight zero-padded to 128 lanes
    # wf2_ref: (LANE, LANE)        fc2 weight zero-padded
    # feat_ref, y_ref: (B, LANE)   lane-dense outputs
    # p1_ref : ((T+KMAX-1)*B, F)      zero-padded conv1 input scratch
    # p2_ref : ((T+KMAX-1)*B, 3*C1)   zero-padded conv2 input scratch
    tb = x_ref.shape[0]
    b = feat_ref.shape[0]
    t = tb // b
    kmax = w1_ref.shape[0]
    pad = (kmax - 1) // 2

    # ---- conv1 (all three window sizes fused into one wide matmul per tap) --
    p1_ref[...] = jnp.zeros_like(p1_ref)
    p1_ref[pad * b:pad * b + tb, :] = x_ref[...]
    acc1 = jnp.dot(p1_ref[0:tb, :], w1_ref[0],
                   preferred_element_type=jnp.float32)
    for k in range(1, kmax):
        acc1 = acc1 + jnp.dot(p1_ref[k * b:k * b + tb, :], w1_ref[k],
                              preferred_element_type=jnp.float32)
    g1 = jnp.clip(acc1 + b1_ref[...], 0.0, 6.0)          # relu6, (T*B, 3*C1)

    # ---- conv2 (all three window sizes fused) --------------------------------
    p2_ref[...] = jnp.zeros_like(p2_ref)
    p2_ref[pad * b:pad * b + tb, :] = g1
    acc2 = jnp.dot(p2_ref[0:tb, :], w2_ref[0],
                   preferred_element_type=jnp.float32)
    for k in range(1, kmax):
        acc2 = acc2 + jnp.dot(p2_ref[k * b:k * b + tb, :], w2_ref[k],
                              preferred_element_type=jnp.float32)
    g2 = jnp.clip(acc2 + b2_ref[...], 0.0, 6.0)          # relu6, (T*B, 3*C2)

    # ---- global max-pool over time (MaxPool1d(kernel_size=T)) ----------------
    pooled = g2[0:b, :]
    for step in range(1, t):
        pooled = jnp.maximum(pooled, g2[step * b:(step + 1) * b, :])

    # TODO(synk): dropout (p=0.2) on the pooled features is omitted
    #             (drop=False / eval semantics).

    # ---- fc1 (lane-padded to 128) -> relu -> fc2 ------------------------------
    feat = jnp.dot(pooled, wf1_ref[...],
                   preferred_element_type=jnp.float32) + bf1_ref[...]
    feat_ref[...] = feat                                  # cols [:O] = dl_feature
    y_ref[...] = jnp.dot(jnp.maximum(feat, 0.0), wf2_ref[...],
                         preferred_element_type=jnp.float32) + bf2_ref[...]


# ---------------------------------------------------------------------------
# Parameter init (PyTorch-shaped) and one-time conversion to kernel layout
# ---------------------------------------------------------------------------
def init_params(key, input_size, output_size):
    nw = len(WINDOWS)
    ks = iter(jax.random.split(key, 4 * nw + 4))

    def u(k, shape, fan_in):
        s = 1.0 / np.sqrt(fan_in)
        return jax.random.uniform(k, shape, jnp.float32, -s, s)

    p = {"conv1_w": [], "conv1_b": [], "conv2_w": [], "conv2_b": []}
    for ws in WINDOWS:                                   # Conv2d(1, 256, (ws, F))
        fan = 1 * ws * input_size
        p["conv1_w"].append(u(next(ks), (C1, 1, ws, input_size), fan))
        p["conv1_b"].append(u(next(ks), (C1,), fan))
    for ws in WINDOWS:                                   # Conv2d(3, 128, (ws, 256))
        fan = nw * ws * C1
        p["conv2_w"].append(u(next(ks), (C2, nw, ws, C1), fan))
        p["conv2_b"].append(u(next(ks), (C2,), fan))
    p["fc1_w"] = u(next(ks), (output_size, nw * C2), nw * C2)
    p["fc1_b"] = u(next(ks), (output_size,), nw * C2)
    p["fc2_w"] = u(next(ks), (1, output_size), output_size)
    p["fc2_b"] = u(next(ks), (1,), output_size)
    return p


def prepare_kernel_params(p):
    """Zero-extend conv kernels to KMAX taps and fuse the 3 windows laneward."""
    nw = len(WINDOWS)

    blocks = []
    for i, ws in enumerate(WINDOWS):
        w = p["conv1_w"][i][:, 0]                        # (C1, ws, F)
        w = jnp.transpose(w, (1, 2, 0))                  # (ws, F, C1): [k, f, c]
        off = (KMAX - ws) // 2
        w = jnp.pad(w, ((off, KMAX - ws - off), (0, 0), (0, 0)))
        blocks.append(w)
    w1 = jnp.concatenate(blocks, axis=2)                 # (KMAX, F, nw*C1)
    b1 = jnp.concatenate(p["conv1_b"]).reshape(1, nw * C1)

    blocks = []
    for j, ws in enumerate(WINDOWS):
        w = p["conv2_w"][j]                              # (C2, nw, ws, C1)
        w = jnp.transpose(w, (2, 1, 3, 0))               # (ws, nw, C1, C2)
        w = w.reshape(ws, nw * C1, C2)                   # [k, cin*C1 + c1, c2]
        off = (KMAX - ws) // 2
        w = jnp.pad(w, ((off, KMAX - ws - off), (0, 0), (0, 0)))
        blocks.append(w)
    w2 = jnp.concatenate(blocks, axis=2)                 # (KMAX, nw*C1, nw*C2)
    b2 = jnp.concatenate(p["conv2_b"]).reshape(1, nw * C2)

    o = p["fc1_w"].shape[0]
    wf1 = jnp.zeros((nw * C2, LANE), jnp.float32).at[:, :o].set(p["fc1_w"].T)
    bf1 = jnp.zeros((1, LANE), jnp.float32).at[0, :o].set(p["fc1_b"])
    wf2 = jnp.zeros((LANE, LANE), jnp.float32).at[:o, :1].set(p["fc2_w"].T)
    bf2 = jnp.zeros((1, LANE), jnp.float32).at[0, 0].set(p["fc2_b"][0])
    return dict(w1=w1, b1=b1, w2=w2, b2=b2, wf1=wf1, bf1=bf1, wf2=wf2, bf2=bf2)


# ---------------------------------------------------------------------------
# Wrapper: one pallas_call for the whole forward pass
# ---------------------------------------------------------------------------
@functools.partial(jax.jit, static_argnames=("output_size",))
def earthquake_cnn_forward(kp, x, *, output_size):
    B, T, F = x.shape
    nw = len(WINDOWS)
    # time-major flatten (row = t*B + b) so temporal conv shifts are row shifts
    x_tm = jnp.transpose(x, (1, 0, 2)).reshape(T * B, F)

    feat_pad, y_pad = pl.pallas_call(
        fused_cnn_kernel,
        out_shape=(jax.ShapeDtypeStruct((B, LANE), jnp.float32),
                   jax.ShapeDtypeStruct((B, LANE), jnp.float32)),
        in_specs=[VMEM_SPEC] * 9,
        out_specs=(VMEM_SPEC, VMEM_SPEC),
        scratch_shapes=[
            pltpu.VMEM(((T + KMAX - 1) * B, F), jnp.float32),
            pltpu.VMEM(((T + KMAX - 1) * B, nw * C1), jnp.float32),
        ],
        compiler_params=pltpu.CompilerParams(
            vmem_limit_bytes=48 * 1024 * 1024),
    )(x_tm, kp["w1"], kp["b1"], kp["w2"], kp["b2"],
      kp["wf1"], kp["bf1"], kp["wf2"], kp["bf2"])

    dl_feature = feat_pad[:, :output_size]               # (B, O) pre-ReLU fc1 out
    y = y_pad[:, 0]                                      # (B,)   fc2 out, squeezed
    return y, dl_feature


# ---------------------------------------------------------------------------
# Pure-JAX reference (mirrors the PyTorch module, drop=False) for validation
# ---------------------------------------------------------------------------
def reference_forward(p, x):
    xi = x[:, None, :, :]                                # (B, 1, T, F)
    outs = []
    for i, ws in enumerate(WINDOWS):
        y = lax.conv_general_dilated(
            xi, p["conv1_w"][i], (1, 1), ((ws // 2, ws // 2), (0, 0)),
            dimension_numbers=("NCHW", "OIHW", "NCHW"))
        y = jnp.clip(y + p["conv1_b"][i][None, :, None, None], 0.0, 6.0)
        outs.append(jnp.transpose(y, (0, 3, 2, 1)))      # (B, 1, T, C1)
    a = jnp.concatenate(outs, axis=1)                    # (B, 3, T, C1)
    pooled = []
    for j, ws in enumerate(WINDOWS):
        y = lax.conv_general_dilated(
            a, p["conv2_w"][j], (1, 1), ((ws // 2, ws // 2), (0, 0)),
            dimension_numbers=("NCHW", "OIHW", "NCHW"))
        y = jnp.clip(y + p["conv2_b"][j][None, :, None, None], 0.0, 6.0)
        pooled.append(jnp.max(y[:, :, :, 0], axis=2))    # MaxPool1d(kernel=T)
    f = jnp.concatenate(pooled, axis=1)                  # (B, 3*C2)
    dl = f @ p["fc1_w"].T + p["fc1_b"]
    y = jnp.maximum(dl, 0.0) @ p["fc2_w"].T + p["fc2_b"]
    return y[:, 0], dl


if __name__ == "__main__":
    # Small shapes consistent with the module:
    #   feature_num = 16, extract_feature_num = 8, seq = seg_size[0] = 8, batch = 2
    B, T, F, OUT = 2, 8, 16, 8

    key = jax.random.PRNGKey(0)
    k_param, k_x = jax.random.split(key)
    params = init_params(k_param, F, OUT)
    kparams = prepare_kernel_params(params)
    x = jax.random.normal(k_x, (B, T, F), jnp.float32)

    y, dl_feature = earthquake_cnn_forward(kparams, x, output_size=OUT)
    jax.block_until_ready((y, dl_feature))
    assert y.shape == (B,) and dl_feature.shape == (B, OUT)

    y_ref, dl_ref = reference_forward(params, x)
    np.testing.assert_allclose(np.asarray(y), np.asarray(y_ref),
                               rtol=2e-3, atol=2e-3)
    np.testing.assert_allclose(np.asarray(dl_feature), np.asarray(dl_ref),
                               rtol=2e-3, atol=2e-3)

    print("KERNEL_OK")
</pallas_src>

<mosaic_0001>
module attributes {stable_mosaic.version = 11 : i64} {
  func.func @fused_cnn_kernel(%arg0: memref<16x16xf32, #tpu.memory_space<vmem>>, %arg1: memref<7x16x768xf32, #tpu.memory_space<vmem>>, %arg2: memref<1x768xf32, #tpu.memory_space<vmem>>, %arg3: memref<7x768x384xf32, #tpu.memory_space<vmem>>, %arg4: memref<1x384xf32, #tpu.memory_space<vmem>>, %arg5: memref<384x128xf32, #tpu.memory_space<vmem>>, %arg6: memref<1x128xf32, #tpu.memory_space<vmem>>, %arg7: memref<128x128xf32, #tpu.memory_space<vmem>>, %arg8: memref<1x128xf32, #tpu.memory_space<vmem>>, %arg9: memref<2x128xf32, #tpu.memory_space<vmem>>, %arg10: memref<2x128xf32, #tpu.memory_space<vmem>>, %arg11: memref<28x16xf32, #tpu.memory_space<vmem>>, %arg12: memref<28x768xf32, #tpu.memory_space<vmem>>) attributes {dimension_semantics = [], scalar_prefetch = 0 : i64, scratch_operands = 2 : i64, tpu.core_type = #tpu.core_type<tc>} {
    %cst = arith.constant 0.000000e+00 : f32
    %0 = vector.broadcast %cst : f32 to vector<28x16xf32>
    %c0 = arith.constant 0 : index
    %c0_0 = arith.constant 0 : index
    %1 = vector.load %arg11[%c0, %c0_0] : memref<28x16xf32, #tpu.memory_space<vmem>>, vector<28x16xf32>
    tpu.vector_store %arg11[%c0, %c0_0], %0 {strides = array<i32>} : memref<28x16xf32, #tpu.memory_space<vmem>>, vector<28x16xf32>,
    %c0_1 = arith.constant 0 : index
    %c0_2 = arith.constant 0 : index
    %2 = vector.load %arg0[%c0_1, %c0_2] : memref<16x16xf32, #tpu.memory_space<vmem>>, vector<16x16xf32>
    %c6 = arith.constant 6 : index
    %c0_3 = arith.constant 0 : index
    %3 = vector.load %arg11[%c6, %c0_3] : memref<28x16xf32, #tpu.memory_space<vmem>>, vector<16x16xf32>
    tpu.vector_store %arg11[%c6, %c0_3], %2 {strides = array<i32>} : memref<28x16xf32, #tpu.memory_space<vmem>>, vector<16x16xf32>,
    %c0_4 = arith.constant 0 : index
    %c0_5 = arith.constant 0 : index
    %4 = vector.load %arg11[%c0_4, %c0_5] : memref<28x16xf32, #tpu.memory_space<vmem>>, vector<16x16xf32>
    %c0_6 = arith.constant 0 : index
    %c0_7 = arith.constant 0 : index
    %c0_8 = arith.constant 0 : index
    %5 = vector.load %arg1[%c0_6, %c0_7, %c0_8] : memref<7x16x768xf32, #tpu.memory_space<vmem>>, vector<1x16x768xf32>
    %6 = vector.shape_cast %5 : vector<1x16x768xf32> to vector<16x768xf32>
    %cst_9 = arith.constant dense<0.000000e+00> : vector<16x768xf32>
    %7 = tpu.matmul %4, %6, %cst_9 {dimension_numbers = #tpu.dot_dimension_numbers<[1], [0], [0], [1], [0, 0, 1, 1], [], []>} : vector<16x16xf32>, vector<16x768xf32>, vector<16x768xf32> -> vector<16x768xf32>
    %c2 = arith.constant 2 : index
    %c0_10 = arith.constant 0 : index
    %8 = vector.load %arg11[%c2, %c0_10] : memref<28x16xf32, #tpu.memory_space<vmem>>, vector<16x16xf32>
    %c1 = arith.constant 1 : index
    %c0_11 = arith.constant 0 : index
    %c0_12 = arith.constant 0 : index
    %9 = vector.load %arg1[%c1, %c0_11, %c0_12] : memref<7x16x768xf32, #tpu.memory_space<vmem>>, vector<1x16x768xf32>
    %10 = vector.shape_cast %9 : vector<1x16x768xf32> to vector<16x768xf32>
    %cst_13 = arith.constant dense<0.000000e+00> : vector<16x768xf32>
    %11 = tpu.matmul %8, %10, %cst_13 {dimension_numbers = #tpu.dot_dimension_numbers<[1], [0], [0], [1], [0, 0, 1, 1], [], []>} : vector<16x16xf32>, vector<16x768xf32>, vector<16x768xf32> -> vector<16x768xf32>
    %12 = arith.addf %7, %11 : vector<16x768xf32>
    %c4 = arith.constant 4 : index
    %c0_14 = arith.constant 0 : index
    %13 = vector.load %arg11[%c4, %c0_14] : memref<28x16xf32, #tpu.memory_space<vmem>>, vector<16x16xf32>
    %c2_15 = arith.constant 2 : index
    %c0_16 = arith.constant 0 : index
    %c0_17 = arith.constant 0 : index
    %14 = vector.load %arg1[%c2_15, %c0_16, %c0_17] : memref<7x16x768xf32, #tpu.memory_space<vmem>>, vector<1x16x768xf32>
    %15 = vector.shape_cast %14 : vector<1x16x768xf32> to vector<16x768xf32>
    %cst_18 = arith.constant dense<0.000000e+00> : vector<16x768xf32>
    %16 = tpu.matmul %13, %15, %cst_18 {dimension_numbers = #tpu.dot_dimension_numbers<[1], [0], [0], [1], [0, 0, 1, 1], [], []>} : vector<16x16xf32>, vector<16x768xf32>, vector<16x768xf32> -> vector<16x768xf32>
    %17 = arith.addf %12, %16 : vector<16x768xf32>
    %c6_19 = arith.constant 6 : index
    %c0_20 = arith.constant 0 : index
    %18 = vector.load %arg11[%c6_19, %c0_20] : memref<28x16xf32, #tpu.memory_space<vmem>>, vector<16x16xf32>
    %c3 = arith.constant 3 : index
    %c0_21 = arith.constant 0 : index
    %c0_22 = arith.constant 0 : index
    %19 = vector.load %arg1[%c3, %c0_21, %c0_22] : memref<7x16x768xf32, #tpu.memory_space<vmem>>, vector<1x16x768xf32>
    %20 = vector.shape_cast %19 : vector<1x16x768xf32> to vector<16x768xf32>
    %cst_23 = arith.constant dense<0.000000e+00> : vector<16x768xf32>
    %21 = tpu.matmul %18, %20, %cst_23 {dimension_numbers = #tpu.dot_dimension_numbers<[1], [0], [0], [1], [0, 0, 1, 1], [], []>} : vector<16x16xf32>, vector<16x768xf32>, vector<16x768xf32> -> vector<16x768xf32>
    %22 = arith.addf %17, %21 : vector<16x768xf32>
    %c8 = arith.constant 8 : index
    %c0_24 = arith.constant 0 : index
    %23 = vector.load %arg11[%c8, %c0_24] : memref<28x16xf32, #tpu.memory_space<vmem>>, vector<16x16xf32>
    %c4_25 = arith.constant 4 : index
    %c0_26 = arith.constant 0 : index
    %c0_27 = arith.constant 0 : index
    %24 = vector.load %arg1[%c4_25, %c0_26, %c0_27] : memref<7x16x768xf32, #tpu.memory_space<vmem>>, vector<1x16x768xf32>
    %25 = vector.shape_cast %24 : vector<1x16x768xf32> to vector<16x768xf32>
    %cst_28 = arith.constant dense<0.000000e+00> : vector<16x768xf32>
    %26 = tpu.matmul %23, %25, %cst_28 {dimension_numbers = #tpu.dot_dimension_numbers<[1], [0], [0], [1], [0, 0, 1, 1], [], []>} : vector<16x16xf32>, vector<16x768xf32>, vector<16x768xf32> -> vector<16x768xf32>
    %27 = arith.addf %22, %26 : vector<16x768xf32>
    %c10 = arith.constant 10 : index
    %c0_29 = arith.constant 0 : index
    %28 = vector.load %arg11[%c10, %c0_29] : memref<28x16xf32, #tpu.memory_space<vmem>>, vector<16x16xf32>
    %c5 = arith.constant 5 : index
    %c0_30 = arith.constant 0 : index
    %c0_31 = arith.constant 0 : index
    %29 = vector.load %arg1[%c5, %c0_30, %c0_31] : memref<7x16x768xf32, #tpu.memory_space<vmem>>, vector<1x16x768xf32>
    %30 = vector.shape_cast %29 : vector<1x16x768xf32> to vector<16x768xf32>
    %cst_32 = arith.constant dense<0.000000e+00> : vector<16x768xf32>
    %31 = tpu.matmul %28, %30, %cst_32 {dimension_numbers = #tpu.dot_dimension_numbers<[1], [0], [0], [1], [0, 0, 1, 1], [], []>} : vector<16x16xf32>, vector<16x768xf32>, vector<16x768xf32> -> vector<16x768xf32>
    %32 = arith.addf %27, %31 : vector<16x768xf32>
    %c12 = arith.constant 12 : index
    %c0_33 = arith.constant 0 : index
    %33 = vector.load %arg11[%c12, %c0_33] : memref<28x16xf32, #tpu.memory_space<vmem>>, vector<16x16xf32>
    %c6_34 = arith.constant 6 : index
    %c0_35 = arith.constant 0 : index
    %c0_36 = arith.constant 0 : index
    %34 = vector.load %arg1[%c6_34, %c0_35, %c0_36] : memref<7x16x768xf32, #tpu.memory_space<vmem>>, vector<1x16x768xf32>
    %35 = vector.shape_cast %34 : vector<1x16x768xf32> to vector<16x768xf32>
    %cst_37 = arith.constant dense<0.000000e+00> : vector<16x768xf32>
    %36 = tpu.matmul %33, %35, %cst_37 {dimension_numbers = #tpu.dot_dimension_numbers<[1], [0], [0], [1], [0, 0, 1, 1], [], []>} : vector<16x16xf32>, vector<16x768xf32>, vector<16x768xf32> -> vector<16x768xf32>
    %37 = arith.addf %32, %36 : vector<16x768xf32>
    %c0_38 = arith.constant 0 : index
    %c0_39 = arith.constant 0 : index
    %38 = vector.load %arg2[%c0_38, %c0_39] : memref<1x768xf32, #tpu.memory_space<vmem>>, vector<1x768xf32>
    %39 = vector.broadcast %38 : vector<1x768xf32> to vector<16x768xf32>
    %40 = arith.addf %37, %39 : vector<16x768xf32>
    %cst_40 = arith.constant 0.000000e+00 : f32
    %cst_41 = arith.constant 6.000000e+00 : f32
    %41 = vector.broadcast %cst_40 : f32 to vector<16x768xf32>
    %42 = arith.maximumf %41, %40 : vector<16x768xf32>
    %43 = vector.broadcast %cst_41 : f32 to vector<16x768xf32>
    %44 = arith.minimumf %43, %42 : vector<16x768xf32>
    %cst_42 = arith.constant 0.000000e+00 : f32
    %45 = vector.broadcast %cst_42 : f32 to vector<28x768xf32>
    %c0_43 = arith.constant 0 : index
    %c0_44 = arith.constant 0 : index
    %46 = vector.load %arg12[%c0_43, %c0_44] : memref<28x768xf32, #tpu.memory_space<vmem>>, vector<28x768xf32>
    tpu.vector_store %arg12[%c0_43, %c0_44], %45 {strides = array<i32>} : memref<28x768xf32, #tpu.memory_space<vmem>>, vector<28x768xf32>,
    %c6_45 = arith.constant 6 : index
    %c0_46 = arith.constant 0 : index
    %47 = vector.load %arg12[%c6_45, %c0_46] : memref<28x768xf32, #tpu.memory_space<vmem>>, vector<16x768xf32>
    tpu.vector_store %arg12[%c6_45, %c0_46], %44 {strides = array<i32>} : memref<28x768xf32, #tpu.memory_space<vmem>>, vector<16x768xf32>,
    %c0_47 = arith.constant 0 : index
    %c0_48 = arith.constant 0 : index
    %48 = vector.load %arg12[%c0_47, %c0_48] : memref<28x768xf32, #tpu.memory_space<vmem>>, vector<16x768xf32>
    %c0_49 = arith.constant 0 : index
    %c0_50 = arith.constant 0 : index
    %c0_51 = arith.constant 0 : index
    %49 = vector.load %arg3[%c0_49, %c0_50, %c0_51] : memref<7x768x384xf32, #tpu.memory_space<vmem>>, vector<1x768x384xf32>
    %50 = vector.shape_cast %49 : vector<1x768x384xf32> to vector<768x384xf32>
    %cst_52 = arith.constant dense<0.000000e+00> : vector<16x384xf32>
    %51 = tpu.matmul %48, %50, %cst_52 {dimension_numbers = #tpu.dot_dimension_numbers<[1], [0], [0], [1], [0, 0, 1, 1], [], []>} : vector<16x768xf32>, vector<768x384xf32>, vector<16x384xf32> -> vector<16x384xf32>
    %c2_53 = arith.constant 2 : index
    %c0_54 = arith.constant 0 : index
    %52 = vector.load %arg12[%c2_53, %c0_54] : memref<28x768xf32, #tpu.memory_space<vmem>>, vector<16x768xf32>
    %c1_55 = arith.constant 1 : index
    %c0_56 = arith.constant 0 : index
    %c0_57 = arith.constant 0 : index
    %53 = vector.load %arg3[%c1_55, %c0_56, %c0_57] : memref<7x768x384xf32, #tpu.memory_space<vmem>>, vector<1x768x384xf32>
    %54 = vector.shape_cast %53 : vector<1x768x384xf32> to vector<768x384xf32>
    %cst_58 = arith.constant dense<0.000000e+00> : vector<16x384xf32>
    %55 = tpu.matmul %52, %54, %cst_58 {dimension_numbers = #tpu.dot_dimension_numbers<[1], [0], [0], [1], [0, 0, 1, 1], [], []>} : vector<16x768xf32>, vector<768x384xf32>, vector<16x384xf32> -> vector<16x384xf32>
    %56 = arith.addf %51, %55 : vector<16x384xf32>
    %c4_59 = arith.constant 4 : index
    %c0_60 = arith.constant 0 : index
    %57 = vector.load %arg12[%c4_59, %c0_60] : memref<28x768xf32, #tpu.memory_space<vmem>>, vector<16x768xf32>
    %c2_61 = arith.constant 2 : index
    %c0_62 = arith.constant 0 : index
    %c0_63 = arith.constant 0 : index
    %58 = vector.load %arg3[%c2_61, %c0_62, %c0_63] : memref<7x768x384xf32, #tpu.memory_space<vmem>>, vector<1x768x384xf32>
    %59 = vector.shape_cast %58 : vector<1x768x384xf32> to vector<768x384xf32>
    %cst_64 = arith.constant dense<0.000000e+00> : vector<16x384xf32>
    %60 = tpu.matmul %57, %59, %cst_64 {dimension_numbers = #tpu.dot_dimension_numbers<[1], [0], [0], [1], [0, 0, 1, 1], [], []>} : vector<16x768xf32>, vector<768x384xf32>, vector<16x384xf32> -> vector<16x384xf32>
    %61 = arith.addf %56, %60 : vector<16x384xf32>
    %c6_65 = arith.constant 6 : index
    %c0_66 = arith.constant 0 : index
    %62 = vector.load %arg12[%c6_65, %c0_66] : memref<28x768xf32, #tpu.memory_space<vmem>>, vector<16x768xf32>
    %c3_67 = arith.constant 3 : index
    %c0_68 = arith.constant 0 : index
    %c0_69 = arith.constant 0 : index
    %63 = vector.load %arg3[%c3_67, %c0_68, %c0_69] : memref<7x768x384xf32, #tpu.memory_space<vmem>>, vector<1x768x384xf32>
    %64 = vector.shape_cast %63 : vector<1x768x384xf32> to vector<768x384xf32>
    %cst_70 = arith.constant dense<0.000000e+00> : vector<16x384xf32>
    %65 = tpu.matmul %62, %64, %cst_70 {dimension_numbers = #tpu.dot_dimension_numbers<[1], [0], [0], [1], [0, 0, 1, 1], [], []>} : vector<16x768xf32>, vector<768x384xf32>, vector<16x384xf32> -> vector<16x384xf32>
    %66 = arith.addf %61, %65 : vector<16x384xf32>
    %c8_71 = arith.constant 8 : index
    %c0_72 = arith.constant 0 : index
    %67 = vector.load %arg12[%c8_71, %c0_72] : memref<28x768xf32, #tpu.memory_space<vmem>>, vector<16x768xf32>
    %c4_73 = arith.constant 4 : index
    %c0_74 = arith.constant 0 : index
    %c0_75 = arith.constant 0 : index
    %68 = vector.load %arg3[%c4_73, %c0_74, %c0_75] : memref<7x768x384xf32, #tpu.memory_space<vmem>>, vector<1x768x384xf32>
    %69 = vector.shape_cast %68 : vector<1x768x384xf32> to vector<768x384xf32>
    %cst_76 = arith.constant dense<0.000000e+00> : vector<16x384xf32>
    %70 = tpu.matmul %67, %69, %cst_76 {dimension_numbers = #tpu.dot_dimension_numbers<[1], [0], [0], [1], [0, 0, 1, 1], [], []>} : vector<16x768xf32>, vector<768x384xf32>, vector<16x384xf32> -> vector<16x384xf32>
    %71 = arith.addf %66, %70 : vector<16x384xf32>
    %c10_77 = arith.constant 10 : index
    %c0_78 = arith.constant 0 : index
    %72 = vector.load %arg12[%c10_77, %c0_78] : memref<28x768xf32, #tpu.memory_space<vmem>>, vector<16x768xf32>
    %c5_79 = arith.constant 5 : index
    %c0_80 = arith.constant 0 : index
    %c0_81 = arith.constant 0 : index
    %73 = vector.load %arg3[%c5_79, %c0_80, %c0_81] : memref<7x768x384xf32, #tpu.memory_space<vmem>>, vector<1x768x384xf32>
    %74 = vector.shape_cast %73 : vector<1x768x384xf32> to vector<768x384xf32>
    %cst_82 = arith.constant dense<0.000000e+00> : vector<16x384xf32>
    %75 = tpu.matmul %72, %74, %cst_82 {dimension_numbers = #tpu.dot_dimension_numbers<[1], [0], [0], [1], [0, 0, 1, 1], [], []>} : vector<16x768xf32>, vector<768x384xf32>, vector<16x384xf32> -> vector<16x384xf32>
    %76 = arith.addf %71, %75 : vector<16x384xf32>
    %c12_83 = arith.constant 12 : index
    %c0_84 = arith.constant 0 : index
    %77 = vector.load %arg12[%c12_83, %c0_84] : memref<28x768xf32, #tpu.memory_space<vmem>>, vector<16x768xf32>
    %c6_85 = arith.constant 6 : index
    %c0_86 = arith.constant 0 : index
    %c0_87 = arith.constant 0 : index
    %78 = vector.load %arg3[%c6_85, %c0_86, %c0_87] : memref<7x768x384xf32, #tpu.memory_space<vmem>>, vector<1x768x384xf32>
    %79 = vector.shape_cast %78 : vector<1x768x384xf32> to vector<768x384xf32>
    %cst_88 = arith.constant dense<0.000000e+00> : vector<16x384xf32>
    %80 = tpu.matmul %77, %79, %cst_88 {dimension_numbers = #tpu.dot_dimension_numbers<[1], [0], [0], [1], [0, 0, 1, 1], [], []>} : vector<16x768xf32>, vector<768x384xf32>, vector<16x384xf32> -> vector<16x384xf32>
    %81 = arith.addf %76, %80 : vector<16x384xf32>
    %c0_89 = arith.constant 0 : index
    %c0_90 = arith.constant 0 : index
    %82 = vector.load %arg4[%c0_89, %c0_90] : memref<1x384xf32, #tpu.memory_space<vmem>>, vector<1x384xf32>
    %83 = vector.broadcast %82 : vector<1x384xf32> to vector<16x384xf32>
    %84 = arith.addf %81, %83 : vector<16x384xf32>
    %cst_91 = arith.constant 0.000000e+00 : f32
    %cst_92 = arith.constant 6.000000e+00 : f32
    %85 = vector.broadcast %cst_91 : f32 to vector<16x384xf32>
    %86 = arith.maximumf %85, %84 : vector<16x384xf32>
    %87 = vector.broadcast %cst_92 : f32 to vector<16x384xf32>
    %88 = arith.minimumf %87, %86 : vector<16x384xf32>
    %89 = vector.extract_strided_slice %88 {offsets = [0, 0], sizes = [2, 384], strides = [1, 1]} : vector<16x384xf32> to vector<2x384xf32>
    %90 = vector.extract_strided_slice %88 {offsets = [2, 0], sizes = [2, 384], strides = [1, 1]} : vector<16x384xf32> to vector<2x384xf32>
    %91 = arith.maximumf %89, %90 : vector<2x384xf32>
    %92 = vector.extract_strided_slice %88 {offsets = [4, 0], sizes = [2, 384], strides = [1, 1]} : vector<16x384xf32> to vector<2x384xf32>
    %93 = arith.maximumf %91, %92 : vector<2x384xf32>
    %94 = vector.extract_strided_slice %88 {offsets = [6, 0], sizes = [2, 384], strides = [1, 1]} : vector<16x384xf32> to vector<2x384xf32>
    %95 = arith.maximumf %93, %94 : vector<2x384xf32>
    %96 = vector.extract_strided_slice %88 {offsets = [8, 0], sizes = [2, 384], strides = [1, 1]} : vector<16x384xf32> to vector<2x384xf32>
    %97 = arith.maximumf %95, %96 : vector<2x384xf32>
    %98 = vector.extract_strided_slice %88 {offsets = [10, 0], sizes = [2, 384], strides = [1, 1]} : vector<16x384xf32> to vector<2x384xf32>
    %99 = arith.maximumf %97, %98 : vector<2x384xf32>
    %100 = vector.extract_strided_slice %88 {offsets = [12, 0], sizes = [2, 384], strides = [1, 1]} : vector<16x384xf32> to vector<2x384xf32>
    %101 = arith.maximumf %99, %100 : vector<2x384xf32>
    %102 = vector.extract_strided_slice %88 {offsets = [14, 0], sizes = [2, 384], strides = [1, 1]} : vector<16x384xf32> to vector<2x384xf32>
    %103 = arith.maximumf %101, %102 : vector<2x384xf32>
    %c0_93 = arith.constant 0 : index
    %c0_94 = arith.constant 0 : index
    %104 = vector.load %arg5[%c0_93, %c0_94] : memref<384x128xf32, #tpu.memory_space<vmem>>, vector<384x128xf32>
    %cst_95 = arith.constant dense<0.000000e+00> : vector<2x128xf32>
    %105 = tpu.matmul %103, %104, %cst_95 {dimension_numbers = #tpu.dot_dimension_numbers<[1], [0], [0], [1], [0, 0, 1, 1], [], []>} : vector<2x384xf32>, vector<384x128xf32>, vector<2x128xf32> -> vector<2x128xf32>
    %c0_96 = arith.constant 0 : index
    %c0_97 = arith.constant 0 : index
    %106 = vector.load %arg6[%c0_96, %c0_97] : memref<1x128xf32, #tpu.memory_space<vmem>>, vector<1x128xf32>
    %107 = vector.broadcast %106 : vector<1x128xf32> to vector<2x128xf32>
    %108 = arith.addf %105, %107 : vector<2x128xf32>
    %c0_98 = arith.constant 0 : index
    %c0_99 = arith.constant 0 : index
    %109 = vector.load %arg9[%c0_98, %c0_99] : memref<2x128xf32, #tpu.memory_space<vmem>>, vector<2x128xf32>
    tpu.vector_store %arg9[%c0_98, %c0_99], %108 {strides = array<i32>} : memref<2x128xf32, #tpu.memory_space<vmem>>, vector<2x128xf32>,
    %cst_100 = arith.constant 0.000000e+00 : f32
    %110 = vector.broadcast %cst_100 : f32 to vector<2x128xf32>
    %111 = arith.maximumf %108, %110 : vector<2x128xf32>
    %c0_101 = arith.constant 0 : index
    %c0_102 = arith.constant 0 : index
    %112 = vector.load %arg7[%c0_101, %c0_102] : memref<128x128xf32, #tpu.memory_space<vmem>>, vector<128x128xf32>
    %cst_103 = arith.constant dense<0.000000e+00> : vector<2x128xf32>
    %113 = tpu.matmul %111, %112, %cst_103 {dimension_numbers = #tpu.dot_dimension_numbers<[1], [0], [0], [1], [0, 0, 1, 1], [], []>} : vector<2x128xf32>, vector<128x128xf32>, vector<2x128xf32> -> vector<2x128xf32>
    %c0_104 = arith.constant 0 : index
    %c0_105 = arith.constant 0 : index
    %114 = vector.load %arg8[%c0_104, %c0_105] : memref<1x128xf32, #tpu.memory_space<vmem>>, vector<1x128xf32>
    %115 = vector.broadcast %114 : vector<1x128xf32> to vector<2x128xf32>
    %116 = arith.addf %113, %115 : vector<2x128xf32>
    %c0_106 = arith.constant 0 : index
    %c0_107 = arith.constant 0 : index
    %117 = vector.load %arg10[%c0_106, %c0_107] : memref<2x128xf32, #tpu.memory_space<vmem>>, vector<2x128xf32>
    tpu.vector_store %arg10[%c0_106, %c0_107], %116 {strides = array<i32>} : memref<2x128xf32, #tpu.memory_space<vmem>>, vector<2x128xf32>,
    return
  }
}

</mosaic_0001>

<llo_original>
// kernel: earthquake_cnn_forward.1
$region0: #{earthquake_cnn_forward.1}
  #allocation0 [shape = 'u32[]', space=smem, size = 0x4, offset = 0x4, fixed_abs, tag = 'smem constant byte address 0x4 - core index']
  #allocation1 [shape = 'u32[72,128]{1,0:T(1,128)}', space=vmem, size = 0x9000, scoped, tag = 'internal scratch']
  #allocation2 [shape = 'f32[28,16]{1,0:T(8,128)}', space=vmem, size = 0x4000, scoped, tag = 'scratch operand']
  #allocation3 [shape = 'f32[28,768]{1,0:T(8,128)}', space=vmem, size = 0x18000, scoped, tag = 'scratch operand']
  %s0 = inlined_call_operand.vmem [shape: f32[16,16], index: 0, kind: input, shape index: {}]
  %s1 = inlined_call_operand.hbm [shape: f32[7,16,768], index: 1, kind: input, shape index: {}]
  %s2 = inlined_call_operand.hbm [shape: f32[1,768], index: 2, kind: input, shape index: {}]
  %s3 = inlined_call_operand.hbm [shape: f32[7,768,384], index: 3, kind: input, shape index: {}]
  %s4 = inlined_call_operand.hbm [shape: f32[1,384], index: 4, kind: input, shape index: {}]
  %s5 = inlined_call_operand.hbm [shape: f32[384,128], index: 5, kind: input, shape index: {}]
  %s6 = inlined_call_operand.hbm [shape: f32[1,128], index: 6, kind: input, shape index: {}]
  %s7 = inlined_call_operand.hbm [shape: f32[128,128], index: 7, kind: input, shape index: {}]
  %s8 = inlined_call_operand.hbm [shape: f32[1,128], index: 8, kind: input, shape index: {}]
  %s9 = inlined_call_operand.hbm [shape: f32[2,128], index: 9, kind: output, shape index: {0}]
  %s10 = inlined_call_operand.vmem [shape: f32[2,128], index: 10, kind: output, shape index: {1}]
  %11 = xla_tuple %s9, %s10
  %s12 = sld [smem:[#allocation0]]
  $region86: #{earthquake_cnn_forward.1} parent=0
    _
  %s14 = ssub.s32 1, %s12
  %s15 = scalar_select 0, %s14, %s12
  $region1: #{earthquake_cnn_forward.1} parent=0
    #allocation4 [shape = 'u8[344064]{0}', space=vmem, size = 0x54000, scoped, tag = 'input window, operand 1, single buffered']
    #allocation5 [shape = 's32[1]{0}', space=sflag, size = 0x4, scoped, tag = 'scoped memory for earthquake_cnn_forward.1']
    #allocation6 [shape = 's32[1]{0}', space=sflag, size = 0x4, scoped, tag = 'scoped memory for earthquake_cnn_forward.1']
    #allocation7 [shape = 'u8[3072]{0}', space=vmem, size = 0xc00, scoped, tag = 'input window, operand 2, single buffered']
    #allocation8 [shape = 's32[1]{0}', space=sflag, size = 0x4, scoped, tag = 'scoped memory for earthquake_cnn_forward.1']
    #allocation9 [shape = 'u8[8257536]{0}', space=vmem, size = 0x7e0000, scoped, tag = 'input window, operand 3, single buffered']
    #allocation10 [shape = 'u8[1536]{0}', space=vmem, size = 0x800, scoped, tag = 'input window, operand 4, single buffered']
    #allocation11 [shape = 's32[1]{0}', space=sflag, size = 0x4, scoped, tag = 'scoped memory for earthquake_cnn_forward.1']
    #allocation12 [shape = 'u8[196608]{0}', space=vmem, size = 0x30000, scoped, tag = 'input window, operand 5, single buffered']
    #allocation13 [shape = 'u8[512]{0}', space=vmem, size = 0x400, scoped, tag = 'input window, operand 6, single buffered']
    #allocation14 [shape = 's32[1]{0}', space=sflag, size = 0x4, scoped, tag = 'scoped memory for earthquake_cnn_forward.1']
    #allocation15 [shape = 'u8[65536]{0}', space=vmem, size = 0x10000, scoped, tag = 'input window, operand 7, single buffered']
    #allocation16 [shape = 'u8[512]{0}', space=vmem, size = 0x400, scoped, tag = 'input window, operand 8, single buffered']
    #allocation17 [shape = 's32[1]{0}', space=sflag, size = 0x4, scoped, tag = 'scoped memory for earthquake_cnn_forward.1']
    #allocation18 [shape = 'u8[1024]{0}', space=vmem, size = 0x400, scoped, tag = 'output window, operand 0, single buffered']
    %16 = vsyncpa [#allocation5], 0
    %17 = vsyncpa [#allocation8], 0
    %18 = vsyncpa [#allocation11], 0
    %19 = vsyncpa [#allocation14], 0
    %20 = vsyncpa [#allocation17], 0
    %21 = vsyncpa [#allocation6], 0
    // Predicated region
    $region2: #{earthquake_cnn_forward.1} parent=1 // pred_check
      _
    $region3: #{earthquake_cnn_forward.1} parent=1 // pred_check_branch
      %23 = sbr.rel (0) target = $region5
    $region4: #{earthquake_cnn_forward.1} parent=1 // pred_region
      _
    $region5: #{earthquake_cnn_forward.1} parent=1 // pred_fallthru
      _
    // Predicated region
    $region6: #{earthquake_cnn_forward.1} parent=1 // pred_check
      _
    $region7: #{earthquake_cnn_forward.1} parent=1 // pred_check_branch
      %25 = sbr.rel (0) target = $region9
    $region8: #{earthquake_cnn_forward.1} parent=1 // pred_region
      %27 = vsyncadd [#allocation5], 0
      %s28 = sshll.u32 %s1, 4
      %s29 = int_to_ptr.hbm [resolvable:$true] %s28
      %s30 = sshll.u32 [#allocation4], 4
      %s31 = int_to_ptr.vmem [resolvable:$true] %s30
      %36 = dma.hbm_to_vmem [thread:$0]  %s29, 10752, %s31, [#allocation5], 768, 768, 48
    $region9: #{earthquake_cnn_forward.1} parent=1 // pred_fallthru
      _
    // Predicated region
    $region10: #{earthquake_cnn_forward.1} parent=1 // pred_check
      _
    $region11: #{earthquake_cnn_forward.1} parent=1 // pred_check_branch
      %38 = sbr.rel (0) target = $region13
    $region12: #{earthquake_cnn_forward.1} parent=1 // pred_region
      %40 = vsyncadd [#allocation8], 0
      %s42 = sshll.u32 %s2, 4
      %s43 = int_to_ptr.hbm [resolvable:$true] %s42
      %s44 = sshll.u32 [#allocation7], 4
      %s45 = int_to_ptr.vmem [resolvable:$true] %s44
      %47 = dma.hbm_to_vmem [thread:$0]  %s43, 96, %s45, [#allocation8]
    $region13: #{earthquake_cnn_forward.1} parent=1 // pred_fallthru
      _
    // Predicated region
    $region14: #{earthquake_cnn_forward.1} parent=1 // pred_check
      _
    $region15: #{earthquake_cnn_forward.1} parent=1 // pred_check_branch
      %49 = sbr.rel (0) target = $region17
    $region16: #{earthquake_cnn_forward.1} parent=1 // pred_region
      %51 = vsyncadd [#allocation8], 0
      %s52 = sshll.u32 %s3, 4
      %s53 = int_to_ptr.hbm [resolvable:$true] %s52
      %s54 = sshll.u32 [#allocation9], 4
      %s55 = int_to_ptr.vmem [resolvable:$true] %s54
      %60 = dma.hbm_to_vmem [thread:$0]  %s53, 258048, %s55, [#allocation8], 384, 384, 24
    $region17: #{earthquake_cnn_forward.1} parent=1 // pred_fallthru
      _
    // Predicated region
    $region18: #{earthquake_cnn_forward.1} parent=1 // pred_check
      _
    $region19: #{earthquake_cnn_forward.1} parent=1 // pred_check_branch
      %62 = sbr.rel (0) target = $region21
    $region20: #{earthquake_cnn_forward.1} parent=1 // pred_region
      %64 = vsyncadd [#allocation11], 0
      %s66 = sshll.u32 %s4, 4
      %s67 = int_to_ptr.hbm [resolvable:$true] %s66
      %s68 = sshll.u32 [#allocation10], 4
      %s69 = int_to_ptr.vmem [resolvable:$true] %s68
      %71 = dma.hbm_to_vmem [thread:$0]  %s67, 48, %s69, [#allocation11]
    $region21: #{earthquake_cnn_forward.1} parent=1 // pred_fallthru
      _
    // Predicated region
    $region22: #{earthquake_cnn_forward.1} parent=1 // pred_check
      _
    $region23: #{earthquake_cnn_forward.1} parent=1 // pred_check_branch
      %73 = sbr.rel (0) target = $region25
    $region24: #{earthquake_cnn_forward.1} parent=1 // pred_region
      %75 = vsyncadd [#allocation11], 0
      %s76 = sshll.u32 %s5, 4
      %s77 = int_to_ptr.hbm [resolvable:$true] %s76
      %s78 = sshll.u32 [#allocation12], 4
      %s79 = int_to_ptr.vmem [resolvable:$true] %s78
      %84 = dma.hbm_to_vmem [thread:$0]  %s77, 6144, %s79, [#allocation11], 128, 128, 8
    $region25: #{earthquake_cnn_forward.1} parent=1 // pred_fallthru
      _
    // Predicated region
    $region26: #{earthquake_cnn_forward.1} parent=1 // pred_check
      _
    $region27: #{earthquake_cnn_forward.1} parent=1 // pred_check_branch
      %86 = sbr.rel (0) target = $region29
    $region28: #{earthquake_cnn_forward.1} parent=1 // pred_region
      %88 = vsyncadd [#allocation14], 0
      %s90 = sshll.u32 %s6, 4
      %s91 = int_to_ptr.hbm [resolvable:$true] %s90
      %s92 = sshll.u32 [#allocation13], 4
      %s93 = int_to_ptr.vmem [resolvable:$true] %s92
      %95 = dma.hbm_to_vmem [thread:$0]  %s91, 16, %s93, [#allocation14]
    $region29: #{earthquake_cnn_forward.1} parent=1 // pred_fallthru
      _
    // Predicated region
    $region30: #{earthquake_cnn_forward.1} parent=1 // pred_check
      _
    $region31: #{earthquake_cnn_forward.1} parent=1 // pred_check_branch
      %97 = sbr.rel (0) target = $region33
    $region32: #{earthquake_cnn_forward.1} parent=1 // pred_region
      %99 = vsyncadd [#allocation14], 0
      %s100 = sshll.u32 %s7, 4
      %s101 = int_to_ptr.hbm [resolvable:$true] %s100
      %s102 = sshll.u32 [#allocation15], 4
      %s103 = int_to_ptr.vmem [resolvable:$true] %s102
      %108 = dma.hbm_to_vmem [thread:$0]  %s101, 2048, %s103, [#allocation14], 128, 128, 8
    $region33: #{earthquake_cnn_forward.1} parent=1 // pred_fallthru
      _
    // Predicated region
    $region34: #{earthquake_cnn_forward.1} parent=1 // pred_check
      _
    $region35: #{earthquake_cnn_forward.1} parent=1 // pred_check_branch
      %110 = sbr.rel (0) target = $region37
    $region36: #{earthquake_cnn_forward.1} parent=1 // pred_region
      %112 = vsyncadd [#allocation17], 0
      %s114 = sshll.u32 %s8, 4
      %s115 = int_to_ptr.hbm [resolvable:$true] %s114
      %s116 = sshll.u32 [#allocation16], 4
      %s117 = int_to_ptr.vmem [resolvable:$true] %s116
      %119 = dma.hbm_to_vmem [thread:$0]  %s115, 16, %s117, [#allocation17]
    $region37: #{earthquake_cnn_forward.1} parent=1 // pred_fallthru
      _
    // Predicated region
    $region38: #{earthquake_cnn_forward.1} parent=1 // pred_check
      _
    $region39: #{earthquake_cnn_forward.1} parent=1 // pred_check_branch
      %121 = sbr.rel (0) target = $region41
    $region40: #{earthquake_cnn_forward.1} parent=1 // pred_region
      %123 = dma.done [#allocation5], 10752
    $region41: #{earthquake_cnn_forward.1} parent=1 // pred_fallthru
      _
    // Predicated region
    $region42: #{earthquake_cnn_forward.1} parent=1 // pred_check
      _
    $region43: #{earthquake_cnn_forward.1} parent=1 // pred_check_branch
      %125 = sbr.rel (0) target = $region45
    $region44: #{earthquake_cnn_forward.1} parent=1 // pred_region
      %127 = dma.done [#allocation8], 96
    $region45: #{earthquake_cnn_forward.1} parent=1 // pred_fallthru
      _
    // Predicated region
    $region46: #{earthquake_cnn_forward.1} parent=1 // pred_check
      _
    $region47: #{earthquake_cnn_forward.1} parent=1 // pred_check_branch
      %129 = sbr.rel (0) target = $region49
    $region48: #{earthquake_cnn_forward.1} parent=1 // pred_region
      %131 = dma.done [#allocation8], 258048
    $region49: #{earthquake_cnn_forward.1} parent=1 // pred_fallthru
      _
    // Predicated region
    $region50: #{earthquake_cnn_forward.1} parent=1 // pred_check
      _
    $region51: #{earthquake_cnn_forward.1} parent=1 // pred_check_branch
      %133 = sbr.rel (0) target = $region53
    $region52: #{earthquake_cnn_forward.1} parent=1 // pred_region
      %135 = dma.done [#allocation11], 48
    $region53: #{earthquake_cnn_forward.1} parent=1 // pred_fallthru
      _
    // Predicated region
    $region54: #{earthquake_cnn_forward.1} parent=1 // pred_check
      _
    $region55: #{earthquake_cnn_forward.1} parent=1 // pred_check_branch
      %137 = sbr.rel (0) target = $region57
    $region56: #{earthquake_cnn_forward.1} parent=1 // pred_region
      %139 = dma.done [#allocation11], 6144
    $region57: #{earthquake_cnn_forward.1} parent=1 // pred_fallthru
      _
    // Predicated region
    $region58: #{earthquake_cnn_forward.1} parent=1 // pred_check
      _
    $region59: #{earthquake_cnn_forward.1} parent=1 // pred_check_branch
      %141 = sbr.rel (0) target = $region61
    $region60: #{earthquake_cnn_forward.1} parent=1 // pred_region
      %143 = dma.done [#allocation14], 16
    $region61: #{earthquake_cnn_forward.1} parent=1 // pred_fallthru
      _
    // Predicated region
    $region62: #{earthquake_cnn_forward.1} parent=1 // pred_check
      _
    $region63: #{earthquake_cnn_forward.1} parent=1 // pred_check_branch
      %145 = sbr.rel (0) target = $region65
    $region64: #{earthquake_cnn_forward.1} parent=1 // pred_region
      %147 = dma.done [#allocation14], 2048
    $region65: #{earthquake_cnn_forward.1} parent=1 // pred_fallthru
      _
    // Predicated region
    $region66: #{earthquake_cnn_forward.1} parent=1 // pred_check
      _
    $region67: #{earthquake_cnn_forward.1} parent=1 // pred_check_branch
      %149 = sbr.rel (0) target = $region69
    $region68: #{earthquake_cnn_forward.1} parent=1 // pred_region
      %151 = dma.done [#allocation17], 16
    $region69: #{earthquake_cnn_forward.1} parent=1 // pred_fallthru
      _
    %vm152 = vcmask 130048
    %153 = vst.msk [vmem:[#allocation2] sm:$0xff] %vm152, 0.0
    %154 = vst.msk [vmem:[#allocation2 + $0x8] sm:$0xff] %vm152, 0.0
    %155 = vst.msk [vmem:[#allocation2 + $0x10] sm:$0xff] %vm152, 0.0
    %vm156 = vcmask 125952
    %157 = vst.msk [vmem:[#allocation2 + $0x18] sm:$0xf] %vm156, 0.0
    %v158 = vld [vmem:[%s0] sm:$0xff]
    %v159 = vld [vmem:[%s0 + $0x8] sm:$0xff]
    %160 = vst.msk [vmem:[#allocation2 + $0x6] sm:$0xff] %vm152, %v158
    %161 = vst.msk [vmem:[#allocation2 + $0xe] sm:$0xff] %vm152, %v159
    %v162 = vld [vmem:[#allocation2] sm:$0xff]
    %v163 = vld [vmem:[#allocation2 + $0x8] sm:$0xff]
    %v164 = vld [vmem:[#allocation4] sm:$0xff]
    %v165 = vld [vmem:[#allocation4 + $0x8] sm:$0xff]
    %v166 = vld [vmem:[#allocation4 + $0x10] sm:$0xff]
    %v167 = vld [vmem:[#allocation4 + $0x18] sm:$0xff]
    %v168 = vld [vmem:[#allocation4 + $0x20] sm:$0xff]
    %v169 = vld [vmem:[#allocation4 + $0x28] sm:$0xff]
    %v170 = vld [vmem:[#allocation4 + $0x30] sm:$0xff]
    %v171 = vld [vmem:[#allocation4 + $0x38] sm:$0xff]
    %v172 = vld [vmem:[#allocation4 + $0x40] sm:$0xff]
    %v173 = vld [vmem:[#allocation4 + $0x48] sm:$0xff]
    %v174 = vld [vmem:[#allocation4 + $0x50] sm:$0xff]
    %v175 = vld [vmem:[#allocation4 + $0x58] sm:$0xff]
    %v176 = vld [vmem:[#allocation2 + $0x2] sm:$0xff]
    %v177 = vld [vmem:[#allocation2 + $0xa] sm:$0xff]
    %s178 = scalar_lea.vmem [#allocation4], 96
    %v179 = vld [vmem:[%s178] sm:$0xff]
    %v180 = vld [vmem:[%s178 + $0x8] sm:$0xff]
    %v181 = vld [vmem:[%s178 + $0x10] sm:$0xff]
    %v182 = vld [vmem:[%s178 + $0x18] sm:$0xff]
    %v183 = vld [vmem:[%s178 + $0x20] sm:$0xff]
    %v184 = vld [vmem:[%s178 + $0x28] sm:$0xff]
    %v185 = vld [vmem:[%s178 + $0x30] sm:$0xff]
    %v186 = vld [vmem:[%s178 + $0x38] sm:$0xff]
    %v187 = vld [vmem:[%s178 + $0x40] sm:$0xff]
    %v188 = vld [vmem:[%s178 + $0x48] sm:$0xff]
    %v189 = vld [vmem:[%s178 + $0x50] sm:$0xff]
    %v190 = vld [vmem:[%s178 + $0x58] sm:$0xff]
    %v192 = vsel %vm152, %v176, 0
    %v195 = vsel %vm152, %v177, 0
    %197 = vmatpush.msra.mxu0 0.0
    %198 = vmatpush.msra.mxu0 0.0
    %199 = vmatpush.msra.mxu0 0.0
    %200 = vmatpush.msra.mxu0 0.0
    %201 = vmatpush.msra.mxu0 0.0
    %202 = vmatpush.msra.mxu0 0.0
    %203 = vmatpush.msra.mxu0 0.0
    %204 = vmatpush.msra.mxu0 0.0
    %205 = vmatpush.msra.mxu0 0.0
    %206 = vmatpush.msra.mxu0 0.0
    %207 = vmatpush.msra.mxu0 0.0
    %208 = vmatpush.msra.mxu0 0.0
    %209 = vmatpush.msra.mxu0 0.0
    %210 = vmatpush.msra.mxu0 0.0
    %211 = vmatpush.msra.mxu0 %v185
    %212 = vmatpush.msra.mxu0 %v179
    %213 = vmatmul.f32.gmra.mxu0 %v192
    %v214 = vpop.f32.mrf.mxu0
    %v215 = vadd.f32 0.0, %v214
    %216 = vmatmul.f32.gmra.mxu0 %v195
    %v217 = vpop.f32.mrf.mxu0
    %v218 = vadd.f32 0.0, %v217
    %219 = vdwg.mxu0
    %220 = vmatpush.msra.mxu0 0.0
    %221 = vmatpush.msra.mxu0 0.0
    %222 = vmatpush.msra.mxu0 0.0
    %223 = vmatpush.msra.mxu0 0.0
    %224 = vmatpush.msra.mxu0 0.0
    %225 = vmatpush.msra.mxu0 0.0
    %226 = vmatpush.msra.mxu0 0.0
    %227 = vmatpush.msra.mxu0 0.0
    %228 = vmatpush.msra.mxu0 0.0
    %229 = vmatpush.msra.mxu0 0.0
    %230 = vmatpush.msra.mxu0 0.0
    %231 = vmatpush.msra.mxu0 0.0
    %232 = vmatpush.msra.mxu0 0.0
    %233 = vmatpush.msra.mxu0 0.0
    %234 = vmatpush.msra.mxu0 %v186
    %235 = vmatpush.msra.mxu0 %v180
    %236 = vmatmul.f32.gmra.mxu0 %v192
    %v237 = vpop.f32.mrf.mxu0
    %v238 = vadd.f32 0.0, %v237
    %239 = vmatmul.f32.gmra.mxu0 %v195
    %v240 = vpop.f32.mrf.mxu0
    %v241 = vadd.f32 0.0, %v240
    %242 = vdwg.mxu0
    %243 = vmatpush.msra.mxu0 0.0
    %244 = vmatpush.msra.mxu0 0.0
    %245 = vmatpush.msra.mxu0 0.0
    %246 = vmatpush.msra.mxu0 0.0
    %247 = vmatpush.msra.mxu0 0.0
    %248 = vmatpush.msra.mxu0 0.0
    %249 = vmatpush.msra.mxu0 0.0
    %250 = vmatpush.msra.mxu0 0.0
    %251 = vmatpush.msra.mxu0 0.0
    %252 = vmatpush.msra.mxu0 0.0
    %253 = vmatpush.msra.mxu0 0.0
    %254 = vmatpush.msra.mxu0 0.0
    %255 = vmatpush.msra.mxu0 0.0
    %256 = vmatpush.msra.mxu0 0.0
    %257 = vmatpush.msra.mxu0 %v187
    %258 = vmatpush.msra.mxu0 %v181
    %259 = vmatmul.f32.gmra.mxu0 %v192
    %v260 = vpop.f32.mrf.mxu0
    %v261 = vadd.f32 0.0, %v260
    %262 = vmatmul.f32.gmra.mxu0 %v195
    %v263 = vpop.f32.mrf.mxu0
    %v264 = vadd.f32 0.0, %v263
    %265 = vdwg.mxu0
    %266 = vmatpush.msra.mxu0 0.0
    %267 = vmatpush.msra.mxu0 0.0
    %268 = vmatpush.msra.mxu0 0.0
    %269 = vmatpush.msra.mxu0 0.0
    %270 = vmatpush.msra.mxu0 0.0
    %271 = vmatpush.msra.mxu0 0.0
    %272 = vmatpush.msra.mxu0 0.0
    %273 = vmatpush.msra.mxu0 0.0
    %274 = vmatpush.msra.mxu0 0.0
    %275 = vmatpush.msra.mxu0 0.0
    %276 = vmatpush.msra.mxu0 0.0
    %277 = vmatpush.msra.mxu0 0.0
    %278 = vmatpush.msra.mxu0 0.0
    %279 = vmatpush.msra.mxu0 0.0
    %280 = vmatpush.msra.mxu0 %v188
    %281 = vmatpush.msra.mxu0 %v182
    %282 = vmatmul.f32.gmra.mxu0 %v192
    %v283 = vpop.f32.mrf.mxu0
    %v284 = vadd.f32 0.0, %v283
    %285 = vmatmul.f32.gmra.mxu0 %v195
    %v286 = vpop.f32.mrf.mxu0
    %v287 = vadd.f32 0.0, %v286
    %288 = vdwg.mxu0
    %289 = vmatpush.msra.mxu0 0.0
    %290 = vmatpush.msra.mxu0 0.0
    %291 = vmatpush.msra.mxu0 0.0
    %292 = vmatpush.msra.mxu0 0.0
    %293 = vmatpush.msra.mxu0 0.0
    %294 = vmatpush.msra.mxu0 0.0
    %295 = vmatpush.msra.mxu0 0.0
    %296 = vmatpush.msra.mxu0 0.0
    %297 = vmatpush.msra.mxu0 0.0
    %298 = vmatpush.msra.mxu0 0.0
    %299 = vmatpush.msra.mxu0 0.0
    %300 = vmatpush.msra.mxu0 0.0
    %301 = vmatpush.msra.mxu0 0.0
    %302 = vmatpush.msra.mxu0 0.0
    %303 = vmatpush.msra.mxu0 %v189
    %304 = vmatpush.msra.mxu0 %v183
    %305 = vmatmul.f32.gmra.mxu0 %v192
    %v306 = vpop.f32.mrf.mxu0
    %v307 = vadd.f32 0.0, %v306
    %308 = vmatmul.f32.gmra.mxu0 %v195
    %v309 = vpop.f32.mrf.mxu0
    %v310 = vadd.f32 0.0, %v309
    %311 = vdwg.mxu0
    %312 = vmatpush.msra.mxu0 0.0
    %313 = vmatpush.msra.mxu0 0.0
    %314 = vmatpush.msra.mxu0 0.0
    %315 = vmatpush.msra.mxu0 0.0
    %316 = vmatpush.msra.mxu0 0.0
    %317 = vmatpush.msra.mxu0 0.0
    %318 = vmatpush.msra.mxu0 0.0
    %319 = vmatpush.msra.mxu0 0.0
    %320 = vmatpush.msra.mxu0 0.0
    %321 = vmatpush.msra.mxu0 0.0
    %322 = vmatpush.msra.mxu0 0.0
    %323 = vmatpush.msra.mxu0 0.0
    %324 = vmatpush.msra.mxu0 0.0
    %325 = vmatpush.msra.mxu0 0.0
    %326 = vmatpush.msra.mxu0 %v190
    %327 = vmatpush.msra.mxu0 %v184
    %328 = vmatmul.f32.gmra.mxu0 %v192
    %v329 = vpop.f32.mrf.mxu0
    %v330 = vadd.f32 0.0, %v329
    %331 = vmatmul.f32.gmra.mxu0 %v195
    %v332 = vpop.f32.mrf.mxu0
    %v333 = vadd.f32 0.0, %v332
    %334 = vdwg.mxu0
    %v336 = vsel %vm152, %v162, 0
    %v339 = vsel %vm152, %v163, 0
    %341 = vmatpush.msra.mxu0 0.0
    %342 = vmatpush.msra.mxu0 0.0
    %343 = vmatpush.msra.mxu0 0.0
    %344 = vmatpush.msra.mxu0 0.0
    %345 = vmatpush.msra.mxu0 0.0
    %346 = vmatpush.msra.mxu0 0.0
    %347 = vmatpush.msra.mxu0 0.0
    %348 = vmatpush.msra.mxu0 0.0
    %349 = vmatpush.msra.mxu0 0.0
    %350 = vmatpush.msra.mxu0 0.0
    %351 = vmatpush.msra.mxu0 0.0
    %352 = vmatpush.msra.mxu0 0.0
    %353 = vmatpush.msra.mxu0 0.0
    %354 = vmatpush.msra.mxu0 0.0
    %355 = vmatpush.msra.mxu0 %v170
    %356 = vmatpush.msra.mxu0 %v164
    %357 = vmatmul.f32.gmra.mxu0 %v336
    %v358 = vpop.f32.mrf.mxu0
    %v359 = vadd.f32 %v215, %v358
    %360 = vmatmul.f32.gmra.mxu0 %v339
    %v361 = vpop.f32.mrf.mxu0
    %v362 = vadd.f32 %v218, %v361
    %363 = vdwg.mxu0
    %364 = vmatpush.msra.mxu0 0.0
    %365 = vmatpush.msra.mxu0 0.0
    %366 = vmatpush.msra.mxu0 0.0
    %367 = vmatpush.msra.mxu0 0.0
    %368 = vmatpush.msra.mxu0 0.0
    %369 = vmatpush.msra.mxu0 0.0
    %370 = vmatpush.msra.mxu0 0.0
    %371 = vmatpush.msra.mxu0 0.0
    %372 = vmatpush.msra.mxu0 0.0
    %373 = vmatpush.msra.mxu0 0.0
    %374 = vmatpush.msra.mxu0 0.0
    %375 = vmatpush.msra.mxu0 0.0
    %376 = vmatpush.msra.mxu0 0.0
    %377 = vmatpush.msra.mxu0 0.0
    %378 = vmatpush.msra.mxu0 %v171
    %379 = vmatpush.msra.mxu0 %v165
    %380 = vmatmul.f32.gmra.mxu0 %v336
    %v381 = vpop.f32.mrf.mxu0
    %v382 = vadd.f32 %v238, %v381
    %383 = vmatmul.f32.gmra.mxu0 %v339
    %v384 = vpop.f32.mrf.mxu0
    %v385 = vadd.f32 %v241, %v384
    %386 = vdwg.mxu0
    %387 = vmatpush.msra.mxu0 0.0
    %388 = vmatpush.msra.mxu0 0.0
    %389 = vmatpush.msra.mxu0 0.0
    %390 = vmatpush.msra.mxu0 0.0
    %391 = vmatpush.msra.mxu0 0.0
    %392 = vmatpush.msra.mxu0 0.0
    %393 = vmatpush.msra.mxu0 0.0
    %394 = vmatpush.msra.mxu0 0.0
    %395 = vmatpush.msra.mxu0 0.0
    %396 = vmatpush.msra.mxu0 0.0
    %397 = vmatpush.msra.mxu0 0.0
    %398 = vmatpush.msra.mxu0 0.0
    %399 = vmatpush.msra.mxu0 0.0
    %400 = vmatpush.msra.mxu0 0.0
    %401 = vmatpush.msra.mxu0 %v172
    %402 = vmatpush.msra.mxu0 %v166
    %403 = vmatmul.f32.gmra.mxu0 %v336
    %v404 = vpop.f32.mrf.mxu0
    %v405 = vadd.f32 %v261, %v404
    %406 = vmatmul.f32.gmra.mxu0 %v339
    %v407 = vpop.f32.mrf.mxu0
    %v408 = vadd.f32 %v264, %v407
    %409 = vdwg.mxu0
    %410 = vmatpush.msra.mxu0 0.0
    %411 = vmatpush.msra.mxu0 0.0
    %412 = vmatpush.msra.mxu0 0.0
    %413 = vmatpush.msra.mxu0 0.0
    %414 = vmatpush.msra.mxu0 0.0
    %415 = vmatpush.msra.mxu0 0.0
    %416 = vmatpush.msra.mxu0 0.0
    %417 = vmatpush.msra.mxu0 0.0
    %418 = vmatpush.msra.mxu0 0.0
    %419 = vmatpush.msra.mxu0 0.0
    %420 = vmatpush.msra.mxu0 0.0
    %421 = vmatpush.msra.mxu0 0.0
    %422 = vmatpush.msra.mxu0 0.0
    %423 = vmatpush.msra.mxu0 0.0
    %424 = vmatpush.msra.mxu0 %v173
    %425 = vmatpush.msra.mxu0 %v167
    %426 = vmatmul.f32.gmra.mxu0 %v336
    %v427 = vpop.f32.mrf.mxu0
    %v428 = vadd.f32 %v284, %v427
    %429 = vmatmul.f32.gmra.mxu0 %v339
    %v430 = vpop.f32.mrf.mxu0
    %v431 = vadd.f32 %v287, %v430
    %432 = vdwg.mxu0
    %433 = vmatpush.msra.mxu0 0.0
    %434 = vmatpush.msra.mxu0 0.0
    %435 = vmatpush.msra.mxu0 0.0
    %436 = vmatpush.msra.mxu0 0.0
    %437 = vmatpush.msra.mxu0 0.0
    %438 = vmatpush.msra.mxu0 0.0
    %439 = vmatpush.msra.mxu0 0.0
    %440 = vmatpush.msra.mxu0 0.0
    %441 = vmatpush.msra.mxu0 0.0
    %442 = vmatpush.msra.mxu0 0.0
    %443 = vmatpush.msra.mxu0 0.0
    %444 = vmatpush.msra.mxu0 0.0
    %445 = vmatpush.msra.mxu0 0.0
    %446 = vmatpush.msra.mxu0 0.0
    %447 = vmatpush.msra.mxu0 %v174
    %448 = vmatpush.msra.mxu0 %v168
    %449 = vmatmul.f32.gmra.mxu0 %v336
    %v450 = vpop.f32.mrf.mxu0
    %v451 = vadd.f32 %v307, %v450
    %452 = vmatmul.f32.gmra.mxu0 %v339
    %v453 = vpop.f32.mrf.mxu0
    %v454 = vadd.f32 %v310, %v453
    %455 = vdwg.mxu0
    %456 = vmatpush.msra.mxu0 0.0
    %457 = vmatpush.msra.mxu0 0.0
    %458 = vmatpush.msra.mxu0 0.0
    %459 = vmatpush.msra.mxu0 0.0
    %460 = vmatpush.msra.mxu0 0.0
    %461 = vmatpush.msra.mxu0 0.0
    %462 = vmatpush.msra.mxu0 0.0
    %463 = vmatpush.msra.mxu0 0.0
    %464 = vmatpush.msra.mxu0 0.0
    %465 = vmatpush.msra.mxu0 0.0
    %466 = vmatpush.msra.mxu0 0.0
    %467 = vmatpush.msra.mxu0 0.0
    %468 = vmatpush.msra.mxu0 0.0
    %469 = vmatpush.msra.mxu0 0.0
    %470 = vmatpush.msra.mxu0 %v175
    %471 = vmatpush.msra.mxu0 %v169
    %472 = vmatmul.f32.gmra.mxu0 %v336
    %v473 = vpop.f32.mrf.mxu0
    %v474 = vadd.f32 %v330, %v473
    %475 = vmatmul.f32.gmra.mxu0 %v339
    %v476 = vpop.f32.mrf.mxu0
    %v477 = vadd.f32 %v333, %v476
    %478 = vdwg.mxu0
    %v479 = vld [vmem:[#allocation2 + $0x4] sm:$0xff]
    %v480 = vld [vmem:[#allocation2 + $0xc] sm:$0xff]
    %s481 = scalar_lea.vmem [#allocation4], 192
    %v482 = vld [vmem:[%s481] sm:$0xff]
    %v483 = vld [vmem:[%s481 + $0x8] sm:$0xff]
    %v484 = vld [vmem:[%s481 + $0x10] sm:$0xff]
    %v485 = vld [vmem:[%s481 + $0x18] sm:$0xff]
    %v486 = vld [vmem:[%s481 + $0x20] sm:$0xff]
    %v487 = vld [vmem:[%s481 + $0x28] sm:$0xff]
    %v488 = vld [vmem:[%s481 + $0x30] sm:$0xff]
    %v489 = vld [vmem:[%s481 + $0x38] sm:$0xff]
    %v490 = vld [vmem:[%s481 + $0x40] sm:$0xff]
    %v491 = vld [vmem:[%s481 + $0x48] sm:$0xff]
    %v492 = vld [vmem:[%s481 + $0x50] sm:$0xff]
    %v493 = vld [vmem:[%s481 + $0x58] sm:$0xff]
    %v495 = vsel %vm152, %v479, 0
    %v498 = vsel %vm152, %v480, 0
    %500 = vmatpush.msra.mxu0 0.0
    %501 = vmatpush.msra.mxu0 0.0
    %502 = vmatpush.msra.mxu0 0.0
    %503 = vmatpush.msra.mxu0 0.0
    %504 = vmatpush.msra.mxu0 0.0
    %505 = vmatpush.msra.mxu0 0.0
    %506 = vmatpush.msra.mxu0 0.0
    %507 = vmatpush.msra.mxu0 0.0
    %508 = vmatpush.msra.mxu0 0.0
    %509 = vmatpush.msra.mxu0 0.0
    %510 = vmatpush.msra.mxu0 0.0
    %511 = vmatpush.msra.mxu0 0.0
    %512 = vmatpush.msra.mxu0 0.0
    %513 = vmatpush.msra.mxu0 0.0
    %514 = vmatpush.msra.mxu0 %v488
    %515 = vmatpush.msra.mxu0 %v482
    %516 = vmatmul.f32.gmra.mxu0 %v495
    %v517 = vpop.f32.mrf.mxu0
    %v518 = vadd.f32 0.0, %v517
    %519 = vmatmul.f32.gmra.mxu0 %v498
    %v520 = vpop.f32.mrf.mxu0
    %v521 = vadd.f32 0.0, %v520
    %522 = vdwg.mxu0
    %523 = vmatpush.msra.mxu0 0.0
    %524 = vmatpush.msra.mxu0 0.0
    %525 = vmatpush.msra.mxu0 0.0
    %526 = vmatpush.msra.mxu0 0.0
    %527 = vmatpush.msra.mxu0 0.0
    %528 = vmatpush.msra.mxu0 0.0
    %529 = vmatpush.msra.mxu0 0.0
    %530 = vmatpush.msra.mxu0 0.0
    %531 = vmatpush.msra.mxu0 0.0
    %532 = vmatpush.msra.mxu0 0.0
    %533 = vmatpush.msra.mxu0 0.0
    %534 = vmatpush.msra.mxu0 0.0
    %535 = vmatpush.msra.mxu0 0.0
    %536 = vmatpush.msra.mxu0 0.0
    %537 = vmatpush.msra.mxu0 %v489
    %538 = vmatpush.msra.mxu0 %v483
    %539 = vmatmul.f32.gmra.mxu0 %v495
    %v540 = vpop.f32.mrf.mxu0
    %v541 = vadd.f32 0.0, %v540
    %542 = vmatmul.f32.gmra.mxu0 %v498
    %v543 = vpop.f32.mrf.mxu0
    %v544 = vadd.f32 0.0, %v543
    %545 = vdwg.mxu0
    %546 = vmatpush.msra.mxu0 0.0
    %547 = vmatpush.msra.mxu0 0.0
    %548 = vmatpush.msra.mxu0 0.0
    %549 = vmatpush.msra.mxu0 0.0
    %550 = vmatpush.msra.mxu0 0.0
    %551 = vmatpush.msra.mxu0 0.0
    %552 = vmatpush.msra.mxu0 0.0
    %553 = vmatpush.msra.mxu0 0.0
    %554 = vmatpush.msra.mxu0 0.0
    %555 = vmatpush.msra.mxu0 0.0
    %556 = vmatpush.msra.mxu0 0.0
    %557 = vmatpush.msra.mxu0 0.0
    %558 = vmatpush.msra.mxu0 0.0
    %559 = vmatpush.msra.mxu0 0.0
    %560 = vmatpush.msra.mxu0 %v490
    %561 = vmatpush.msra.mxu0 %v484
    %562 = vmatmul.f32.gmra.mxu0 %v495
    %v563 = vpop.f32.mrf.mxu0
    %v564 = vadd.f32 0.0, %v563
    %565 = vmatmul.f32.gmra.mxu0 %v498
    %v566 = vpop.f32.mrf.mxu0
    %v567 = vadd.f32 0.0, %v566
    %568 = vdwg.mxu0
    %569 = vmatpush.msra.mxu0 0.0
    %570 = vmatpush.msra.mxu0 0.0
    %571 = vmatpush.msra.mxu0 0.0
    %572 = vmatpush.msra.mxu0 0.0
    %573 = vmatpush.msra.mxu0 0.0
    %574 = vmatpush.msra.mxu0 0.0
    %575 = vmatpush.msra.mxu0 0.0
    %576 = vmatpush.msra.mxu0 0.0
    %577 = vmatpush.msra.mxu0 0.0
    %578 = vmatpush.msra.mxu0 0.0
    %579 = vmatpush.msra.mxu0 0.0
    %580 = vmatpush.msra.mxu0 0.0
    %581 = vmatpush.msra.mxu0 0.0
    %582 = vmatpush.msra.mxu0 0.0
    %583 = vmatpush.msra.mxu0 %v491
    %584 = vmatpush.msra.mxu0 %v485
    %585 = vmatmul.f32.gmra.mxu0 %v495
    %v586 = vpop.f32.mrf.mxu0
    %v587 = vadd.f32 0.0, %v586
    %588 = vmatmul.f32.gmra.mxu0 %v498
    %v589 = vpop.f32.mrf.mxu0
    %v590 = vadd.f32 0.0, %v589
    %591 = vdwg.mxu0
    %592 = vmatpush.msra.mxu0 0.0
    %593 = vmatpush.msra.mxu0 0.0
    %594 = vmatpush.msra.mxu0 0.0
    %595 = vmatpush.msra.mxu0 0.0
    %596 = vmatpush.msra.mxu0 0.0
    %597 = vmatpush.msra.mxu0 0.0
    %598 = vmatpush.msra.mxu0 0.0
    %599 = vmatpush.msra.mxu0 0.0
    %600 = vmatpush.msra.mxu0 0.0
    %601 = vmatpush.msra.mxu0 0.0
    %602 = vmatpush.msra.mxu0 0.0
    %603 = vmatpush.msra.mxu0 0.0
    %604 = vmatpush.msra.mxu0 0.0
    %605 = vmatpush.msra.mxu0 0.0
    %606 = vmatpush.msra.mxu0 %v492
    %607 = vmatpush.msra.mxu0 %v486
    %608 = vmatmul.f32.gmra.mxu0 %v495
    %v609 = vpop.f32.mrf.mxu0
    %v610 = vadd.f32 0.0, %v609
    %611 = vmatmul.f32.gmra.mxu0 %v498
    %v612 = vpop.f32.mrf.mxu0
    %v613 = vadd.f32 0.0, %v612
    %614 = vdwg.mxu0
    %615 = vmatpush.msra.mxu0 0.0
    %616 = vmatpush.msra.mxu0 0.0
    %617 = vmatpush.msra.mxu0 0.0
    %618 = vmatpush.msra.mxu0 0.0
    %619 = vmatpush.msra.mxu0 0.0
    %620 = vmatpush.msra.mxu0 0.0
    %621 = vmatpush.msra.mxu0 0.0
    %622 = vmatpush.msra.mxu0 0.0
    %623 = vmatpush.msra.mxu0 0.0
    %624 = vmatpush.msra.mxu0 0.0
    %625 = vmatpush.msra.mxu0 0.0
    %626 = vmatpush.msra.mxu0 0.0
    %627 = vmatpush.msra.mxu0 0.0
    %628 = vmatpush.msra.mxu0 0.0
    %629 = vmatpush.msra.mxu0 %v493
    %630 = vmatpush.msra.mxu0 %v487
    %631 = vmatmul.f32.gmra.mxu0 %v495
    %v632 = vpop.f32.mrf.mxu0
    %v633 = vadd.f32 0.0, %v632
    %634 = vmatmul.f32.gmra.mxu0 %v498
    %v635 = vpop.f32.mrf.mxu0
    %v636 = vadd.f32 0.0, %v635
    %637 = vdwg.mxu0
    %v638 = vadd.f32 %v359, %v518
    %v639 = vadd.f32 %v382, %v541
    %v640 = vadd.f32 %v405, %v564
    %v641 = vadd.f32 %v428, %v587
    %v642 = vadd.f32 %v451, %v610
    %v643 = vadd.f32 %v474, %v633
    %v644 = vadd.f32 %v362, %v521
    %v645 = vadd.f32 %v385, %v544
    %v646 = vadd.f32 %v408, %v567
    %v647 = vadd.f32 %v431, %v590
    %v648 = vadd.f32 %v454, %v613
    %v649 = vadd.f32 %v477, %v636
    %v650 = vld [vmem:[#allocation2 + $0x6] sm:$0xff]
    %v651 = vld [vmem:[#allocation2 + $0xe] sm:$0xff]
    %s652 = scalar_lea.vmem [#allocation4], 288
    %v653 = vld [vmem:[%s652] sm:$0xff]
    %v654 = vld [vmem:[%s652 + $0x8] sm:$0xff]
    %v655 = vld [vmem:[%s652 + $0x10] sm:$0xff]
    %v656 = vld [vmem:[%s652 + $0x18] sm:$0xff]
    %v657 = vld [vmem:[%s652 + $0x20] sm:$0xff]
    %v658 = vld [vmem:[%s652 + $0x28] sm:$0xff]
    %v659 = vld [vmem:[%s652 + $0x30] sm:$0xff]
    %v660 = vld [vmem:[%s652 + $0x38] sm:$0xff]
    %v661 = vld [vmem:[%s652 + $0x40] sm:$0xff]
    %v662 = vld [vmem:[%s652 + $0x48] sm:$0xff]
    %v663 = vld [vmem:[%s652 + $0x50] sm:$0xff]
    %v664 = vld [vmem:[%s652 + $0x58] sm:$0xff]
    %v666 = vsel %vm152, %v650, 0
    %v669 = vsel %vm152, %v651, 0
    %671 = vmatpush.msra.mxu0 0.0
    %672 = vmatpush.msra.mxu0 0.0
    %673 = vmatpush.msra.mxu0 0.0
    %674 = vmatpush.msra.mxu0 0.0
    %675 = vmatpush.msra.mxu0 0.0
    %676 = vmatpush.msra.mxu0 0.0
    %677 = vmatpush.msra.mxu0 0.0
    %678 = vmatpush.msra.mxu0 0.0
    %679 = vmatpush.msra.mxu0 0.0
    %680 = vmatpush.msra.mxu0 0.0
    %681 = vmatpush.msra.mxu0 0.0
    %682 = vmatpush.msra.mxu0 0.0
    %683 = vmatpush.msra.mxu0 0.0
    %684 = vmatpush.msra.mxu0 0.0
    %685 = vmatpush.msra.mxu0 %v659
    %686 = vmatpush.msra.mxu0 %v653
    %687 = vmatmul.f32.gmra.mxu0 %v666
    %v688 = vpop.f32.mrf.mxu0
    %v689 = vadd.f32 0.0, %v688
    %690 = vmatmul.f32.gmra.mxu0 %v669
    %v691 = vpop.f32.mrf.mxu0
    %v692 = vadd.f32 0.0, %v691
    %693 = vdwg.mxu0
    %694 = vmatpush.msra.mxu0 0.0
    %695 = vmatpush.msra.mxu0 0.0
    %696 = vmatpush.msra.mxu0 0.0
    %697 = vmatpush.msra.mxu0 0.0
    %698 = vmatpush.msra.mxu0 0.0
    %699 = vmatpush.msra.mxu0 0.0
    %700 = vmatpush.msra.mxu0 0.0
    %701 = vmatpush.msra.mxu0 0.0
    %702 = vmatpush.msra.mxu0 0.0
    %703 = vmatpush.msra.mxu0 0.0
    %704 = vmatpush.msra.mxu0 0.0
    %705 = vmatpush.msra.mxu0 0.0
    %706 = vmatpush.msra.mxu0 0.0
    %707 = vmatpush.msra.mxu0 0.0
    %708 = vmatpush.msra.mxu0 %v660
    %709 = vmatpush.msra.mxu0 %v654
    %710 = vmatmul.f32.gmra.mxu0 %v666
    %v711 = vpop.f32.mrf.mxu0
    %v712 = vadd.f32 0.0, %v711
    %713 = vmatmul.f32.gmra.mxu0 %v669
    %v714 = vpop.f32.mrf.mxu0
    %v715 = vadd.f32 0.0, %v714
    %716 = vdwg.mxu0
    %717 = vmatpush.msra.mxu0 0.0
    %718 = vmatpush.msra.mxu0 0.0
    %719 = vmatpush.msra.mxu0 0.0
    %720 = vmatpush.msra.mxu0 0.0
    %721 = vmatpush.msra.mxu0 0.0
    %722 = vmatpush.msra.mxu0 0.0
    %723 = vmatpush.msra.mxu0 0.0
    %724 = vmatpush.msra.mxu0 0.0
    %725 = vmatpush.msra.mxu0 0.0
    %726 = vmatpush.msra.mxu0 0.0
    %727 = vmatpush.msra.mxu0 0.0
    %728 = vmatpush.msra.mxu0 0.0
    %729 = vmatpush.msra.mxu0 0.0
    %730 = vmatpush.msra.mxu0 0.0
    %731 = vmatpush.msra.mxu0 %v661
    %732 = vmatpush.msra.mxu0 %v655
    %733 = vmatmul.f32.gmra.mxu0 %v666
    %v734 = vpop.f32.mrf.mxu0
    %v735 = vadd.f32 0.0, %v734
    %736 = vmatmul.f32.gmra.mxu0 %v669
    %v737 = vpop.f32.mrf.mxu0
    %v738 = vadd.f32 0.0, %v737
    %739 = vdwg.mxu0
    %740 = vmatpush.msra.mxu0 0.0
    %741 = vmatpush.msra.mxu0 0.0
    %742 = vmatpush.msra.mxu0 0.0
    %743 = vmatpush.msra.mxu0 0.0
    %744 = vmatpush.msra.mxu0 0.0
    %745 = vmatpush.msra.mxu0 0.0
    %746 = vmatpush.msra.mxu0 0.0
    %747 = vmatpush.msra.mxu0 0.0
    %748 = vmatpush.msra.mxu0 0.0
    %749 = vmatpush.msra.mxu0 0.0
    %750 = vmatpush.msra.mxu0 0.0
    %751 = vmatpush.msra.mxu0 0.0
    %752 = vmatpush.msra.mxu0 0.0
    %753 = vmatpush.msra.mxu0 0.0
    %754 = vmatpush.msra.mxu0 %v662
    %755 = vmatpush.msra.mxu0 %v656
    %756 = vmatmul.f32.gmra.mxu0 %v666
    %v757 = vpop.f32.mrf.mxu0
    %v758 = vadd.f32 0.0, %v757
    %759 = vmatmul.f32.gmra.mxu0 %v669
    %v760 = vpop.f32.mrf.mxu0
    %v761 = vadd.f32 0.0, %v760
    %762 = vdwg.mxu0
    %763 = vmatpush.msra.mxu0 0.0
    %764 = vmatpush.msra.mxu0 0.0
    %765 = vmatpush.msra.mxu0 0.0
    %766 = vmatpush.msra.mxu0 0.0
    %767 = vmatpush.msra.mxu0 0.0
    %768 = vmatpush.msra.mxu0 0.0
    %769 = vmatpush.msra.mxu0 0.0
    %770 = vmatpush.msra.mxu0 0.0
    %771 = vmatpush.msra.mxu0 0.0
    %772 = vmatpush.msra.mxu0 0.0
    %773 = vmatpush.msra.mxu0 0.0
    %774 = vmatpush.msra.mxu0 0.0
    %775 = vmatpush.msra.mxu0 0.0
    %776 = vmatpush.msra.mxu0 0.0
    %777 = vmatpush.msra.mxu0 %v663
    %778 = vmatpush.msra.mxu0 %v657
    %779 = vmatmul.f32.gmra.mxu0 %v666
    %v780 = vpop.f32.mrf.mxu0
    %v781 = vadd.f32 0.0, %v780
    %782 = vmatmul.f32.gmra.mxu0 %v669
    %v783 = vpop.f32.mrf.mxu0
    %v784 = vadd.f32 0.0, %v783
    %785 = vdwg.mxu0
    %786 = vmatpush.msra.mxu0 0.0
    %787 = vmatpush.msra.mxu0 0.0
    %788 = vmatpush.msra.mxu0 0.0
    %789 = vmatpush.msra.mxu0 0.0
    %790 = vmatpush.msra.mxu0 0.0
    %791 = vmatpush.msra.mxu0 0.0
    %792 = vmatpush.msra.mxu0 0.0
    %793 = vmatpush.msra.mxu0 0.0
    %794 = vmatpush.msra.mxu0 0.0
    %795 = vmatpush.msra.mxu0 0.0
    %796 = vmatpush.msra.mxu0 0.0
    %797 = vmatpush.msra.mxu0 0.0
    %798 = vmatpush.msra.mxu0 0.0
    %799 = vmatpush.msra.mxu0 0.0
    %800 = vmatpush.msra.mxu0 %v664
    %801 = vmatpush.msra.mxu0 %v658
    %802 = vmatmul.f32.gmra.mxu0 %v666
    %v803 = vpop.f32.mrf.mxu0
    %v804 = vadd.f32 0.0, %v803
    %805 = vmatmul.f32.gmra.mxu0 %v669
    %v806 = vpop.f32.mrf.mxu0
    %v807 = vadd.f32 0.0, %v806
    %808 = vdwg.mxu0
    %v809 = vadd.f32 %v638, %v689
    %v810 = vadd.f32 %v639, %v712
    %v811 = vadd.f32 %v640, %v735
    %v812 = vadd.f32 %v641, %v758
    %v813 = vadd.f32 %v642, %v781
    %v814 = vadd.f32 %v643, %v804
    %v815 = vadd.f32 %v644, %v692
    %v816 = vadd.f32 %v645, %v715
    %v817 = vadd.f32 %v646, %v738
    %v818 = vadd.f32 %v647, %v761
    %v819 = vadd.f32 %v648, %v784
    %v820 = vadd.f32 %v649, %v807
    %v821 = vld [vmem:[#allocation2 + $0x8] sm:$0xff]
    %v822 = vld [vmem:[#allocation2 + $0x10] sm:$0xff]
    %s823 = scalar_lea.vmem [#allocation4], 384
    %v824 = vld [vmem:[%s823] sm:$0xff]
    %v825 = vld [vmem:[%s823 + $0x8] sm:$0xff]
    %v826 = vld [vmem:[%s823 + $0x10] sm:$0xff]
    %v827 = vld [vmem:[%s823 + $0x18] sm:$0xff]
    %v828 = vld [vmem:[%s823 + $0x20] sm:$0xff]
    %v829 = vld [vmem:[%s823 + $0x28] sm:$0xff]
    %v830 = vld [vmem:[%s823 + $0x30] sm:$0xff]
    %v831 = vld [vmem:[%s823 + $0x38] sm:$0xff]
    %v832 = vld [vmem:[%s823 + $0x40] sm:$0xff]
    %v833 = vld [vmem:[%s823 + $0x48] sm:$0xff]
    %v834 = vld [vmem:[%s823 + $0x50] sm:$0xff]
    %v835 = vld [vmem:[%s823 + $0x58] sm:$0xff]
    %v837 = vsel %vm152, %v821, 0
    %v840 = vsel %vm152, %v822, 0
    %842 = vmatpush.msra.mxu0 0.0
    %843 = vmatpush.msra.mxu0 0.0
    %844 = vmatpush.msra.mxu0 0.0
    %845 = vmatpush.msra.mxu0 0.0
    %846 = vmatpush.msra.mxu0 0.0
    %847 = vmatpush.msra.mxu0 0.0
    %848 = vmatpush.msra.mxu0 0.0
    %849 = vmatpush.msra.mxu0 0.0
    %850 = vmatpush.msra.mxu0 0.0
    %851 = vmatpush.msra.mxu0 0.0
    %852 = vmatpush.msra.mxu0 0.0
    %853 = vmatpush.msra.mxu0 0.0
    %854 = vmatpush.msra.mxu0 0.0
    %855 = vmatpush.msra.mxu0 0.0
    %856 = vmatpush.msra.mxu0 %v830
    %857 = vmatpush.msra.mxu0 %v824
    %858 = vmatmul.f32.gmra.mxu0 %v837
    %v859 = vpop.f32.mrf.mxu0
    %v860 = vadd.f32 0.0, %v859
    %861 = vmatmul.f32.gmra.mxu0 %v840
    %v862 = vpop.f32.mrf.mxu0
    %v863 = vadd.f32 0.0, %v862
    %864 = vdwg.mxu0
    %865 = vmatpush.msra.mxu0 0.0
    %866 = vmatpush.msra.mxu0 0.0
    %867 = vmatpush.msra.mxu0 0.0
    %868 = vmatpush.msra.mxu0 0.0
    %869 = vmatpush.msra.mxu0 0.0
    %870 = vmatpush.msra.mxu0 0.0
    %871 = vmatpush.msra.mxu0 0.0
    %872 = vmatpush.msra.mxu0 0.0
    %873 = vmatpush.msra.mxu0 0.0
    %874 = vmatpush.msra.mxu0 0.0
    %875 = vmatpush.msra.mxu0 0.0
    %876 = vmatpush.msra.mxu0 0.0
    %877 = vmatpush.msra.mxu0 0.0
    %878 = vmatpush.msra.mxu0 0.0
    %879 = vmatpush.msra.mxu0 %v831
    %880 = vmatpush.msra.mxu0 %v825
    %881 = vmatmul.f32.gmra.mxu0 %v837
    %v882 = vpop.f32.mrf.mxu0
    %v883 = vadd.f32 0.0, %v882
    %884 = vmatmul.f32.gmra.mxu0 %v840
    %v885 = vpop.f32.mrf.mxu0
    %v886 = vadd.f32 0.0, %v885
    %887 = vdwg.mxu0
    %888 = vmatpush.msra.mxu0 0.0
    %889 = vmatpush.msra.mxu0 0.0
    %890 = vmatpush.msra.mxu0 0.0
    %891 = vmatpush.msra.mxu0 0.0
    %892 = vmatpush.msra.mxu0 0.0
    %893 = vmatpush.msra.mxu0 0.0
    %894 = vmatpush.msra.mxu0 0.0
    %895 = vmatpush.msra.mxu0 0.0
    %896 = vmatpush.msra.mxu0 0.0
    %897 = vmatpush.msra.mxu0 0.0
    %898 = vmatpush.msra.mxu0 0.0
    %899 = vmatpush.msra.mxu0 0.0
    %900 = vmatpush.msra.mxu0 0.0
    %901 = vmatpush.msra.mxu0 0.0
    %902 = vmatpush.msra.mxu0 %v832
    %903 = vmatpush.msra.mxu0 %v826
    %904 = vmatmul.f32.gmra.mxu0 %v837
    %v905 = vpop.f32.mrf.mxu0
    %v906 = vadd.f32 0.0, %v905
    %907 = vmatmul.f32.gmra.mxu0 %v840
    %v908 = vpop.f32.mrf.mxu0
    %v909 = vadd.f32 0.0, %v908
    %910 = vdwg.mxu0
    %911 = vmatpush.msra.mxu0 0.0
    %912 = vmatpush.msra.mxu0 0.0
    %913 = vmatpush.msra.mxu0 0.0
    %914 = vmatpush.msra.mxu0 0.0
    %915 = vmatpush.msra.mxu0 0.0
    %916 = vmatpush.msra.mxu0 0.0
    %917 = vmatpush.msra.mxu0 0.0
    %918 = vmatpush.msra.mxu0 0.0
    %919 = vmatpush.msra.mxu0 0.0
    %920 = vmatpush.msra.mxu0 0.0
    %921 = vmatpush.msra.mxu0 0.0
    %922 = vmatpush.msra.mxu0 0.0
    %923 = vmatpush.msra.mxu0 0.0
    %924 = vmatpush.msra.mxu0 0.0
    %925 = vmatpush.msra.mxu0 %v833
    %926 = vmatpush.msra.mxu0 %v827
    %927 = vmatmul.f32.gmra.mxu0 %v837
    %v928 = vpop.f32.mrf.mxu0
    %v929 = vadd.f32 0.0, %v928
    %930 = vmatmul.f32.gmra.mxu0 %v840
    %v931 = vpop.f32.mrf.mxu0
    %v932 = vadd.f32 0.0, %v931
    %933 = vdwg.mxu0
    %934 = vmatpush.msra.mxu0 0.0
    %935 = vmatpush.msra.mxu0 0.0
    %936 = vmatpush.msra.mxu0 0.0
    %937 = vmatpush.msra.mxu0 0.0
    %938 = vmatpush.msra.mxu0 0.0
    %939 = vmatpush.msra.mxu0 0.0
    %940 = vmatpush.msra.mxu0 0.0
    %941 = vmatpush.msra.mxu0 0.0
    %942 = vmatpush.msra.mxu0 0.0
    %943 = vmatpush.msra.mxu0 0.0
    %944 = vmatpush.msra.mxu0 0.0
    %945 = vmatpush.msra.mxu0 0.0
    %946 = vmatpush.msra.mxu0 0.0
    %947 = vmatpush.msra.mxu0 0.0
    %948 = vmatpush.msra.mxu0 %v834
    %949 = vmatpush.msra.mxu0 %v828
    %950 = vmatmul.f32.gmra.mxu0 %v837
    %v951 = vpop.f32.mrf.mxu0
    %v952 = vadd.f32 0.0, %v951
    %953 = vmatmul.f32.gmra.mxu0 %v840
    %v954 = vpop.f32.mrf.mxu0
    %v955 = vadd.f32 0.0, %v954
    %956 = vdwg.mxu0
    %957 = vmatpush.msra.mxu0 0.0
    %958 = vmatpush.msra.mxu0 0.0
    %959 = vmatpush.msra.mxu0 0.0
    %960 = vmatpush.msra.mxu0 0.0
    %961 = vmatpush.msra.mxu0 0.0
    %962 = vmatpush.msra.mxu0 0.0
    %963 = vmatpush.msra.mxu0 0.0
    %964 = vmatpush.msra.mxu0 0.0
    %965 = vmatpush.msra.mxu0 0.0
    %966 = vmatpush.msra.mxu0 0.0
    %967 = vmatpush.msra.mxu0 0.0
    %968 = vmatpush.msra.mxu0 0.0
    %969 = vmatpush.msra.mxu0 0.0
    %970 = vmatpush.msra.mxu0 0.0
    %971 = vmatpush.msra.mxu0 %v835
    %972 = vmatpush.msra.mxu0 %v829
    %973 = vmatmul.f32.gmra.mxu0 %v837
    %v974 = vpop.f32.mrf.mxu0
    %v975 = vadd.f32 0.0, %v974
    %976 = vmatmul.f32.gmra.mxu0 %v840
    %v977 = vpop.f32.mrf.mxu0
    %v978 = vadd.f32 0.0, %v977
    %979 = vdwg.mxu0
    %v980 = vadd.f32 %v809, %v860
    %v981 = vadd.f32 %v810, %v883
    %v982 = vadd.f32 %v811, %v906
    %v983 = vadd.f32 %v812, %v929
    %v984 = vadd.f32 %v813, %v952
    %v985 = vadd.f32 %v814, %v975
    %v986 = vadd.f32 %v815, %v863
    %v987 = vadd.f32 %v816, %v886
    %v988 = vadd.f32 %v817, %v909
    %v989 = vadd.f32 %v818, %v932
    %v990 = vadd.f32 %v819, %v955
    %v991 = vadd.f32 %v820, %v978
    %v992 = vld [vmem:[#allocation2 + $0xa] sm:$0xff]
    %v993 = vld [vmem:[#allocation2 + $0x12] sm:$0xff]
    %s994 = scalar_lea.vmem [#allocation4], 480
    %v995 = vld [vmem:[%s994] sm:$0xff]
    %v996 = vld [vmem:[%s994 + $0x8] sm:$0xff]
    %v997 = vld [vmem:[%s994 + $0x10] sm:$0xff]
    %v998 = vld [vmem:[%s994 + $0x18] sm:$0xff]
    %v999 = vld [vmem:[%s994 + $0x20] sm:$0xff]
    %v1000 = vld [vmem:[%s994 + $0x28] sm:$0xff]
    %v1001 = vld [vmem:[%s994 + $0x30] sm:$0xff]
    %v1002 = vld [vmem:[%s994 + $0x38] sm:$0xff]
    %v1003 = vld [vmem:[%s994 + $0x40] sm:$0xff]
    %v1004 = vld [vmem:[%s994 + $0x48] sm:$0xff]
    %v1005 = vld [vmem:[%s994 + $0x50] sm:$0xff]
    %v1006 = vld [vmem:[%s994 + $0x58] sm:$0xff]
    %v1008 = vsel %vm152, %v992, 0
    %v1011 = vsel %vm152, %v993, 0
    %1013 = vmatpush.msra.mxu0 0.0
    %1014 = vmatpush.msra.mxu0 0.0
    %1015 = vmatpush.msra.mxu0 0.0
    %1016 = vmatpush.msra.mxu0 0.0
    %1017 = vmatpush.msra.mxu0 0.0
    %1018 = vmatpush.msra.mxu0 0.0
    %1019 = vmatpush.msra.mxu0 0.0
    %1020 = vmatpush.msra.mxu0 0.0
    %1021 = vmatpush.msra.mxu0 0.0
    %1022 = vmatpush.msra.mxu0 0.0
    %1023 = vmatpush.msra.mxu0 0.0
    %1024 = vmatpush.msra.mxu0 0.0
    %1025 = vmatpush.msra.mxu0 0.0
    %1026 = vmatpush.msra.mxu0 0.0
    %1027 = vmatpush.msra.mxu0 %v1001
    %1028 = vmatpush.msra.mxu0 %v995
    %1029 = vmatmul.f32.gmra.mxu0 %v1008
    %v1030 = vpop.f32.mrf.mxu0
    %v1031 = vadd.f32 0.0, %v1030
    %1032 = vmatmul.f32.gmra.mxu0 %v1011
    %v1033 = vpop.f32.mrf.mxu0
    %v1034 = vadd.f32 0.0, %v1033
    %1035 = vdwg.mxu0
    %1036 = vmatpush.msra.mxu0 0.0
    %1037 = vmatpush.msra.mxu0 0.0
    %1038 = vmatpush.msra.mxu0 0.0
    %1039 = vmatpush.msra.mxu0 0.0
    %1040 = vmatpush.msra.mxu0 0.0
    %1041 = vmatpush.msra.mxu0 0.0
    %1042 = vmatpush.msra.mxu0 0.0
    %1043 = vmatpush.msra.mxu0 0.0
    %1044 = vmatpush.msra.mxu0 0.0
    %1045 = vmatpush.msra.mxu0 0.0
    %1046 = vmatpush.msra.mxu0 0.0
    %1047 = vmatpush.msra.mxu0 0.0
    %1048 = vmatpush.msra.mxu0 0.0
    %1049 = vmatpush.msra.mxu0 0.0
    %1050 = vmatpush.msra.mxu0 %v1002
    %1051 = vmatpush.msra.mxu0 %v996
    %1052 = vmatmul.f32.gmra.mxu0 %v1008
    %v1053 = vpop.f32.mrf.mxu0
    %v1054 = vadd.f32 0.0, %v1053
    %1055 = vmatmul.f32.gmra.mxu0 %v1011
    %v1056 = vpop.f32.mrf.mxu0
    %v1057 = vadd.f32 0.0, %v1056
    %1058 = vdwg.mxu0
    %1059 = vmatpush.msra.mxu0 0.0
    %1060 = vmatpush.msra.mxu0 0.0
    %1061 = vmatpush.msra.mxu0 0.0
    %1062 = vmatpush.msra.mxu0 0.0
    %1063 = vmatpush.msra.mxu0 0.0
    %1064 = vmatpush.msra.mxu0 0.0
    %1065 = vmatpush.msra.mxu0 0.0
    %1066 = vmatpush.msra.mxu0 0.0
    %1067 = vmatpush.msra.mxu0 0.0
    %1068 = vmatpush.msra.mxu0 0.0
    %1069 = vmatpush.msra.mxu0 0.0
    %1070 = vmatpush.msra.mxu0 0.0
    %1071 = vmatpush.msra.mxu0 0.0
    %1072 = vmatpush.msra.mxu0 0.0
    %1073 = vmatpush.msra.mxu0 %v1003
    %1074 = vmatpush.msra.mxu0 %v997
    %1075 = vmatmul.f32.gmra.mxu0 %v1008
    %v1076 = vpop.f32.mrf.mxu0
    %v1077 = vadd.f32 0.0, %v1076
    %1078 = vmatmul.f32.gmra.mxu0 %v1011
    %v1079 = vpop.f32.mrf.mxu0
    %v1080 = vadd.f32 0.0, %v1079
    %1081 = vdwg.mxu0
    %1082 = vmatpush.msra.mxu0 0.0
    %1083 = vmatpush.msra.mxu0 0.0
    %1084 = vmatpush.msra.mxu0 0.0
    %1085 = vmatpush.msra.mxu0 0.0
    %1086 = vmatpush.msra.mxu0 0.0
    %1087 = vmatpush.msra.mxu0 0.0
    %1088 = vmatpush.msra.mxu0 0.0
    %1089 = vmatpush.msra.mxu0 0.0
    %1090 = vmatpush.msra.mxu0 0.0
    %1091 = vmatpush.msra.mxu0 0.0
    %1092 = vmatpush.msra.mxu0 0.0
    %1093 = vmatpush.msra.mxu0 0.0
    %1094 = vmatpush.msra.mxu0 0.0
    %1095 = vmatpush.msra.mxu0 0.0
    %1096 = vmatpush.msra.mxu0 %v1004
    %1097 = vmatpush.msra.mxu0 %v998
    %1098 = vmatmul.f32.gmra.mxu0 %v1008
    %v1099 = vpop.f32.mrf.mxu0
    %v1100 = vadd.f32 0.0, %v1099
    %1101 = vmatmul.f32.gmra.mxu0 %v1011
    %v1102 = vpop.f32.mrf.mxu0
    %v1103 = vadd.f32 0.0, %v1102
    %1104 = vdwg.mxu0
    %1105 = vmatpush.msra.mxu0 0.0
    %1106 = vmatpush.msra.mxu0 0.0
    %1107 = vmatpush.msra.mxu0 0.0
    %1108 = vmatpush.msra.mxu0 0.0
    %1109 = vmatpush.msra.mxu0 0.0
    %1110 = vmatpush.msra.mxu0 0.0
    %1111 = vmatpush.msra.mxu0 0.0
    %1112 = vmatpush.msra.mxu0 0.0
    %1113 = vmatpush.msra.mxu0 0.0
    %1114 = vmatpush.msra.mxu0 0.0
    %1115 = vmatpush.msra.mxu0 0.0
    %1116 = vmatpush.msra.mxu0 0.0
    %1117 = vmatpush.msra.mxu0 0.0
    %1118 = vmatpush.msra.mxu0 0.0
    %1119 = vmatpush.msra.mxu0 %v1005
    %1120 = vmatpush.msra.mxu0 %v999
    %1121 = vmatmul.f32.gmra.mxu0 %v1008
    %v1122 = vpop.f32.mrf.mxu0
    %v1123 = vadd.f32 0.0, %v1122
    %1124 = vmatmul.f32.gmra.mxu0 %v1011
    %v1125 = vpop.f32.mrf.mxu0
    %v1126 = vadd.f32 0.0, %v1125
    %1127 = vdwg.mxu0
    %1128 = vmatpush.msra.mxu0 0.0
    %1129 = vmatpush.msra.mxu0 0.0
    %1130 = vmatpush.msra.mxu0 0.0
    %1131 = vmatpush.msra.mxu0 0.0
    %1132 = vmatpush.msra.mxu0 0.0
    %1133 = vmatpush.msra.mxu0 0.0
    %1134 = vmatpush.msra.mxu0 0.0
    %1135 = vmatpush.msra.mxu0 0.0
    %1136 = vmatpush.msra.mxu0 0.0
    %1137 = vmatpush.msra.mxu0 0.0
    %1138 = vmatpush.msra.mxu0 0.0
    %1139 = vmatpush.msra.mxu0 0.0
    %1140 = vmatpush.msra.mxu0 0.0
    %1141 = vmatpush.msra.mxu0 0.0
    %1142 = vmatpush.msra.mxu0 %v1006
    %1143 = vmatpush.msra.mxu0 %v1000
    %1144 = vmatmul.f32.gmra.mxu0 %v1008
    %v1145 = vpop.f32.mrf.mxu0
    %v1146 = vadd.f32 0.0, %v1145
    %1147 = vmatmul.f32.gmra.mxu0 %v1011
    %v1148 = vpop.f32.mrf.mxu0
    %v1149 = vadd.f32 0.0, %v1148
    %1150 = vdwg.mxu0
    %v1151 = vadd.f32 %v980, %v1031
    %v1152 = vadd.f32 %v981, %v1054
    %v1153 = vadd.f32 %v982, %v1077
    %v1154 = vadd.f32 %v983, %v1100
    %v1155 = vadd.f32 %v984, %v1123
    %v1156 = vadd.f32 %v985, %v1146
    %v1157 = vadd.f32 %v986, %v1034
    %v1158 = vadd.f32 %v987, %v1057
    %v1159 = vadd.f32 %v988, %v1080
    %v1160 = vadd.f32 %v989, %v1103
    %v1161 = vadd.f32 %v990, %v1126
    %v1162 = vadd.f32 %v991, %v1149
    %v1163 = vld [vmem:[#allocation2 + $0xc] sm:$0xff]
    %v1164 = vld [vmem:[#allocation2 + $0x14] sm:$0xff]
    %s1165 = scalar_lea.vmem [#allocation4], 576
    %v1166 = vld [vmem:[%s1165] sm:$0xff]
    %v1167 = vld [vmem:[%s1165 + $0x8] sm:$0xff]
    %v1168 = vld [vmem:[%s1165 + $0x10] sm:$0xff]
    %v1169 = vld [vmem:[%s1165 + $0x18] sm:$0xff]
    %v1170 = vld [vmem:[%s1165 + $0x20] sm:$0xff]
    %v1171 = vld [vmem:[%s1165 + $0x28] sm:$0xff]
    %v1172 = vld [vmem:[%s1165 + $0x30] sm:$0xff]
    %v1173 = vld [vmem:[%s1165 + $0x38] sm:$0xff]
    %v1174 = vld [vmem:[%s1165 + $0x40] sm:$0xff]
    %v1175 = vld [vmem:[%s1165 + $0x48] sm:$0xff]
    %v1176 = vld [vmem:[%s1165 + $0x50] sm:$0xff]
    %v1177 = vld [vmem:[%s1165 + $0x58] sm:$0xff]
    %v1179 = vsel %vm152, %v1163, 0
    %v1182 = vsel %vm152, %v1164, 0
    %1184 = vmatpush.msra.mxu0 0.0
    %1185 = vmatpush.msra.mxu0 0.0
    %1186 = vmatpush.msra.mxu0 0.0
    %1187 = vmatpush.msra.mxu0 0.0
    %1188 = vmatpush.msra.mxu0 0.0
    %1189 = vmatpush.msra.mxu0 0.0
    %1190 = vmatpush.msra.mxu0 0.0
    %1191 = vmatpush.msra.mxu0 0.0
    %1192 = vmatpush.msra.mxu0 0.0
    %1193 = vmatpush.msra.mxu0 0.0
    %1194 = vmatpush.msra.mxu0 0.0
    %1195 = vmatpush.msra.mxu0 0.0
    %1196 = vmatpush.msra.mxu0 0.0
    %1197 = vmatpush.msra.mxu0 0.0
    %1198 = vmatpush.msra.mxu0 %v1172
    %1199 = vmatpush.msra.mxu0 %v1166
    %1200 = vmatmul.f32.gmra.mxu0 %v1179
    %v1201 = vpop.f32.mrf.mxu0
    %v1202 = vadd.f32 0.0, %v1201
    %1203 = vmatmul.f32.gmra.mxu0 %v1182
    %v1204 = vpop.f32.mrf.mxu0
    %v1205 = vadd.f32 0.0, %v1204
    %1206 = vdwg.mxu0
    %1207 = vmatpush.msra.mxu0 0.0
    %1208 = vmatpush.msra.mxu0 0.0
    %1209 = vmatpush.msra.mxu0 0.0
    %1210 = vmatpush.msra.mxu0 0.0
    %1211 = vmatpush.msra.mxu0 0.0
    %1212 = vmatpush.msra.mxu0 0.0
    %1213 = vmatpush.msra.mxu0 0.0
    %1214 = vmatpush.msra.mxu0 0.0
    %1215 = vmatpush.msra.mxu0 0.0
    %1216 = vmatpush.msra.mxu0 0.0
    %1217 = vmatpush.msra.mxu0 0.0
    %1218 = vmatpush.msra.mxu0 0.0
    %1219 = vmatpush.msra.mxu0 0.0
    %1220 = vmatpush.msra.mxu0 0.0
    %1221 = vmatpush.msra.mxu0 %v1173
    %1222 = vmatpush.msra.mxu0 %v1167
    %1223 = vmatmul.f32.gmra.mxu0 %v1179
    %v1224 = vpop.f32.mrf.mxu0
    %v1225 = vadd.f32 0.0, %v1224
    %1226 = vmatmul.f32.gmra.mxu0 %v1182
    %v1227 = vpop.f32.mrf.mxu0
    %v1228 = vadd.f32 0.0, %v1227
    %1229 = vdwg.mxu0
    %1230 = vmatpush.msra.mxu0 0.0
    %1231 = vmatpush.msra.mxu0 0.0
    %1232 = vmatpush.msra.mxu0 0.0
    %1233 = vmatpush.msra.mxu0 0.0
    %1234 = vmatpush.msra.mxu0 0.0
    %1235 = vmatpush.msra.mxu0 0.0
    %1236 = vmatpush.msra.mxu0 0.0
    %1237 = vmatpush.msra.mxu0 0.0
    %1238 = vmatpush.msra.mxu0 0.0
    %1239 = vmatpush.msra.mxu0 0.0
    %1240 = vmatpush.msra.mxu0 0.0
    %1241 = vmatpush.msra.mxu0 0.0
    %1242 = vmatpush.msra.mxu0 0.0
    %1243 = vmatpush.msra.mxu0 0.0
    %1244 = vmatpush.msra.mxu0 %v1174
    %1245 = vmatpush.msra.mxu0 %v1168
    %1246 = vmatmul.f32.gmra.mxu0 %v1179
    %v1247 = vpop.f32.mrf.mxu0
    %v1248 = vadd.f32 0.0, %v1247
    %1249 = vmatmul.f32.gmra.mxu0 %v1182
    %v1250 = vpop.f32.mrf.mxu0
    %v1251 = vadd.f32 0.0, %v1250
    %1252 = vdwg.mxu0
    %1253 = vmatpush.msra.mxu0 0.0
    %1254 = vmatpush.msra.mxu0 0.0
    %1255 = vmatpush.msra.mxu0 0.0
    %1256 = vmatpush.msra.mxu0 0.0
    %1257 = vmatpush.msra.mxu0 0.0
    %1258 = vmatpush.msra.mxu0 0.0
    %1259 = vmatpush.msra.mxu0 0.0
    %1260 = vmatpush.msra.mxu0 0.0
    %1261 = vmatpush.msra.mxu0 0.0
    %1262 = vmatpush.msra.mxu0 0.0
    %1263 = vmatpush.msra.mxu0 0.0
    %1264 = vmatpush.msra.mxu0 0.0
    %1265 = vmatpush.msra.mxu0 0.0
    %1266 = vmatpush.msra.mxu0 0.0
    %1267 = vmatpush.msra.mxu0 %v1175
    %1268 = vmatpush.msra.mxu0 %v1169
    %1269 = vmatmul.f32.gmra.mxu0 %v1179
    %v1270 = vpop.f32.mrf.mxu0
    %v1271 = vadd.f32 0.0, %v1270
    %1272 = vmatmul.f32.gmra.mxu0 %v1182
    %v1273 = vpop.f32.mrf.mxu0
    %v1274 = vadd.f32 0.0, %v1273
    %1275 = vdwg.mxu0
    %1276 = vmatpush.msra.mxu0 0.0
    %1277 = vmatpush.msra.mxu0 0.0
    %1278 = vmatpush.msra.mxu0 0.0
    %1279 = vmatpush.msra.mxu0 0.0
    %1280 = vmatpush.msra.mxu0 0.0
    %1281 = vmatpush.msra.mxu0 0.0
    %1282 = vmatpush.msra.mxu0 0.0
    %1283 = vmatpush.msra.mxu0 0.0
    %1284 = vmatpush.msra.mxu0 0.0
    %1285 = vmatpush.msra.mxu0 0.0
    %1286 = vmatpush.msra.mxu0 0.0
    %1287 = vmatpush.msra.mxu0 0.0
    %1288 = vmatpush.msra.mxu0 0.0
    %1289 = vmatpush.msra.mxu0 0.0
    %1290 = vmatpush.msra.mxu0 %v1176
    %1291 = vmatpush.msra.mxu0 %v1170
    %1292 = vmatmul.f32.gmra.mxu0 %v1179
    %v1293 = vpop.f32.mrf.mxu0
    %v1294 = vadd.f32 0.0, %v1293
    %1295 = vmatmul.f32.gmra.mxu0 %v1182
    %v1296 = vpop.f32.mrf.mxu0
    %v1297 = vadd.f32 0.0, %v1296
    %1298 = vdwg.mxu0
    %1299 = vmatpush.msra.mxu0 0.0
    %1300 = vmatpush.msra.mxu0 0.0
    %1301 = vmatpush.msra.mxu0 0.0
    %1302 = vmatpush.msra.mxu0 0.0
    %1303 = vmatpush.msra.mxu0 0.0
    %1304 = vmatpush.msra.mxu0 0.0
    %1305 = vmatpush.msra.mxu0 0.0
    %1306 = vmatpush.msra.mxu0 0.0
    %1307 = vmatpush.msra.mxu0 0.0
    %1308 = vmatpush.msra.mxu0 0.0
    %1309 = vmatpush.msra.mxu0 0.0
    %1310 = vmatpush.msra.mxu0 0.0
    %1311 = vmatpush.msra.mxu0 0.0
    %1312 = vmatpush.msra.mxu0 0.0
    %1313 = vmatpush.msra.mxu0 %v1177
    %1314 = vmatpush.msra.mxu0 %v1171
    %1315 = vmatmul.f32.gmra.mxu0 %v1179
    %v1316 = vpop.f32.mrf.mxu0
    %v1317 = vadd.f32 0.0, %v1316
    %1318 = vmatmul.f32.gmra.mxu0 %v1182
    %v1319 = vpop.f32.mrf.mxu0
    %v1320 = vadd.f32 0.0, %v1319
    %1321 = vdwg.mxu0
    %v1322 = vadd.f32 %v1151, %v1202
    %v1323 = vadd.f32 %v1152, %v1225
    %v1324 = vadd.f32 %v1153, %v1248
    %v1325 = vadd.f32 %v1154, %v1271
    %v1326 = vadd.f32 %v1155, %v1294
    %v1327 = vadd.f32 %v1156, %v1317
    %v1328 = vadd.f32 %v1157, %v1205
    %v1329 = vadd.f32 %v1158, %v1228
    %v1330 = vadd.f32 %v1159, %v1251
    %v1331 = vadd.f32 %v1160, %v1274
    %v1332 = vadd.f32 %v1161, %v1297
    %v1333 = vadd.f32 %v1162, %v1320
    %v1334 = vld [vmem:[#allocation7] sm:$0x3f]
    %v1336 = vperm.slane %v1334, 0
    %v1337 = vperm.slane %v1334, 1
    %v1338 = vperm.slane %v1334, 2
    %v1339 = vperm.slane %v1334, 3
    %v1340 = vperm.slane %v1334, 4
    %v1341 = vperm.slane %v1334, 5
    %v1348 = vadd.f32 %v1322, %v1336
    %v1349 = vadd.f32 %v1323, %v1337
    %v1350 = vadd.f32 %v1324, %v1338
    %v1351 = vadd.f32 %v1325, %v1339
    %v1352 = vadd.f32 %v1326, %v1340
    %v1353 = vadd.f32 %v1327, %v1341
    %v1354 = vadd.f32 %v1328, %v1336
    %v1355 = vadd.f32 %v1329, %v1337
    %v1356 = vadd.f32 %v1330, %v1338
    %v1357 = vadd.f32 %v1331, %v1339
    %v1358 = vadd.f32 %v1332, %v1340
    %v1359 = vadd.f32 %v1333, %v1341
    %v1360 = vmax.f32 %v1348, 0.0
    %v1361 = vmax.f32 %v1349, 0.0
    %v1362 = vmax.f32 %v1350, 0.0
    %v1363 = vmax.f32 %v1351, 0.0
    %v1364 = vmax.f32 %v1352, 0.0
    %v1365 = vmax.f32 %v1353, 0.0
    %v1366 = vmax.f32 %v1354, 0.0
    %v1367 = vmax.f32 %v1355, 0.0
    %v1368 = vmax.f32 %v1356, 0.0
    %v1369 = vmax.f32 %v1357, 0.0
    %v1370 = vmax.f32 %v1358, 0.0
    %v1371 = vmax.f32 %v1359, 0.0
    %v1372 = vmin.f32 %v1360, 6.0
    %v1373 = vmin.f32 %v1361, 6.0
    %v1374 = vmin.f32 %v1362, 6.0
    %v1375 = vmin.f32 %v1363, 6.0
    %v1376 = vmin.f32 %v1364, 6.0
    %v1377 = vmin.f32 %v1365, 6.0
    %v1378 = vmin.f32 %v1366, 6.0
    %v1379 = vmin.f32 %v1367, 6.0
    %v1380 = vmin.f32 %v1368, 6.0
    %v1381 = vmin.f32 %v1369, 6.0
    %v1382 = vmin.f32 %v1370, 6.0
    %v1383 = vmin.f32 %v1371, 6.0
    %1384 = vst [vmem:[#allocation3] sm:$0xff] 0.0
    %1385 = vst [vmem:[#allocation3 + $0x8] sm:$0xff] 0.0
    %1386 = vst [vmem:[#allocation3 + $0x10] sm:$0xff] 0.0
    %1387 = vst [vmem:[#allocation3 + $0x18] sm:$0xff] 0.0
    %1388 = vst [vmem:[#allocation3 + $0x20] sm:$0xff] 0.0
    %1389 = vst [vmem:[#allocation3 + $0x28] sm:$0xff] 0.0
    %1390 = vst [vmem:[#allocation3 + $0x30] sm:$0xff] 0.0
    %1391 = vst [vmem:[#allocation3 + $0x38] sm:$0xff] 0.0
    %1392 = vst [vmem:[#allocation3 + $0x40] sm:$0xff] 0.0
    %1393 = vst [vmem:[#allocation3 + $0x48] sm:$0xff] 0.0
    %1394 = vst [vmem:[#allocation3 + $0x50] sm:$0xff] 0.0
    %1395 = vst [vmem:[#allocation3 + $0x58] sm:$0xff] 0.0
    %1396 = vst [vmem:[#allocation3 + $0x60] sm:$0xff] 0.0
    %1397 = vst [vmem:[#allocation3 + $0x68] sm:$0xff] 0.0
    %1398 = vst [vmem:[#allocation3 + $0x70] sm:$0xff] 0.0
    %1399 = vst [vmem:[#allocation3 + $0x78] sm:$0xff] 0.0
    %1400 = vst [vmem:[#allocation3 + $0x80] sm:$0xff] 0.0
    %1401 = vst [vmem:[#allocation3 + $0x88] sm:$0xff] 0.0
    %1402 = vst [vmem:[#allocation3 + $0x90] sm:$0xf] 0.0
    %1403 = vst [vmem:[#allocation3 + $0x98] sm:$0xf] 0.0
    %1404 = vst [vmem:[#allocation3 + $0xa0] sm:$0xf] 0.0
    %1405 = vst [vmem:[#allocation3 + $0xa8] sm:$0xf] 0.0
    %1406 = vst [vmem:[#allocation3 + $0xb0] sm:$0xf] 0.0
    %1407 = vst [vmem:[#allocation3 + $0xb8] sm:$0xf] 0.0
    %vm1420 = vcmask 1045504
    %v1421 = vrot.slane %v1372, 2
    %v1422 = vrot.slane %v1373, 2
    %v1423 = vrot.slane %v1374, 2
    %v1424 = vrot.slane %v1375, 2
    %v1425 = vrot.slane %v1376, 2
    %v1426 = vrot.slane %v1377, 2
    %v1427 = vrot.slane %v1378, 2
    %v1428 = vsel %vm1420, %v1421, %v1427
    %v1429 = vrot.slane %v1379, 2
    %v1430 = vsel %vm1420, %v1422, %v1429
    %v1431 = vrot.slane %v1380, 2
    %v1432 = vsel %vm1420, %v1423, %v1431
    %v1433 = vrot.slane %v1381, 2
    %v1434 = vsel %vm1420, %v1424, %v1433
    %v1435 = vrot.slane %v1382, 2
    %v1436 = vsel %vm1420, %v1425, %v1435
    %v1437 = vrot.slane %v1383, 2
    %v1438 = vsel %vm1420, %v1426, %v1437
    %1457 = vst [vmem:[#allocation3] sm:$0xc0] %v1421
    %1458 = vst [vmem:[#allocation3 + $0x8] sm:$0xc0] %v1422
    %1459 = vst [vmem:[#allocation3 + $0x10] sm:$0xc0] %v1423
    %1460 = vst [vmem:[#allocation3 + $0x18] sm:$0xc0] %v1424
    %1461 = vst [vmem:[#allocation3 + $0x20] sm:$0xc0] %v1425
    %1462 = vst [vmem:[#allocation3 + $0x28] sm:$0xc0] %v1426
    %1463 = vst [vmem:[#allocation3 + $0x30] sm:$0xff] %v1428
    %1464 = vst [vmem:[#allocation3 + $0x38] sm:$0xff] %v1430
    %1465 = vst [vmem:[#allocation3 + $0x40] sm:$0xff] %v1432
    %1466 = vst [vmem:[#allocation3 + $0x48] sm:$0xff] %v1434
    %1467 = vst [vmem:[#allocation3 + $0x50] sm:$0xff] %v1436
    %1468 = vst [vmem:[#allocation3 + $0x58] sm:$0xff] %v1438
    %1469 = vst [vmem:[#allocation3 + $0x60] sm:$0x3f] %v1427
    %1470 = vst [vmem:[#allocation3 + $0x68] sm:$0x3f] %v1429
    %1471 = vst [vmem:[#allocation3 + $0x70] sm:$0x3f] %v1431
    %1472 = vst [vmem:[#allocation3 + $0x78] sm:$0x3f] %v1433
    %1473 = vst [vmem:[#allocation3 + $0x80] sm:$0x3f] %v1435
    %1474 = vst [vmem:[#allocation3 + $0x88] sm:$0x3f] %v1437
    %v1475 = vld [vmem:[#allocation3] sm:$0xff]
    %v1476 = vld [vmem:[#allocation3 + $0x8] sm:$0xff]
    %v1477 = vld [vmem:[#allocation3 + $0x10] sm:$0xff]
    %v1478 = vld [vmem:[#allocation3 + $0x18] sm:$0xff]
    %v1479 = vld [vmem:[#allocation3 + $0x20] sm:$0xff]
    %v1480 = vld [vmem:[#allocation3 + $0x28] sm:$0xff]
    %v1481 = vld [vmem:[#allocation3 + $0x30] sm:$0xff]
    %v1482 = vld [vmem:[#allocation3 + $0x38] sm:$0xff]
    %v1483 = vld [vmem:[#allocation3 + $0x40] sm:$0xff]
    %v1484 = vld [vmem:[#allocation3 + $0x48] sm:$0xff]
    %v1485 = vld [vmem:[#allocation3 + $0x50] sm:$0xff]
    %v1486 = vld [vmem:[#allocation3 + $0x58] sm:$0xff]
    %v1487 = vld [vmem:[#allocation9] sm:$0xff]
    %v1488 = vld [vmem:[#allocation9 + $0x8] sm:$0xff]
    %v1489 = vld [vmem:[#allocation9 + $0x10] sm:$0xff]
    %v1490 = vld [vmem:[#allocation9 + $0x18] sm:$0xff]
    %v1491 = vld [vmem:[#allocation9 + $0x20] sm:$0xff]
    %v1492 = vld [vmem:[#allocation9 + $0x28] sm:$0xff]
    %v1493 = vld [vmem:[#allocation9 + $0x30] sm:$0xff]
    %v1494 = vld [vmem:[#allocation9 + $0x38] sm:$0xff]
    %v1495 = vld [vmem:[#allocation9 + $0x40] sm:$0xff]
    %v1496 = vld [vmem:[#allocation9 + $0x48] sm:$0xff]
    %v1497 = vld [vmem:[#allocation9 + $0x50] sm:$0xff]
    %v1498 = vld [vmem:[#allocation9 + $0x58] sm:$0xff]
    %v1499 = vld [vmem:[#allocation9 + $0x60] sm:$0xff]
    %v1500 = vld [vmem:[#allocation9 + $0x68] sm:$0xff]
    %v1501 = vld [vmem:[#allocation9 + $0x70] sm:$0xff]
    %v1502 = vld [vmem:[#allocation9 + $0x78] sm:$0xff]
    %v1503 = vld [vmem:[#allocation9 + $0x80] sm:$0xff]
    %v1504 = vld [vmem:[#allocation9 + $0x88] sm:$0xff]
    %v1505 = vld [vmem:[#allocation9 + $0x90] sm:$0xff]
    %v1506 = vld [vmem:[#allocation9 + $0x98] sm:$0xff]
    %v1507 = vld [vmem:[#allocation9 + $0xa0] sm:$0xff]
    %v1508 = vld [vmem:[#allocation9 + $0xa8] sm:$0xff]
    %v1509 = vld [vmem:[#allocation9 + $0xb0] sm:$0xff]
    %v1510 = vld [vmem:[#allocation9 + $0xb8] sm:$0xff]
    %v1511 = vld [vmem:[#allocation9 + $0xc0] sm:$0xff]
    %v1512 = vld [vmem:[#allocation9 + $0xc8] sm:$0xff]
    %v1513 = vld [vmem:[#allocation9 + $0xd0] sm:$0xff]
    %v1514 = vld [vmem:[#allocation9 + $0xd8] sm:$0xff]
    %v1515 = vld [vmem:[#allocation9 + $0xe0] sm:$0xff]
    %v1516 = vld [vmem:[#allocation9 + $0xe8] sm:$0xff]
    %v1517 = vld [vmem:[#allocation9 + $0xf0] sm:$0xff]
    %v1518 = vld [vmem:[#allocation9 + $0xf8] sm:$0xff]
    %v1519 = vld [vmem:[#allocation9 + $0x100] sm:$0xff]
    %v1520 = vld [vmem:[#allocation9 + $0x108] sm:$0xff]
    %v1521 = vld [vmem:[#allocation9 + $0x110] sm:$0xff]
    %v1522 = vld [vmem:[#allocation9 + $0x118] sm:$0xff]
    %v1523 = vld [vmem:[#allocation9 + $0x120] sm:$0xff]
    %v1524 = vld [vmem:[#allocation9 + $0x128] sm:$0xff]
    %v1525 = vld [vmem:[#allocation9 + $0x130] sm:$0xff]
    %v1526 = vld [vmem:[#allocation9 + $0x138] sm:$0xff]
    %v1527 = vld [vmem:[#allocation9 + $0x140] sm:$0xff]
    %v1528 = vld [vmem:[#allocation9 + $0x148] sm:$0xff]
    %v1529 = vld [vmem:[#allocation9 + $0x150] sm:$0xff]
    %v1530 = vld [vmem:[#allocation9 + $0x158] sm:$0xff]
    %v1531 = vld [vmem:[#allocation9 + $0x160] sm:$0xff]
    %v1532 = vld [vmem:[#allocation9 + $0x168] sm:$0xff]
    %v1533 = vld [vmem:[#allocation9 + $0x170] sm:$0xff]
    %v1534 = vld [vmem:[#allocation9 + $0x178] sm:$0xff]
    %v1535 = vld [vmem:[#allocation9 + $0x180] sm:$0xff]
    %v1536 = vld [vmem:[#allocation9 + $0x188] sm:$0xff]
    %v1537 = vld [vmem:[#allocation9 + $0x190] sm:$0xff]
    %v1538 = vld [vmem:[#allocation9 + $0x198] sm:$0xff]
    %v1539 = vld [vmem:[#allocation9 + $0x1a0] sm:$0xff]
    %v1540 = vld [vmem:[#allocation9 + $0x1a8] sm:$0xff]
    %v1541 = vld [vmem:[#allocation9 + $0x1b0] sm:$0xff]
    %v1542 = vld [vmem:[#allocation9 + $0x1b8] sm:$0xff]
    %v1543 = vld [vmem:[#allocation9 + $0x1c0] sm:$0xff]
    %v1544 = vld [vmem:[#allocation9 + $0x1c8] sm:$0xff]
    %v1545 = vld [vmem:[#allocation9 + $0x1d0] sm:$0xff]
    %v1546 = vld [vmem:[#allocation9 + $0x1d8] sm:$0xff]
    %v1547 = vld [vmem:[#allocation9 + $0x1e0] sm:$0xff]
    %v1548 = vld [vmem:[#allocation9 + $0x1e8] sm:$0xff]
    %v1549 = vld [vmem:[#allocation9 + $0x1f0] sm:$0xff]
    %v1550 = vld [vmem:[#allocation9 + $0x1f8] sm:$0xff]
    %v1551 = vld [vmem:[#allocation9 + $0x200] sm:$0xff]
    %v1552 = vld [vmem:[#allocation9 + $0x208] sm:$0xff]
    %v1553 = vld [vmem:[#allocation9 + $0x210] sm:$0xff]
    %v1554 = vld [vmem:[#allocation9 + $0x218] sm:$0xff]
    %v1555 = vld [vmem:[#allocation9 + $0x220] sm:$0xff]
    %v1556 = vld [vmem:[#allocation9 + $0x228] sm:$0xff]
    %v1557 = vld [vmem:[#allocation9 + $0x230] sm:$0xff]
    %v1558 = vld [vmem:[#allocation9 + $0x238] sm:$0xff]
    %v1559 = vld [vmem:[#allocation9 + $0x240] sm:$0xff]
    %v1560 = vld [vmem:[#allocation9 + $0x248] sm:$0xff]
    %v1561 = vld [vmem:[#allocation9 + $0x250] sm:$0xff]
    %v1562 = vld [vmem:[#allocation9 + $0x258] sm:$0xff]
    %v1563 = vld [vmem:[#allocation9 + $0x260] sm:$0xff]
    %v1564 = vld [vmem:[#allocation9 + $0x268] sm:$0xff]
    %v1565 = vld [vmem:[#allocation9 + $0x270] sm:$0xff]
    %v1566 = vld [vmem:[#allocation9 + $0x278] sm:$0xff]
    %v1567 = vld [vmem:[#allocation9 + $0x280] sm:$0xff]
    %v1568 = vld [vmem:[#allocation9 + $0x288] sm:$0xff]
    %v1569 = vld [vmem:[#allocation9 + $0x290] sm:$0xff]
    %v1570 = vld [vmem:[#allocation9 + $0x298] sm:$0xff]
    %v1571 = vld [vmem:[#allocation9 + $0x2a0] sm:$0xff]
    %v1572 = vld [vmem:[#allocation9 + $0x2a8] sm:$0xff]
    %v1573 = vld [vmem:[#allocation9 + $0x2b0] sm:$0xff]
    %v1574 = vld [vmem:[#allocation9 + $0x2b8] sm:$0xff]
    %v1575 = vld [vmem:[#allocation9 + $0x2c0] sm:$0xff]
    %v1576 = vld [vmem:[#allocation9 + $0x2c8] sm:$0xff]
    %v1577 = vld [vmem:[#allocation9 + $0x2d0] sm:$0xff]
    %v1578 = vld [vmem:[#allocation9 + $0x2d8] sm:$0xff]
    %v1579 = vld [vmem:[#allocation9 + $0x2e0] sm:$0xff]
    %v1580 = vld [vmem:[#allocation9 + $0x2e8] sm:$0xff]
    %v1581 = vld [vmem:[#allocation9 + $0x2f0] sm:$0xff]
    %v1582 = vld [vmem:[#allocation9 + $0x2f8] sm:$0xff]
    %v1583 = vld [vmem:[#allocation9 + $0x300] sm:$0xff]
    %v1584 = vld [vmem:[#allocation9 + $0x308] sm:$0xff]
    %v1585 = vld [vmem:[#allocation9 + $0x310] sm:$0xff]
    %v1586 = vld [vmem:[#allocation9 + $0x318] sm:$0xff]
    %v1587 = vld [vmem:[#allocation9 + $0x320] sm:$0xff]
    %v1588 = vld [vmem:[#allocation9 + $0x328] sm:$0xff]
    %v1589 = vld [vmem:[#allocation9 + $0x330] sm:$0xff]
    %v1590 = vld [vmem:[#allocation9 + $0x338] sm:$0xff]
    %v1591 = vld [vmem:[#allocation9 + $0x340] sm:$0xff]
    %v1592 = vld [vmem:[#allocation9 + $0x348] sm:$0xff]
    %v1593 = vld [vmem:[#allocation9 + $0x350] sm:$0xff]
    %v1594 = vld [vmem:[#allocation9 + $0x358] sm:$0xff]
    %v1595 = vld [vmem:[#allocation9 + $0x360] sm:$0xff]
    %v1596 = vld [vmem:[#allocation9 + $0x368] sm:$0xff]
    %v1597 = vld [vmem:[#allocation9 + $0x370] sm:$0xff]
    %v1598 = vld [vmem:[#allocation9 + $0x378] sm:$0xff]
    %v1599 = vld [vmem:[#allocation9 + $0x380] sm:$0xff]
    %v1600 = vld [vmem:[#allocation9 + $0x388] sm:$0xff]
    %v1601 = vld [vmem:[#allocation9 + $0x390] sm:$0xff]
    %v1602 = vld [vmem:[#allocation9 + $0x398] sm:$0xff]
    %v1603 = vld [vmem:[#allocation9 + $0x3a0] sm:$0xff]
    %v1604 = vld [vmem:[#allocation9 + $0x3a8] sm:$0xff]
    %v1605 = vld [vmem:[#allocation9 + $0x3b0] sm:$0xff]
    %v1606 = vld [vmem:[#allocation9 + $0x3b8] sm:$0xff]
    %v1607 = vld [vmem:[#allocation9 + $0x3c0] sm:$0xff]
    %v1608 = vld [vmem:[#allocation9 + $0x3c8] sm:$0xff]
    %v1609 = vld [vmem:[#allocation9 + $0x3d0] sm:$0xff]
    %v1610 = vld [vmem:[#allocation9 + $0x3d8] sm:$0xff]
    %v1611 = vld [vmem:[#allocation9 + $0x3e0] sm:$0xff]
    %v1612 = vld [vmem:[#allocation9 + $0x3e8] sm:$0xff]
    %v1613 = vld [vmem:[#allocation9 + $0x3f0] sm:$0xff]
    %v1614 = vld [vmem:[#allocation9 + $0x3f8] sm:$0xff]
    %v1615 = vld [vmem:[#allocation9 + $0x400] sm:$0xff]
    %v1616 = vld [vmem:[#allocation9 + $0x408] sm:$0xff]
    %v1617 = vld [vmem:[#allocation9 + $0x410] sm:$0xff]
    %v1618 = vld [vmem:[#allocation9 + $0x418] sm:$0xff]
    %v1619 = vld [vmem:[#allocation9 + $0x420] sm:$0xff]
    %v1620 = vld [vmem:[#allocation9 + $0x428] sm:$0xff]
    %v1621 = vld [vmem:[#allocation9 + $0x430] sm:$0xff]
    %v1622 = vld [vmem:[#allocation9 + $0x438] sm:$0xff]
    %v1623 = vld [vmem:[#allocation9 + $0x440] sm:$0xff]
    %v1624 = vld [vmem:[#allocation9 + $0x448] sm:$0xff]
    %v1625 = vld [vmem:[#allocation9 + $0x450] sm:$0xff]
    %v1626 = vld [vmem:[#allocation9 + $0x458] sm:$0xff]
    %v1627 = vld [vmem:[#allocation9 + $0x460] sm:$0xff]
    %v1628 = vld [vmem:[#allocation9 + $0x468] sm:$0xff]
    %v1629 = vld [vmem:[#allocation9 + $0x470] sm:$0xff]
    %v1630 = vld [vmem:[#allocation9 + $0x478] sm:$0xff]
    %v1631 = vld [vmem:[#allocation9 + $0x480] sm:$0xff]
    %v1632 = vld [vmem:[#allocation9 + $0x488] sm:$0xff]
    %v1633 = vld [vmem:[#allocation9 + $0x490] sm:$0xff]
    %v1634 = vld [vmem:[#allocation9 + $0x498] sm:$0xff]
    %v1635 = vld [vmem:[#allocation9 + $0x4a0] sm:$0xff]
    %v1636 = vld [vmem:[#allocation9 + $0x4a8] sm:$0xff]
    %v1637 = vld [vmem:[#allocation9 + $0x4b0] sm:$0xff]
    %v1638 = vld [vmem:[#allocation9 + $0x4b8] sm:$0xff]
    %v1639 = vld [vmem:[#allocation9 + $0x4c0] sm:$0xff]
    %v1640 = vld [vmem:[#allocation9 + $0x4c8] sm:$0xff]
    %v1641 = vld [vmem:[#allocation9 + $0x4d0] sm:$0xff]
    %v1642 = vld [vmem:[#allocation9 + $0x4d8] sm:$0xff]
    %v1643 = vld [vmem:[#allocation9 + $0x4e0] sm:$0xff]
    %v1644 = vld [vmem:[#allocation9 + $0x4e8] sm:$0xff]
    %v1645 = vld [vmem:[#allocation9 + $0x4f0] sm:$0xff]
    %v1646 = vld [vmem:[#allocation9 + $0x4f8] sm:$0xff]
    %v1647 = vld [vmem:[#allocation9 + $0x500] sm:$0xff]
    %v1648 = vld [vmem:[#allocation9 + $0x508] sm:$0xff]
    %v1649 = vld [vmem:[#allocation9 + $0x510] sm:$0xff]
    %v1650 = vld [vmem:[#allocation9 + $0x518] sm:$0xff]
    %v1651 = vld [vmem:[#allocation9 + $0x520] sm:$0xff]
    %v1652 = vld [vmem:[#allocation9 + $0x528] sm:$0xff]
    %v1653 = vld [vmem:[#allocation9 + $0x530] sm:$0xff]
    %v1654 = vld [vmem:[#allocation9 + $0x538] sm:$0xff]
    %v1655 = vld [vmem:[#allocation9 + $0x540] sm:$0xff]
    %v1656 = vld [vmem:[#allocation9 + $0x548] sm:$0xff]
    %v1657 = vld [vmem:[#allocation9 + $0x550] sm:$0xff]
    %v1658 = vld [vmem:[#allocation9 + $0x558] sm:$0xff]
    %v1659 = vld [vmem:[#allocation9 + $0x560] sm:$0xff]
    %v1660 = vld [vmem:[#allocation9 + $0x568] sm:$0xff]
    %v1661 = vld [vmem:[#allocation9 + $0x570] sm:$0xff]
    %v1662 = vld [vmem:[#allocation9 + $0x578] sm:$0xff]
    %v1663 = vld [vmem:[#allocation9 + $0x580] sm:$0xff]
    %v1664 = vld [vmem:[#allocation9 + $0x588] sm:$0xff]
    %v1665 = vld [vmem:[#allocation9 + $0x590] sm:$0xff]
    %v1666 = vld [vmem:[#allocation9 + $0x598] sm:$0xff]
    %v1667 = vld [vmem:[#allocation9 + $0x5a0] sm:$0xff]
    %v1668 = vld [vmem:[#allocation9 + $0x5a8] sm:$0xff]
    %v1669 = vld [vmem:[#allocation9 + $0x5b0] sm:$0xff]
    %v1670 = vld [vmem:[#allocation9 + $0x5b8] sm:$0xff]
    %v1671 = vld [vmem:[#allocation9 + $0x5c0] sm:$0xff]
    %v1672 = vld [vmem:[#allocation9 + $0x5c8] sm:$0xff]
    %v1673 = vld [vmem:[#allocation9 + $0x5d0] sm:$0xff]
    %v1674 = vld [vmem:[#allocation9 + $0x5d8] sm:$0xff]
    %v1675 = vld [vmem:[#allocation9 + $0x5e0] sm:$0xff]
    %v1676 = vld [vmem:[#allocation9 + $0x5e8] sm:$0xff]
    %v1677 = vld [vmem:[#allocation9 + $0x5f0] sm:$0xff]
    %v1678 = vld [vmem:[#allocation9 + $0x5f8] sm:$0xff]
    %v1679 = vld [vmem:[#allocation9 + $0x600] sm:$0xff]
    %v1680 = vld [vmem:[#allocation9 + $0x608] sm:$0xff]
    %v1681 = vld [vmem:[#allocation9 + $0x610] sm:$0xff]
    %v1682 = vld [vmem:[#allocation9 + $0x618] sm:$0xff]
    %v1683 = vld [vmem:[#allocation9 + $0x620] sm:$0xff]
    %v1684 = vld [vmem:[#allocation9 + $0x628] sm:$0xff]
    %v1685 = vld [vmem:[#allocation9 + $0x630] sm:$0xff]
    %v1686 = vld [vmem:[#allocation9 + $0x638] sm:$0xff]
    %v1687 = vld [vmem:[#allocation9 + $0x640] sm:$0xff]
    %v1688 = vld [vmem:[#allocation9 + $0x648] sm:$0xff]
    %v1689 = vld [vmem:[#allocation9 + $0x650] sm:$0xff]
    %v1690 = vld [vmem:[#allocation9 + $0x658] sm:$0xff]
    %v1691 = vld [vmem:[#allocation9 + $0x660] sm:$0xff]
    %v1692 = vld [vmem:[#allocation9 + $0x668] sm:$0xff]
    %v1693 = vld [vmem:[#allocation9 + $0x670] sm:$0xff]
    %v1694 = vld [vmem:[#allocation9 + $0x678] sm:$0xff]
    %v1695 = vld [vmem:[#allocation9 + $0x680] sm:$0xff]
    %v1696 = vld [vmem:[#allocation9 + $0x688] sm:$0xff]
    %v1697 = vld [vmem:[#allocation9 + $0x690] sm:$0xff]
    %v1698 = vld [vmem:[#allocation9 + $0x698] sm:$0xff]
    %v1699 = vld [vmem:[#allocation9 + $0x6a0] sm:$0xff]
    %v1700 = vld [vmem:[#allocation9 + $0x6a8] sm:$0xff]
    %v1701 = vld [vmem:[#allocation9 + $0x6b0] sm:$0xff]
    %v1702 = vld [vmem:[#allocation9 + $0x6b8] sm:$0xff]
    %v1703 = vld [vmem:[#allocation9 + $0x6c0] sm:$0xff]
    %v1704 = vld [vmem:[#allocation9 + $0x6c8] sm:$0xff]
    %v1705 = vld [vmem:[#allocation9 + $0x6d0] sm:$0xff]
    %v1706 = vld [vmem:[#allocation9 + $0x6d8] sm:$0xff]
    %v1707 = vld [vmem:[#allocation9 + $0x6e0] sm:$0xff]
    %v1708 = vld [vmem:[#allocation9 + $0x6e8] sm:$0xff]
    %v1709 = vld [vmem:[#allocation9 + $0x6f0] sm:$0xff]
    %v1710 = vld [vmem:[#allocation9 + $0x6f8] sm:$0xff]
    %v1711 = vld [vmem:[#allocation9 + $0x700] sm:$0xff]
    %v1712 = vld [vmem:[#allocation9 + $0x708] sm:$0xff]
    %v1713 = vld [vmem:[#allocation9 + $0x710] sm:$0xff]
    %v1714 = vld [vmem:[#allocation9 + $0x718] sm:$0xff]
    %v1715 = vld [vmem:[#allocation9 + $0x720] sm:$0xff]
    %v1716 = vld [vmem:[#allocation9 + $0x728] sm:$0xff]
    %v1717 = vld [vmem:[#allocation9 + $0x730] sm:$0xff]
    %v1718 = vld [vmem:[#allocation9 + $0x738] sm:$0xff]
    %v1719 = vld [vmem:[#allocation9 + $0x740] sm:$0xff]
    %v1720 = vld [vmem:[#allocation9 + $0x748] sm:$0xff]
    %v1721 = vld [vmem:[#allocation9 + $0x750] sm:$0xff]
    %v1722 = vld [vmem:[#allocation9 + $0x758] sm:$0xff]
    %v1723 = vld [vmem:[#allocation9 + $0x760] sm:$0xff]
    %v1724 = vld [vmem:[#allocation9 + $0x768] sm:$0xff]
    %v1725 = vld [vmem:[#allocation9 + $0x770] sm:$0xff]
    %v1726 = vld [vmem:[#allocation9 + $0x778] sm:$0xff]
    %v1727 = vld [vmem:[#allocation9 + $0x780] sm:$0xff]
    %v1728 = vld [vmem:[#allocation9 + $0x788] sm:$0xff]
    %v1729 = vld [vmem:[#allocation9 + $0x790] sm:$0xff]
    %v1730 = vld [vmem:[#allocation9 + $0x798] sm:$0xff]
    %v1731 = vld [vmem:[#allocation9 + $0x7a0] sm:$0xff]
    %v1732 = vld [vmem:[#allocation9 + $0x7a8] sm:$0xff]
    %v1733 = vld [vmem:[#allocation9 + $0x7b0] sm:$0xff]
    %v1734 = vld [vmem:[#allocation9 + $0x7b8] sm:$0xff]
    %v1735 = vld [vmem:[#allocation9 + $0x7c0] sm:$0xff]
    %v1736 = vld [vmem:[#allocation9 + $0x7c8] sm:$0xff]
    %v1737 = vld [vmem:[#allocation9 + $0x7d0] sm:$0xff]
    %v1738 = vld [vmem:[#allocation9 + $0x7d8] sm:$0xff]
    %v1739 = vld [vmem:[#allocation9 + $0x7e0] sm:$0xff]
    %v1740 = vld [vmem:[#allocation9 + $0x7e8] sm:$0xff]
    %v1741 = vld [vmem:[#allocation9 + $0x7f0] sm:$0xff]
    %v1742 = vld [vmem:[#allocation9 + $0x7f8] sm:$0xff]
    %v1743 = vld [vmem:[#allocation9 + $0x800] sm:$0xff]
    %v1744 = vld [vmem:[#allocation9 + $0x808] sm:$0xff]
    %v1745 = vld [vmem:[#allocation9 + $0x810] sm:$0xff]
    %v1746 = vld [vmem:[#allocation9 + $0x818] sm:$0xff]
    %v1747 = vld [vmem:[#allocation9 + $0x820] sm:$0xff]
    %v1748 = vld [vmem:[#allocation9 + $0x828] sm:$0xff]
    %v1749 = vld [vmem:[#allocation9 + $0x830] sm:$0xff]
    %v1750 = vld [vmem:[#allocation9 + $0x838] sm:$0xff]
    %v1751 = vld [vmem:[#allocation9 + $0x840] sm:$0xff]
    %v1752 = vld [vmem:[#allocation9 + $0x848] sm:$0xff]
    %v1753 = vld [vmem:[#allocation9 + $0x850] sm:$0xff]
    %v1754 = vld [vmem:[#allocation9 + $0x858] sm:$0xff]
    %v1755 = vld [vmem:[#allocation9 + $0x860] sm:$0xff]
    %v1756 = vld [vmem:[#allocation9 + $0x868] sm:$0xff]
    %v1757 = vld [vmem:[#allocation9 + $0x870] sm:$0xff]
    %v1758 = vld [vmem:[#allocation9 + $0x878] sm:$0xff]
    %v1759 = vld [vmem:[#allocation9 + $0x880] sm:$0xff]
    %v1760 = vld [vmem:[#allocation9 + $0x888] sm:$0xff]
    %v1761 = vld [vmem:[#allocation9 + $0x890] sm:$0xff]
    %v1762 = vld [vmem:[#allocation9 + $0x898] sm:$0xff]
    %v1763 = vld [vmem:[#allocation9 + $0x8a0] sm:$0xff]
    %v1764 = vld [vmem:[#allocation9 + $0x8a8] sm:$0xff]
    %v1765 = vld [vmem:[#allocation9 + $0x8b0] sm:$0xff]
    %v1766 = vld [vmem:[#allocation9 + $0x8b8] sm:$0xff]
    %v1767 = vld [vmem:[#allocation9 + $0x8c0] sm:$0xff]
    %v1768 = vld [vmem:[#allocation9 + $0x8c8] sm:$0xff]
    %v1769 = vld [vmem:[#allocation9 + $0x8d0] sm:$0xff]
    %v1770 = vld [vmem:[#allocation9 + $0x8d8] sm:$0xff]
    %v1771 = vld [vmem:[#allocation9 + $0x8e0] sm:$0xff]
    %v1772 = vld [vmem:[#allocation9 + $0x8e8] sm:$0xff]
    %v1773 = vld [vmem:[#allocation9 + $0x8f0] sm:$0xff]
    %v1774 = vld [vmem:[#allocation9 + $0x8f8] sm:$0xff]
    %v1775 = vld [vmem:[#allocation3] sm:$0xfc]
    %v1776 = vld [vmem:[#allocation3 + $0x8] sm:$0xfc]
    %v1777 = vld [vmem:[#allocation3 + $0x10] sm:$0xfc]
    %v1778 = vld [vmem:[#allocation3 + $0x18] sm:$0xfc]
    %v1779 = vld [vmem:[#allocation3 + $0x20] sm:$0xfc]
    %v1780 = vld [vmem:[#allocation3 + $0x28] sm:$0xfc]
    %v1781 = vld [vmem:[#allocation3 + $0x60] sm:$0x3]
    %v1782 = vld [vmem:[#allocation3 + $0x68] sm:$0x3]
    %v1783 = vld [vmem:[#allocation3 + $0x70] sm:$0x3]
    %v1784 = vld [vmem:[#allocation3 + $0x78] sm:$0x3]
    %v1785 = vld [vmem:[#allocation3 + $0x80] sm:$0x3]
    %v1786 = vld [vmem:[#allocation3 + $0x88] sm:$0x3]
    %s1787 = scalar_lea.vmem [#allocation9], 2304
    %v1788 = vld [vmem:[%s1787] sm:$0xff]
    %v1789 = vld [vmem:[%s1787 + $0x8] sm:$0xff]
    %v1790 = vld [vmem:[%s1787 + $0x10] sm:$0xff]
    %v1791 = vld [vmem:[%s1787 + $0x18] sm:$0xff]
    %v1792 = vld [vmem:[%s1787 + $0x20] sm:$0xff]
    %v1793 = vld [vmem:[%s1787 + $0x28] sm:$0xff]
    %v1794 = vld [vmem:[%s1787 + $0x30] sm:$0xff]
    %v1795 = vld [vmem:[%s1787 + $0x38] sm:$0xff]
    %v1796 = vld [vmem:[%s1787 + $0x40] sm:$0xff]
    %v1797 = vld [vmem:[%s1787 + $0x48] sm:$0xff]
    %v1798 = vld [vmem:[%s1787 + $0x50] sm:$0xff]
    %v1799 = vld [vmem:[%s1787 + $0x58] sm:$0xff]
    %v1800 = vld [vmem:[%s1787 + $0x60] sm:$0xff]
    %v1801 = vld [vmem:[%s1787 + $0x68] sm:$0xff]
    %v1802 = vld [vmem:[%s1787 + $0x70] sm:$0xff]
    %v1803 = vld [vmem:[%s1787 + $0x78] sm:$0xff]
    %v1804 = vld [vmem:[%s1787 + $0x80] sm:$0xff]
    %v1805 = vld [vmem:[%s1787 + $0x88] sm:$0xff]
    %v1806 = vld [vmem:[%s1787 + $0x90] sm:$0xff]
    %v1807 = vld [vmem:[%s1787 + $0x98] sm:$0xff]
    %v1808 = vld [vmem:[%s1787 + $0xa0] sm:$0xff]
    %v1809 = vld [vmem:[%s1787 + $0xa8] sm:$0xff]
    %v1810 = vld [vmem:[%s1787 + $0xb0] sm:$0xff]
    %v1811 = vld [vmem:[%s1787 + $0xb8] sm:$0xff]
    %v1812 = vld [vmem:[%s1787 + $0xc0] sm:$0xff]
    %v1813 = vld [vmem:[%s1787 + $0xc8] sm:$0xff]
    %v1814 = vld [vmem:[%s1787 + $0xd0] sm:$0xff]
    %v1815 = vld [vmem:[%s1787 + $0xd8] sm:$0xff]
    %v1816 = vld [vmem:[%s1787 + $0xe0] sm:$0xff]
    %v1817 = vld [vmem:[%s1787 + $0xe8] sm:$0xff]
    %v1818 = vld [vmem:[%s1787 + $0xf0] sm:$0xff]
    %v1819 = vld [vmem:[%s1787 + $0xf8] sm:$0xff]
    %v1820 = vld [vmem:[%s1787 + $0x100] sm:$0xff]
    %v1821 = vld [vmem:[%s1787 + $0x108] sm:$0xff]
    %v1822 = vld [vmem:[%s1787 + $0x110] sm:$0xff]
    %v1823 = vld [vmem:[%s1787 + $0x118] sm:$0xff]
    %v1824 = vld [vmem:[%s1787 + $0x120] sm:$0xff]
    %v1825 = vld [vmem:[%s1787 + $0x128] sm:$0xff]
    %v1826 = vld [vmem:[%s1787 + $0x130] sm:$0xff]
    %v1827 = vld [vmem:[%s1787 + $0x138] sm:$0xff]
    %v1828 = vld [vmem:[%s1787 + $0x140] sm:$0xff]
    %v1829 = vld [vmem:[%s1787 + $0x148] sm:$0xff]
    %v1830 = vld [vmem:[%s1787 + $0x150] sm:$0xff]
    %v1831 = vld [vmem:[%s1787 + $0x158] sm:$0xff]
    %v1832 = vld [vmem:[%s1787 + $0x160] sm:$0xff]
    %v1833 = vld [vmem:[%s1787 + $0x168] sm:$0xff]
    %v1834 = vld [vmem:[%s1787 + $0x170] sm:$0xff]
    %v1835 = vld [vmem:[%s1787 + $0x178] sm:$0xff]
    %v1836 = vld [vmem:[%s1787 + $0x180] sm:$0xff]
    %v1837 = vld [vmem:[%s1787 + $0x188] sm:$0xff]
    %v1838 = vld [vmem:[%s1787 + $0x190] sm:$0xff]
    %v1839 = vld [vmem:[%s1787 + $0x198] sm:$0xff]
    %v1840 = vld [vmem:[%s1787 + $0x1a0] sm:$0xff]
    %v1841 = vld [vmem:[%s1787 + $0x1a8] sm:$0xff]
    %v1842 = vld [vmem:[%s1787 + $0x1b0] sm:$0xff]
    %v1843 = vld [vmem:[%s1787 + $0x1b8] sm:$0xff]
    %v1844 = vld [vmem:[%s1787 + $0x1c0] sm:$0xff]
    %v1845 = vld [vmem:[%s1787 + $0x1c8] sm:$0xff]
    %v1846 = vld [vmem:[%s1787 + $0x1d0] sm:$0xff]
    %v1847 = vld [vmem:[%s1787 + $0x1d8] sm:$0xff]
    %v1848 = vld [vmem:[%s1787 + $0x1e0] sm:$0xff]
    %v1849 = vld [vmem:[%s1787 + $0x1e8] sm:$0xff]
    %v1850 = vld [vmem:[%s1787 + $0x1f0] sm:$0xff]
    %v1851 = vld [vmem:[%s1787 + $0x1f8] sm:$0xff]
    %v1852 = vld [vmem:[%s1787 + $0x200] sm:$0xff]
    %v1853 = vld [vmem:[%s1787 + $0x208] sm:$0xff]
    %v1854 = vld [vmem:[%s1787 + $0x210] sm:$0xff]
    %v1855 = vld [vmem:[%s1787 + $0x218] sm:$0xff]
    %v1856 = vld [vmem:[%s1787 + $0x220] sm:$0xff]
    %v1857 = vld [vmem:[%s1787 + $0x228] sm:$0xff]
    %v1858 = vld [vmem:[%s1787 + $0x230] sm:$0xff]
    %v1859 = vld [vmem:[%s1787 + $0x238] sm:$0xff]
    %v1860 = vld [vmem:[%s1787 + $0x240] sm:$0xff]
    %v1861 = vld [vmem:[%s1787 + $0x248] sm:$0xff]
    %v1862 = vld [vmem:[%s1787 + $0x250] sm:$0xff]
    %v1863 = vld [vmem:[%s1787 + $0x258] sm:$0xff]
    %v1864 = vld [vmem:[%s1787 + $0x260] sm:$0xff]
    %v1865 = vld [vmem:[%s1787 + $0x268] sm:$0xff]
    %v1866 = vld [vmem:[%s1787 + $0x270] sm:$0xff]
    %v1867 = vld [vmem:[%s1787 + $0x278] sm:$0xff]
    %v1868 = vld [vmem:[%s1787 + $0x280] sm:$0xff]
    %v1869 = vld [vmem:[%s1787 + $0x288] sm:$0xff]
    %v1870 = vld [vmem:[%s1787 + $0x290] sm:$0xff]
    %v1871 = vld [vmem:[%s1787 + $0x298] sm:$0xff]
    %v1872 = vld [vmem:[%s1787 + $0x2a0] sm:$0xff]
    %v1873 = vld [vmem:[%s1787 + $0x2a8] sm:$0xff]
    %v1874 = vld [vmem:[%s1787 + $0x2b0] sm:$0xff]
    %v1875 = vld [vmem:[%s1787 + $0x2b8] sm:$0xff]
    %v1876 = vld [vmem:[%s1787 + $0x2c0] sm:$0xff]
    %v1877 = vld [vmem:[%s1787 + $0x2c8] sm:$0xff]
    %v1878 = vld [vmem:[%s1787 + $0x2d0] sm:$0xff]
    %v1879 = vld [vmem:[%s1787 + $0x2d8] sm:$0xff]
    %v1880 = vld [vmem:[%s1787 + $0x2e0] sm:$0xff]
    %v1881 = vld [vmem:[%s1787 + $0x2e8] sm:$0xff]
    %v1882 = vld [vmem:[%s1787 + $0x2f0] sm:$0xff]
    %v1883 = vld [vmem:[%s1787 + $0x2f8] sm:$0xff]
    %v1884 = vld [vmem:[%s1787 + $0x300] sm:$0xff]
    %v1885 = vld [vmem:[%s1787 + $0x308] sm:$0xff]
    %v1886 = vld [vmem:[%s1787 + $0x310] sm:$0xff]
    %v1887 = vld [vmem:[%s1787 + $0x318] sm:$0xff]
    %v1888 = vld [vmem:[%s1787 + $0x320] sm:$0xff]
    %v1889 = vld [vmem:[%s1787 + $0x328] sm:$0xff]
    %v1890 = vld [vmem:[%s1787 + $0x330] sm:$0xff]
    %v1891 = vld [vmem:[%s1787 + $0x338] sm:$0xff]
    %v1892 = vld [vmem:[%s1787 + $0x340] sm:$0xff]
    %v1893 = vld [vmem:[%s1787 + $0x348] sm:$0xff]
    %v1894 = vld [vmem:[%s1787 + $0x350] sm:$0xff]
    %v1895 = vld [vmem:[%s1787 + $0x358] sm:$0xff]
    %v1896 = vld [vmem:[%s1787 + $0x360] sm:$0xff]
    %v1897 = vld [vmem:[%s1787 + $0x368] sm:$0xff]
    %v1898 = vld [vmem:[%s1787 + $0x370] sm:$0xff]
    %v1899 = vld [vmem:[%s1787 + $0x378] sm:$0xff]
    %v1900 = vld [vmem:[%s1787 + $0x380] sm:$0xff]
    %v1901 = vld [vmem:[%s1787 + $0x388] sm:$0xff]
    %v1902 = vld [vmem:[%s1787 + $0x390] sm:$0xff]
    %v1903 = vld [vmem:[%s1787 + $0x398] sm:$0xff]
    %v1904 = vld [vmem:[%s1787 + $0x3a0] sm:$0xff]
    %v1905 = vld [vmem:[%s1787 + $0x3a8] sm:$0xff]
    %v1906 = vld [vmem:[%s1787 + $0x3b0] sm:$0xff]
    %v1907 = vld [vmem:[%s1787 + $0x3b8] sm:$0xff]
    %v1908 = vld [vmem:[%s1787 + $0x3c0] sm:$0xff]
    %v1909 = vld [vmem:[%s1787 + $0x3c8] sm:$0xff]
    %v1910 = vld [vmem:[%s1787 + $0x3d0] sm:$0xff]
    %v1911 = vld [vmem:[%s1787 + $0x3d8] sm:$0xff]
    %v1912 = vld [vmem:[%s1787 + $0x3e0] sm:$0xff]
    %v1913 = vld [vmem:[%s1787 + $0x3e8] sm:$0xff]
    %v1914 = vld [vmem:[%s1787 + $0x3f0] sm:$0xff]
    %v1915 = vld [vmem:[%s1787 + $0x3f8] sm:$0xff]
    %v1916 = vld [vmem:[%s1787 + $0x400] sm:$0xff]
    %v1917 = vld [vmem:[%s1787 + $0x408] sm:$0xff]
    %v1918 = vld [vmem:[%s1787 + $0x410] sm:$0xff]
    %v1919 = vld [vmem:[%s1787 + $0x418] sm:$0xff]
    %v1920 = vld [vmem:[%s1787 + $0x420] sm:$0xff]
    %v1921 = vld [vmem:[%s1787 + $0x428] sm:$0xff]
    %v1922 = vld [vmem:[%s1787 + $0x430] sm:$0xff]
    %v1923 = vld [vmem:[%s1787 + $0x438] sm:$0xff]
    %v1924 = vld [vmem:[%s1787 + $0x440] sm:$0xff]
    %v1925 = vld [vmem:[%s1787 + $0x448] sm:$0xff]
    %v1926 = vld [vmem:[%s1787 + $0x450] sm:$0xff]
    %v1927 = vld [vmem:[%s1787 + $0x458] sm:$0xff]
    %v1928 = vld [vmem:[%s1787 + $0x460] sm:$0xff]
    %v1929 = vld [vmem:[%s1787 + $0x468] sm:$0xff]
    %v1930 = vld [vmem:[%s1787 + $0x470] sm:$0xff]
    %v1931 = vld [vmem:[%s1787 + $0x478] sm:$0xff]
    %v1932 = vld [vmem:[%s1787 + $0x480] sm:$0xff]
    %v1933 = vld [vmem:[%s1787 + $0x488] sm:$0xff]
    %v1934 = vld [vmem:[%s1787 + $0x490] sm:$0xff]
    %v1935 = vld [vmem:[%s1787 + $0x498] sm:$0xff]
    %v1936 = vld [vmem:[%s1787 + $0x4a0] sm:$0xff]
    %v1937 = vld [vmem:[%s1787 + $0x4a8] sm:$0xff]
    %v1938 = vld [vmem:[%s1787 + $0x4b0] sm:$0xff]
    %v1939 = vld [vmem:[%s1787 + $0x4b8] sm:$0xff]
    %v1940 = vld [vmem:[%s1787 + $0x4c0] sm:$0xff]
    %v1941 = vld [vmem:[%s1787 + $0x4c8] sm:$0xff]
    %v1942 = vld [vmem:[%s1787 + $0x4d0] sm:$0xff]
    %v1943 = vld [vmem:[%s1787 + $0x4d8] sm:$0xff]
    %v1944 = vld [vmem:[%s1787 + $0x4e0] sm:$0xff]
    %v1945 = vld [vmem:[%s1787 + $0x4e8] sm:$0xff]
    %v1946 = vld [vmem:[%s1787 + $0x4f0] sm:$0xff]
    %v1947 = vld [vmem:[%s1787 + $0x4f8] sm:$0xff]
    %v1948 = vld [vmem:[%s1787 + $0x500] sm:$0xff]
    %v1949 = vld [vmem:[%s1787 + $0x508] sm:$0xff]
    %v1950 = vld [vmem:[%s1787 + $0x510] sm:$0xff]
    %v1951 = vld [vmem:[%s1787 + $0x518] sm:$0xff]
    %v1952 = vld [vmem:[%s1787 + $0x520] sm:$0xff]
    %v1953 = vld [vmem:[%s1787 + $0x528] sm:$0xff]
    %v1954 = vld [vmem:[%s1787 + $0x530] sm:$0xff]
    %v1955 = vld [vmem:[%s1787 + $0x538] sm:$0xff]
    %v1956 = vld [vmem:[%s1787 + $0x540] sm:$0xff]
    %v1957 = vld [vmem:[%s1787 + $0x548] sm:$0xff]
    %v1958 = vld [vmem:[%s1787 + $0x550] sm:$0xff]
    %v1959 = vld [vmem:[%s1787 + $0x558] sm:$0xff]
    %v1960 = vld [vmem:[%s1787 + $0x560] sm:$0xff]
    %v1961 = vld [vmem:[%s1787 + $0x568] sm:$0xff]
    %v1962 = vld [vmem:[%s1787 + $0x570] sm:$0xff]
    %v1963 = vld [vmem:[%s1787 + $0x578] sm:$0xff]
    %v1964 = vld [vmem:[%s1787 + $0x580] sm:$0xff]
    %v1965 = vld [vmem:[%s1787 + $0x588] sm:$0xff]
    %v1966 = vld [vmem:[%s1787 + $0x590] sm:$0xff]
    %v1967 = vld [vmem:[%s1787 + $0x598] sm:$0xff]
    %v1968 = vld [vmem:[%s1787 + $0x5a0] sm:$0xff]
    %v1969 = vld [vmem:[%s1787 + $0x5a8] sm:$0xff]
    %v1970 = vld [vmem:[%s1787 + $0x5b0] sm:$0xff]
    %v1971 = vld [vmem:[%s1787 + $0x5b8] sm:$0xff]
    %v1972 = vld [vmem:[%s1787 + $0x5c0] sm:$0xff]
    %v1973 = vld [vmem:[%s1787 + $0x5c8] sm:$0xff]
    %v1974 = vld [vmem:[%s1787 + $0x5d0] sm:$0xff]
    %v1975 = vld [vmem:[%s1787 + $0x5d8] sm:$0xff]
    %v1976 = vld [vmem:[%s1787 + $0x5e0] sm:$0xff]
    %v1977 = vld [vmem:[%s1787 + $0x5e8] sm:$0xff]
    %v1978 = vld [vmem:[%s1787 + $0x5f0] sm:$0xff]
    %v1979 = vld [vmem:[%s1787 + $0x5f8] sm:$0xff]
    %v1980 = vld [vmem:[%s1787 + $0x600] sm:$0xff]
    %v1981 = vld [vmem:[%s1787 + $0x608] sm:$0xff]
    %v1982 = vld [vmem:[%s1787 + $0x610] sm:$0xff]
    %v1983 = vld [vmem:[%s1787 + $0x618] sm:$0xff]
    %v1984 = vld [vmem:[%s1787 + $0x620] sm:$0xff]
    %v1985 = vld [vmem:[%s1787 + $0x628] sm:$0xff]
    %v1986 = vld [vmem:[%s1787 + $0x630] sm:$0xff]
    %v1987 = vld [vmem:[%s1787 + $0x638] sm:$0xff]
    %v1988 = vld [vmem:[%s1787 + $0x640] sm:$0xff]
    %v1989 = vld [vmem:[%s1787 + $0x648] sm:$0xff]
    %v1990 = vld [vmem:[%s1787 + $0x650] sm:$0xff]
    %v1991 = vld [vmem:[%s1787 + $0x658] sm:$0xff]
    %v1992 = vld [vmem:[%s1787 + $0x660] sm:$0xff]
    %v1993 = vld [vmem:[%s1787 + $0x668] sm:$0xff]
    %v1994 = vld [vmem:[%s1787 + $0x670] sm:$0xff]
    %v1995 = vld [vmem:[%s1787 + $0x678] sm:$0xff]
    %v1996 = vld [vmem:[%s1787 + $0x680] sm:$0xff]
    %v1997 = vld [vmem:[%s1787 + $0x688] sm:$0xff]
    %v1998 = vld [vmem:[%s1787 + $0x690] sm:$0xff]
    %v1999 = vld [vmem:[%s1787 + $0x698] sm:$0xff]
    %v2000 = vld [vmem:[%s1787 + $0x6a0] sm:$0xff]
    %v2001 = vld [vmem:[%s1787 + $0x6a8] sm:$0xff]
    %v2002 = vld [vmem:[%s1787 + $0x6b0] sm:$0xff]
    %v2003 = vld [vmem:[%s1787 + $0x6b8] sm:$0xff]
    %v2004 = vld [vmem:[%s1787 + $0x6c0] sm:$0xff]
    %v2005 = vld [vmem:[%s1787 + $0x6c8] sm:$0xff]
    %v2006 = vld [vmem:[%s1787 + $0x6d0] sm:$0xff]
    %v2007 = vld [vmem:[%s1787 + $0x6d8] sm:$0xff]
    %v2008 = vld [vmem:[%s1787 + $0x6e0] sm:$0xff]
    %v2009 = vld [vmem:[%s1787 + $0x6e8] sm:$0xff]
    %v2010 = vld [vmem:[%s1787 + $0x6f0] sm:$0xff]
    %v2011 = vld [vmem:[%s1787 + $0x6f8] sm:$0xff]
    %v2012 = vld [vmem:[%s1787 + $0x700] sm:$0xff]
    %v2013 = vld [vmem:[%s1787 + $0x708] sm:$0xff]
    %v2014 = vld [vmem:[%s1787 + $0x710] sm:$0xff]
    %v2015 = vld [vmem:[%s1787 + $0x718] sm:$0xff]
    %v2016 = vld [vmem:[%s1787 + $0x720] sm:$0xff]
    %v2017 = vld [vmem:[%s1787 + $0x728] sm:$0xff]
    %v2018 = vld [vmem:[%s1787 + $0x730] sm:$0xff]
    %v2019 = vld [vmem:[%s1787 + $0x738] sm:$0xff]
    %v2020 = vld [vmem:[%s1787 + $0x740] sm:$0xff]
    %v2021 = vld [vmem:[%s1787 + $0x748] sm:$0xff]
    %v2022 = vld [vmem:[%s1787 + $0x750] sm:$0xff]
    %v2023 = vld [vmem:[%s1787 + $0x758] sm:$0xff]
    %v2024 = vld [vmem:[%s1787 + $0x760] sm:$0xff]
    %v2025 = vld [vmem:[%s1787 + $0x768] sm:$0xff]
    %v2026 = vld [vmem:[%s1787 + $0x770] sm:$0xff]
    %v2027 = vld [vmem:[%s1787 + $0x778] sm:$0xff]
    %v2028 = vld [vmem:[%s1787 + $0x780] sm:$0xff]
    %v2029 = vld [vmem:[%s1787 + $0x788] sm:$0xff]
    %v2030 = vld [vmem:[%s1787 + $0x790] sm:$0xff]
    %v2031 = vld [vmem:[%s1787 + $0x798] sm:$0xff]
    %v2032 = vld [vmem:[%s1787 + $0x7a0] sm:$0xff]
    %v2033 = vld [vmem:[%s1787 + $0x7a8] sm:$0xff]
    %v2034 = vld [vmem:[%s1787 + $0x7b0] sm:$0xff]
    %v2035 = vld [vmem:[%s1787 + $0x7b8] sm:$0xff]
    %v2036 = vld [vmem:[%s1787 + $0x7c0] sm:$0xff]
    %v2037 = vld [vmem:[%s1787 + $0x7c8] sm:$0xff]
    %v2038 = vld [vmem:[%s1787 + $0x7d0] sm:$0xff]
    %v2039 = vld [vmem:[%s1787 + $0x7d8] sm:$0xff]
    %v2040 = vld [vmem:[%s1787 + $0x7e0] sm:$0xff]
    %v2041 = vld [vmem:[%s1787 + $0x7e8] sm:$0xff]
    %v2042 = vld [vmem:[%s1787 + $0x7f0] sm:$0xff]
    %v2043 = vld [vmem:[%s1787 + $0x7f8] sm:$0xff]
    %v2044 = vld [vmem:[%s1787 + $0x800] sm:$0xff]
    %v2045 = vld [vmem:[%s1787 + $0x808] sm:$0xff]
    %v2046 = vld [vmem:[%s1787 + $0x810] sm:$0xff]
    %v2047 = vld [vmem:[%s1787 + $0x818] sm:$0xff]
    %v2048 = vld [vmem:[%s1787 + $0x820] sm:$0xff]
    %v2049 = vld [vmem:[%s1787 + $0x828] sm:$0xff]
    %v2050 = vld [vmem:[%s1787 + $0x830] sm:$0xff]
    %v2051 = vld [vmem:[%s1787 + $0x838] sm:$0xff]
    %v2052 = vld [vmem:[%s1787 + $0x840] sm:$0xff]
    %v2053 = vld [vmem:[%s1787 + $0x848] sm:$0xff]
    %v2054 = vld [vmem:[%s1787 + $0x850] sm:$0xff]
    %v2055 = vld [vmem:[%s1787 + $0x858] sm:$0xff]
    %v2056 = vld [vmem:[%s1787 + $0x860] sm:$0xff]
    %v2057 = vld [vmem:[%s1787 + $0x868] sm:$0xff]
    %v2058 = vld [vmem:[%s1787 + $0x870] sm:$0xff]
    %v2059 = vld [vmem:[%s1787 + $0x878] sm:$0xff]
    %v2060 = vld [vmem:[%s1787 + $0x880] sm:$0xff]
    %v2061 = vld [vmem:[%s1787 + $0x888] sm:$0xff]
    %v2062 = vld [vmem:[%s1787 + $0x890] sm:$0xff]
    %v2063 = vld [vmem:[%s1787 + $0x898] sm:$0xff]
    %v2064 = vld [vmem:[%s1787 + $0x8a0] sm:$0xff]
    %v2065 = vld [vmem:[%s1787 + $0x8a8] sm:$0xff]
    %v2066 = vld [vmem:[%s1787 + $0x8b0] sm:$0xff]
    %v2067 = vld [vmem:[%s1787 + $0x8b8] sm:$0xff]
    %v2068 = vld [vmem:[%s1787 + $0x8c0] sm:$0xff]
    %v2069 = vld [vmem:[%s1787 + $0x8c8] sm:$0xff]
    %v2070 = vld [vmem:[%s1787 + $0x8d0] sm:$0xff]
    %v2071 = vld [vmem:[%s1787 + $0x8d8] sm:$0xff]
    %v2072 = vld [vmem:[%s1787 + $0x8e0] sm:$0xff]
    %v2073 = vld [vmem:[%s1787 + $0x8e8] sm:$0xff]
    %v2074 = vld [vmem:[%s1787 + $0x8f0] sm:$0xff]
    %v2075 = vld [vmem:[%s1787 + $0x8f8] sm:$0xff]
    %v2094 = vrot.slane %v1775, 2
    %v2095 = vrot.slane %v1481, 2
    %v2096 = vsel %vm1420, %v2094, %v2095
    %v2097 = vrot.slane %v1776, 2
    %v2098 = vrot.slane %v1482, 2
    %v2099 = vsel %vm1420, %v2097, %v2098
    %v2100 = vrot.slane %v1777, 2
    %v2101 = vrot.slane %v1483, 2
    %v2102 = vsel %vm1420, %v2100, %v2101
    %v2103 = vrot.slane %v1778, 2
    %v2104 = vrot.slane %v1484, 2
    %v2105 = vsel %vm1420, %v2103, %v2104
    %v2106 = vrot.slane %v1779, 2
    %v2107 = vrot.slane %v1485, 2
    %v2108 = vsel %vm1420, %v2106, %v2107
    %v2109 = vrot.slane %v1780, 2
    %v2110 = vrot.slane %v1486, 2
    %v2111 = vsel %vm1420, %v2109, %v2110
    %v2112 = vrot.slane %v1781, 2
    %v2113 = vsel %vm1420, %v2095, %v2112
    %v2114 = vrot.slane %v1782, 2
    %v2115 = vsel %vm1420, %v2098, %v2114
    %v2116 = vrot.slane %v1783, 2
    %v2117 = vsel %vm1420, %v2101, %v2116
    %v2118 = vrot.slane %v1784, 2
    %v2119 = vsel %vm1420, %v2104, %v2118
    %v2120 = vrot.slane %v1785, 2
    %v2121 = vsel %vm1420, %v2107, %v2120
    %v2122 = vrot.slane %v1786, 2
    %v2123 = vsel %vm1420, %v2110, %v2122
    %2136 = vmatpush.msra.mxu0 %v1833
    %2137 = vmatpush.msra.mxu0 %v1830
    %2138 = vmatpush.msra.mxu0 %v1827
    %2139 = vmatpush.msra.mxu0 %v1824
    %2140 = vmatpush.msra.mxu0 %v1821
    %2141 = vmatpush.msra.mxu0 %v1818
    %2142 = vmatpush.msra.mxu0 %v1815
    %2143 = vmatpush.msra.mxu0 %v1812
    %2144 = vmatpush.msra.mxu0 %v1809
    %2145 = vmatpush.msra.mxu0 %v1806
    %2146 = vmatpush.msra.mxu0 %v1803
    %2147 = vmatpush.msra.mxu0 %v1800
    %2148 = vmatpush.msra.mxu0 %v1797
    %2149 = vmatpush.msra.mxu0 %v1794
    %2150 = vmatpush.msra.mxu0 %v1791
    %2151 = vmatpush.msra.mxu0 %v1788
    %2152 = vmatmul.f32.gmra.mxu0 %v2096
    %v2153 = vpop.f32.mrf.mxu0
    %v2154 = vadd.f32 0.0, %v2153
    %2155 = vmatmul.f32.gmra.mxu0 %v2113
    %v2156 = vpop.f32.mrf.mxu0
    %v2157 = vadd.f32 0.0, %v2156
    %2158 = vdwg.mxu0
    %2159 = vmatpush.msra.mxu0 %v1881
    %2160 = vmatpush.msra.mxu0 %v1878
    %2161 = vmatpush.msra.mxu0 %v1875
    %2162 = vmatpush.msra.mxu0 %v1872
    %2163 = vmatpush.msra.mxu0 %v1869
    %2164 = vmatpush.msra.mxu0 %v1866
    %2165 = vmatpush.msra.mxu0 %v1863
    %2166 = vmatpush.msra.mxu0 %v1860
    %2167 = vmatpush.msra.mxu0 %v1857
    %2168 = vmatpush.msra.mxu0 %v1854
    %2169 = vmatpush.msra.mxu0 %v1851
    %2170 = vmatpush.msra.mxu0 %v1848
    %2171 = vmatpush.msra.mxu0 %v1845
    %2172 = vmatpush.msra.mxu0 %v1842
    %2173 = vmatpush.msra.mxu0 %v1839
    %2174 = vmatpush.msra.mxu0 %v1836
    %2175 = vmatmul.f32.gmra.mxu0 %v2099
    %v2176 = vpop.f32.mrf.mxu0
    %v2177 = vadd.f32 %v2154, %v2176
    %2178 = vmatmul.f32.gmra.mxu0 %v2115
    %v2179 = vpop.f32.mrf.mxu0
    %v2180 = vadd.f32 %v2157, %v2179
    %2181 = vdwg.mxu0
    %2182 = vmatpush.msra.mxu0 %v1929
    %2183 = vmatpush.msra.mxu0 %v1926
    %2184 = vmatpush.msra.mxu0 %v1923
    %2185 = vmatpush.msra.mxu0 %v1920
    %2186 = vmatpush.msra.mxu0 %v1917
    %2187 = vmatpush.msra.mxu0 %v1914
    %2188 = vmatpush.msra.mxu0 %v1911
    %2189 = vmatpush.msra.mxu0 %v1908
    %2190 = vmatpush.msra.mxu0 %v1905
    %2191 = vmatpush.msra.mxu0 %v1902
    %2192 = vmatpush.msra.mxu0 %v1899
    %2193 = vmatpush.msra.mxu0 %v1896
    %2194 = vmatpush.msra.mxu0 %v1893
    %2195 = vmatpush.msra.mxu0 %v1890
    %2196 = vmatpush.msra.mxu0 %v1887
    %2197 = vmatpush.msra.mxu0 %v1884
    %2198 = vmatmul.f32.gmra.mxu0 %v2102
    %v2199 = vpop.f32.mrf.mxu0
    %v2200 = vadd.f32 %v2177, %v2199
    %2201 = vmatmul.f32.gmra.mxu0 %v2117
    %v2202 = vpop.f32.mrf.mxu0
    %v2203 = vadd.f32 %v2180, %v2202
    %2204 = vdwg.mxu0
    %2205 = vmatpush.msra.mxu0 %v1977
    %2206 = vmatpush.msra.mxu0 %v1974
    %2207 = vmatpush.msra.mxu0 %v1971
    %2208 = vmatpush.msra.mxu0 %v1968
    %2209 = vmatpush.msra.mxu0 %v1965
    %2210 = vmatpush.msra.mxu0 %v1962
    %2211 = vmatpush.msra.mxu0 %v1959
    %2212 = vmatpush.msra.mxu0 %v1956
    %2213 = vmatpush.msra.mxu0 %v1953
    %2214 = vmatpush.msra.mxu0 %v1950
    %2215 = vmatpush.msra.mxu0 %v1947
    %2216 = vmatpush.msra.mxu0 %v1944
    %2217 = vmatpush.msra.mxu0 %v1941
    %2218 = vmatpush.msra.mxu0 %v1938
    %2219 = vmatpush.msra.mxu0 %v1935
    %2220 = vmatpush.msra.mxu0 %v1932
    %2221 = vmatmul.f32.gmra.mxu0 %v2105
    %v2222 = vpop.f32.mrf.mxu0
    %v2223 = vadd.f32 %v2200, %v2222
    %2224 = vmatmul.f32.gmra.mxu0 %v2119
    %v2225 = vpop.f32.mrf.mxu0
    %v2226 = vadd.f32 %v2203, %v2225
    %2227 = vdwg.mxu0
    %2228 = vmatpush.msra.mxu0 %v2025
    %2229 = vmatpush.msra.mxu0 %v2022
    %2230 = vmatpush.msra.mxu0 %v2019
    %2231 = vmatpush.msra.mxu0 %v2016
    %2232 = vmatpush.msra.mxu0 %v2013
    %2233 = vmatpush.msra.mxu0 %v2010
    %2234 = vmatpush.msra.mxu0 %v2007
    %2235 = vmatpush.msra.mxu0 %v2004
    %2236 = vmatpush.msra.mxu0 %v2001
    %2237 = vmatpush.msra.mxu0 %v1998
    %2238 = vmatpush.msra.mxu0 %v1995
    %2239 = vmatpush.msra.mxu0 %v1992
    %2240 = vmatpush.msra.mxu0 %v1989
    %2241 = vmatpush.msra.mxu0 %v1986
    %2242 = vmatpush.msra.mxu0 %v1983
    %2243 = vmatpush.msra.mxu0 %v1980
    %2244 = vmatmul.f32.gmra.mxu0 %v2108
    %v2245 = vpop.f32.mrf.mxu0
    %v2246 = vadd.f32 %v2223, %v2245
    %2247 = vmatmul.f32.gmra.mxu0 %v2121
    %v2248 = vpop.f32.mrf.mxu0
    %v2249 = vadd.f32 %v2226, %v2248
    %2250 = vdwg.mxu0
    %2251 = vmatpush.msra.mxu0 %v2073
    %2252 = vmatpush.msra.mxu0 %v2070
    %2253 = vmatpush.msra.mxu0 %v2067
    %2254 = vmatpush.msra.mxu0 %v2064
    %2255 = vmatpush.msra.mxu0 %v2061
    %2256 = vmatpush.msra.mxu0 %v2058
    %2257 = vmatpush.msra.mxu0 %v2055
    %2258 = vmatpush.msra.mxu0 %v2052
    %2259 = vmatpush.msra.mxu0 %v2049
    %2260 = vmatpush.msra.mxu0 %v2046
    %2261 = vmatpush.msra.mxu0 %v2043
    %2262 = vmatpush.msra.mxu0 %v2040
    %2263 = vmatpush.msra.mxu0 %v2037
    %2264 = vmatpush.msra.mxu0 %v2034
    %2265 = vmatpush.msra.mxu0 %v2031
    %2266 = vmatpush.msra.mxu0 %v2028
    %2267 = vmatmul.f32.gmra.mxu0 %v2111
    %v2268 = vpop.f32.mrf.mxu0
    %v2269 = vadd.f32 %v2246, %v2268
    %2270 = vmatmul.f32.gmra.mxu0 %v2123
    %v2271 = vpop.f32.mrf.mxu0
    %v2272 = vadd.f32 %v2249, %v2271
    %2273 = vdwg.mxu0
    %2274 = vmatpush.msra.mxu0 %v1834
    %2275 = vmatpush.msra.mxu0 %v1831
    %2276 = vmatpush.msra.mxu0 %v1828
    %2277 = vmatpush.msra.mxu0 %v1825
    %2278 = vmatpush.msra.mxu0 %v1822
    %2279 = vmatpush.msra.mxu0 %v1819
    %2280 = vmatpush.msra.mxu0 %v1816
    %2281 = vmatpush.msra.mxu0 %v1813
    %2282 = vmatpush.msra.mxu0 %v1810
    %2283 = vmatpush.msra.mxu0 %v1807
    %2284 = vmatpush.msra.mxu0 %v1804
    %2285 = vmatpush.msra.mxu0 %v1801
    %2286 = vmatpush.msra.mxu0 %v1798
    %2287 = vmatpush.msra.mxu0 %v1795
    %2288 = vmatpush.msra.mxu0 %v1792
    %2289 = vmatpush.msra.mxu0 %v1789
    %2290 = vmatmul.f32.gmra.mxu0 %v2096
    %v2291 = vpop.f32.mrf.mxu0
    %v2292 = vadd.f32 0.0, %v2291
    %2293 = vmatmul.f32.gmra.mxu0 %v2113
    %v2294 = vpop.f32.mrf.mxu0
    %v2295 = vadd.f32 0.0, %v2294
    %2296 = vdwg.mxu0
    %2297 = vmatpush.msra.mxu0 %v1882
    %2298 = vmatpush.msra.mxu0 %v1879
    %2299 = vmatpush.msra.mxu0 %v1876
    %2300 = vmatpush.msra.mxu0 %v1873
    %2301 = vmatpush.msra.mxu0 %v1870
    %2302 = vmatpush.msra.mxu0 %v1867
    %2303 = vmatpush.msra.mxu0 %v1864
    %2304 = vmatpush.msra.mxu0 %v1861
    %2305 = vmatpush.msra.mxu0 %v1858
    %2306 = vmatpush.msra.mxu0 %v1855
    %2307 = vmatpush.msra.mxu0 %v1852
    %2308 = vmatpush.msra.mxu0 %v1849
    %2309 = vmatpush.msra.mxu0 %v1846
    %2310 = vmatpush.msra.mxu0 %v1843
    %2311 = vmatpush.msra.mxu0 %v1840
    %2312 = vmatpush.msra.mxu0 %v1837
    %2313 = vmatmul.f32.gmra.mxu0 %v2099
    %v2314 = vpop.f32.mrf.mxu0
    %v2315 = vadd.f32 %v2292, %v2314
    %2316 = vmatmul.f32.gmra.mxu0 %v2115
    %v2317 = vpop.f32.mrf.mxu0
    %v2318 = vadd.f32 %v2295, %v2317
    %2319 = vdwg.mxu0
    %2320 = vmatpush.msra.mxu0 %v1930
    %2321 = vmatpush.msra.mxu0 %v1927
    %2322 = vmatpush.msra.mxu0 %v1924
    %2323 = vmatpush.msra.mxu0 %v1921
    %2324 = vmatpush.msra.mxu0 %v1918
    %2325 = vmatpush.msra.mxu0 %v1915
    %2326 = vmatpush.msra.mxu0 %v1912
    %2327 = vmatpush.msra.mxu0 %v1909
    %2328 = vmatpush.msra.mxu0 %v1906
    %2329 = vmatpush.msra.mxu0 %v1903
    %2330 = vmatpush.msra.mxu0 %v1900
    %2331 = vmatpush.msra.mxu0 %v1897
    %2332 = vmatpush.msra.mxu0 %v1894
    %2333 = vmatpush.msra.mxu0 %v1891
    %2334 = vmatpush.msra.mxu0 %v1888
    %2335 = vmatpush.msra.mxu0 %v1885
    %2336 = vmatmul.f32.gmra.mxu0 %v2102
    %v2337 = vpop.f32.mrf.mxu0
    %v2338 = vadd.f32 %v2315, %v2337
    %2339 = vmatmul.f32.gmra.mxu0 %v2117
    %v2340 = vpop.f32.mrf.mxu0
    %v2341 = vadd.f32 %v2318, %v2340
    %2342 = vdwg.mxu0
    %2343 = vmatpush.msra.mxu0 %v1978
    %2344 = vmatpush.msra.mxu0 %v1975
    %2345 = vmatpush.msra.mxu0 %v1972
    %2346 = vmatpush.msra.mxu0 %v1969
    %2347 = vmatpush.msra.mxu0 %v1966
    %2348 = vmatpush.msra.mxu0 %v1963
    %2349 = vmatpush.msra.mxu0 %v1960
    %2350 = vmatpush.msra.mxu0 %v1957
    %2351 = vmatpush.msra.mxu0 %v1954
    %2352 = vmatpush.msra.mxu0 %v1951
    %2353 = vmatpush.msra.mxu0 %v1948
    %2354 = vmatpush.msra.mxu0 %v1945
    %2355 = vmatpush.msra.mxu0 %v1942
    %2356 = vmatpush.msra.mxu0 %v1939
    %2357 = vmatpush.msra.mxu0 %v1936
    %2358 = vmatpush.msra.mxu0 %v1933
    %2359 = vmatmul.f32.gmra.mxu0 %v2105
    %v2360 = vpop.f32.mrf.mxu0
    %v2361 = vadd.f32 %v2338, %v2360
    %2362 = vmatmul.f32.gmra.mxu0 %v2119
    %v2363 = vpop.f32.mrf.mxu0
    %v2364 = vadd.f32 %v2341, %v2363
    %2365 = vdwg.mxu0
    %2366 = vmatpush.msra.mxu0 %v2026
    %2367 = vmatpush.msra.mxu0 %v2023
    %2368 = vmatpush.msra.mxu0 %v2020
    %2369 = vmatpush.msra.mxu0 %v2017
    %2370 = vmatpush.msra.mxu0 %v2014
    %2371 = vmatpush.msra.mxu0 %v2011
    %2372 = vmatpush.msra.mxu0 %v2008
    %2373 = vmatpush.msra.mxu0 %v2005
    %2374 = vmatpush.msra.mxu0 %v2002
    %2375 = vmatpush.msra.mxu0 %v1999
    %2376 = vmatpush.msra.mxu0 %v1996
    %2377 = vmatpush.msra.mxu0 %v1993
    %2378 = vmatpush.msra.mxu0 %v1990
    %2379 = vmatpush.msra.mxu0 %v1987
    %2380 = vmatpush.msra.mxu0 %v1984
    %2381 = vmatpush.msra.mxu0 %v1981
    %2382 = vmatmul.f32.gmra.mxu0 %v2108
    %v2383 = vpop.f32.mrf.mxu0
    %v2384 = vadd.f32 %v2361, %v2383
    %2385 = vmatmul.f32.gmra.mxu0 %v2121
    %v2386 = vpop.f32.mrf.mxu0
    %v2387 = vadd.f32 %v2364, %v2386
    %2388 = vdwg.mxu0
    %2389 = vmatpush.msra.mxu0 %v2074
    %2390 = vmatpush.msra.mxu0 %v2071
    %2391 = vmatpush.msra.mxu0 %v2068
    %2392 = vmatpush.msra.mxu0 %v2065
    %2393 = vmatpush.msra.mxu0 %v2062
    %2394 = vmatpush.msra.mxu0 %v2059
    %2395 = vmatpush.msra.mxu0 %v2056
    %2396 = vmatpush.msra.mxu0 %v2053
    %2397 = vmatpush.msra.mxu0 %v2050
    %2398 = vmatpush.msra.mxu0 %v2047
    %2399 = vmatpush.msra.mxu0 %v2044
    %2400 = vmatpush.msra.mxu0 %v2041
    %2401 = vmatpush.msra.mxu0 %v2038
    %2402 = vmatpush.msra.mxu0 %v2035
    %2403 = vmatpush.msra.mxu0 %v2032
    %2404 = vmatpush.msra.mxu0 %v2029
    %2405 = vmatmul.f32.gmra.mxu0 %v2111
    %v2406 = vpop.f32.mrf.mxu0
    %v2407 = vadd.f32 %v2384, %v2406
    %2408 = vmatmul.f32.gmra.mxu0 %v2123
    %v2409 = vpop.f32.mrf.mxu0
    %v2410 = vadd.f32 %v2387, %v2409
    %2411 = vdwg.mxu0
    %2412 = vmatpush.msra.mxu0 %v1835
    %2413 = vmatpush.msra.mxu0 %v1832
    %2414 = vmatpush.msra.mxu0 %v1829
    %2415 = vmatpush.msra.mxu0 %v1826
    %2416 = vmatpush.msra.mxu0 %v1823
    %2417 = vmatpush.msra.mxu0 %v1820
    %2418 = vmatpush.msra.mxu0 %v1817
    %2419 = vmatpush.msra.mxu0 %v1814
    %2420 = vmatpush.msra.mxu0 %v1811
    %2421 = vmatpush.msra.mxu0 %v1808
    %2422 = vmatpush.msra.mxu0 %v1805
    %2423 = vmatpush.msra.mxu0 %v1802
    %2424 = vmatpush.msra.mxu0 %v1799
    %2425 = vmatpush.msra.mxu0 %v1796
    %2426 = vmatpush.msra.mxu0 %v1793
    %2427 = vmatpush.msra.mxu0 %v1790
    %2428 = vmatmul.f32.gmra.mxu0 %v2096
    %v2429 = vpop.f32.mrf.mxu0
    %v2430 = vadd.f32 0.0, %v2429
    %2431 = vmatmul.f32.gmra.mxu0 %v2113
    %v2432 = vpop.f32.mrf.mxu0
    %v2433 = vadd.f32 0.0, %v2432
    %2434 = vdwg.mxu0
    %2435 = vmatpush.msra.mxu0 %v1883
    %2436 = vmatpush.msra.mxu0 %v1880
    %2437 = vmatpush.msra.mxu0 %v1877
    %2438 = vmatpush.msra.mxu0 %v1874
    %2439 = vmatpush.msra.mxu0 %v1871
    %2440 = vmatpush.msra.mxu0 %v1868
    %2441 = vmatpush.msra.mxu0 %v1865
    %2442 = vmatpush.msra.mxu0 %v1862
    %2443 = vmatpush.msra.mxu0 %v1859
    %2444 = vmatpush.msra.mxu0 %v1856
    %2445 = vmatpush.msra.mxu0 %v1853
    %2446 = vmatpush.msra.mxu0 %v1850
    %2447 = vmatpush.msra.mxu0 %v1847
    %2448 = vmatpush.msra.mxu0 %v1844
    %2449 = vmatpush.msra.mxu0 %v1841
    %2450 = vmatpush.msra.mxu0 %v1838
    %2451 = vmatmul.f32.gmra.mxu0 %v2099
    %v2452 = vpop.f32.mrf.mxu0
    %v2453 = vadd.f32 %v2430, %v2452
    %2454 = vmatmul.f32.gmra.mxu0 %v2115
    %v2455 = vpop.f32.mrf.mxu0
    %v2456 = vadd.f32 %v2433, %v2455
    %2457 = vdwg.mxu0
    %2458 = vmatpush.msra.mxu0 %v1931
    %2459 = vmatpush.msra.mxu0 %v1928
    %2460 = vmatpush.msra.mxu0 %v1925
    %2461 = vmatpush.msra.mxu0 %v1922
    %2462 = vmatpush.msra.mxu0 %v1919
    %2463 = vmatpush.msra.mxu0 %v1916
    %2464 = vmatpush.msra.mxu0 %v1913
    %2465 = vmatpush.msra.mxu0 %v1910
    %2466 = vmatpush.msra.mxu0 %v1907
    %2467 = vmatpush.msra.mxu0 %v1904
    %2468 = vmatpush.msra.mxu0 %v1901
    %2469 = vmatpush.msra.mxu0 %v1898
    %2470 = vmatpush.msra.mxu0 %v1895
    %2471 = vmatpush.msra.mxu0 %v1892
    %2472 = vmatpush.msra.mxu0 %v1889
    %2473 = vmatpush.msra.mxu0 %v1886
    %2474 = vmatmul.f32.gmra.mxu0 %v2102
    %v2475 = vpop.f32.mrf.mxu0
    %v2476 = vadd.f32 %v2453, %v2475
    %2477 = vmatmul.f32.gmra.mxu0 %v2117
    %v2478 = vpop.f32.mrf.mxu0
    %v2479 = vadd.f32 %v2456, %v2478
    %2480 = vdwg.mxu0
    %2481 = vmatpush.msra.mxu0 %v1979
    %2482 = vmatpush.msra.mxu0 %v1976
    %2483 = vmatpush.msra.mxu0 %v1973
    %2484 = vmatpush.msra.mxu0 %v1970
    %2485 = vmatpush.msra.mxu0 %v1967
    %2486 = vmatpush.msra.mxu0 %v1964
    %2487 = vmatpush.msra.mxu0 %v1961
    %2488 = vmatpush.msra.mxu0 %v1958
    %2489 = vmatpush.msra.mxu0 %v1955
    %2490 = vmatpush.msra.mxu0 %v1952
    %2491 = vmatpush.msra.mxu0 %v1949
    %2492 = vmatpush.msra.mxu0 %v1946
    %2493 = vmatpush.msra.mxu0 %v1943
    %2494 = vmatpush.msra.mxu0 %v1940
    %2495 = vmatpush.msra.mxu0 %v1937
    %2496 = vmatpush.msra.mxu0 %v1934
    %2497 = vmatmul.f32.gmra.mxu0 %v2105
    %v2498 = vpop.f32.mrf.mxu0
    %v2499 = vadd.f32 %v2476, %v2498
    %2500 = vmatmul.f32.gmra.mxu0 %v2119
    %v2501 = vpop.f32.mrf.mxu0
    %v2502 = vadd.f32 %v2479, %v2501
    %2503 = vdwg.mxu0
    %2504 = vmatpush.msra.mxu0 %v2027
    %2505 = vmatpush.msra.mxu0 %v2024
    %2506 = vmatpush.msra.mxu0 %v2021
    %2507 = vmatpush.msra.mxu0 %v2018
    %2508 = vmatpush.msra.mxu0 %v2015
    %2509 = vmatpush.msra.mxu0 %v2012
    %2510 = vmatpush.msra.mxu0 %v2009
    %2511 = vmatpush.msra.mxu0 %v2006
    %2512 = vmatpush.msra.mxu0 %v2003
    %2513 = vmatpush.msra.mxu0 %v2000
    %2514 = vmatpush.msra.mxu0 %v1997
    %2515 = vmatpush.msra.mxu0 %v1994
    %2516 = vmatpush.msra.mxu0 %v1991
    %2517 = vmatpush.msra.mxu0 %v1988
    %2518 = vmatpush.msra.mxu0 %v1985
    %2519 = vmatpush.msra.mxu0 %v1982
    %2520 = vmatmul.f32.gmra.mxu0 %v2108
    %v2521 = vpop.f32.mrf.mxu0
    %v2522 = vadd.f32 %v2499, %v2521
    %2523 = vmatmul.f32.gmra.mxu0 %v2121
    %v2524 = vpop.f32.mrf.mxu0
    %v2525 = vadd.f32 %v2502, %v2524
    %2526 = vdwg.mxu0
    %2527 = vmatpush.msra.mxu0 %v2075
    %2528 = vmatpush.msra.mxu0 %v2072
    %2529 = vmatpush.msra.mxu0 %v2069
    %2530 = vmatpush.msra.mxu0 %v2066
    %2531 = vmatpush.msra.mxu0 %v2063
    %2532 = vmatpush.msra.mxu0 %v2060
    %2533 = vmatpush.msra.mxu0 %v2057
    %2534 = vmatpush.msra.mxu0 %v2054
    %2535 = vmatpush.msra.mxu0 %v2051
    %2536 = vmatpush.msra.mxu0 %v2048
    %2537 = vmatpush.msra.mxu0 %v2045
    %2538 = vmatpush.msra.mxu0 %v2042
    %2539 = vmatpush.msra.mxu0 %v2039
    %2540 = vmatpush.msra.mxu0 %v2036
    %2541 = vmatpush.msra.mxu0 %v2033
    %2542 = vmatpush.msra.mxu0 %v2030
    %2543 = vmatmul.f32.gmra.mxu0 %v2111
    %v2544 = vpop.f32.mrf.mxu0
    %v2545 = vadd.f32 %v2522, %v2544
    %2546 = vmatmul.f32.gmra.mxu0 %v2123
    %v2547 = vpop.f32.mrf.mxu0
    %v2548 = vadd.f32 %v2525, %v2547
    %2549 = vdwg.mxu0
    %2550 = vmatpush.msra.mxu0 %v1532
    %2551 = vmatpush.msra.mxu0 %v1529
    %2552 = vmatpush.msra.mxu0 %v1526
    %2553 = vmatpush.msra.mxu0 %v1523
    %2554 = vmatpush.msra.mxu0 %v1520
    %2555 = vmatpush.msra.mxu0 %v1517
    %2556 = vmatpush.msra.mxu0 %v1514
    %2557 = vmatpush.msra.mxu0 %v1511
    %2558 = vmatpush.msra.mxu0 %v1508
    %2559 = vmatpush.msra.mxu0 %v1505
    %2560 = vmatpush.msra.mxu0 %v1502
    %2561 = vmatpush.msra.mxu0 %v1499
    %2562 = vmatpush.msra.mxu0 %v1496
    %2563 = vmatpush.msra.mxu0 %v1493
    %2564 = vmatpush.msra.mxu0 %v1490
    %2565 = vmatpush.msra.mxu0 %v1487
    %2566 = vmatmul.f32.gmra.mxu0 %v1475
    %v2567 = vpop.f32.mrf.mxu0
    %v2568 = vadd.f32 %v2269, %v2567
    %2569 = vmatmul.f32.gmra.mxu0 %v1481
    %v2570 = vpop.f32.mrf.mxu0
    %v2571 = vadd.f32 %v2272, %v2570
    %2572 = vdwg.mxu0
    %2573 = vmatpush.msra.mxu0 %v1580
    %2574 = vmatpush.msra.mxu0 %v1577
    %2575 = vmatpush.msra.mxu0 %v1574
    %2576 = vmatpush.msra.mxu0 %v1571
    %2577 = vmatpush.msra.mxu0 %v1568
    %2578 = vmatpush.msra.mxu0 %v1565
    %2579 = vmatpush.msra.mxu0 %v1562
    %2580 = vmatpush.msra.mxu0 %v1559
    %2581 = vmatpush.msra.mxu0 %v1556
    %2582 = vmatpush.msra.mxu0 %v1553
    %2583 = vmatpush.msra.mxu0 %v1550
    %2584 = vmatpush.msra.mxu0 %v1547
    %2585 = vmatpush.msra.mxu0 %v1544
    %2586 = vmatpush.msra.mxu0 %v1541
    %2587 = vmatpush.msra.mxu0 %v1538
    %2588 = vmatpush.msra.mxu0 %v1535
    %2589 = vmatmul.f32.gmra.mxu0 %v1476
    %v2590 = vpop.f32.mrf.mxu0
    %v2591 = vadd.f32 %v2568, %v2590
    %2592 = vmatmul.f32.gmra.mxu0 %v1482
    %v2593 = vpop.f32.mrf.mxu0
    %v2594 = vadd.f32 %v2571, %v2593
    %2595 = vdwg.mxu0
    %2596 = vmatpush.msra.mxu0 %v1628
    %2597 = vmatpush.msra.mxu0 %v1625
    %2598 = vmatpush.msra.mxu0 %v1622
    %2599 = vmatpush.msra.mxu0 %v1619
    %2600 = vmatpush.msra.mxu0 %v1616
    %2601 = vmatpush.msra.mxu0 %v1613
    %2602 = vmatpush.msra.mxu0 %v1610
    %2603 = vmatpush.msra.mxu0 %v1607
    %2604 = vmatpush.msra.mxu0 %v1604
    %2605 = vmatpush.msra.mxu0 %v1601
    %2606 = vmatpush.msra.mxu0 %v1598
    %2607 = vmatpush.msra.mxu0 %v1595
    %2608 = vmatpush.msra.mxu0 %v1592
    %2609 = vmatpush.msra.mxu0 %v1589
    %2610 = vmatpush.msra.mxu0 %v1586
    %2611 = vmatpush.msra.mxu0 %v1583
    %2612 = vmatmul.f32.gmra.mxu0 %v1477
    %v2613 = vpop.f32.mrf.mxu0
    %v2614 = vadd.f32 %v2591, %v2613
    %2615 = vmatmul.f32.gmra.mxu0 %v1483
    %v2616 = vpop.f32.mrf.mxu0
    %v2617 = vadd.f32 %v2594, %v2616
    %2618 = vdwg.mxu0
    %2619 = vmatpush.msra.mxu0 %v1676
    %2620 = vmatpush.msra.mxu0 %v1673
    %2621 = vmatpush.msra.mxu0 %v1670
    %2622 = vmatpush.msra.mxu0 %v1667
    %2623 = vmatpush.msra.mxu0 %v1664
    %2624 = vmatpush.msra.mxu0 %v1661
    %2625 = vmatpush.msra.mxu0 %v1658
    %2626 = vmatpush.msra.mxu0 %v1655
    %2627 = vmatpush.msra.mxu0 %v1652
    %2628 = vmatpush.msra.mxu0 %v1649
    %2629 = vmatpush.msra.mxu0 %v1646
    %2630 = vmatpush.msra.mxu0 %v1643
    %2631 = vmatpush.msra.mxu0 %v1640
    %2632 = vmatpush.msra.mxu0 %v1637
    %2633 = vmatpush.msra.mxu0 %v1634
    %2634 = vmatpush.msra.mxu0 %v1631
    %2635 = vmatmul.f32.gmra.mxu0 %v1478
    %v2636 = vpop.f32.mrf.mxu0
    %v2637 = vadd.f32 %v2614, %v2636
    %2638 = vmatmul.f32.gmra.mxu0 %v1484
    %v2639 = vpop.f32.mrf.mxu0
    %v2640 = vadd.f32 %v2617, %v2639
    %2641 = vdwg.mxu0
    %2642 = vmatpush.msra.mxu0 %v1724
    %2643 = vmatpush.msra.mxu0 %v1721
    %2644 = vmatpush.msra.mxu0 %v1718
    %2645 = vmatpush.msra.mxu0 %v1715
    %2646 = vmatpush.msra.mxu0 %v1712
    %2647 = vmatpush.msra.mxu0 %v1709
    %2648 = vmatpush.msra.mxu0 %v1706
    %2649 = vmatpush.msra.mxu0 %v1703
    %2650 = vmatpush.msra.mxu0 %v1700
    %2651 = vmatpush.msra.mxu0 %v1697
    %2652 = vmatpush.msra.mxu0 %v1694
    %2653 = vmatpush.msra.mxu0 %v1691
    %2654 = vmatpush.msra.mxu0 %v1688
    %2655 = vmatpush.msra.mxu0 %v1685
    %2656 = vmatpush.msra.mxu0 %v1682
    %2657 = vmatpush.msra.mxu0 %v1679
    %2658 = vmatmul.f32.gmra.mxu0 %v1479
    %v2659 = vpop.f32.mrf.mxu0
    %v2660 = vadd.f32 %v2637, %v2659
    %2661 = vmatmul.f32.gmra.mxu0 %v1485
    %v2662 = vpop.f32.mrf.mxu0
    %v2663 = vadd.f32 %v2640, %v2662
    %2664 = vdwg.mxu0
    %2665 = vmatpush.msra.mxu0 %v1772
    %2666 = vmatpush.msra.mxu0 %v1769
    %2667 = vmatpush.msra.mxu0 %v1766
    %2668 = vmatpush.msra.mxu0 %v1763
    %2669 = vmatpush.msra.mxu0 %v1760
    %2670 = vmatpush.msra.mxu0 %v1757
    %2671 = vmatpush.msra.mxu0 %v1754
    %2672 = vmatpush.msra.mxu0 %v1751
    %2673 = vmatpush.msra.mxu0 %v1748
    %2674 = vmatpush.msra.mxu0 %v1745
    %2675 = vmatpush.msra.mxu0 %v1742
    %2676 = vmatpush.msra.mxu0 %v1739
    %2677 = vmatpush.msra.mxu0 %v1736
    %2678 = vmatpush.msra.mxu0 %v1733
    %2679 = vmatpush.msra.mxu0 %v1730
    %2680 = vmatpush.msra.mxu0 %v1727
    %2681 = vmatmul.f32.gmra.mxu0 %v1480
    %v2682 = vpop.f32.mrf.mxu0
    %v2683 = vadd.f32 %v2660, %v2682
    %2684 = vmatmul.f32.gmra.mxu0 %v1486
    %v2685 = vpop.f32.mrf.mxu0
    %v2686 = vadd.f32 %v2663, %v2685
    %2687 = vdwg.mxu0
    %2688 = vmatpush.msra.mxu0 %v1533
    %2689 = vmatpush.msra.mxu0 %v1530
    %2690 = vmatpush.msra.mxu0 %v1527
    %2691 = vmatpush.msra.mxu0 %v1524
    %2692 = vmatpush.msra.mxu0 %v1521
    %2693 = vmatpush.msra.mxu0 %v1518
    %2694 = vmatpush.msra.mxu0 %v1515
    %2695 = vmatpush.msra.mxu0 %v1512
    %2696 = vmatpush.msra.mxu0 %v1509
    %2697 = vmatpush.msra.mxu0 %v1506
    %2698 = vmatpush.msra.mxu0 %v1503
    %2699 = vmatpush.msra.mxu0 %v1500
    %2700 = vmatpush.msra.mxu0 %v1497
    %2701 = vmatpush.msra.mxu0 %v1494
    %2702 = vmatpush.msra.mxu0 %v1491
    %2703 = vmatpush.msra.mxu0 %v1488
    %2704 = vmatmul.f32.gmra.mxu0 %v1475
    %v2705 = vpop.f32.mrf.mxu0
    %v2706 = vadd.f32 %v2407, %v2705
    %2707 = vmatmul.f32.gmra.mxu0 %v1481
    %v2708 = vpop.f32.mrf.mxu0
    %v2709 = vadd.f32 %v2410, %v2708
    %2710 = vdwg.mxu0
    %2711 = vmatpush.msra.mxu0 %v1581
    %2712 = vmatpush.msra.mxu0 %v1578
    %2713 = vmatpush.msra.mxu0 %v1575
    %2714 = vmatpush.msra.mxu0 %v1572
    %2715 = vmatpush.msra.mxu0 %v1569
    %2716 = vmatpush.msra.mxu0 %v1566
    %2717 = vmatpush.msra.mxu0 %v1563
    %2718 = vmatpush.msra.mxu0 %v1560
    %2719 = vmatpush.msra.mxu0 %v1557
    %2720 = vmatpush.msra.mxu0 %v1554
    %2721 = vmatpush.msra.mxu0 %v1551
    %2722 = vmatpush.msra.mxu0 %v1548
    %2723 = vmatpush.msra.mxu0 %v1545
    %2724 = vmatpush.msra.mxu0 %v1542
    %2725 = vmatpush.msra.mxu0 %v1539
    %2726 = vmatpush.msra.mxu0 %v1536
    %2727 = vmatmul.f32.gmra.mxu0 %v1476
    %v2728 = vpop.f32.mrf.mxu0
    %v2729 = vadd.f32 %v2706, %v2728
    %2730 = vmatmul.f32.gmra.mxu0 %v1482
    %v2731 = vpop.f32.mrf.mxu0
    %v2732 = vadd.f32 %v2709, %v2731
    %2733 = vdwg.mxu0
    %2734 = vmatpush.msra.mxu0 %v1629
    %2735 = vmatpush.msra.mxu0 %v1626
    %2736 = vmatpush.msra.mxu0 %v1623
    %2737 = vmatpush.msra.mxu0 %v1620
    %2738 = vmatpush.msra.mxu0 %v1617
    %2739 = vmatpush.msra.mxu0 %v1614
    %2740 = vmatpush.msra.mxu0 %v1611
    %2741 = vmatpush.msra.mxu0 %v1608
    %2742 = vmatpush.msra.mxu0 %v1605
    %2743 = vmatpush.msra.mxu0 %v1602
    %2744 = vmatpush.msra.mxu0 %v1599
    %2745 = vmatpush.msra.mxu0 %v1596
    %2746 = vmatpush.msra.mxu0 %v1593
    %2747 = vmatpush.msra.mxu0 %v1590
    %2748 = vmatpush.msra.mxu0 %v1587
    %2749 = vmatpush.msra.mxu0 %v1584
    %2750 = vmatmul.f32.gmra.mxu0 %v1477
    %v2751 = vpop.f32.mrf.mxu0
    %v2752 = vadd.f32 %v2729, %v2751
    %2753 = vmatmul.f32.gmra.mxu0 %v1483
    %v2754 = vpop.f32.mrf.mxu0
    %v2755 = vadd.f32 %v2732, %v2754
    %2756 = vdwg.mxu0
    %2757 = vmatpush.msra.mxu0 %v1677
    %2758 = vmatpush.msra.mxu0 %v1674
    %2759 = vmatpush.msra.mxu0 %v1671
    %2760 = vmatpush.msra.mxu0 %v1668
    %2761 = vmatpush.msra.mxu0 %v1665
    %2762 = vmatpush.msra.mxu0 %v1662
    %2763 = vmatpush.msra.mxu0 %v1659
    %2764 = vmatpush.msra.mxu0 %v1656
    %2765 = vmatpush.msra.mxu0 %v1653
    %2766 = vmatpush.msra.mxu0 %v1650
    %2767 = vmatpush.msra.mxu0 %v1647
    %2768 = vmatpush.msra.mxu0 %v1644
    %2769 = vmatpush.msra.mxu0 %v1641
    %2770 = vmatpush.msra.mxu0 %v1638
    %2771 = vmatpush.msra.mxu0 %v1635
    %2772 = vmatpush.msra.mxu0 %v1632
    %2773 = vmatmul.f32.gmra.mxu0 %v1478
    %v2774 = vpop.f32.mrf.mxu0
    %v2775 = vadd.f32 %v2752, %v2774
    %2776 = vmatmul.f32.gmra.mxu0 %v1484
    %v2777 = vpop.f32.mrf.mxu0
    %v2778 = vadd.f32 %v2755, %v2777
    %2779 = vdwg.mxu0
    %2780 = vmatpush.msra.mxu0 %v1725
    %2781 = vmatpush.msra.mxu0 %v1722
    %2782 = vmatpush.msra.mxu0 %v1719
    %2783 = vmatpush.msra.mxu0 %v1716
    %2784 = vmatpush.msra.mxu0 %v1713
    %2785 = vmatpush.msra.mxu0 %v1710
    %2786 = vmatpush.msra.mxu0 %v1707
    %2787 = vmatpush.msra.mxu0 %v1704
    %2788 = vmatpush.msra.mxu0 %v1701
    %2789 = vmatpush.msra.mxu0 %v1698
    %2790 = vmatpush.msra.mxu0 %v1695
    %2791 = vmatpush.msra.mxu0 %v1692
    %2792 = vmatpush.msra.mxu0 %v1689
    %2793 = vmatpush.msra.mxu0 %v1686
    %2794 = vmatpush.msra.mxu0 %v1683
    %2795 = vmatpush.msra.mxu0 %v1680
    %2796 = vmatmul.f32.gmra.mxu0 %v1479
    %v2797 = vpop.f32.mrf.mxu0
    %v2798 = vadd.f32 %v2775, %v2797
    %2799 = vmatmul.f32.gmra.mxu0 %v1485
    %v2800 = vpop.f32.mrf.mxu0
    %v2801 = vadd.f32 %v2778, %v2800
    %2802 = vdwg.mxu0
    %2803 = vmatpush.msra.mxu0 %v1773
    %2804 = vmatpush.msra.mxu0 %v1770
    %2805 = vmatpush.msra.mxu0 %v1767
    %2806 = vmatpush.msra.mxu0 %v1764
    %2807 = vmatpush.msra.mxu0 %v1761
    %2808 = vmatpush.msra.mxu0 %v1758
    %2809 = vmatpush.msra.mxu0 %v1755
    %2810 = vmatpush.msra.mxu0 %v1752
    %2811 = vmatpush.msra.mxu0 %v1749
    %2812 = vmatpush.msra.mxu0 %v1746
    %2813 = vmatpush.msra.mxu0 %v1743
    %2814 = vmatpush.msra.mxu0 %v1740
    %2815 = vmatpush.msra.mxu0 %v1737
    %2816 = vmatpush.msra.mxu0 %v1734
    %2817 = vmatpush.msra.mxu0 %v1731
    %2818 = vmatpush.msra.mxu0 %v1728
    %2819 = vmatmul.f32.gmra.mxu0 %v1480
    %v2820 = vpop.f32.mrf.mxu0
    %v2821 = vadd.f32 %v2798, %v2820
    %2822 = vmatmul.f32.gmra.mxu0 %v1486
    %v2823 = vpop.f32.mrf.mxu0
    %v2824 = vadd.f32 %v2801, %v2823
    %2825 = vdwg.mxu0
    %2826 = vmatpush.msra.mxu0 %v1534
    %2827 = vmatpush.msra.mxu0 %v1531
    %2828 = vmatpush.msra.mxu0 %v1528
    %2829 = vmatpush.msra.mxu0 %v1525
    %2830 = vmatpush.msra.mxu0 %v1522
    %2831 = vmatpush.msra.mxu0 %v1519
    %2832 = vmatpush.msra.mxu0 %v1516
    %2833 = vmatpush.msra.mxu0 %v1513
    %2834 = vmatpush.msra.mxu0 %v1510
    %2835 = vmatpush.msra.mxu0 %v1507
    %2836 = vmatpush.msra.mxu0 %v1504
    %2837 = vmatpush.msra.mxu0 %v1501
    %2838 = vmatpush.msra.mxu0 %v1498
    %2839 = vmatpush.msra.mxu0 %v1495
    %2840 = vmatpush.msra.mxu0 %v1492
    %2841 = vmatpush.msra.mxu0 %v1489
    %2842 = vmatmul.f32.gmra.mxu0 %v1475
    %v2843 = vpop.f32.mrf.mxu0
    %v2844 = vadd.f32 %v2545, %v2843
    %2845 = vmatmul.f32.gmra.mxu0 %v1481
    %v2846 = vpop.f32.mrf.mxu0
    %v2847 = vadd.f32 %v2548, %v2846
    %2848 = vdwg.mxu0
    %2849 = vmatpush.msra.mxu0 %v1582
    %2850 = vmatpush.msra.mxu0 %v1579
    %2851 = vmatpush.msra.mxu0 %v1576
    %2852 = vmatpush.msra.mxu0 %v1573
    %2853 = vmatpush.msra.mxu0 %v1570
    %2854 = vmatpush.msra.mxu0 %v1567
    %2855 = vmatpush.msra.mxu0 %v1564
    %2856 = vmatpush.msra.mxu0 %v1561
    %2857 = vmatpush.msra.mxu0 %v1558
    %2858 = vmatpush.msra.mxu0 %v1555
    %2859 = vmatpush.msra.mxu0 %v1552
    %2860 = vmatpush.msra.mxu0 %v1549
    %2861 = vmatpush.msra.mxu0 %v1546
    %2862 = vmatpush.msra.mxu0 %v1543
    %2863 = vmatpush.msra.mxu0 %v1540
    %2864 = vmatpush.msra.mxu0 %v1537
    %2865 = vmatmul.f32.gmra.mxu0 %v1476
    %v2866 = vpop.f32.mrf.mxu0
    %v2867 = vadd.f32 %v2844, %v2866
    %2868 = vmatmul.f32.gmra.mxu0 %v1482
    %v2869 = vpop.f32.mrf.mxu0
    %v2870 = vadd.f32 %v2847, %v2869
    %2871 = vdwg.mxu0
    %2872 = vmatpush.msra.mxu0 %v1630
    %2873 = vmatpush.msra.mxu0 %v1627
    %2874 = vmatpush.msra.mxu0 %v1624
    %2875 = vmatpush.msra.mxu0 %v1621
    %2876 = vmatpush.msra.mxu0 %v1618
    %2877 = vmatpush.msra.mxu0 %v1615
    %2878 = vmatpush.msra.mxu0 %v1612
    %2879 = vmatpush.msra.mxu0 %v1609
    %2880 = vmatpush.msra.mxu0 %v1606
    %2881 = vmatpush.msra.mxu0 %v1603
    %2882 = vmatpush.msra.mxu0 %v1600
    %2883 = vmatpush.msra.mxu0 %v1597
    %2884 = vmatpush.msra.mxu0 %v1594
    %2885 = vmatpush.msra.mxu0 %v1591
    %2886 = vmatpush.msra.mxu0 %v1588
    %2887 = vmatpush.msra.mxu0 %v1585
    %2888 = vmatmul.f32.gmra.mxu0 %v1477
    %v2889 = vpop.f32.mrf.mxu0
    %v2890 = vadd.f32 %v2867, %v2889
    %2891 = vmatmul.f32.gmra.mxu0 %v1483
    %v2892 = vpop.f32.mrf.mxu0
    %v2893 = vadd.f32 %v2870, %v2892
    %2894 = vdwg.mxu0
    %2895 = vmatpush.msra.mxu0 %v1678
    %2896 = vmatpush.msra.mxu0 %v1675
    %2897 = vmatpush.msra.mxu0 %v1672
    %2898 = vmatpush.msra.mxu0 %v1669
    %2899 = vmatpush.msra.mxu0 %v1666
    %2900 = vmatpush.msra.mxu0 %v1663
    %2901 = vmatpush.msra.mxu0 %v1660
    %2902 = vmatpush.msra.mxu0 %v1657
    %2903 = vmatpush.msra.mxu0 %v1654
    %2904 = vmatpush.msra.mxu0 %v1651
    %2905 = vmatpush.msra.mxu0 %v1648
    %2906 = vmatpush.msra.mxu0 %v1645
    %2907 = vmatpush.msra.mxu0 %v1642
    %2908 = vmatpush.msra.mxu0 %v1639
    %2909 = vmatpush.msra.mxu0 %v1636
    %2910 = vmatpush.msra.mxu0 %v1633
    %2911 = vmatmul.f32.gmra.mxu0 %v1478
    %v2912 = vpop.f32.mrf.mxu0
    %v2913 = vadd.f32 %v2890, %v2912
    %2914 = vmatmul.f32.gmra.mxu0 %v1484
    %v2915 = vpop.f32.mrf.mxu0
    %v2916 = vadd.f32 %v2893, %v2915
    %2917 = vdwg.mxu0
    %2918 = vmatpush.msra.mxu0 %v1726
    %2919 = vmatpush.msra.mxu0 %v1723
    %2920 = vmatpush.msra.mxu0 %v1720
    %2921 = vmatpush.msra.mxu0 %v1717
    %2922 = vmatpush.msra.mxu0 %v1714
    %2923 = vmatpush.msra.mxu0 %v1711
    %2924 = vmatpush.msra.mxu0 %v1708
    %2925 = vmatpush.msra.mxu0 %v1705
    %2926 = vmatpush.msra.mxu0 %v1702
    %2927 = vmatpush.msra.mxu0 %v1699
    %2928 = vmatpush.msra.mxu0 %v1696
    %2929 = vmatpush.msra.mxu0 %v1693
    %2930 = vmatpush.msra.mxu0 %v1690
    %2931 = vmatpush.msra.mxu0 %v1687
    %2932 = vmatpush.msra.mxu0 %v1684
    %2933 = vmatpush.msra.mxu0 %v1681
    %2934 = vmatmul.f32.gmra.mxu0 %v1479
    %v2935 = vpop.f32.mrf.mxu0
    %v2936 = vadd.f32 %v2913, %v2935
    %2937 = vmatmul.f32.gmra.mxu0 %v1485
    %v2938 = vpop.f32.mrf.mxu0
    %v2939 = vadd.f32 %v2916, %v2938
    %2940 = vdwg.mxu0
    %2941 = vmatpush.msra.mxu0 %v1774
    %2942 = vmatpush.msra.mxu0 %v1771
    %2943 = vmatpush.msra.mxu0 %v1768
    %2944 = vmatpush.msra.mxu0 %v1765
    %2945 = vmatpush.msra.mxu0 %v1762
    %2946 = vmatpush.msra.mxu0 %v1759
    %2947 = vmatpush.msra.mxu0 %v1756
    %2948 = vmatpush.msra.mxu0 %v1753
    %2949 = vmatpush.msra.mxu0 %v1750
    %2950 = vmatpush.msra.mxu0 %v1747
    %2951 = vmatpush.msra.mxu0 %v1744
    %2952 = vmatpush.msra.mxu0 %v1741
    %2953 = vmatpush.msra.mxu0 %v1738
    %2954 = vmatpush.msra.mxu0 %v1735
    %2955 = vmatpush.msra.mxu0 %v1732
    %2956 = vmatpush.msra.mxu0 %v1729
    %2957 = vmatmul.f32.gmra.mxu0 %v1480
    %v2958 = vpop.f32.mrf.mxu0
    %v2959 = vadd.f32 %v2936, %v2958
    %2960 = vmatmul.f32.gmra.mxu0 %v1486
    %v2961 = vpop.f32.mrf.mxu0
    %v2962 = vadd.f32 %v2939, %v2961
    %2963 = vdwg.mxu0
    %v2964 = vld [vmem:[#allocation3] sm:$0xf0]
    %v2965 = vld [vmem:[#allocation3 + $0x8] sm:$0xf0]
    %v2966 = vld [vmem:[#allocation3 + $0x10] sm:$0xf0]
    %v2967 = vld [vmem:[#allocation3 + $0x18] sm:$0xf0]
    %v2968 = vld [vmem:[#allocation3 + $0x20] sm:$0xf0]
    %v2969 = vld [vmem:[#allocation3 + $0x28] sm:$0xf0]
    %v2970 = vld [vmem:[#allocation3 + $0x60] sm:$0xf]
    %v2971 = vld [vmem:[#allocation3 + $0x68] sm:$0xf]
    %v2972 = vld [vmem:[#allocation3 + $0x70] sm:$0xf]
    %v2973 = vld [vmem:[#allocation3 + $0x78] sm:$0xf]
    %v2974 = vld [vmem:[#allocation3 + $0x80] sm:$0xf]
    %v2975 = vld [vmem:[#allocation3 + $0x88] sm:$0xf]
    %s2976 = scalar_lea.vmem [#allocation9], 4608
    %v2977 = vld [vmem:[%s2976] sm:$0xff]
    %v2978 = vld [vmem:[%s2976 + $0x8] sm:$0xff]
    %v2979 = vld [vmem:[%s2976 + $0x10] sm:$0xff]
    %v2980 = vld [vmem:[%s2976 + $0x18] sm:$0xff]
    %v2981 = vld [vmem:[%s2976 + $0x20] sm:$0xff]
    %v2982 = vld [vmem:[%s2976 + $0x28] sm:$0xff]
    %v2983 = vld [vmem:[%s2976 + $0x30] sm:$0xff]
    %v2984 = vld [vmem:[%s2976 + $0x38] sm:$0xff]
    %v2985 = vld [vmem:[%s2976 + $0x40] sm:$0xff]
    %v2986 = vld [vmem:[%s2976 + $0x48] sm:$0xff]
    %v2987 = vld [vmem:[%s2976 + $0x50] sm:$0xff]
    %v2988 = vld [vmem:[%s2976 + $0x58] sm:$0xff]
    %v2989 = vld [vmem:[%s2976 + $0x60] sm:$0xff]
    %v2990 = vld [vmem:[%s2976 + $0x68] sm:$0xff]
    %v2991 = vld [vmem:[%s2976 + $0x70] sm:$0xff]
    %v2992 = vld [vmem:[%s2976 + $0x78] sm:$0xff]
    %v2993 = vld [vmem:[%s2976 + $0x80] sm:$0xff]
    %v2994 = vld [vmem:[%s2976 + $0x88] sm:$0xff]
    %v2995 = vld [vmem:[%s2976 + $0x90] sm:$0xff]
    %v2996 = vld [vmem:[%s2976 + $0x98] sm:$0xff]
    %v2997 = vld [vmem:[%s2976 + $0xa0] sm:$0xff]
    %v2998 = vld [vmem:[%s2976 + $0xa8] sm:$0xff]
    %v2999 = vld [vmem:[%s2976 + $0xb0] sm:$0xff]
    %v3000 = vld [vmem:[%s2976 + $0xb8] sm:$0xff]
    %v3001 = vld [vmem:[%s2976 + $0xc0] sm:$0xff]
    %v3002 = vld [vmem:[%s2976 + $0xc8] sm:$0xff]
    %v3003 = vld [vmem:[%s2976 + $0xd0] sm:$0xff]
    %v3004 = vld [vmem:[%s2976 + $0xd8] sm:$0xff]
    %v3005 = vld [vmem:[%s2976 + $0xe0] sm:$0xff]
    %v3006 = vld [vmem:[%s2976 + $0xe8] sm:$0xff]
    %v3007 = vld [vmem:[%s2976 + $0xf0] sm:$0xff]
    %v3008 = vld [vmem:[%s2976 + $0xf8] sm:$0xff]
    %v3009 = vld [vmem:[%s2976 + $0x100] sm:$0xff]
    %v3010 = vld [vmem:[%s2976 + $0x108] sm:$0xff]
    %v3011 = vld [vmem:[%s2976 + $0x110] sm:$0xff]
    %v3012 = vld [vmem:[%s2976 + $0x118] sm:$0xff]
    %v3013 = vld [vmem:[%s2976 + $0x120] sm:$0xff]
    %v3014 = vld [vmem:[%s2976 + $0x128] sm:$0xff]
    %v3015 = vld [vmem:[%s2976 + $0x130] sm:$0xff]
    %v3016 = vld [vmem:[%s2976 + $0x138] sm:$0xff]
    %v3017 = vld [vmem:[%s2976 + $0x140] sm:$0xff]
    %v3018 = vld [vmem:[%s2976 + $0x148] sm:$0xff]
    %v3019 = vld [vmem:[%s2976 + $0x150] sm:$0xff]
    %v3020 = vld [vmem:[%s2976 + $0x158] sm:$0xff]
    %v3021 = vld [vmem:[%s2976 + $0x160] sm:$0xff]
    %v3022 = vld [vmem:[%s2976 + $0x168] sm:$0xff]
    %v3023 = vld [vmem:[%s2976 + $0x170] sm:$0xff]
    %v3024 = vld [vmem:[%s2976 + $0x178] sm:$0xff]
    %v3025 = vld [vmem:[%s2976 + $0x180] sm:$0xff]
    %v3026 = vld [vmem:[%s2976 + $0x188] sm:$0xff]
    %v3027 = vld [vmem:[%s2976 + $0x190] sm:$0xff]
    %v3028 = vld [vmem:[%s2976 + $0x198] sm:$0xff]
    %v3029 = vld [vmem:[%s2976 + $0x1a0] sm:$0xff]
    %v3030 = vld [vmem:[%s2976 + $0x1a8] sm:$0xff]
    %v3031 = vld [vmem:[%s2976 + $0x1b0] sm:$0xff]
    %v3032 = vld [vmem:[%s2976 + $0x1b8] sm:$0xff]
    %v3033 = vld [vmem:[%s2976 + $0x1c0] sm:$0xff]
    %v3034 = vld [vmem:[%s2976 + $0x1c8] sm:$0xff]
    %v3035 = vld [vmem:[%s2976 + $0x1d0] sm:$0xff]
    %v3036 = vld [vmem:[%s2976 + $0x1d8] sm:$0xff]
    %v3037 = vld [vmem:[%s2976 + $0x1e0] sm:$0xff]
    %v3038 = vld [vmem:[%s2976 + $0x1e8] sm:$0xff]
    %v3039 = vld [vmem:[%s2976 + $0x1f0] sm:$0xff]
    %v3040 = vld [vmem:[%s2976 + $0x1f8] sm:$0xff]
    %v3041 = vld [vmem:[%s2976 + $0x200] sm:$0xff]
    %v3042 = vld [vmem:[%s2976 + $0x208] sm:$0xff]
    %v3043 = vld [vmem:[%s2976 + $0x210] sm:$0xff]
    %v3044 = vld [vmem:[%s2976 + $0x218] sm:$0xff]
    %v3045 = vld [vmem:[%s2976 + $0x220] sm:$0xff]
    %v3046 = vld [vmem:[%s2976 + $0x228] sm:$0xff]
    %v3047 = vld [vmem:[%s2976 + $0x230] sm:$0xff]
    %v3048 = vld [vmem:[%s2976 + $0x238] sm:$0xff]
    %v3049 = vld [vmem:[%s2976 + $0x240] sm:$0xff]
    %v3050 = vld [vmem:[%s2976 + $0x248] sm:$0xff]
    %v3051 = vld [vmem:[%s2976 + $0x250] sm:$0xff]
    %v3052 = vld [vmem:[%s2976 + $0x258] sm:$0xff]
    %v3053 = vld [vmem:[%s2976 + $0x260] sm:$0xff]
    %v3054 = vld [vmem:[%s2976 + $0x268] sm:$0xff]
    %v3055 = vld [vmem:[%s2976 + $0x270] sm:$0xff]
    %v3056 = vld [vmem:[%s2976 + $0x278] sm:$0xff]
    %v3057 = vld [vmem:[%s2976 + $0x280] sm:$0xff]
    %v3058 = vld [vmem:[%s2976 + $0x288] sm:$0xff]
    %v3059 = vld [vmem:[%s2976 + $0x290] sm:$0xff]
    %v3060 = vld [vmem:[%s2976 + $0x298] sm:$0xff]
    %v3061 = vld [vmem:[%s2976 + $0x2a0] sm:$0xff]
    %v3062 = vld [vmem:[%s2976 + $0x2a8] sm:$0xff]
    %v3063 = vld [vmem:[%s2976 + $0x2b0] sm:$0xff]
    %v3064 = vld [vmem:[%s2976 + $0x2b8] sm:$0xff]
    %v3065 = vld [vmem:[%s2976 + $0x2c0] sm:$0xff]
    %v3066 = vld [vmem:[%s2976 + $0x2c8] sm:$0xff]
    %v3067 = vld [vmem:[%s2976 + $0x2d0] sm:$0xff]
    %v3068 = vld [vmem:[%s2976 + $0x2d8] sm:$0xff]
    %v3069 = vld [vmem:[%s2976 + $0x2e0] sm:$0xff]
    %v3070 = vld [vmem:[%s2976 + $0x2e8] sm:$0xff]
    %v3071 = vld [vmem:[%s2976 + $0x2f0] sm:$0xff]
    %v3072 = vld [vmem:[%s2976 + $0x2f8] sm:$0xff]
    %v3073 = vld [vmem:[%s2976 + $0x300] sm:$0xff]
    %v3074 = vld [vmem:[%s2976 + $0x308] sm:$0xff]
    %v3075 = vld [vmem:[%s2976 + $0x310] sm:$0xff]
    %v3076 = vld [vmem:[%s2976 + $0x318] sm:$0xff]
    %v3077 = vld [vmem:[%s2976 + $0x320] sm:$0xff]
    %v3078 = vld [vmem:[%s2976 + $0x328] sm:$0xff]
    %v3079 = vld [vmem:[%s2976 + $0x330] sm:$0xff]
    %v3080 = vld [vmem:[%s2976 + $0x338] sm:$0xff]
    %v3081 = vld [vmem:[%s2976 + $0x340] sm:$0xff]
    %v3082 = vld [vmem:[%s2976 + $0x348] sm:$0xff]
    %v3083 = vld [vmem:[%s2976 + $0x350] sm:$0xff]
    %v3084 = vld [vmem:[%s2976 + $0x358] sm:$0xff]
    %v3085 = vld [vmem:[%s2976 + $0x360] sm:$0xff]
    %v3086 = vld [vmem:[%s2976 + $0x368] sm:$0xff]
    %v3087 = vld [vmem:[%s2976 + $0x370] sm:$0xff]
    %v3088 = vld [vmem:[%s2976 + $0x378] sm:$0xff]
    %v3089 = vld [vmem:[%s2976 + $0x380] sm:$0xff]
    %v3090 = vld [vmem:[%s2976 + $0x388] sm:$0xff]
    %v3091 = vld [vmem:[%s2976 + $0x390] sm:$0xff]
    %v3092 = vld [vmem:[%s2976 + $0x398] sm:$0xff]
    %v3093 = vld [vmem:[%s2976 + $0x3a0] sm:$0xff]
    %v3094 = vld [vmem:[%s2976 + $0x3a8] sm:$0xff]
    %v3095 = vld [vmem:[%s2976 + $0x3b0] sm:$0xff]
    %v3096 = vld [vmem:[%s2976 + $0x3b8] sm:$0xff]
    %v3097 = vld [vmem:[%s2976 + $0x3c0] sm:$0xff]
    %v3098 = vld [vmem:[%s2976 + $0x3c8] sm:$0xff]
    %v3099 = vld [vmem:[%s2976 + $0x3d0] sm:$0xff]
    %v3100 = vld [vmem:[%s2976 + $0x3d8] sm:$0xff]
    %v3101 = vld [vmem:[%s2976 + $0x3e0] sm:$0xff]
    %v3102 = vld [vmem:[%s2976 + $0x3e8] sm:$0xff]
    %v3103 = vld [vmem:[%s2976 + $0x3f0] sm:$0xff]
    %v3104 = vld [vmem:[%s2976 + $0x3f8] sm:$0xff]
    %v3105 = vld [vmem:[%s2976 + $0x400] sm:$0xff]
    %v3106 = vld [vmem:[%s2976 + $0x408] sm:$0xff]
    %v3107 = vld [vmem:[%s2976 + $0x410] sm:$0xff]
    %v3108 = vld [vmem:[%s2976 + $0x418] sm:$0xff]
    %v3109 = vld [vmem:[%s2976 + $0x420] sm:$0xff]
    %v3110 = vld [vmem:[%s2976 + $0x428] sm:$0xff]
    %v3111 = vld [vmem:[%s2976 + $0x430] sm:$0xff]
    %v3112 = vld [vmem:[%s2976 + $0x438] sm:$0xff]
    %v3113 = vld [vmem:[%s2976 + $0x440] sm:$0xff]
    %v3114 = vld [vmem:[%s2976 + $0x448] sm:$0xff]
    %v3115 = vld [vmem:[%s2976 + $0x450] sm:$0xff]
    %v3116 = vld [vmem:[%s2976 + $0x458] sm:$0xff]
    %v3117 = vld [vmem:[%s2976 + $0x460] sm:$0xff]
    %v3118 = vld [vmem:[%s2976 + $0x468] sm:$0xff]
    %v3119 = vld [vmem:[%s2976 + $0x470] sm:$0xff]
    %v3120 = vld [vmem:[%s2976 + $0x478] sm:$0xff]
    %v3121 = vld [vmem:[%s2976 + $0x480] sm:$0xff]
    %v3122 = vld [vmem:[%s2976 + $0x488] sm:$0xff]
    %v3123 = vld [vmem:[%s2976 + $0x490] sm:$0xff]
    %v3124 = vld [vmem:[%s2976 + $0x498] sm:$0xff]
    %v3125 = vld [vmem:[%s2976 + $0x4a0] sm:$0xff]
    %v3126 = vld [vmem:[%s2976 + $0x4a8] sm:$0xff]
    %v3127 = vld [vmem:[%s2976 + $0x4b0] sm:$0xff]
    %v3128 = vld [vmem:[%s2976 + $0x4b8] sm:$0xff]
    %v3129 = vld [vmem:[%s2976 + $0x4c0] sm:$0xff]
    %v3130 = vld [vmem:[%s2976 + $0x4c8] sm:$0xff]
    %v3131 = vld [vmem:[%s2976 + $0x4d0] sm:$0xff]
    %v3132 = vld [vmem:[%s2976 + $0x4d8] sm:$0xff]
    %v3133 = vld [vmem:[%s2976 + $0x4e0] sm:$0xff]
    %v3134 = vld [vmem:[%s2976 + $0x4e8] sm:$0xff]
    %v3135 = vld [vmem:[%s2976 + $0x4f0] sm:$0xff]
    %v3136 = vld [vmem:[%s2976 + $0x4f8] sm:$0xff]
    %v3137 = vld [vmem:[%s2976 + $0x500] sm:$0xff]
    %v3138 = vld [vmem:[%s2976 + $0x508] sm:$0xff]
    %v3139 = vld [vmem:[%s2976 + $0x510] sm:$0xff]
    %v3140 = vld [vmem:[%s2976 + $0x518] sm:$0xff]
    %v3141 = vld [vmem:[%s2976 + $0x520] sm:$0xff]
    %v3142 = vld [vmem:[%s2976 + $0x528] sm:$0xff]
    %v3143 = vld [vmem:[%s2976 + $0x530] sm:$0xff]
    %v3144 = vld [vmem:[%s2976 + $0x538] sm:$0xff]
    %v3145 = vld [vmem:[%s2976 + $0x540] sm:$0xff]
    %v3146 = vld [vmem:[%s2976 + $0x548] sm:$0xff]
    %v3147 = vld [vmem:[%s2976 + $0x550] sm:$0xff]
    %v3148 = vld [vmem:[%s2976 + $0x558] sm:$0xff]
    %v3149 = vld [vmem:[%s2976 + $0x560] sm:$0xff]
    %v3150 = vld [vmem:[%s2976 + $0x568] sm:$0xff]
    %v3151 = vld [vmem:[%s2976 + $0x570] sm:$0xff]
    %v3152 = vld [vmem:[%s2976 + $0x578] sm:$0xff]
    %v3153 = vld [vmem:[%s2976 + $0x580] sm:$0xff]
    %v3154 = vld [vmem:[%s2976 + $0x588] sm:$0xff]
    %v3155 = vld [vmem:[%s2976 + $0x590] sm:$0xff]
    %v3156 = vld [vmem:[%s2976 + $0x598] sm:$0xff]
    %v3157 = vld [vmem:[%s2976 + $0x5a0] sm:$0xff]
    %v3158 = vld [vmem:[%s2976 + $0x5a8] sm:$0xff]
    %v3159 = vld [vmem:[%s2976 + $0x5b0] sm:$0xff]
    %v3160 = vld [vmem:[%s2976 + $0x5b8] sm:$0xff]
    %v3161 = vld [vmem:[%s2976 + $0x5c0] sm:$0xff]
    %v3162 = vld [vmem:[%s2976 + $0x5c8] sm:$0xff]
    %v3163 = vld [vmem:[%s2976 + $0x5d0] sm:$0xff]
    %v3164 = vld [vmem:[%s2976 + $0x5d8] sm:$0xff]
    %v3165 = vld [vmem:[%s2976 + $0x5e0] sm:$0xff]
    %v3166 = vld [vmem:[%s2976 + $0x5e8] sm:$0xff]
    %v3167 = vld [vmem:[%s2976 + $0x5f0] sm:$0xff]
    %v3168 = vld [vmem:[%s2976 + $0x5f8] sm:$0xff]
    %v3169 = vld [vmem:[%s2976 + $0x600] sm:$0xff]
    %v3170 = vld [vmem:[%s2976 + $0x608] sm:$0xff]
    %v3171 = vld [vmem:[%s2976 + $0x610] sm:$0xff]
    %v3172 = vld [vmem:[%s2976 + $0x618] sm:$0xff]
    %v3173 = vld [vmem:[%s2976 + $0x620] sm:$0xff]
    %v3174 = vld [vmem:[%s2976 + $0x628] sm:$0xff]
    %v3175 = vld [vmem:[%s2976 + $0x630] sm:$0xff]
    %v3176 = vld [vmem:[%s2976 + $0x638] sm:$0xff]
    %v3177 = vld [vmem:[%s2976 + $0x640] sm:$0xff]
    %v3178 = vld [vmem:[%s2976 + $0x648] sm:$0xff]
    %v3179 = vld [vmem:[%s2976 + $0x650] sm:$0xff]
    %v3180 = vld [vmem:[%s2976 + $0x658] sm:$0xff]
    %v3181 = vld [vmem:[%s2976 + $0x660] sm:$0xff]
    %v3182 = vld [vmem:[%s2976 + $0x668] sm:$0xff]
    %v3183 = vld [vmem:[%s2976 + $0x670] sm:$0xff]
    %v3184 = vld [vmem:[%s2976 + $0x678] sm:$0xff]
    %v3185 = vld [vmem:[%s2976 + $0x680] sm:$0xff]
    %v3186 = vld [vmem:[%s2976 + $0x688] sm:$0xff]
    %v3187 = vld [vmem:[%s2976 + $0x690] sm:$0xff]
    %v3188 = vld [vmem:[%s2976 + $0x698] sm:$0xff]
    %v3189 = vld [vmem:[%s2976 + $0x6a0] sm:$0xff]
    %v3190 = vld [vmem:[%s2976 + $0x6a8] sm:$0xff]
    %v3191 = vld [vmem:[%s2976 + $0x6b0] sm:$0xff]
    %v3192 = vld [vmem:[%s2976 + $0x6b8] sm:$0xff]
    %v3193 = vld [vmem:[%s2976 + $0x6c0] sm:$0xff]
    %v3194 = vld [vmem:[%s2976 + $0x6c8] sm:$0xff]
    %v3195 = vld [vmem:[%s2976 + $0x6d0] sm:$0xff]
    %v3196 = vld [vmem:[%s2976 + $0x6d8] sm:$0xff]
    %v3197 = vld [vmem:[%s2976 + $0x6e0] sm:$0xff]
    %v3198 = vld [vmem:[%s2976 + $0x6e8] sm:$0xff]
    %v3199 = vld [vmem:[%s2976 + $0x6f0] sm:$0xff]
    %v3200 = vld [vmem:[%s2976 + $0x6f8] sm:$0xff]
    %v3201 = vld [vmem:[%s2976 + $0x700] sm:$0xff]
    %v3202 = vld [vmem:[%s2976 + $0x708] sm:$0xff]
    %v3203 = vld [vmem:[%s2976 + $0x710] sm:$0xff]
    %v3204 = vld [vmem:[%s2976 + $0x718] sm:$0xff]
    %v3205 = vld [vmem:[%s2976 + $0x720] sm:$0xff]
    %v3206 = vld [vmem:[%s2976 + $0x728] sm:$0xff]
    %v3207 = vld [vmem:[%s2976 + $0x730] sm:$0xff]
    %v3208 = vld [vmem:[%s2976 + $0x738] sm:$0xff]
    %v3209 = vld [vmem:[%s2976 + $0x740] sm:$0xff]
    %v3210 = vld [vmem:[%s2976 + $0x748] sm:$0xff]
    %v3211 = vld [vmem:[%s2976 + $0x750] sm:$0xff]
    %v3212 = vld [vmem:[%s2976 + $0x758] sm:$0xff]
    %v3213 = vld [vmem:[%s2976 + $0x760] sm:$0xff]
    %v3214 = vld [vmem:[%s2976 + $0x768] sm:$0xff]
    %v3215 = vld [vmem:[%s2976 + $0x770] sm:$0xff]
    %v3216 = vld [vmem:[%s2976 + $0x778] sm:$0xff]
    %v3217 = vld [vmem:[%s2976 + $0x780] sm:$0xff]
    %v3218 = vld [vmem:[%s2976 + $0x788] sm:$0xff]
    %v3219 = vld [vmem:[%s2976 + $0x790] sm:$0xff]
    %v3220 = vld [vmem:[%s2976 + $0x798] sm:$0xff]
    %v3221 = vld [vmem:[%s2976 + $0x7a0] sm:$0xff]
    %v3222 = vld [vmem:[%s2976 + $0x7a8] sm:$0xff]
    %v3223 = vld [vmem:[%s2976 + $0x7b0] sm:$0xff]
    %v3224 = vld [vmem:[%s2976 + $0x7b8] sm:$0xff]
    %v3225 = vld [vmem:[%s2976 + $0x7c0] sm:$0xff]
    %v3226 = vld [vmem:[%s2976 + $0x7c8] sm:$0xff]
    %v3227 = vld [vmem:[%s2976 + $0x7d0] sm:$0xff]
    %v3228 = vld [vmem:[%s2976 + $0x7d8] sm:$0xff]
    %v3229 = vld [vmem:[%s2976 + $0x7e0] sm:$0xff]
    %v3230 = vld [vmem:[%s2976 + $0x7e8] sm:$0xff]
    %v3231 = vld [vmem:[%s2976 + $0x7f0] sm:$0xff]
    %v3232 = vld [vmem:[%s2976 + $0x7f8] sm:$0xff]
    %v3233 = vld [vmem:[%s2976 + $0x800] sm:$0xff]
    %v3234 = vld [vmem:[%s2976 + $0x808] sm:$0xff]
    %v3235 = vld [vmem:[%s2976 + $0x810] sm:$0xff]
    %v3236 = vld [vmem:[%s2976 + $0x818] sm:$0xff]
    %v3237 = vld [vmem:[%s2976 + $0x820] sm:$0xff]
    %v3238 = vld [vmem:[%s2976 + $0x828] sm:$0xff]
    %v3239 = vld [vmem:[%s2976 + $0x830] sm:$0xff]
    %v3240 = vld [vmem:[%s2976 + $0x838] sm:$0xff]
    %v3241 = vld [vmem:[%s2976 + $0x840] sm:$0xff]
    %v3242 = vld [vmem:[%s2976 + $0x848] sm:$0xff]
    %v3243 = vld [vmem:[%s2976 + $0x850] sm:$0xff]
    %v3244 = vld [vmem:[%s2976 + $0x858] sm:$0xff]
    %v3245 = vld [vmem:[%s2976 + $0x860] sm:$0xff]
    %v3246 = vld [vmem:[%s2976 + $0x868] sm:$0xff]
    %v3247 = vld [vmem:[%s2976 + $0x870] sm:$0xff]
    %v3248 = vld [vmem:[%s2976 + $0x878] sm:$0xff]
    %v3249 = vld [vmem:[%s2976 + $0x880] sm:$0xff]
    %v3250 = vld [vmem:[%s2976 + $0x888] sm:$0xff]
    %v3251 = vld [vmem:[%s2976 + $0x890] sm:$0xff]
    %v3252 = vld [vmem:[%s2976 + $0x898] sm:$0xff]
    %v3253 = vld [vmem:[%s2976 + $0x8a0] sm:$0xff]
    %v3254 = vld [vmem:[%s2976 + $0x8a8] sm:$0xff]
    %v3255 = vld [vmem:[%s2976 + $0x8b0] sm:$0xff]
    %v3256 = vld [vmem:[%s2976 + $0x8b8] sm:$0xff]
    %v3257 = vld [vmem:[%s2976 + $0x8c0] sm:$0xff]
    %v3258 = vld [vmem:[%s2976 + $0x8c8] sm:$0xff]
    %v3259 = vld [vmem:[%s2976 + $0x8d0] sm:$0xff]
    %v3260 = vld [vmem:[%s2976 + $0x8d8] sm:$0xff]
    %v3261 = vld [vmem:[%s2976 + $0x8e0] sm:$0xff]
    %v3262 = vld [vmem:[%s2976 + $0x8e8] sm:$0xff]
    %v3263 = vld [vmem:[%s2976 + $0x8f0] sm:$0xff]
    %v3264 = vld [vmem:[%s2976 + $0x8f8] sm:$0xff]
    %vm3277 = vcmask 1043456
    %v3278 = vrot.slane %v2964, 4
    %v3279 = vrot.slane %v1481, 4
    %v3280 = vsel %vm3277, %v3278, %v3279
    %v3281 = vrot.slane %v2965, 4
    %v3282 = vrot.slane %v1482, 4
    %v3283 = vsel %vm3277, %v3281, %v3282
    %v3284 = vrot.slane %v2966, 4
    %v3285 = vrot.slane %v1483, 4
    %v3286 = vsel %vm3277, %v3284, %v3285
    %v3287 = vrot.slane %v2967, 4
    %v3288 = vrot.slane %v1484, 4
    %v3289 = vsel %vm3277, %v3287, %v3288
    %v3290 = vrot.slane %v2968, 4
    %v3291 = vrot.slane %v1485, 4
    %v3292 = vsel %vm3277, %v3290, %v3291
    %v3293 = vrot.slane %v2969, 4
    %v3294 = vrot.slane %v1486, 4
    %v3295 = vsel %vm3277, %v3293, %v3294
    %v3296 = vrot.slane %v2970, 4
    %v3297 = vsel %vm3277, %v3279, %v3296
    %v3298 = vrot.slane %v2971, 4
    %v3299 = vsel %vm3277, %v3282, %v3298
    %v3300 = vrot.slane %v2972, 4
    %v3301 = vsel %vm3277, %v3285, %v3300
    %v3302 = vrot.slane %v2973, 4
    %v3303 = vsel %vm3277, %v3288, %v3302
    %v3304 = vrot.slane %v2974, 4
    %v3305 = vsel %vm3277, %v3291, %v3304
    %v3306 = vrot.slane %v2975, 4
    %v3307 = vsel %vm3277, %v3294, %v3306
    %3320 = vmatpush.msra.mxu0 %v3022
    %3321 = vmatpush.msra.mxu0 %v3019
    %3322 = vmatpush.msra.mxu0 %v3016
    %3323 = vmatpush.msra.mxu0 %v3013
    %3324 = vmatpush.msra.mxu0 %v3010
    %3325 = vmatpush.msra.mxu0 %v3007
    %3326 = vmatpush.msra.mxu0 %v3004
    %3327 = vmatpush.msra.mxu0 %v3001
    %3328 = vmatpush.msra.mxu0 %v2998
    %3329 = vmatpush.msra.mxu0 %v2995
    %3330 = vmatpush.msra.mxu0 %v2992
    %3331 = vmatpush.msra.mxu0 %v2989
    %3332 = vmatpush.msra.mxu0 %v2986
    %3333 = vmatpush.msra.mxu0 %v2983
    %3334 = vmatpush.msra.mxu0 %v2980
    %3335 = vmatpush.msra.mxu0 %v2977
    %3336 = vmatmul.f32.gmra.mxu0 %v3280
    %v3337 = vpop.f32.mrf.mxu0
    %v3338 = vadd.f32 0.0, %v3337
    %3339 = vmatmul.f32.gmra.mxu0 %v3297
    %v3340 = vpop.f32.mrf.mxu0
    %v3341 = vadd.f32 0.0, %v3340
    %3342 = vdwg.mxu0
    %3343 = vmatpush.msra.mxu0 %v3070
    %3344 = vmatpush.msra.mxu0 %v3067
    %3345 = vmatpush.msra.mxu0 %v3064
    %3346 = vmatpush.msra.mxu0 %v3061
    %3347 = vmatpush.msra.mxu0 %v3058
    %3348 = vmatpush.msra.mxu0 %v3055
    %3349 = vmatpush.msra.mxu0 %v3052
    %3350 = vmatpush.msra.mxu0 %v3049
    %3351 = vmatpush.msra.mxu0 %v3046
    %3352 = vmatpush.msra.mxu0 %v3043
    %3353 = vmatpush.msra.mxu0 %v3040
    %3354 = vmatpush.msra.mxu0 %v3037
    %3355 = vmatpush.msra.mxu0 %v3034
    %3356 = vmatpush.msra.mxu0 %v3031
    %3357 = vmatpush.msra.mxu0 %v3028
    %3358 = vmatpush.msra.mxu0 %v3025
    %3359 = vmatmul.f32.gmra.mxu0 %v3283
    %v3360 = vpop.f32.mrf.mxu0
    %v3361 = vadd.f32 %v3338, %v3360
    %3362 = vmatmul.f32.gmra.mxu0 %v3299
    %v3363 = vpop.f32.mrf.mxu0
    %v3364 = vadd.f32 %v3341, %v3363
    %3365 = vdwg.mxu0
    %3366 = vmatpush.msra.mxu0 %v3118
    %3367 = vmatpush.msra.mxu0 %v3115
    %3368 = vmatpush.msra.mxu0 %v3112
    %3369 = vmatpush.msra.mxu0 %v3109
    %3370 = vmatpush.msra.mxu0 %v3106
    %3371 = vmatpush.msra.mxu0 %v3103
    %3372 = vmatpush.msra.mxu0 %v3100
    %3373 = vmatpush.msra.mxu0 %v3097
    %3374 = vmatpush.msra.mxu0 %v3094
    %3375 = vmatpush.msra.mxu0 %v3091
    %3376 = vmatpush.msra.mxu0 %v3088
    %3377 = vmatpush.msra.mxu0 %v3085
    %3378 = vmatpush.msra.mxu0 %v3082
    %3379 = vmatpush.msra.mxu0 %v3079
    %3380 = vmatpush.msra.mxu0 %v3076
    %3381 = vmatpush.msra.mxu0 %v3073
    %3382 = vmatmul.f32.gmra.mxu0 %v3286
    %v3383 = vpop.f32.mrf.mxu0
    %v3384 = vadd.f32 %v3361, %v3383
    %3385 = vmatmul.f32.gmra.mxu0 %v3301
    %v3386 = vpop.f32.mrf.mxu0
    %v3387 = vadd.f32 %v3364, %v3386
    %3388 = vdwg.mxu0
    %3389 = vmatpush.msra.mxu0 %v3166
    %3390 = vmatpush.msra.mxu0 %v3163
    %3391 = vmatpush.msra.mxu0 %v3160
    %3392 = vmatpush.msra.mxu0 %v3157
    %3393 = vmatpush.msra.mxu0 %v3154
    %3394 = vmatpush.msra.mxu0 %v3151
    %3395 = vmatpush.msra.mxu0 %v3148
    %3396 = vmatpush.msra.mxu0 %v3145
    %3397 = vmatpush.msra.mxu0 %v3142
    %3398 = vmatpush.msra.mxu0 %v3139
    %3399 = vmatpush.msra.mxu0 %v3136
    %3400 = vmatpush.msra.mxu0 %v3133
    %3401 = vmatpush.msra.mxu0 %v3130
    %3402 = vmatpush.msra.mxu0 %v3127
    %3403 = vmatpush.msra.mxu0 %v3124
    %3404 = vmatpush.msra.mxu0 %v3121
    %3405 = vmatmul.f32.gmra.mxu0 %v3289
    %v3406 = vpop.f32.mrf.mxu0
    %v3407 = vadd.f32 %v3384, %v3406
    %3408 = vmatmul.f32.gmra.mxu0 %v3303
    %v3409 = vpop.f32.mrf.mxu0
    %v3410 = vadd.f32 %v3387, %v3409
    %3411 = vdwg.mxu0
    %3412 = vmatpush.msra.mxu0 %v3214
    %3413 = vmatpush.msra.mxu0 %v3211
    %3414 = vmatpush.msra.mxu0 %v3208
    %3415 = vmatpush.msra.mxu0 %v3205
    %3416 = vmatpush.msra.mxu0 %v3202
    %3417 = vmatpush.msra.mxu0 %v3199
    %3418 = vmatpush.msra.mxu0 %v3196
    %3419 = vmatpush.msra.mxu0 %v3193
    %3420 = vmatpush.msra.mxu0 %v3190
    %3421 = vmatpush.msra.mxu0 %v3187
    %3422 = vmatpush.msra.mxu0 %v3184
    %3423 = vmatpush.msra.mxu0 %v3181
    %3424 = vmatpush.msra.mxu0 %v3178
    %3425 = vmatpush.msra.mxu0 %v3175
    %3426 = vmatpush.msra.mxu0 %v3172
    %3427 = vmatpush.msra.mxu0 %v3169
    %3428 = vmatmul.f32.gmra.mxu0 %v3292
    %v3429 = vpop.f32.mrf.mxu0
    %v3430 = vadd.f32 %v3407, %v3429
    %3431 = vmatmul.f32.gmra.mxu0 %v3305
    %v3432 = vpop.f32.mrf.mxu0
    %v3433 = vadd.f32 %v3410, %v3432
    %3434 = vdwg.mxu0
    %3435 = vmatpush.msra.mxu0 %v3262
    %3436 = vmatpush.msra.mxu0 %v3259
    %3437 = vmatpush.msra.mxu0 %v3256
    %3438 = vmatpush.msra.mxu0 %v3253
    %3439 = vmatpush.msra.mxu0 %v3250
    %3440 = vmatpush.msra.mxu0 %v3247
    %3441 = vmatpush.msra.mxu0 %v3244
    %3442 = vmatpush.msra.mxu0 %v3241
    %3443 = vmatpush.msra.mxu0 %v3238
    %3444 = vmatpush.msra.mxu0 %v3235
    %3445 = vmatpush.msra.mxu0 %v3232
    %3446 = vmatpush.msra.mxu0 %v3229
    %3447 = vmatpush.msra.mxu0 %v3226
    %3448 = vmatpush.msra.mxu0 %v3223
    %3449 = vmatpush.msra.mxu0 %v3220
    %3450 = vmatpush.msra.mxu0 %v3217
    %3451 = vmatmul.f32.gmra.mxu0 %v3295
    %v3452 = vpop.f32.mrf.mxu0
    %v3453 = vadd.f32 %v3430, %v3452
    %3454 = vmatmul.f32.gmra.mxu0 %v3307
    %v3455 = vpop.f32.mrf.mxu0
    %v3456 = vadd.f32 %v3433, %v3455
    %3457 = vdwg.mxu0
    %3458 = vmatpush.msra.mxu0 %v3023
    %3459 = vmatpush.msra.mxu0 %v3020
    %3460 = vmatpush.msra.mxu0 %v3017
    %3461 = vmatpush.msra.mxu0 %v3014
    %3462 = vmatpush.msra.mxu0 %v3011
    %3463 = vmatpush.msra.mxu0 %v3008
    %3464 = vmatpush.msra.mxu0 %v3005
    %3465 = vmatpush.msra.mxu0 %v3002
    %3466 = vmatpush.msra.mxu0 %v2999
    %3467 = vmatpush.msra.mxu0 %v2996
    %3468 = vmatpush.msra.mxu0 %v2993
    %3469 = vmatpush.msra.mxu0 %v2990
    %3470 = vmatpush.msra.mxu0 %v2987
    %3471 = vmatpush.msra.mxu0 %v2984
    %3472 = vmatpush.msra.mxu0 %v2981
    %3473 = vmatpush.msra.mxu0 %v2978
    %3474 = vmatmul.f32.gmra.mxu0 %v3280
    %v3475 = vpop.f32.mrf.mxu0
    %v3476 = vadd.f32 0.0, %v3475
    %3477 = vmatmul.f32.gmra.mxu0 %v3297
    %v3478 = vpop.f32.mrf.mxu0
    %v3479 = vadd.f32 0.0, %v3478
    %3480 = vdwg.mxu0
    %3481 = vmatpush.msra.mxu0 %v3071
    %3482 = vmatpush.msra.mxu0 %v3068
    %3483 = vmatpush.msra.mxu0 %v3065
    %3484 = vmatpush.msra.mxu0 %v3062
    %3485 = vmatpush.msra.mxu0 %v3059
    %3486 = vmatpush.msra.mxu0 %v3056
    %3487 = vmatpush.msra.mxu0 %v3053
    %3488 = vmatpush.msra.mxu0 %v3050
    %3489 = vmatpush.msra.mxu0 %v3047
    %3490 = vmatpush.msra.mxu0 %v3044
    %3491 = vmatpush.msra.mxu0 %v3041
    %3492 = vmatpush.msra.mxu0 %v3038
    %3493 = vmatpush.msra.mxu0 %v3035
    %3494 = vmatpush.msra.mxu0 %v3032
    %3495 = vmatpush.msra.mxu0 %v3029
    %3496 = vmatpush.msra.mxu0 %v3026
    %3497 = vmatmul.f32.gmra.mxu0 %v3283
    %v3498 = vpop.f32.mrf.mxu0
    %v3499 = vadd.f32 %v3476, %v3498
    %3500 = vmatmul.f32.gmra.mxu0 %v3299
    %v3501 = vpop.f32.mrf.mxu0
    %v3502 = vadd.f32 %v3479, %v3501
    %3503 = vdwg.mxu0
    %3504 = vmatpush.msra.mxu0 %v3119
    %3505 = vmatpush.msra.mxu0 %v3116
    %3506 = vmatpush.msra.mxu0 %v3113
    %3507 = vmatpush.msra.mxu0 %v3110
    %3508 = vmatpush.msra.mxu0 %v3107
    %3509 = vmatpush.msra.mxu0 %v3104
    %3510 = vmatpush.msra.mxu0 %v3101
    %3511 = vmatpush.msra.mxu0 %v3098
    %3512 = vmatpush.msra.mxu0 %v3095
    %3513 = vmatpush.msra.mxu0 %v3092
    %3514 = vmatpush.msra.mxu0 %v3089
    %3515 = vmatpush.msra.mxu0 %v3086
    %3516 = vmatpush.msra.mxu0 %v3083
    %3517 = vmatpush.msra.mxu0 %v3080
    %3518 = vmatpush.msra.mxu0 %v3077
    %3519 = vmatpush.msra.mxu0 %v3074
    %3520 = vmatmul.f32.gmra.mxu0 %v3286
    %v3521 = vpop.f32.mrf.mxu0
    %v3522 = vadd.f32 %v3499, %v3521
    %3523 = vmatmul.f32.gmra.mxu0 %v3301
    %v3524 = vpop.f32.mrf.mxu0
    %v3525 = vadd.f32 %v3502, %v3524
    %3526 = vdwg.mxu0
    %3527 = vmatpush.msra.mxu0 %v3167
    %3528 = vmatpush.msra.mxu0 %v3164
    %3529 = vmatpush.msra.mxu0 %v3161
    %3530 = vmatpush.msra.mxu0 %v3158
    %3531 = vmatpush.msra.mxu0 %v3155
    %3532 = vmatpush.msra.mxu0 %v3152
    %3533 = vmatpush.msra.mxu0 %v3149
    %3534 = vmatpush.msra.mxu0 %v3146
    %3535 = vmatpush.msra.mxu0 %v3143
    %3536 = vmatpush.msra.mxu0 %v3140
    %3537 = vmatpush.msra.mxu0 %v3137
    %3538 = vmatpush.msra.mxu0 %v3134
    %3539 = vmatpush.msra.mxu0 %v3131
    %3540 = vmatpush.msra.mxu0 %v3128
    %3541 = vmatpush.msra.mxu0 %v3125
    %3542 = vmatpush.msra.mxu0 %v3122
    %3543 = vmatmul.f32.gmra.mxu0 %v3289
    %v3544 = vpop.f32.mrf.mxu0
    %v3545 = vadd.f32 %v3522, %v3544
    %3546 = vmatmul.f32.gmra.mxu0 %v3303
    %v3547 = vpop.f32.mrf.mxu0
    %v3548 = vadd.f32 %v3525, %v3547
    %3549 = vdwg.mxu0
    %3550 = vmatpush.msra.mxu0 %v3215
    %3551 = vmatpush.msra.mxu0 %v3212
    %3552 = vmatpush.msra.mxu0 %v3209
    %3553 = vmatpush.msra.mxu0 %v3206
    %3554 = vmatpush.msra.mxu0 %v3203
    %3555 = vmatpush.msra.mxu0 %v3200
    %3556 = vmatpush.msra.mxu0 %v3197
    %3557 = vmatpush.msra.mxu0 %v3194
    %3558 = vmatpush.msra.mxu0 %v3191
    %3559 = vmatpush.msra.mxu0 %v3188
    %3560 = vmatpush.msra.mxu0 %v3185
    %3561 = vmatpush.msra.mxu0 %v3182
    %3562 = vmatpush.msra.mxu0 %v3179
    %3563 = vmatpush.msra.mxu0 %v3176
    %3564 = vmatpush.msra.mxu0 %v3173
    %3565 = vmatpush.msra.mxu0 %v3170
    %3566 = vmatmul.f32.gmra.mxu0 %v3292
    %v3567 = vpop.f32.mrf.mxu0
    %v3568 = vadd.f32 %v3545, %v3567
    %3569 = vmatmul.f32.gmra.mxu0 %v3305
    %v3570 = vpop.f32.mrf.mxu0
    %v3571 = vadd.f32 %v3548, %v3570
    %3572 = vdwg.mxu0
    %3573 = vmatpush.msra.mxu0 %v3263
    %3574 = vmatpush.msra.mxu0 %v3260
    %3575 = vmatpush.msra.mxu0 %v3257
    %3576 = vmatpush.msra.mxu0 %v3254
    %3577 = vmatpush.msra.mxu0 %v3251
    %3578 = vmatpush.msra.mxu0 %v3248
    %3579 = vmatpush.msra.mxu0 %v3245
    %3580 = vmatpush.msra.mxu0 %v3242
    %3581 = vmatpush.msra.mxu0 %v3239
    %3582 = vmatpush.msra.mxu0 %v3236
    %3583 = vmatpush.msra.mxu0 %v3233
    %3584 = vmatpush.msra.mxu0 %v3230
    %3585 = vmatpush.msra.mxu0 %v3227
    %3586 = vmatpush.msra.mxu0 %v3224
    %3587 = vmatpush.msra.mxu0 %v3221
    %3588 = vmatpush.msra.mxu0 %v3218
    %3589 = vmatmul.f32.gmra.mxu0 %v3295
    %v3590 = vpop.f32.mrf.mxu0
    %v3591 = vadd.f32 %v3568, %v3590
    %3592 = vmatmul.f32.gmra.mxu0 %v3307
    %v3593 = vpop.f32.mrf.mxu0
    %v3594 = vadd.f32 %v3571, %v3593
    %3595 = vdwg.mxu0
    %3596 = vmatpush.msra.mxu0 %v3024
    %3597 = vmatpush.msra.mxu0 %v3021
    %3598 = vmatpush.msra.mxu0 %v3018
    %3599 = vmatpush.msra.mxu0 %v3015
    %3600 = vmatpush.msra.mxu0 %v3012
    %3601 = vmatpush.msra.mxu0 %v3009
    %3602 = vmatpush.msra.mxu0 %v3006
    %3603 = vmatpush.msra.mxu0 %v3003
    %3604 = vmatpush.msra.mxu0 %v3000
    %3605 = vmatpush.msra.mxu0 %v2997
    %3606 = vmatpush.msra.mxu0 %v2994
    %3607 = vmatpush.msra.mxu0 %v2991
    %3608 = vmatpush.msra.mxu0 %v2988
    %3609 = vmatpush.msra.mxu0 %v2985
    %3610 = vmatpush.msra.mxu0 %v2982
    %3611 = vmatpush.msra.mxu0 %v2979
    %3612 = vmatmul.f32.gmra.mxu0 %v3280
    %v3613 = vpop.f32.mrf.mxu0
    %v3614 = vadd.f32 0.0, %v3613
    %3615 = vmatmul.f32.gmra.mxu0 %v3297
    %v3616 = vpop.f32.mrf.mxu0
    %v3617 = vadd.f32 0.0, %v3616
    %3618 = vdwg.mxu0
    %3619 = vmatpush.msra.mxu0 %v3072
    %3620 = vmatpush.msra.mxu0 %v3069
    %3621 = vmatpush.msra.mxu0 %v3066
    %3622 = vmatpush.msra.mxu0 %v3063
    %3623 = vmatpush.msra.mxu0 %v3060
    %3624 = vmatpush.msra.mxu0 %v3057
    %3625 = vmatpush.msra.mxu0 %v3054
    %3626 = vmatpush.msra.mxu0 %v3051
    %3627 = vmatpush.msra.mxu0 %v3048
    %3628 = vmatpush.msra.mxu0 %v3045
    %3629 = vmatpush.msra.mxu0 %v3042
    %3630 = vmatpush.msra.mxu0 %v3039
    %3631 = vmatpush.msra.mxu0 %v3036
    %3632 = vmatpush.msra.mxu0 %v3033
    %3633 = vmatpush.msra.mxu0 %v3030
    %3634 = vmatpush.msra.mxu0 %v3027
    %3635 = vmatmul.f32.gmra.mxu0 %v3283
    %v3636 = vpop.f32.mrf.mxu0
    %v3637 = vadd.f32 %v3614, %v3636
    %3638 = vmatmul.f32.gmra.mxu0 %v3299
    %v3639 = vpop.f32.mrf.mxu0
    %v3640 = vadd.f32 %v3617, %v3639
    %3641 = vdwg.mxu0
    %3642 = vmatpush.msra.mxu0 %v3120
    %3643 = vmatpush.msra.mxu0 %v3117
    %3644 = vmatpush.msra.mxu0 %v3114
    %3645 = vmatpush.msra.mxu0 %v3111
    %3646 = vmatpush.msra.mxu0 %v3108
    %3647 = vmatpush.msra.mxu0 %v3105
    %3648 = vmatpush.msra.mxu0 %v3102
    %3649 = vmatpush.msra.mxu0 %v3099
    %3650 = vmatpush.msra.mxu0 %v3096
    %3651 = vmatpush.msra.mxu0 %v3093
    %3652 = vmatpush.msra.mxu0 %v3090
    %3653 = vmatpush.msra.mxu0 %v3087
    %3654 = vmatpush.msra.mxu0 %v3084
    %3655 = vmatpush.msra.mxu0 %v3081
    %3656 = vmatpush.msra.mxu0 %v3078
    %3657 = vmatpush.msra.mxu0 %v3075
    %3658 = vmatmul.f32.gmra.mxu0 %v3286
    %v3659 = vpop.f32.mrf.mxu0
    %v3660 = vadd.f32 %v3637, %v3659
    %3661 = vmatmul.f32.gmra.mxu0 %v3301
    %v3662 = vpop.f32.mrf.mxu0
    %v3663 = vadd.f32 %v3640, %v3662
    %3664 = vdwg.mxu0
    %3665 = vmatpush.msra.mxu0 %v3168
    %3666 = vmatpush.msra.mxu0 %v3165
    %3667 = vmatpush.msra.mxu0 %v3162
    %3668 = vmatpush.msra.mxu0 %v3159
    %3669 = vmatpush.msra.mxu0 %v3156
    %3670 = vmatpush.msra.mxu0 %v3153
    %3671 = vmatpush.msra.mxu0 %v3150
    %3672 = vmatpush.msra.mxu0 %v3147
    %3673 = vmatpush.msra.mxu0 %v3144
    %3674 = vmatpush.msra.mxu0 %v3141
    %3675 = vmatpush.msra.mxu0 %v3138
    %3676 = vmatpush.msra.mxu0 %v3135
    %3677 = vmatpush.msra.mxu0 %v3132
    %3678 = vmatpush.msra.mxu0 %v3129
    %3679 = vmatpush.msra.mxu0 %v3126
    %3680 = vmatpush.msra.mxu0 %v3123
    %3681 = vmatmul.f32.gmra.mxu0 %v3289
    %v3682 = vpop.f32.mrf.mxu0
    %v3683 = vadd.f32 %v3660, %v3682
    %3684 = vmatmul.f32.gmra.mxu0 %v3303
    %v3685 = vpop.f32.mrf.mxu0
    %v3686 = vadd.f32 %v3663, %v3685
    %3687 = vdwg.mxu0
    %3688 = vmatpush.msra.mxu0 %v3216
    %3689 = vmatpush.msra.mxu0 %v3213
    %3690 = vmatpush.msra.mxu0 %v3210
    %3691 = vmatpush.msra.mxu0 %v3207
    %3692 = vmatpush.msra.mxu0 %v3204
    %3693 = vmatpush.msra.mxu0 %v3201
    %3694 = vmatpush.msra.mxu0 %v3198
    %3695 = vmatpush.msra.mxu0 %v3195
    %3696 = vmatpush.msra.mxu0 %v3192
    %3697 = vmatpush.msra.mxu0 %v3189
    %3698 = vmatpush.msra.mxu0 %v3186
    %3699 = vmatpush.msra.mxu0 %v3183
    %3700 = vmatpush.msra.mxu0 %v3180
    %3701 = vmatpush.msra.mxu0 %v3177
    %3702 = vmatpush.msra.mxu0 %v3174
    %3703 = vmatpush.msra.mxu0 %v3171
    %3704 = vmatmul.f32.gmra.mxu0 %v3292
    %v3705 = vpop.f32.mrf.mxu0
    %v3706 = vadd.f32 %v3683, %v3705
    %3707 = vmatmul.f32.gmra.mxu0 %v3305
    %v3708 = vpop.f32.mrf.mxu0
    %v3709 = vadd.f32 %v3686, %v3708
    %3710 = vdwg.mxu0
    %3711 = vmatpush.msra.mxu0 %v3264
    %3712 = vmatpush.msra.mxu0 %v3261
    %3713 = vmatpush.msra.mxu0 %v3258
    %3714 = vmatpush.msra.mxu0 %v3255
    %3715 = vmatpush.msra.mxu0 %v3252
    %3716 = vmatpush.msra.mxu0 %v3249
    %3717 = vmatpush.msra.mxu0 %v3246
    %3718 = vmatpush.msra.mxu0 %v3243
    %3719 = vmatpush.msra.mxu0 %v3240
    %3720 = vmatpush.msra.mxu0 %v3237
    %3721 = vmatpush.msra.mxu0 %v3234
    %3722 = vmatpush.msra.mxu0 %v3231
    %3723 = vmatpush.msra.mxu0 %v3228
    %3724 = vmatpush.msra.mxu0 %v3225
    %3725 = vmatpush.msra.mxu0 %v3222
    %3726 = vmatpush.msra.mxu0 %v3219
    %3727 = vmatmul.f32.gmra.mxu0 %v3295
    %v3728 = vpop.f32.mrf.mxu0
    %v3729 = vadd.f32 %v3706, %v3728
    %3730 = vmatmul.f32.gmra.mxu0 %v3307
    %v3731 = vpop.f32.mrf.mxu0
    %v3732 = vadd.f32 %v3709, %v3731
    %3733 = vdwg.mxu0
    %v3734 = vadd.f32 %v2683, %v3453
    %v3735 = vadd.f32 %v2821, %v3591
    %v3736 = vadd.f32 %v2959, %v3729
    %v3737 = vadd.f32 %v2686, %v3456
    %v3738 = vadd.f32 %v2824, %v3594
    %v3739 = vadd.f32 %v2962, %v3732
    %v3740 = vld [vmem:[#allocation3] sm:$0xc0]
    %v3741 = vld [vmem:[#allocation3 + $0x8] sm:$0xc0]
    %v3742 = vld [vmem:[#allocation3 + $0x10] sm:$0xc0]
    %v3743 = vld [vmem:[#allocation3 + $0x18] sm:$0xc0]
    %v3744 = vld [vmem:[#allocation3 + $0x20] sm:$0xc0]
    %v3745 = vld [vmem:[#allocation3 + $0x28] sm:$0xc0]
    %v3746 = vld [vmem:[#allocation3 + $0x60] sm:$0x3f]
    %v3747 = vld [vmem:[#allocation3 + $0x68] sm:$0x3f]
    %v3748 = vld [vmem:[#allocation3 + $0x70] sm:$0x3f]
    %v3749 = vld [vmem:[#allocation3 + $0x78] sm:$0x3f]
    %v3750 = vld [vmem:[#allocation3 + $0x80] sm:$0x3f]
    %v3751 = vld [vmem:[#allocation3 + $0x88] sm:$0x3f]
    %s3752 = scalar_lea.vmem [#allocation9], 6912
    %v3753 = vld [vmem:[%s3752] sm:$0xff]
    %v3754 = vld [vmem:[%s3752 + $0x8] sm:$0xff]
    %v3755 = vld [vmem:[%s3752 + $0x10] sm:$0xff]
    %v3756 = vld [vmem:[%s3752 + $0x18] sm:$0xff]
    %v3757 = vld [vmem:[%s3752 + $0x20] sm:$0xff]
    %v3758 = vld [vmem:[%s3752 + $0x28] sm:$0xff]
    %v3759 = vld [vmem:[%s3752 + $0x30] sm:$0xff]
    %v3760 = vld [vmem:[%s3752 + $0x38] sm:$0xff]
    %v3761 = vld [vmem:[%s3752 + $0x40] sm:$0xff]
    %v3762 = vld [vmem:[%s3752 + $0x48] sm:$0xff]
    %v3763 = vld [vmem:[%s3752 + $0x50] sm:$0xff]
    %v3764 = vld [vmem:[%s3752 + $0x58] sm:$0xff]
    %v3765 = vld [vmem:[%s3752 + $0x60] sm:$0xff]
    %v3766 = vld [vmem:[%s3752 + $0x68] sm:$0xff]
    %v3767 = vld [vmem:[%s3752 + $0x70] sm:$0xff]
    %v3768 = vld [vmem:[%s3752 + $0x78] sm:$0xff]
    %v3769 = vld [vmem:[%s3752 + $0x80] sm:$0xff]
    %v3770 = vld [vmem:[%s3752 + $0x88] sm:$0xff]
    %v3771 = vld [vmem:[%s3752 + $0x90] sm:$0xff]
    %v3772 = vld [vmem:[%s3752 + $0x98] sm:$0xff]
    %v3773 = vld [vmem:[%s3752 + $0xa0] sm:$0xff]
    %v3774 = vld [vmem:[%s3752 + $0xa8] sm:$0xff]
    %v3775 = vld [vmem:[%s3752 + $0xb0] sm:$0xff]
    %v3776 = vld [vmem:[%s3752 + $0xb8] sm:$0xff]
    %v3777 = vld [vmem:[%s3752 + $0xc0] sm:$0xff]
    %v3778 = vld [vmem:[%s3752 + $0xc8] sm:$0xff]
    %v3779 = vld [vmem:[%s3752 + $0xd0] sm:$0xff]
    %v3780 = vld [vmem:[%s3752 + $0xd8] sm:$0xff]
    %v3781 = vld [vmem:[%s3752 + $0xe0] sm:$0xff]
    %v3782 = vld [vmem:[%s3752 + $0xe8] sm:$0xff]
    %v3783 = vld [vmem:[%s3752 + $0xf0] sm:$0xff]
    %v3784 = vld [vmem:[%s3752 + $0xf8] sm:$0xff]
    %v3785 = vld [vmem:[%s3752 + $0x100] sm:$0xff]
    %v3786 = vld [vmem:[%s3752 + $0x108] sm:$0xff]
    %v3787 = vld [vmem:[%s3752 + $0x110] sm:$0xff]
    %v3788 = vld [vmem:[%s3752 + $0x118] sm:$0xff]
    %v3789 = vld [vmem:[%s3752 + $0x120] sm:$0xff]
    %v3790 = vld [vmem:[%s3752 + $0x128] sm:$0xff]
    %v3791 = vld [vmem:[%s3752 + $0x130] sm:$0xff]
    %v3792 = vld [vmem:[%s3752 + $0x138] sm:$0xff]
    %v3793 = vld [vmem:[%s3752 + $0x140] sm:$0xff]
    %v3794 = vld [vmem:[%s3752 + $0x148] sm:$0xff]
    %v3795 = vld [vmem:[%s3752 + $0x150] sm:$0xff]
    %v3796 = vld [vmem:[%s3752 + $0x158] sm:$0xff]
    %v3797 = vld [vmem:[%s3752 + $0x160] sm:$0xff]
    %v3798 = vld [vmem:[%s3752 + $0x168] sm:$0xff]
    %v3799 = vld [vmem:[%s3752 + $0x170] sm:$0xff]
    %v3800 = vld [vmem:[%s3752 + $0x178] sm:$0xff]
    %v3801 = vld [vmem:[%s3752 + $0x180] sm:$0xff]
    %v3802 = vld [vmem:[%s3752 + $0x188] sm:$0xff]
    %v3803 = vld [vmem:[%s3752 + $0x190] sm:$0xff]
    %v3804 = vld [vmem:[%s3752 + $0x198] sm:$0xff]
    %v3805 = vld [vmem:[%s3752 + $0x1a0] sm:$0xff]
    %v3806 = vld [vmem:[%s3752 + $0x1a8] sm:$0xff]
    %v3807 = vld [vmem:[%s3752 + $0x1b0] sm:$0xff]
    %v3808 = vld [vmem:[%s3752 + $0x1b8] sm:$0xff]
    %v3809 = vld [vmem:[%s3752 + $0x1c0] sm:$0xff]
    %v3810 = vld [vmem:[%s3752 + $0x1c8] sm:$0xff]
    %v3811 = vld [vmem:[%s3752 + $0x1d0] sm:$0xff]
    %v3812 = vld [vmem:[%s3752 + $0x1d8] sm:$0xff]
    %v3813 = vld [vmem:[%s3752 + $0x1e0] sm:$0xff]
    %v3814 = vld [vmem:[%s3752 + $0x1e8] sm:$0xff]
    %v3815 = vld [vmem:[%s3752 + $0x1f0] sm:$0xff]
    %v3816 = vld [vmem:[%s3752 + $0x1f8] sm:$0xff]
    %v3817 = vld [vmem:[%s3752 + $0x200] sm:$0xff]
    %v3818 = vld [vmem:[%s3752 + $0x208] sm:$0xff]
    %v3819 = vld [vmem:[%s3752 + $0x210] sm:$0xff]
    %v3820 = vld [vmem:[%s3752 + $0x218] sm:$0xff]
    %v3821 = vld [vmem:[%s3752 + $0x220] sm:$0xff]
    %v3822 = vld [vmem:[%s3752 + $0x228] sm:$0xff]
    %v3823 = vld [vmem:[%s3752 + $0x230] sm:$0xff]
    %v3824 = vld [vmem:[%s3752 + $0x238] sm:$0xff]
    %v3825 = vld [vmem:[%s3752 + $0x240] sm:$0xff]
    %v3826 = vld [vmem:[%s3752 + $0x248] sm:$0xff]
    %v3827 = vld [vmem:[%s3752 + $0x250] sm:$0xff]
    %v3828 = vld [vmem:[%s3752 + $0x258] sm:$0xff]
    %v3829 = vld [vmem:[%s3752 + $0x260] sm:$0xff]
    %v3830 = vld [vmem:[%s3752 + $0x268] sm:$0xff]
    %v3831 = vld [vmem:[%s3752 + $0x270] sm:$0xff]
    %v3832 = vld [vmem:[%s3752 + $0x278] sm:$0xff]
    %v3833 = vld [vmem:[%s3752 + $0x280] sm:$0xff]
    %v3834 = vld [vmem:[%s3752 + $0x288] sm:$0xff]
    %v3835 = vld [vmem:[%s3752 + $0x290] sm:$0xff]
    %v3836 = vld [vmem:[%s3752 + $0x298] sm:$0xff]
    %v3837 = vld [vmem:[%s3752 + $0x2a0] sm:$0xff]
    %v3838 = vld [vmem:[%s3752 + $0x2a8] sm:$0xff]
    %v3839 = vld [vmem:[%s3752 + $0x2b0] sm:$0xff]
    %v3840 = vld [vmem:[%s3752 + $0x2b8] sm:$0xff]
    %v3841 = vld [vmem:[%s3752 + $0x2c0] sm:$0xff]
    %v3842 = vld [vmem:[%s3752 + $0x2c8] sm:$0xff]
    %v3843 = vld [vmem:[%s3752 + $0x2d0] sm:$0xff]
    %v3844 = vld [vmem:[%s3752 + $0x2d8] sm:$0xff]
    %v3845 = vld [vmem:[%s3752 + $0x2e0] sm:$0xff]
    %v3846 = vld [vmem:[%s3752 + $0x2e8] sm:$0xff]
    %v3847 = vld [vmem:[%s3752 + $0x2f0] sm:$0xff]
    %v3848 = vld [vmem:[%s3752 + $0x2f8] sm:$0xff]
    %v3849 = vld [vmem:[%s3752 + $0x300] sm:$0xff]
    %v3850 = vld [vmem:[%s3752 + $0x308] sm:$0xff]
    %v3851 = vld [vmem:[%s3752 + $0x310] sm:$0xff]
    %v3852 = vld [vmem:[%s3752 + $0x318] sm:$0xff]
    %v3853 = vld [vmem:[%s3752 + $0x320] sm:$0xff]
    %v3854 = vld [vmem:[%s3752 + $0x328] sm:$0xff]
    %v3855 = vld [vmem:[%s3752 + $0x330] sm:$0xff]
    %v3856 = vld [vmem:[%s3752 + $0x338] sm:$0xff]
    %v3857 = vld [vmem:[%s3752 + $0x340] sm:$0xff]
    %v3858 = vld [vmem:[%s3752 + $0x348] sm:$0xff]
    %v3859 = vld [vmem:[%s3752 + $0x350] sm:$0xff]
    %v3860 = vld [vmem:[%s3752 + $0x358] sm:$0xff]
    %v3861 = vld [vmem:[%s3752 + $0x360] sm:$0xff]
    %v3862 = vld [vmem:[%s3752 + $0x368] sm:$0xff]
    %v3863 = vld [vmem:[%s3752 + $0x370] sm:$0xff]
    %v3864 = vld [vmem:[%s3752 + $0x378] sm:$0xff]
    %v3865 = vld [vmem:[%s3752 + $0x380] sm:$0xff]
    %v3866 = vld [vmem:[%s3752 + $0x388] sm:$0xff]
    %v3867 = vld [vmem:[%s3752 + $0x390] sm:$0xff]
    %v3868 = vld [vmem:[%s3752 + $0x398] sm:$0xff]
    %v3869 = vld [vmem:[%s3752 + $0x3a0] sm:$0xff]
    %v3870 = vld [vmem:[%s3752 + $0x3a8] sm:$0xff]
    %v3871 = vld [vmem:[%s3752 + $0x3b0] sm:$0xff]
    %v3872 = vld [vmem:[%s3752 + $0x3b8] sm:$0xff]
    %v3873 = vld [vmem:[%s3752 + $0x3c0] sm:$0xff]
    %v3874 = vld [vmem:[%s3752 + $0x3c8] sm:$0xff]
    %v3875 = vld [vmem:[%s3752 + $0x3d0] sm:$0xff]
    %v3876 = vld [vmem:[%s3752 + $0x3d8] sm:$0xff]
    %v3877 = vld [vmem:[%s3752 + $0x3e0] sm:$0xff]
    %v3878 = vld [vmem:[%s3752 + $0x3e8] sm:$0xff]
    %v3879 = vld [vmem:[%s3752 + $0x3f0] sm:$0xff]
    %v3880 = vld [vmem:[%s3752 + $0x3f8] sm:$0xff]
    %v3881 = vld [vmem:[%s3752 + $0x400] sm:$0xff]
    %v3882 = vld [vmem:[%s3752 + $0x408] sm:$0xff]
    %v3883 = vld [vmem:[%s3752 + $0x410] sm:$0xff]
    %v3884 = vld [vmem:[%s3752 + $0x418] sm:$0xff]
    %v3885 = vld [vmem:[%s3752 + $0x420] sm:$0xff]
    %v3886 = vld [vmem:[%s3752 + $0x428] sm:$0xff]
    %v3887 = vld [vmem:[%s3752 + $0x430] sm:$0xff]
    %v3888 = vld [vmem:[%s3752 + $0x438] sm:$0xff]
    %v3889 = vld [vmem:[%s3752 + $0x440] sm:$0xff]
    %v3890 = vld [vmem:[%s3752 + $0x448] sm:$0xff]
    %v3891 = vld [vmem:[%s3752 + $0x450] sm:$0xff]
    %v3892 = vld [vmem:[%s3752 + $0x458] sm:$0xff]
    %v3893 = vld [vmem:[%s3752 + $0x460] sm:$0xff]
    %v3894 = vld [vmem:[%s3752 + $0x468] sm:$0xff]
    %v3895 = vld [vmem:[%s3752 + $0x470] sm:$0xff]
    %v3896 = vld [vmem:[%s3752 + $0x478] sm:$0xff]
    %v3897 = vld [vmem:[%s3752 + $0x480] sm:$0xff]
    %v3898 = vld [vmem:[%s3752 + $0x488] sm:$0xff]
    %v3899 = vld [vmem:[%s3752 + $0x490] sm:$0xff]
    %v3900 = vld [vmem:[%s3752 + $0x498] sm:$0xff]
    %v3901 = vld [vmem:[%s3752 + $0x4a0] sm:$0xff]
    %v3902 = vld [vmem:[%s3752 + $0x4a8] sm:$0xff]
    %v3903 = vld [vmem:[%s3752 + $0x4b0] sm:$0xff]
    %v3904 = vld [vmem:[%s3752 + $0x4b8] sm:$0xff]
    %v3905 = vld [vmem:[%s3752 + $0x4c0] sm:$0xff]
    %v3906 = vld [vmem:[%s3752 + $0x4c8] sm:$0xff]
    %v3907 = vld [vmem:[%s3752 + $0x4d0] sm:$0xff]
    %v3908 = vld [vmem:[%s3752 + $0x4d8] sm:$0xff]
    %v3909 = vld [vmem:[%s3752 + $0x4e0] sm:$0xff]
    %v3910 = vld [vmem:[%s3752 + $0x4e8] sm:$0xff]
    %v3911 = vld [vmem:[%s3752 + $0x4f0] sm:$0xff]
    %v3912 = vld [vmem:[%s3752 + $0x4f8] sm:$0xff]
    %v3913 = vld [vmem:[%s3752 + $0x500] sm:$0xff]
    %v3914 = vld [vmem:[%s3752 + $0x508] sm:$0xff]
    %v3915 = vld [vmem:[%s3752 + $0x510] sm:$0xff]
    %v3916 = vld [vmem:[%s3752 + $0x518] sm:$0xff]
    %v3917 = vld [vmem:[%s3752 + $0x520] sm:$0xff]
    %v3918 = vld [vmem:[%s3752 + $0x528] sm:$0xff]
    %v3919 = vld [vmem:[%s3752 + $0x530] sm:$0xff]
    %v3920 = vld [vmem:[%s3752 + $0x538] sm:$0xff]
    %v3921 = vld [vmem:[%s3752 + $0x540] sm:$0xff]
    %v3922 = vld [vmem:[%s3752 + $0x548] sm:$0xff]
    %v3923 = vld [vmem:[%s3752 + $0x550] sm:$0xff]
    %v3924 = vld [vmem:[%s3752 + $0x558] sm:$0xff]
    %v3925 = vld [vmem:[%s3752 + $0x560] sm:$0xff]
    %v3926 = vld [vmem:[%s3752 + $0x568] sm:$0xff]
    %v3927 = vld [vmem:[%s3752 + $0x570] sm:$0xff]
    %v3928 = vld [vmem:[%s3752 + $0x578] sm:$0xff]
    %v3929 = vld [vmem:[%s3752 + $0x580] sm:$0xff]
    %v3930 = vld [vmem:[%s3752 + $0x588] sm:$0xff]
    %v3931 = vld [vmem:[%s3752 + $0x590] sm:$0xff]
    %v3932 = vld [vmem:[%s3752 + $0x598] sm:$0xff]
    %v3933 = vld [vmem:[%s3752 + $0x5a0] sm:$0xff]
    %v3934 = vld [vmem:[%s3752 + $0x5a8] sm:$0xff]
    %v3935 = vld [vmem:[%s3752 + $0x5b0] sm:$0xff]
    %v3936 = vld [vmem:[%s3752 + $0x5b8] sm:$0xff]
    %v3937 = vld [vmem:[%s3752 + $0x5c0] sm:$0xff]
    %v3938 = vld [vmem:[%s3752 + $0x5c8] sm:$0xff]
    %v3939 = vld [vmem:[%s3752 + $0x5d0] sm:$0xff]
    %v3940 = vld [vmem:[%s3752 + $0x5d8] sm:$0xff]
    %v3941 = vld [vmem:[%s3752 + $0x5e0] sm:$0xff]
    %v3942 = vld [vmem:[%s3752 + $0x5e8] sm:$0xff]
    %v3943 = vld [vmem:[%s3752 + $0x5f0] sm:$0xff]
    %v3944 = vld [vmem:[%s3752 + $0x5f8] sm:$0xff]
    %v3945 = vld [vmem:[%s3752 + $0x600] sm:$0xff]
    %v3946 = vld [vmem:[%s3752 + $0x608] sm:$0xff]
    %v3947 = vld [vmem:[%s3752 + $0x610] sm:$0xff]
    %v3948 = vld [vmem:[%s3752 + $0x618] sm:$0xff]
    %v3949 = vld [vmem:[%s3752 + $0x620] sm:$0xff]
    %v3950 = vld [vmem:[%s3752 + $0x628] sm:$0xff]
    %v3951 = vld [vmem:[%s3752 + $0x630] sm:$0xff]
    %v3952 = vld [vmem:[%s3752 + $0x638] sm:$0xff]
    %v3953 = vld [vmem:[%s3752 + $0x640] sm:$0xff]
    %v3954 = vld [vmem:[%s3752 + $0x648] sm:$0xff]
    %v3955 = vld [vmem:[%s3752 + $0x650] sm:$0xff]
    %v3956 = vld [vmem:[%s3752 + $0x658] sm:$0xff]
    %v3957 = vld [vmem:[%s3752 + $0x660] sm:$0xff]
    %v3958 = vld [vmem:[%s3752 + $0x668] sm:$0xff]
    %v3959 = vld [vmem:[%s3752 + $0x670] sm:$0xff]
    %v3960 = vld [vmem:[%s3752 + $0x678] sm:$0xff]
    %v3961 = vld [vmem:[%s3752 + $0x680] sm:$0xff]
    %v3962 = vld [vmem:[%s3752 + $0x688] sm:$0xff]
    %v3963 = vld [vmem:[%s3752 + $0x690] sm:$0xff]
    %v3964 = vld [vmem:[%s3752 + $0x698] sm:$0xff]
    %v3965 = vld [vmem:[%s3752 + $0x6a0] sm:$0xff]
    %v3966 = vld [vmem:[%s3752 + $0x6a8] sm:$0xff]
    %v3967 = vld [vmem:[%s3752 + $0x6b0] sm:$0xff]
    %v3968 = vld [vmem:[%s3752 + $0x6b8] sm:$0xff]
    %v3969 = vld [vmem:[%s3752 + $0x6c0] sm:$0xff]
    %v3970 = vld [vmem:[%s3752 + $0x6c8] sm:$0xff]
    %v3971 = vld [vmem:[%s3752 + $0x6d0] sm:$0xff]
    %v3972 = vld [vmem:[%s3752 + $0x6d8] sm:$0xff]
    %v3973 = vld [vmem:[%s3752 + $0x6e0] sm:$0xff]
    %v3974 = vld [vmem:[%s3752 + $0x6e8] sm:$0xff]
    %v3975 = vld [vmem:[%s3752 + $0x6f0] sm:$0xff]
    %v3976 = vld [vmem:[%s3752 + $0x6f8] sm:$0xff]
    %v3977 = vld [vmem:[%s3752 + $0x700] sm:$0xff]
    %v3978 = vld [vmem:[%s3752 + $0x708] sm:$0xff]
    %v3979 = vld [vmem:[%s3752 + $0x710] sm:$0xff]
    %v3980 = vld [vmem:[%s3752 + $0x718] sm:$0xff]
    %v3981 = vld [vmem:[%s3752 + $0x720] sm:$0xff]
    %v3982 = vld [vmem:[%s3752 + $0x728] sm:$0xff]
    %v3983 = vld [vmem:[%s3752 + $0x730] sm:$0xff]
    %v3984 = vld [vmem:[%s3752 + $0x738] sm:$0xff]
    %v3985 = vld [vmem:[%s3752 + $0x740] sm:$0xff]
    %v3986 = vld [vmem:[%s3752 + $0x748] sm:$0xff]
    %v3987 = vld [vmem:[%s3752 + $0x750] sm:$0xff]
    %v3988 = vld [vmem:[%s3752 + $0x758] sm:$0xff]
    %v3989 = vld [vmem:[%s3752 + $0x760] sm:$0xff]
    %v3990 = vld [vmem:[%s3752 + $0x768] sm:$0xff]
    %v3991 = vld [vmem:[%s3752 + $0x770] sm:$0xff]
    %v3992 = vld [vmem:[%s3752 + $0x778] sm:$0xff]
    %v3993 = vld [vmem:[%s3752 + $0x780] sm:$0xff]
    %v3994 = vld [vmem:[%s3752 + $0x788] sm:$0xff]
    %v3995 = vld [vmem:[%s3752 + $0x790] sm:$0xff]
    %v3996 = vld [vmem:[%s3752 + $0x798] sm:$0xff]
    %v3997 = vld [vmem:[%s3752 + $0x7a0] sm:$0xff]
    %v3998 = vld [vmem:[%s3752 + $0x7a8] sm:$0xff]
    %v3999 = vld [vmem:[%s3752 + $0x7b0] sm:$0xff]
    %v4000 = vld [vmem:[%s3752 + $0x7b8] sm:$0xff]
    %v4001 = vld [vmem:[%s3752 + $0x7c0] sm:$0xff]
    %v4002 = vld [vmem:[%s3752 + $0x7c8] sm:$0xff]
    %v4003 = vld [vmem:[%s3752 + $0x7d0] sm:$0xff]
    %v4004 = vld [vmem:[%s3752 + $0x7d8] sm:$0xff]
    %v4005 = vld [vmem:[%s3752 + $0x7e0] sm:$0xff]
    %v4006 = vld [vmem:[%s3752 + $0x7e8] sm:$0xff]
    %v4007 = vld [vmem:[%s3752 + $0x7f0] sm:$0xff]
    %v4008 = vld [vmem:[%s3752 + $0x7f8] sm:$0xff]
    %v4009 = vld [vmem:[%s3752 + $0x800] sm:$0xff]
    %v4010 = vld [vmem:[%s3752 + $0x808] sm:$0xff]
    %v4011 = vld [vmem:[%s3752 + $0x810] sm:$0xff]
    %v4012 = vld [vmem:[%s3752 + $0x818] sm:$0xff]
    %v4013 = vld [vmem:[%s3752 + $0x820] sm:$0xff]
    %v4014 = vld [vmem:[%s3752 + $0x828] sm:$0xff]
    %v4015 = vld [vmem:[%s3752 + $0x830] sm:$0xff]
    %v4016 = vld [vmem:[%s3752 + $0x838] sm:$0xff]
    %v4017 = vld [vmem:[%s3752 + $0x840] sm:$0xff]
    %v4018 = vld [vmem:[%s3752 + $0x848] sm:$0xff]
    %v4019 = vld [vmem:[%s3752 + $0x850] sm:$0xff]
    %v4020 = vld [vmem:[%s3752 + $0x858] sm:$0xff]
    %v4021 = vld [vmem:[%s3752 + $0x860] sm:$0xff]
    %v4022 = vld [vmem:[%s3752 + $0x868] sm:$0xff]
    %v4023 = vld [vmem:[%s3752 + $0x870] sm:$0xff]
    %v4024 = vld [vmem:[%s3752 + $0x878] sm:$0xff]
    %v4025 = vld [vmem:[%s3752 + $0x880] sm:$0xff]
    %v4026 = vld [vmem:[%s3752 + $0x888] sm:$0xff]
    %v4027 = vld [vmem:[%s3752 + $0x890] sm:$0xff]
    %v4028 = vld [vmem:[%s3752 + $0x898] sm:$0xff]
    %v4029 = vld [vmem:[%s3752 + $0x8a0] sm:$0xff]
    %v4030 = vld [vmem:[%s3752 + $0x8a8] sm:$0xff]
    %v4031 = vld [vmem:[%s3752 + $0x8b0] sm:$0xff]
    %v4032 = vld [vmem:[%s3752 + $0x8b8] sm:$0xff]
    %v4033 = vld [vmem:[%s3752 + $0x8c0] sm:$0xff]
    %v4034 = vld [vmem:[%s3752 + $0x8c8] sm:$0xff]
    %v4035 = vld [vmem:[%s3752 + $0x8d0] sm:$0xff]
    %v4036 = vld [vmem:[%s3752 + $0x8d8] sm:$0xff]
    %v4037 = vld [vmem:[%s3752 + $0x8e0] sm:$0xff]
    %v4038 = vld [vmem:[%s3752 + $0x8e8] sm:$0xff]
    %v4039 = vld [vmem:[%s3752 + $0x8f0] sm:$0xff]
    %v4040 = vld [vmem:[%s3752 + $0x8f8] sm:$0xff]
    %vm4053 = vcmask 1041408
    %v4054 = vrot.slane %v3740, 6
    %v4055 = vrot.slane %v1481, 6
    %v4056 = vsel %vm4053, %v4054, %v4055
    %v4057 = vrot.slane %v3741, 6
    %v4058 = vrot.slane %v1482, 6
    %v4059 = vsel %vm4053, %v4057, %v4058
    %v4060 = vrot.slane %v3742, 6
    %v4061 = vrot.slane %v1483, 6
    %v4062 = vsel %vm4053, %v4060, %v4061
    %v4063 = vrot.slane %v3743, 6
    %v4064 = vrot.slane %v1484, 6
    %v4065 = vsel %vm4053, %v4063, %v4064
    %v4066 = vrot.slane %v3744, 6
    %v4067 = vrot.slane %v1485, 6
    %v4068 = vsel %vm4053, %v4066, %v4067
    %v4069 = vrot.slane %v3745, 6
    %v4070 = vrot.slane %v1486, 6
    %v4071 = vsel %vm4053, %v4069, %v4070
    %v4072 = vrot.slane %v3746, 6
    %v4073 = vsel %vm4053, %v4055, %v4072
    %v4074 = vrot.slane %v3747, 6
    %v4075 = vsel %vm4053, %v4058, %v4074
    %v4076 = vrot.slane %v3748, 6
    %v4077 = vsel %vm4053, %v4061, %v4076
    %v4078 = vrot.slane %v3749, 6
    %v4079 = vsel %vm4053, %v4064, %v4078
    %v4080 = vrot.slane %v3750, 6
    %v4081 = vsel %vm4053, %v4067, %v4080
    %v4082 = vrot.slane %v3751, 6
    %v4083 = vsel %vm4053, %v4070, %v4082
    %4096 = vmatpush.msra.mxu0 %v3798
    %4097 = vmatpush.msra.mxu0 %v3795
    %4098 = vmatpush.msra.mxu0 %v3792
    %4099 = vmatpush.msra.mxu0 %v3789
    %4100 = vmatpush.msra.mxu0 %v3786
    %4101 = vmatpush.msra.mxu0 %v3783
    %4102 = vmatpush.msra.mxu0 %v3780
    %4103 = vmatpush.msra.mxu0 %v3777
    %4104 = vmatpush.msra.mxu0 %v3774
    %4105 = vmatpush.msra.mxu0 %v3771
    %4106 = vmatpush.msra.mxu0 %v3768
    %4107 = vmatpush.msra.mxu0 %v3765
    %4108 = vmatpush.msra.mxu0 %v3762
    %4109 = vmatpush.msra.mxu0 %v3759
    %4110 = vmatpush.msra.mxu0 %v3756
    %4111 = vmatpush.msra.mxu0 %v3753
    %4112 = vmatmul.f32.gmra.mxu0 %v4056
    %v4113 = vpop.f32.mrf.mxu0
    %v4114 = vadd.f32 0.0, %v4113
    %4115 = vmatmul.f32.gmra.mxu0 %v4073
    %v4116 = vpop.f32.mrf.mxu0
    %v4117 = vadd.f32 0.0, %v4116
    %4118 = vdwg.mxu0
    %4119 = vmatpush.msra.mxu0 %v3846
    %4120 = vmatpush.msra.mxu0 %v3843
    %4121 = vmatpush.msra.mxu0 %v3840
    %4122 = vmatpush.msra.mxu0 %v3837
    %4123 = vmatpush.msra.mxu0 %v3834
    %4124 = vmatpush.msra.mxu0 %v3831
    %4125 = vmatpush.msra.mxu0 %v3828
    %4126 = vmatpush.msra.mxu0 %v3825
    %4127 = vmatpush.msra.mxu0 %v3822
    %4128 = vmatpush.msra.mxu0 %v3819
    %4129 = vmatpush.msra.mxu0 %v3816
    %4130 = vmatpush.msra.mxu0 %v3813
    %4131 = vmatpush.msra.mxu0 %v3810
    %4132 = vmatpush.msra.mxu0 %v3807
    %4133 = vmatpush.msra.mxu0 %v3804
    %4134 = vmatpush.msra.mxu0 %v3801
    %4135 = vmatmul.f32.gmra.mxu0 %v4059
    %v4136 = vpop.f32.mrf.mxu0
    %v4137 = vadd.f32 %v4114, %v4136
    %4138 = vmatmul.f32.gmra.mxu0 %v4075
    %v4139 = vpop.f32.mrf.mxu0
    %v4140 = vadd.f32 %v4117, %v4139
    %4141 = vdwg.mxu0
    %4142 = vmatpush.msra.mxu0 %v3894
    %4143 = vmatpush.msra.mxu0 %v3891
    %4144 = vmatpush.msra.mxu0 %v3888
    %4145 = vmatpush.msra.mxu0 %v3885
    %4146 = vmatpush.msra.mxu0 %v3882
    %4147 = vmatpush.msra.mxu0 %v3879
    %4148 = vmatpush.msra.mxu0 %v3876
    %4149 = vmatpush.msra.mxu0 %v3873
    %4150 = vmatpush.msra.mxu0 %v3870
    %4151 = vmatpush.msra.mxu0 %v3867
    %4152 = vmatpush.msra.mxu0 %v3864
    %4153 = vmatpush.msra.mxu0 %v3861
    %4154 = vmatpush.msra.mxu0 %v3858
    %4155 = vmatpush.msra.mxu0 %v3855
    %4156 = vmatpush.msra.mxu0 %v3852
    %4157 = vmatpush.msra.mxu0 %v3849
    %4158 = vmatmul.f32.gmra.mxu0 %v4062
    %v4159 = vpop.f32.mrf.mxu0
    %v4160 = vadd.f32 %v4137, %v4159
    %4161 = vmatmul.f32.gmra.mxu0 %v4077
    %v4162 = vpop.f32.mrf.mxu0
    %v4163 = vadd.f32 %v4140, %v4162
    %4164 = vdwg.mxu0
    %4165 = vmatpush.msra.mxu0 %v3942
    %4166 = vmatpush.msra.mxu0 %v3939
    %4167 = vmatpush.msra.mxu0 %v3936
    %4168 = vmatpush.msra.mxu0 %v3933
    %4169 = vmatpush.msra.mxu0 %v3930
    %4170 = vmatpush.msra.mxu0 %v3927
    %4171 = vmatpush.msra.mxu0 %v3924
    %4172 = vmatpush.msra.mxu0 %v3921
    %4173 = vmatpush.msra.mxu0 %v3918
    %4174 = vmatpush.msra.mxu0 %v3915
    %4175 = vmatpush.msra.mxu0 %v3912
    %4176 = vmatpush.msra.mxu0 %v3909
    %4177 = vmatpush.msra.mxu0 %v3906
    %4178 = vmatpush.msra.mxu0 %v3903
    %4179 = vmatpush.msra.mxu0 %v3900
    %4180 = vmatpush.msra.mxu0 %v3897
    %4181 = vmatmul.f32.gmra.mxu0 %v4065
    %v4182 = vpop.f32.mrf.mxu0
    %v4183 = vadd.f32 %v4160, %v4182
    %4184 = vmatmul.f32.gmra.mxu0 %v4079
    %v4185 = vpop.f32.mrf.mxu0
    %v4186 = vadd.f32 %v4163, %v4185
    %4187 = vdwg.mxu0
    %4188 = vmatpush.msra.mxu0 %v3990
    %4189 = vmatpush.msra.mxu0 %v3987
    %4190 = vmatpush.msra.mxu0 %v3984
    %4191 = vmatpush.msra.mxu0 %v3981
    %4192 = vmatpush.msra.mxu0 %v3978
    %4193 = vmatpush.msra.mxu0 %v3975
    %4194 = vmatpush.msra.mxu0 %v3972
    %4195 = vmatpush.msra.mxu0 %v3969
    %4196 = vmatpush.msra.mxu0 %v3966
    %4197 = vmatpush.msra.mxu0 %v3963
    %4198 = vmatpush.msra.mxu0 %v3960
    %4199 = vmatpush.msra.mxu0 %v3957
    %4200 = vmatpush.msra.mxu0 %v3954
    %4201 = vmatpush.msra.mxu0 %v3951
    %4202 = vmatpush.msra.mxu0 %v3948
    %4203 = vmatpush.msra.mxu0 %v3945
    %4204 = vmatmul.f32.gmra.mxu0 %v4068
    %v4205 = vpop.f32.mrf.mxu0
    %v4206 = vadd.f32 %v4183, %v4205
    %4207 = vmatmul.f32.gmra.mxu0 %v4081
    %v4208 = vpop.f32.mrf.mxu0
    %v4209 = vadd.f32 %v4186, %v4208
    %4210 = vdwg.mxu0
    %4211 = vmatpush.msra.mxu0 %v4038
    %4212 = vmatpush.msra.mxu0 %v4035
    %4213 = vmatpush.msra.mxu0 %v4032
    %4214 = vmatpush.msra.mxu0 %v4029
    %4215 = vmatpush.msra.mxu0 %v4026
    %4216 = vmatpush.msra.mxu0 %v4023
    %4217 = vmatpush.msra.mxu0 %v4020
    %4218 = vmatpush.msra.mxu0 %v4017
    %4219 = vmatpush.msra.mxu0 %v4014
    %4220 = vmatpush.msra.mxu0 %v4011
    %4221 = vmatpush.msra.mxu0 %v4008
    %4222 = vmatpush.msra.mxu0 %v4005
    %4223 = vmatpush.msra.mxu0 %v4002
    %4224 = vmatpush.msra.mxu0 %v3999
    %4225 = vmatpush.msra.mxu0 %v3996
    %4226 = vmatpush.msra.mxu0 %v3993
    %4227 = vmatmul.f32.gmra.mxu0 %v4071
    %v4228 = vpop.f32.mrf.mxu0
    %v4229 = vadd.f32 %v4206, %v4228
    %4230 = vmatmul.f32.gmra.mxu0 %v4083
    %v4231 = vpop.f32.mrf.mxu0
    %v4232 = vadd.f32 %v4209, %v4231
    %4233 = vdwg.mxu0
    %4234 = vmatpush.msra.mxu0 %v3799
    %4235 = vmatpush.msra.mxu0 %v3796
    %4236 = vmatpush.msra.mxu0 %v3793
    %4237 = vmatpush.msra.mxu0 %v3790
    %4238 = vmatpush.msra.mxu0 %v3787
    %4239 = vmatpush.msra.mxu0 %v3784
    %4240 = vmatpush.msra.mxu0 %v3781
    %4241 = vmatpush.msra.mxu0 %v3778
    %4242 = vmatpush.msra.mxu0 %v3775
    %4243 = vmatpush.msra.mxu0 %v3772
    %4244 = vmatpush.msra.mxu0 %v3769
    %4245 = vmatpush.msra.mxu0 %v3766
    %4246 = vmatpush.msra.mxu0 %v3763
    %4247 = vmatpush.msra.mxu0 %v3760
    %4248 = vmatpush.msra.mxu0 %v3757
    %4249 = vmatpush.msra.mxu0 %v3754
    %4250 = vmatmul.f32.gmra.mxu0 %v4056
    %v4251 = vpop.f32.mrf.mxu0
    %v4252 = vadd.f32 0.0, %v4251
    %4253 = vmatmul.f32.gmra.mxu0 %v4073
    %v4254 = vpop.f32.mrf.mxu0
    %v4255 = vadd.f32 0.0, %v4254
    %4256 = vdwg.mxu0
    %4257 = vmatpush.msra.mxu0 %v3847
    %4258 = vmatpush.msra.mxu0 %v3844
    %4259 = vmatpush.msra.mxu0 %v3841
    %4260 = vmatpush.msra.mxu0 %v3838
    %4261 = vmatpush.msra.mxu0 %v3835
    %4262 = vmatpush.msra.mxu0 %v3832
    %4263 = vmatpush.msra.mxu0 %v3829
    %4264 = vmatpush.msra.mxu0 %v3826
    %4265 = vmatpush.msra.mxu0 %v3823
    %4266 = vmatpush.msra.mxu0 %v3820
    %4267 = vmatpush.msra.mxu0 %v3817
    %4268 = vmatpush.msra.mxu0 %v3814
    %4269 = vmatpush.msra.mxu0 %v3811
    %4270 = vmatpush.msra.mxu0 %v3808
    %4271 = vmatpush.msra.mxu0 %v3805
    %4272 = vmatpush.msra.mxu0 %v3802
    %4273 = vmatmul.f32.gmra.mxu0 %v4059
    %v4274 = vpop.f32.mrf.mxu0
    %v4275 = vadd.f32 %v4252, %v4274
    %4276 = vmatmul.f32.gmra.mxu0 %v4075
    %v4277 = vpop.f32.mrf.mxu0
    %v4278 = vadd.f32 %v4255, %v4277
    %4279 = vdwg.mxu0
    %4280 = vmatpush.msra.mxu0 %v3895
    %4281 = vmatpush.msra.mxu0 %v3892
    %4282 = vmatpush.msra.mxu0 %v3889
    %4283 = vmatpush.msra.mxu0 %v3886
    %4284 = vmatpush.msra.mxu0 %v3883
    %4285 = vmatpush.msra.mxu0 %v3880
    %4286 = vmatpush.msra.mxu0 %v3877
    %4287 = vmatpush.msra.mxu0 %v3874
    %4288 = vmatpush.msra.mxu0 %v3871
    %4289 = vmatpush.msra.mxu0 %v3868
    %4290 = vmatpush.msra.mxu0 %v3865
    %4291 = vmatpush.msra.mxu0 %v3862
    %4292 = vmatpush.msra.mxu0 %v3859
    %4293 = vmatpush.msra.mxu0 %v3856
    %4294 = vmatpush.msra.mxu0 %v3853
    %4295 = vmatpush.msra.mxu0 %v3850
    %4296 = vmatmul.f32.gmra.mxu0 %v4062
    %v4297 = vpop.f32.mrf.mxu0
    %v4298 = vadd.f32 %v4275, %v4297
    %4299 = vmatmul.f32.gmra.mxu0 %v4077
    %v4300 = vpop.f32.mrf.mxu0
    %v4301 = vadd.f32 %v4278, %v4300
    %4302 = vdwg.mxu0
    %4303 = vmatpush.msra.mxu0 %v3943
    %4304 = vmatpush.msra.mxu0 %v3940
    %4305 = vmatpush.msra.mxu0 %v3937
    %4306 = vmatpush.msra.mxu0 %v3934
    %4307 = vmatpush.msra.mxu0 %v3931
    %4308 = vmatpush.msra.mxu0 %v3928
    %4309 = vmatpush.msra.mxu0 %v3925
    %4310 = vmatpush.msra.mxu0 %v3922
    %4311 = vmatpush.msra.mxu0 %v3919
    %4312 = vmatpush.msra.mxu0 %v3916
    %4313 = vmatpush.msra.mxu0 %v3913
    %4314 = vmatpush.msra.mxu0 %v3910
    %4315 = vmatpush.msra.mxu0 %v3907
    %4316 = vmatpush.msra.mxu0 %v3904
    %4317 = vmatpush.msra.mxu0 %v3901
    %4318 = vmatpush.msra.mxu0 %v3898
    %4319 = vmatmul.f32.gmra.mxu0 %v4065
    %v4320 = vpop.f32.mrf.mxu0
    %v4321 = vadd.f32 %v4298, %v4320
    %4322 = vmatmul.f32.gmra.mxu0 %v4079
    %v4323 = vpop.f32.mrf.mxu0
    %v4324 = vadd.f32 %v4301, %v4323
    %4325 = vdwg.mxu0
    %4326 = vmatpush.msra.mxu0 %v3991
    %4327 = vmatpush.msra.mxu0 %v3988
    %4328 = vmatpush.msra.mxu0 %v3985
    %4329 = vmatpush.msra.mxu0 %v3982
    %4330 = vmatpush.msra.mxu0 %v3979
    %4331 = vmatpush.msra.mxu0 %v3976
    %4332 = vmatpush.msra.mxu0 %v3973
    %4333 = vmatpush.msra.mxu0 %v3970
    %4334 = vmatpush.msra.mxu0 %v3967
    %4335 = vmatpush.msra.mxu0 %v3964
    %4336 = vmatpush.msra.mxu0 %v3961
    %4337 = vmatpush.msra.mxu0 %v3958
    %4338 = vmatpush.msra.mxu0 %v3955
    %4339 = vmatpush.msra.mxu0 %v3952
    %4340 = vmatpush.msra.mxu0 %v3949
    %4341 = vmatpush.msra.mxu0 %v3946
    %4342 = vmatmul.f32.gmra.mxu0 %v4068
    %v4343 = vpop.f32.mrf.mxu0
    %v4344 = vadd.f32 %v4321, %v4343
    %4345 = vmatmul.f32.gmra.mxu0 %v4081
    %v4346 = vpop.f32.mrf.mxu0
    %v4347 = vadd.f32 %v4324, %v4346
    %4348 = vdwg.mxu0
    %4349 = vmatpush.msra.mxu0 %v4039
    %4350 = vmatpush.msra.mxu0 %v4036
    %4351 = vmatpush.msra.mxu0 %v4033
    %4352 = vmatpush.msra.mxu0 %v4030
    %4353 = vmatpush.msra.mxu0 %v4027
    %4354 = vmatpush.msra.mxu0 %v4024
    %4355 = vmatpush.msra.mxu0 %v4021
    %4356 = vmatpush.msra.mxu0 %v4018
    %4357 = vmatpush.msra.mxu0 %v4015
    %4358 = vmatpush.msra.mxu0 %v4012
    %4359 = vmatpush.msra.mxu0 %v4009
    %4360 = vmatpush.msra.mxu0 %v4006
    %4361 = vmatpush.msra.mxu0 %v4003
    %4362 = vmatpush.msra.mxu0 %v4000
    %4363 = vmatpush.msra.mxu0 %v3997
    %4364 = vmatpush.msra.mxu0 %v3994
    %4365 = vmatmul.f32.gmra.mxu0 %v4071
    %v4366 = vpop.f32.mrf.mxu0
    %v4367 = vadd.f32 %v4344, %v4366
    %4368 = vmatmul.f32.gmra.mxu0 %v4083
    %v4369 = vpop.f32.mrf.mxu0
    %v4370 = vadd.f32 %v4347, %v4369
    %4371 = vdwg.mxu0
    %4372 = vmatpush.msra.mxu0 %v3800
    %4373 = vmatpush.msra.mxu0 %v3797
    %4374 = vmatpush.msra.mxu0 %v3794
    %4375 = vmatpush.msra.mxu0 %v3791
    %4376 = vmatpush.msra.mxu0 %v3788
    %4377 = vmatpush.msra.mxu0 %v3785
    %4378 = vmatpush.msra.mxu0 %v3782
    %4379 = vmatpush.msra.mxu0 %v3779
    %4380 = vmatpush.msra.mxu0 %v3776
    %4381 = vmatpush.msra.mxu0 %v3773
    %4382 = vmatpush.msra.mxu0 %v3770
    %4383 = vmatpush.msra.mxu0 %v3767
    %4384 = vmatpush.msra.mxu0 %v3764
    %4385 = vmatpush.msra.mxu0 %v3761
    %4386 = vmatpush.msra.mxu0 %v3758
    %4387 = vmatpush.msra.mxu0 %v3755
    %4388 = vmatmul.f32.gmra.mxu0 %v4056
    %v4389 = vpop.f32.mrf.mxu0
    %v4390 = vadd.f32 0.0, %v4389
    %4391 = vmatmul.f32.gmra.mxu0 %v4073
    %v4392 = vpop.f32.mrf.mxu0
    %v4393 = vadd.f32 0.0, %v4392
    %4394 = vdwg.mxu0
    %4395 = vmatpush.msra.mxu0 %v3848
    %4396 = vmatpush.msra.mxu0 %v3845
    %4397 = vmatpush.msra.mxu0 %v3842
    %4398 = vmatpush.msra.mxu0 %v3839
    %4399 = vmatpush.msra.mxu0 %v3836
    %4400 = vmatpush.msra.mxu0 %v3833
    %4401 = vmatpush.msra.mxu0 %v3830
    %4402 = vmatpush.msra.mxu0 %v3827
    %4403 = vmatpush.msra.mxu0 %v3824
    %4404 = vmatpush.msra.mxu0 %v3821
    %4405 = vmatpush.msra.mxu0 %v3818
    %4406 = vmatpush.msra.mxu0 %v3815
    %4407 = vmatpush.msra.mxu0 %v3812
    %4408 = vmatpush.msra.mxu0 %v3809
    %4409 = vmatpush.msra.mxu0 %v3806
    %4410 = vmatpush.msra.mxu0 %v3803
    %4411 = vmatmul.f32.gmra.mxu0 %v4059
    %v4412 = vpop.f32.mrf.mxu0
    %v4413 = vadd.f32 %v4390, %v4412
    %4414 = vmatmul.f32.gmra.mxu0 %v4075
    %v4415 = vpop.f32.mrf.mxu0
    %v4416 = vadd.f32 %v4393, %v4415
    %4417 = vdwg.mxu0
    %4418 = vmatpush.msra.mxu0 %v3896
    %4419 = vmatpush.msra.mxu0 %v3893
    %4420 = vmatpush.msra.mxu0 %v3890
    %4421 = vmatpush.msra.mxu0 %v3887
    %4422 = vmatpush.msra.mxu0 %v3884
    %4423 = vmatpush.msra.mxu0 %v3881
    %4424 = vmatpush.msra.mxu0 %v3878
    %4425 = vmatpush.msra.mxu0 %v3875
    %4426 = vmatpush.msra.mxu0 %v3872
    %4427 = vmatpush.msra.mxu0 %v3869
    %4428 = vmatpush.msra.mxu0 %v3866
    %4429 = vmatpush.msra.mxu0 %v3863
    %4430 = vmatpush.msra.mxu0 %v3860
    %4431 = vmatpush.msra.mxu0 %v3857
    %4432 = vmatpush.msra.mxu0 %v3854
    %4433 = vmatpush.msra.mxu0 %v3851
    %4434 = vmatmul.f32.gmra.mxu0 %v4062
    %v4435 = vpop.f32.mrf.mxu0
    %v4436 = vadd.f32 %v4413, %v4435
    %4437 = vmatmul.f32.gmra.mxu0 %v4077
    %v4438 = vpop.f32.mrf.mxu0
    %v4439 = vadd.f32 %v4416, %v4438
    %4440 = vdwg.mxu0
    %4441 = vmatpush.msra.mxu0 %v3944
    %4442 = vmatpush.msra.mxu0 %v3941
    %4443 = vmatpush.msra.mxu0 %v3938
    %4444 = vmatpush.msra.mxu0 %v3935
    %4445 = vmatpush.msra.mxu0 %v3932
    %4446 = vmatpush.msra.mxu0 %v3929
    %4447 = vmatpush.msra.mxu0 %v3926
    %4448 = vmatpush.msra.mxu0 %v3923
    %4449 = vmatpush.msra.mxu0 %v3920
    %4450 = vmatpush.msra.mxu0 %v3917
    %4451 = vmatpush.msra.mxu0 %v3914
    %4452 = vmatpush.msra.mxu0 %v3911
    %4453 = vmatpush.msra.mxu0 %v3908
    %4454 = vmatpush.msra.mxu0 %v3905
    %4455 = vmatpush.msra.mxu0 %v3902
    %4456 = vmatpush.msra.mxu0 %v3899
    %4457 = vmatmul.f32.gmra.mxu0 %v4065
    %v4458 = vpop.f32.mrf.mxu0
    %v4459 = vadd.f32 %v4436, %v4458
    %4460 = vmatmul.f32.gmra.mxu0 %v4079
    %v4461 = vpop.f32.mrf.mxu0
    %v4462 = vadd.f32 %v4439, %v4461
    %4463 = vdwg.mxu0
    %4464 = vmatpush.msra.mxu0 %v3992
    %4465 = vmatpush.msra.mxu0 %v3989
    %4466 = vmatpush.msra.mxu0 %v3986
    %4467 = vmatpush.msra.mxu0 %v3983
    %4468 = vmatpush.msra.mxu0 %v3980
    %4469 = vmatpush.msra.mxu0 %v3977
    %4470 = vmatpush.msra.mxu0 %v3974
    %4471 = vmatpush.msra.mxu0 %v3971
    %4472 = vmatpush.msra.mxu0 %v3968
    %4473 = vmatpush.msra.mxu0 %v3965
    %4474 = vmatpush.msra.mxu0 %v3962
    %4475 = vmatpush.msra.mxu0 %v3959
    %4476 = vmatpush.msra.mxu0 %v3956
    %4477 = vmatpush.msra.mxu0 %v3953
    %4478 = vmatpush.msra.mxu0 %v3950
    %4479 = vmatpush.msra.mxu0 %v3947
    %4480 = vmatmul.f32.gmra.mxu0 %v4068
    %v4481 = vpop.f32.mrf.mxu0
    %v4482 = vadd.f32 %v4459, %v4481
    %4483 = vmatmul.f32.gmra.mxu0 %v4081
    %v4484 = vpop.f32.mrf.mxu0
    %v4485 = vadd.f32 %v4462, %v4484
    %4486 = vdwg.mxu0
    %4487 = vmatpush.msra.mxu0 %v4040
    %4488 = vmatpush.msra.mxu0 %v4037
    %4489 = vmatpush.msra.mxu0 %v4034
    %4490 = vmatpush.msra.mxu0 %v4031
    %4491 = vmatpush.msra.mxu0 %v4028
    %4492 = vmatpush.msra.mxu0 %v4025
    %4493 = vmatpush.msra.mxu0 %v4022
    %4494 = vmatpush.msra.mxu0 %v4019
    %4495 = vmatpush.msra.mxu0 %v4016
    %4496 = vmatpush.msra.mxu0 %v4013
    %4497 = vmatpush.msra.mxu0 %v4010
    %4498 = vmatpush.msra.mxu0 %v4007
    %4499 = vmatpush.msra.mxu0 %v4004
    %4500 = vmatpush.msra.mxu0 %v4001
    %4501 = vmatpush.msra.mxu0 %v3998
    %4502 = vmatpush.msra.mxu0 %v3995
    %4503 = vmatmul.f32.gmra.mxu0 %v4071
    %v4504 = vpop.f32.mrf.mxu0
    %v4505 = vadd.f32 %v4482, %v4504
    %4506 = vmatmul.f32.gmra.mxu0 %v4083
    %v4507 = vpop.f32.mrf.mxu0
    %v4508 = vadd.f32 %v4485, %v4507
    %4509 = vdwg.mxu0
    %v4510 = vadd.f32 %v3734, %v4229
    %v4511 = vadd.f32 %v3735, %v4367
    %v4512 = vadd.f32 %v3736, %v4505
    %v4513 = vadd.f32 %v3737, %v4232
    %v4514 = vadd.f32 %v3738, %v4370
    %v4515 = vadd.f32 %v3739, %v4508
    %v4516 = vld [vmem:[#allocation3 + $0x60] sm:$0xff]
    %v4517 = vld [vmem:[#allocation3 + $0x68] sm:$0xff]
    %v4518 = vld [vmem:[#allocation3 + $0x70] sm:$0xff]
    %v4519 = vld [vmem:[#allocation3 + $0x78] sm:$0xff]
    %v4520 = vld [vmem:[#allocation3 + $0x80] sm:$0xff]
    %v4521 = vld [vmem:[#allocation3 + $0x88] sm:$0xff]
    %s4522 = scalar_lea.vmem [#allocation9], 9216
    %v4523 = vld [vmem:[%s4522] sm:$0xff]
    %v4524 = vld [vmem:[%s4522 + $0x8] sm:$0xff]
    %v4525 = vld [vmem:[%s4522 + $0x10] sm:$0xff]
    %v4526 = vld [vmem:[%s4522 + $0x18] sm:$0xff]
    %v4527 = vld [vmem:[%s4522 + $0x20] sm:$0xff]
    %v4528 = vld [vmem:[%s4522 + $0x28] sm:$0xff]
    %v4529 = vld [vmem:[%s4522 + $0x30] sm:$0xff]
    %v4530 = vld [vmem:[%s4522 + $0x38] sm:$0xff]
    %v4531 = vld [vmem:[%s4522 + $0x40] sm:$0xff]
    %v4532 = vld [vmem:[%s4522 + $0x48] sm:$0xff]
    %v4533 = vld [vmem:[%s4522 + $0x50] sm:$0xff]
    %v4534 = vld [vmem:[%s4522 + $0x58] sm:$0xff]
    %v4535 = vld [vmem:[%s4522 + $0x60] sm:$0xff]
    %v4536 = vld [vmem:[%s4522 + $0x68] sm:$0xff]
    %v4537 = vld [vmem:[%s4522 + $0x70] sm:$0xff]
    %v4538 = vld [vmem:[%s4522 + $0x78] sm:$0xff]
    %v4539 = vld [vmem:[%s4522 + $0x80] sm:$0xff]
    %v4540 = vld [vmem:[%s4522 + $0x88] sm:$0xff]
    %v4541 = vld [vmem:[%s4522 + $0x90] sm:$0xff]
    %v4542 = vld [vmem:[%s4522 + $0x98] sm:$0xff]
    %v4543 = vld [vmem:[%s4522 + $0xa0] sm:$0xff]
    %v4544 = vld [vmem:[%s4522 + $0xa8] sm:$0xff]
    %v4545 = vld [vmem:[%s4522 + $0xb0] sm:$0xff]
    %v4546 = vld [vmem:[%s4522 + $0xb8] sm:$0xff]
    %v4547 = vld [vmem:[%s4522 + $0xc0] sm:$0xff]
    %v4548 = vld [vmem:[%s4522 + $0xc8] sm:$0xff]
    %v4549 = vld [vmem:[%s4522 + $0xd0] sm:$0xff]
    %v4550 = vld [vmem:[%s4522 + $0xd8] sm:$0xff]
    %v4551 = vld [vmem:[%s4522 + $0xe0] sm:$0xff]
    %v4552 = vld [vmem:[%s4522 + $0xe8] sm:$0xff]
    %v4553 = vld [vmem:[%s4522 + $0xf0] sm:$0xff]
    %v4554 = vld [vmem:[%s4522 + $0xf8] sm:$0xff]
    %v4555 = vld [vmem:[%s4522 + $0x100] sm:$0xff]
    %v4556 = vld [vmem:[%s4522 + $0x108] sm:$0xff]
    %v4557 = vld [vmem:[%s4522 + $0x110] sm:$0xff]
    %v4558 = vld [vmem:[%s4522 + $0x118] sm:$0xff]
    %v4559 = vld [vmem:[%s4522 + $0x120] sm:$0xff]
    %v4560 = vld [vmem:[%s4522 + $0x128] sm:$0xff]
    %v4561 = vld [vmem:[%s4522 + $0x130] sm:$0xff]
    %v4562 = vld [vmem:[%s4522 + $0x138] sm:$0xff]
    %v4563 = vld [vmem:[%s4522 + $0x140] sm:$0xff]
    %v4564 = vld [vmem:[%s4522 + $0x148] sm:$0xff]
    %v4565 = vld [vmem:[%s4522 + $0x150] sm:$0xff]
    %v4566 = vld [vmem:[%s4522 + $0x158] sm:$0xff]
    %v4567 = vld [vmem:[%s4522 + $0x160] sm:$0xff]
    %v4568 = vld [vmem:[%s4522 + $0x168] sm:$0xff]
    %v4569 = vld [vmem:[%s4522 + $0x170] sm:$0xff]
    %v4570 = vld [vmem:[%s4522 + $0x178] sm:$0xff]
    %v4571 = vld [vmem:[%s4522 + $0x180] sm:$0xff]
    %v4572 = vld [vmem:[%s4522 + $0x188] sm:$0xff]
    %v4573 = vld [vmem:[%s4522 + $0x190] sm:$0xff]
    %v4574 = vld [vmem:[%s4522 + $0x198] sm:$0xff]
    %v4575 = vld [vmem:[%s4522 + $0x1a0] sm:$0xff]
    %v4576 = vld [vmem:[%s4522 + $0x1a8] sm:$0xff]
    %v4577 = vld [vmem:[%s4522 + $0x1b0] sm:$0xff]
    %v4578 = vld [vmem:[%s4522 + $0x1b8] sm:$0xff]
    %v4579 = vld [vmem:[%s4522 + $0x1c0] sm:$0xff]
    %v4580 = vld [vmem:[%s4522 + $0x1c8] sm:$0xff]
    %v4581 = vld [vmem:[%s4522 + $0x1d0] sm:$0xff]
    %v4582 = vld [vmem:[%s4522 + $0x1d8] sm:$0xff]
    %v4583 = vld [vmem:[%s4522 + $0x1e0] sm:$0xff]
    %v4584 = vld [vmem:[%s4522 + $0x1e8] sm:$0xff]
    %v4585 = vld [vmem:[%s4522 + $0x1f0] sm:$0xff]
    %v4586 = vld [vmem:[%s4522 + $0x1f8] sm:$0xff]
    %v4587 = vld [vmem:[%s4522 + $0x200] sm:$0xff]
    %v4588 = vld [vmem:[%s4522 + $0x208] sm:$0xff]
    %v4589 = vld [vmem:[%s4522 + $0x210] sm:$0xff]
    %v4590 = vld [vmem:[%s4522 + $0x218] sm:$0xff]
    %v4591 = vld [vmem:[%s4522 + $0x220] sm:$0xff]
    %v4592 = vld [vmem:[%s4522 + $0x228] sm:$0xff]
    %v4593 = vld [vmem:[%s4522 + $0x230] sm:$0xff]
    %v4594 = vld [vmem:[%s4522 + $0x238] sm:$0xff]
    %v4595 = vld [vmem:[%s4522 + $0x240] sm:$0xff]
    %v4596 = vld [vmem:[%s4522 + $0x248] sm:$0xff]
    %v4597 = vld [vmem:[%s4522 + $0x250] sm:$0xff]
    %v4598 = vld [vmem:[%s4522 + $0x258] sm:$0xff]
    %v4599 = vld [vmem:[%s4522 + $0x260] sm:$0xff]
    %v4600 = vld [vmem:[%s4522 + $0x268] sm:$0xff]
    %v4601 = vld [vmem:[%s4522 + $0x270] sm:$0xff]
    %v4602 = vld [vmem:[%s4522 + $0x278] sm:$0xff]
    %v4603 = vld [vmem:[%s4522 + $0x280] sm:$0xff]
    %v4604 = vld [vmem:[%s4522 + $0x288] sm:$0xff]
    %v4605 = vld [vmem:[%s4522 + $0x290] sm:$0xff]
    %v4606 = vld [vmem:[%s4522 + $0x298] sm:$0xff]
    %v4607 = vld [vmem:[%s4522 + $0x2a0] sm:$0xff]
    %v4608 = vld [vmem:[%s4522 + $0x2a8] sm:$0xff]
    %v4609 = vld [vmem:[%s4522 + $0x2b0] sm:$0xff]
    %v4610 = vld [vmem:[%s4522 + $0x2b8] sm:$0xff]
    %v4611 = vld [vmem:[%s4522 + $0x2c0] sm:$0xff]
    %v4612 = vld [vmem:[%s4522 + $0x2c8] sm:$0xff]
    %v4613 = vld [vmem:[%s4522 + $0x2d0] sm:$0xff]
    %v4614 = vld [vmem:[%s4522 + $0x2d8] sm:$0xff]
    %v4615 = vld [vmem:[%s4522 + $0x2e0] sm:$0xff]
    %v4616 = vld [vmem:[%s4522 + $0x2e8] sm:$0xff]
    %v4617 = vld [vmem:[%s4522 + $0x2f0] sm:$0xff]
    %v4618 = vld [vmem:[%s4522 + $0x2f8] sm:$0xff]
    %v4619 = vld [vmem:[%s4522 + $0x300] sm:$0xff]
    %v4620 = vld [vmem:[%s4522 + $0x308] sm:$0xff]
    %v4621 = vld [vmem:[%s4522 + $0x310] sm:$0xff]
    %v4622 = vld [vmem:[%s4522 + $0x318] sm:$0xff]
    %v4623 = vld [vmem:[%s4522 + $0x320] sm:$0xff]
    %v4624 = vld [vmem:[%s4522 + $0x328] sm:$0xff]
    %v4625 = vld [vmem:[%s4522 + $0x330] sm:$0xff]
    %v4626 = vld [vmem:[%s4522 + $0x338] sm:$0xff]
    %v4627 = vld [vmem:[%s4522 + $0x340] sm:$0xff]
    %v4628 = vld [vmem:[%s4522 + $0x348] sm:$0xff]
    %v4629 = vld [vmem:[%s4522 + $0x350] sm:$0xff]
    %v4630 = vld [vmem:[%s4522 + $0x358] sm:$0xff]
    %v4631 = vld [vmem:[%s4522 + $0x360] sm:$0xff]
    %v4632 = vld [vmem:[%s4522 + $0x368] sm:$0xff]
    %v4633 = vld [vmem:[%s4522 + $0x370] sm:$0xff]
    %v4634 = vld [vmem:[%s4522 + $0x378] sm:$0xff]
    %v4635 = vld [vmem:[%s4522 + $0x380] sm:$0xff]
    %v4636 = vld [vmem:[%s4522 + $0x388] sm:$0xff]
    %v4637 = vld [vmem:[%s4522 + $0x390] sm:$0xff]
    %v4638 = vld [vmem:[%s4522 + $0x398] sm:$0xff]
    %v4639 = vld [vmem:[%s4522 + $0x3a0] sm:$0xff]
    %v4640 = vld [vmem:[%s4522 + $0x3a8] sm:$0xff]
    %v4641 = vld [vmem:[%s4522 + $0x3b0] sm:$0xff]
    %v4642 = vld [vmem:[%s4522 + $0x3b8] sm:$0xff]
    %v4643 = vld [vmem:[%s4522 + $0x3c0] sm:$0xff]
    %v4644 = vld [vmem:[%s4522 + $0x3c8] sm:$0xff]
    %v4645 = vld [vmem:[%s4522 + $0x3d0] sm:$0xff]
    %v4646 = vld [vmem:[%s4522 + $0x3d8] sm:$0xff]
    %v4647 = vld [vmem:[%s4522 + $0x3e0] sm:$0xff]
    %v4648 = vld [vmem:[%s4522 + $0x3e8] sm:$0xff]
    %v4649 = vld [vmem:[%s4522 + $0x3f0] sm:$0xff]
    %v4650 = vld [vmem:[%s4522 + $0x3f8] sm:$0xff]
    %v4651 = vld [vmem:[%s4522 + $0x400] sm:$0xff]
    %v4652 = vld [vmem:[%s4522 + $0x408] sm:$0xff]
    %v4653 = vld [vmem:[%s4522 + $0x410] sm:$0xff]
    %v4654 = vld [vmem:[%s4522 + $0x418] sm:$0xff]
    %v4655 = vld [vmem:[%s4522 + $0x420] sm:$0xff]
    %v4656 = vld [vmem:[%s4522 + $0x428] sm:$0xff]
    %v4657 = vld [vmem:[%s4522 + $0x430] sm:$0xff]
    %v4658 = vld [vmem:[%s4522 + $0x438] sm:$0xff]
    %v4659 = vld [vmem:[%s4522 + $0x440] sm:$0xff]
    %v4660 = vld [vmem:[%s4522 + $0x448] sm:$0xff]
    %v4661 = vld [vmem:[%s4522 + $0x450] sm:$0xff]
    %v4662 = vld [vmem:[%s4522 + $0x458] sm:$0xff]
    %v4663 = vld [vmem:[%s4522 + $0x460] sm:$0xff]
    %v4664 = vld [vmem:[%s4522 + $0x468] sm:$0xff]
    %v4665 = vld [vmem:[%s4522 + $0x470] sm:$0xff]
    %v4666 = vld [vmem:[%s4522 + $0x478] sm:$0xff]
    %v4667 = vld [vmem:[%s4522 + $0x480] sm:$0xff]
    %v4668 = vld [vmem:[%s4522 + $0x488] sm:$0xff]
    %v4669 = vld [vmem:[%s4522 + $0x490] sm:$0xff]
    %v4670 = vld [vmem:[%s4522 + $0x498] sm:$0xff]
    %v4671 = vld [vmem:[%s4522 + $0x4a0] sm:$0xff]
    %v4672 = vld [vmem:[%s4522 + $0x4a8] sm:$0xff]
    %v4673 = vld [vmem:[%s4522 + $0x4b0] sm:$0xff]
    %v4674 = vld [vmem:[%s4522 + $0x4b8] sm:$0xff]
    %v4675 = vld [vmem:[%s4522 + $0x4c0] sm:$0xff]
    %v4676 = vld [vmem:[%s4522 + $0x4c8] sm:$0xff]
    %v4677 = vld [vmem:[%s4522 + $0x4d0] sm:$0xff]
    %v4678 = vld [vmem:[%s4522 + $0x4d8] sm:$0xff]
    %v4679 = vld [vmem:[%s4522 + $0x4e0] sm:$0xff]
    %v4680 = vld [vmem:[%s4522 + $0x4e8] sm:$0xff]
    %v4681 = vld [vmem:[%s4522 + $0x4f0] sm:$0xff]
    %v4682 = vld [vmem:[%s4522 + $0x4f8] sm:$0xff]
    %v4683 = vld [vmem:[%s4522 + $0x500] sm:$0xff]
    %v4684 = vld [vmem:[%s4522 + $0x508] sm:$0xff]
    %v4685 = vld [vmem:[%s4522 + $0x510] sm:$0xff]
    %v4686 = vld [vmem:[%s4522 + $0x518] sm:$0xff]
    %v4687 = vld [vmem:[%s4522 + $0x520] sm:$0xff]
    %v4688 = vld [vmem:[%s4522 + $0x528] sm:$0xff]
    %v4689 = vld [vmem:[%s4522 + $0x530] sm:$0xff]
    %v4690 = vld [vmem:[%s4522 + $0x538] sm:$0xff]
    %v4691 = vld [vmem:[%s4522 + $0x540] sm:$0xff]
    %v4692 = vld [vmem:[%s4522 + $0x548] sm:$0xff]
    %v4693 = vld [vmem:[%s4522 + $0x550] sm:$0xff]
    %v4694 = vld [vmem:[%s4522 + $0x558] sm:$0xff]
    %v4695 = vld [vmem:[%s4522 + $0x560] sm:$0xff]
    %v4696 = vld [vmem:[%s4522 + $0x568] sm:$0xff]
    %v4697 = vld [vmem:[%s4522 + $0x570] sm:$0xff]
    %v4698 = vld [vmem:[%s4522 + $0x578] sm:$0xff]
    %v4699 = vld [vmem:[%s4522 + $0x580] sm:$0xff]
    %v4700 = vld [vmem:[%s4522 + $0x588] sm:$0xff]
    %v4701 = vld [vmem:[%s4522 + $0x590] sm:$0xff]
    %v4702 = vld [vmem:[%s4522 + $0x598] sm:$0xff]
    %v4703 = vld [vmem:[%s4522 + $0x5a0] sm:$0xff]
    %v4704 = vld [vmem:[%s4522 + $0x5a8] sm:$0xff]
    %v4705 = vld [vmem:[%s4522 + $0x5b0] sm:$0xff]
    %v4706 = vld [vmem:[%s4522 + $0x5b8] sm:$0xff]
    %v4707 = vld [vmem:[%s4522 + $0x5c0] sm:$0xff]
    %v4708 = vld [vmem:[%s4522 + $0x5c8] sm:$0xff]
    %v4709 = vld [vmem:[%s4522 + $0x5d0] sm:$0xff]
    %v4710 = vld [vmem:[%s4522 + $0x5d8] sm:$0xff]
    %v4711 = vld [vmem:[%s4522 + $0x5e0] sm:$0xff]
    %v4712 = vld [vmem:[%s4522 + $0x5e8] sm:$0xff]
    %v4713 = vld [vmem:[%s4522 + $0x5f0] sm:$0xff]
    %v4714 = vld [vmem:[%s4522 + $0x5f8] sm:$0xff]
    %v4715 = vld [vmem:[%s4522 + $0x600] sm:$0xff]
    %v4716 = vld [vmem:[%s4522 + $0x608] sm:$0xff]
    %v4717 = vld [vmem:[%s4522 + $0x610] sm:$0xff]
    %v4718 = vld [vmem:[%s4522 + $0x618] sm:$0xff]
    %v4719 = vld [vmem:[%s4522 + $0x620] sm:$0xff]
    %v4720 = vld [vmem:[%s4522 + $0x628] sm:$0xff]
    %v4721 = vld [vmem:[%s4522 + $0x630] sm:$0xff]
    %v4722 = vld [vmem:[%s4522 + $0x638] sm:$0xff]
    %v4723 = vld [vmem:[%s4522 + $0x640] sm:$0xff]
    %v4724 = vld [vmem:[%s4522 + $0x648] sm:$0xff]
    %v4725 = vld [vmem:[%s4522 + $0x650] sm:$0xff]
    %v4726 = vld [vmem:[%s4522 + $0x658] sm:$0xff]
    %v4727 = vld [vmem:[%s4522 + $0x660] sm:$0xff]
    %v4728 = vld [vmem:[%s4522 + $0x668] sm:$0xff]
    %v4729 = vld [vmem:[%s4522 + $0x670] sm:$0xff]
    %v4730 = vld [vmem:[%s4522 + $0x678] sm:$0xff]
    %v4731 = vld [vmem:[%s4522 + $0x680] sm:$0xff]
    %v4732 = vld [vmem:[%s4522 + $0x688] sm:$0xff]
    %v4733 = vld [vmem:[%s4522 + $0x690] sm:$0xff]
    %v4734 = vld [vmem:[%s4522 + $0x698] sm:$0xff]
    %v4735 = vld [vmem:[%s4522 + $0x6a0] sm:$0xff]
    %v4736 = vld [vmem:[%s4522 + $0x6a8] sm:$0xff]
    %v4737 = vld [vmem:[%s4522 + $0x6b0] sm:$0xff]
    %v4738 = vld [vmem:[%s4522 + $0x6b8] sm:$0xff]
    %v4739 = vld [vmem:[%s4522 + $0x6c0] sm:$0xff]
    %v4740 = vld [vmem:[%s4522 + $0x6c8] sm:$0xff]
    %v4741 = vld [vmem:[%s4522 + $0x6d0] sm:$0xff]
    %v4742 = vld [vmem:[%s4522 + $0x6d8] sm:$0xff]
    %v4743 = vld [vmem:[%s4522 + $0x6e0] sm:$0xff]
    %v4744 = vld [vmem:[%s4522 + $0x6e8] sm:$0xff]
    %v4745 = vld [vmem:[%s4522 + $0x6f0] sm:$0xff]
    %v4746 = vld [vmem:[%s4522 + $0x6f8] sm:$0xff]
    %v4747 = vld [vmem:[%s4522 + $0x700] sm:$0xff]
    %v4748 = vld [vmem:[%s4522 + $0x708] sm:$0xff]
    %v4749 = vld [vmem:[%s4522 + $0x710] sm:$0xff]
    %v4750 = vld [vmem:[%s4522 + $0x718] sm:$0xff]
    %v4751 = vld [vmem:[%s4522 + $0x720] sm:$0xff]
    %v4752 = vld [vmem:[%s4522 + $0x728] sm:$0xff]
    %v4753 = vld [vmem:[%s4522 + $0x730] sm:$0xff]
    %v4754 = vld [vmem:[%s4522 + $0x738] sm:$0xff]
    %v4755 = vld [vmem:[%s4522 + $0x740] sm:$0xff]
    %v4756 = vld [vmem:[%s4522 + $0x748] sm:$0xff]
    %v4757 = vld [vmem:[%s4522 + $0x750] sm:$0xff]
    %v4758 = vld [vmem:[%s4522 + $0x758] sm:$0xff]
    %v4759 = vld [vmem:[%s4522 + $0x760] sm:$0xff]
    %v4760 = vld [vmem:[%s4522 + $0x768] sm:$0xff]
    %v4761 = vld [vmem:[%s4522 + $0x770] sm:$0xff]
    %v4762 = vld [vmem:[%s4522 + $0x778] sm:$0xff]
    %v4763 = vld [vmem:[%s4522 + $0x780] sm:$0xff]
    %v4764 = vld [vmem:[%s4522 + $0x788] sm:$0xff]
    %v4765 = vld [vmem:[%s4522 + $0x790] sm:$0xff]
    %v4766 = vld [vmem:[%s4522 + $0x798] sm:$0xff]
    %v4767 = vld [vmem:[%s4522 + $0x7a0] sm:$0xff]
    %v4768 = vld [vmem:[%s4522 + $0x7a8] sm:$0xff]
    %v4769 = vld [vmem:[%s4522 + $0x7b0] sm:$0xff]
    %v4770 = vld [vmem:[%s4522 + $0x7b8] sm:$0xff]
    %v4771 = vld [vmem:[%s4522 + $0x7c0] sm:$0xff]
    %v4772 = vld [vmem:[%s4522 + $0x7c8] sm:$0xff]
    %v4773 = vld [vmem:[%s4522 + $0x7d0] sm:$0xff]
    %v4774 = vld [vmem:[%s4522 + $0x7d8] sm:$0xff]
    %v4775 = vld [vmem:[%s4522 + $0x7e0] sm:$0xff]
    %v4776 = vld [vmem:[%s4522 + $0x7e8] sm:$0xff]
    %v4777 = vld [vmem:[%s4522 + $0x7f0] sm:$0xff]
    %v4778 = vld [vmem:[%s4522 + $0x7f8] sm:$0xff]
    %v4779 = vld [vmem:[%s4522 + $0x800] sm:$0xff]
    %v4780 = vld [vmem:[%s4522 + $0x808] sm:$0xff]
    %v4781 = vld [vmem:[%s4522 + $0x810] sm:$0xff]
    %v4782 = vld [vmem:[%s4522 + $0x818] sm:$0xff]
    %v4783 = vld [vmem:[%s4522 + $0x820] sm:$0xff]
    %v4784 = vld [vmem:[%s4522 + $0x828] sm:$0xff]
    %v4785 = vld [vmem:[%s4522 + $0x830] sm:$0xff]
    %v4786 = vld [vmem:[%s4522 + $0x838] sm:$0xff]
    %v4787 = vld [vmem:[%s4522 + $0x840] sm:$0xff]
    %v4788 = vld [vmem:[%s4522 + $0x848] sm:$0xff]
    %v4789 = vld [vmem:[%s4522 + $0x850] sm:$0xff]
    %v4790 = vld [vmem:[%s4522 + $0x858] sm:$0xff]
    %v4791 = vld [vmem:[%s4522 + $0x860] sm:$0xff]
    %v4792 = vld [vmem:[%s4522 + $0x868] sm:$0xff]
    %v4793 = vld [vmem:[%s4522 + $0x870] sm:$0xff]
    %v4794 = vld [vmem:[%s4522 + $0x878] sm:$0xff]
    %v4795 = vld [vmem:[%s4522 + $0x880] sm:$0xff]
    %v4796 = vld [vmem:[%s4522 + $0x888] sm:$0xff]
    %v4797 = vld [vmem:[%s4522 + $0x890] sm:$0xff]
    %v4798 = vld [vmem:[%s4522 + $0x898] sm:$0xff]
    %v4799 = vld [vmem:[%s4522 + $0x8a0] sm:$0xff]
    %v4800 = vld [vmem:[%s4522 + $0x8a8] sm:$0xff]
    %v4801 = vld [vmem:[%s4522 + $0x8b0] sm:$0xff]
    %v4802 = vld [vmem:[%s4522 + $0x8b8] sm:$0xff]
    %v4803 = vld [vmem:[%s4522 + $0x8c0] sm:$0xff]
    %v4804 = vld [vmem:[%s4522 + $0x8c8] sm:$0xff]
    %v4805 = vld [vmem:[%s4522 + $0x8d0] sm:$0xff]
    %v4806 = vld [vmem:[%s4522 + $0x8d8] sm:$0xff]
    %v4807 = vld [vmem:[%s4522 + $0x8e0] sm:$0xff]
    %v4808 = vld [vmem:[%s4522 + $0x8e8] sm:$0xff]
    %v4809 = vld [vmem:[%s4522 + $0x8f0] sm:$0xff]
    %v4810 = vld [vmem:[%s4522 + $0x8f8] sm:$0xff]
    %4811 = vmatpush.msra.mxu0 %v4568
    %4812 = vmatpush.msra.mxu0 %v4565
    %4813 = vmatpush.msra.mxu0 %v4562
    %4814 = vmatpush.msra.mxu0 %v4559
    %4815 = vmatpush.msra.mxu0 %v4556
    %4816 = vmatpush.msra.mxu0 %v4553
    %4817 = vmatpush.msra.mxu0 %v4550
    %4818 = vmatpush.msra.mxu0 %v4547
    %4819 = vmatpush.msra.mxu0 %v4544
    %4820 = vmatpush.msra.mxu0 %v4541
    %4821 = vmatpush.msra.mxu0 %v4538
    %4822 = vmatpush.msra.mxu0 %v4535
    %4823 = vmatpush.msra.mxu0 %v4532
    %4824 = vmatpush.msra.mxu0 %v4529
    %4825 = vmatpush.msra.mxu0 %v4526
    %4826 = vmatpush.msra.mxu0 %v4523
    %4827 = vmatmul.f32.gmra.mxu0 %v1481
    %v4828 = vpop.f32.mrf.mxu0
    %v4829 = vadd.f32 0.0, %v4828
    %4830 = vmatmul.f32.gmra.mxu0 %v4516
    %v4831 = vpop.f32.mrf.mxu0
    %v4832 = vadd.f32 0.0, %v4831
    %4833 = vdwg.mxu0
    %4834 = vmatpush.msra.mxu0 %v4616
    %4835 = vmatpush.msra.mxu0 %v4613
    %4836 = vmatpush.msra.mxu0 %v4610
    %4837 = vmatpush.msra.mxu0 %v4607
    %4838 = vmatpush.msra.mxu0 %v4604
    %4839 = vmatpush.msra.mxu0 %v4601
    %4840 = vmatpush.msra.mxu0 %v4598
    %4841 = vmatpush.msra.mxu0 %v4595
    %4842 = vmatpush.msra.mxu0 %v4592
    %4843 = vmatpush.msra.mxu0 %v4589
    %4844 = vmatpush.msra.mxu0 %v4586
    %4845 = vmatpush.msra.mxu0 %v4583
    %4846 = vmatpush.msra.mxu0 %v4580
    %4847 = vmatpush.msra.mxu0 %v4577
    %4848 = vmatpush.msra.mxu0 %v4574
    %4849 = vmatpush.msra.mxu0 %v4571
    %4850 = vmatmul.f32.gmra.mxu0 %v1482
    %v4851 = vpop.f32.mrf.mxu0
    %v4852 = vadd.f32 %v4829, %v4851
    %4853 = vmatmul.f32.gmra.mxu0 %v4517
    %v4854 = vpop.f32.mrf.mxu0
    %v4855 = vadd.f32 %v4832, %v4854
    %4856 = vdwg.mxu0
    %4857 = vmatpush.msra.mxu0 %v4664
    %4858 = vmatpush.msra.mxu0 %v4661
    %4859 = vmatpush.msra.mxu0 %v4658
    %4860 = vmatpush.msra.mxu0 %v4655
    %4861 = vmatpush.msra.mxu0 %v4652
    %4862 = vmatpush.msra.mxu0 %v4649
    %4863 = vmatpush.msra.mxu0 %v4646
    %4864 = vmatpush.msra.mxu0 %v4643
    %4865 = vmatpush.msra.mxu0 %v4640
    %4866 = vmatpush.msra.mxu0 %v4637
    %4867 = vmatpush.msra.mxu0 %v4634
    %4868 = vmatpush.msra.mxu0 %v4631
    %4869 = vmatpush.msra.mxu0 %v4628
    %4870 = vmatpush.msra.mxu0 %v4625
    %4871 = vmatpush.msra.mxu0 %v4622
    %4872 = vmatpush.msra.mxu0 %v4619
    %4873 = vmatmul.f32.gmra.mxu0 %v1483
    %v4874 = vpop.f32.mrf.mxu0
    %v4875 = vadd.f32 %v4852, %v4874
    %4876 = vmatmul.f32.gmra.mxu0 %v4518
    %v4877 = vpop.f32.mrf.mxu0
    %v4878 = vadd.f32 %v4855, %v4877
    %4879 = vdwg.mxu0
    %4880 = vmatpush.msra.mxu0 %v4712
    %4881 = vmatpush.msra.mxu0 %v4709
    %4882 = vmatpush.msra.mxu0 %v4706
    %4883 = vmatpush.msra.mxu0 %v4703
    %4884 = vmatpush.msra.mxu0 %v4700
    %4885 = vmatpush.msra.mxu0 %v4697
    %4886 = vmatpush.msra.mxu0 %v4694
    %4887 = vmatpush.msra.mxu0 %v4691
    %4888 = vmatpush.msra.mxu0 %v4688
    %4889 = vmatpush.msra.mxu0 %v4685
    %4890 = vmatpush.msra.mxu0 %v4682
    %4891 = vmatpush.msra.mxu0 %v4679
    %4892 = vmatpush.msra.mxu0 %v4676
    %4893 = vmatpush.msra.mxu0 %v4673
    %4894 = vmatpush.msra.mxu0 %v4670
    %4895 = vmatpush.msra.mxu0 %v4667
    %4896 = vmatmul.f32.gmra.mxu0 %v1484
    %v4897 = vpop.f32.mrf.mxu0
    %v4898 = vadd.f32 %v4875, %v4897
    %4899 = vmatmul.f32.gmra.mxu0 %v4519
    %v4900 = vpop.f32.mrf.mxu0
    %v4901 = vadd.f32 %v4878, %v4900
    %4902 = vdwg.mxu0
    %4903 = vmatpush.msra.mxu0 %v4760
    %4904 = vmatpush.msra.mxu0 %v4757
    %4905 = vmatpush.msra.mxu0 %v4754
    %4906 = vmatpush.msra.mxu0 %v4751
    %4907 = vmatpush.msra.mxu0 %v4748
    %4908 = vmatpush.msra.mxu0 %v4745
    %4909 = vmatpush.msra.mxu0 %v4742
    %4910 = vmatpush.msra.mxu0 %v4739
    %4911 = vmatpush.msra.mxu0 %v4736
    %4912 = vmatpush.msra.mxu0 %v4733
    %4913 = vmatpush.msra.mxu0 %v4730
    %4914 = vmatpush.msra.mxu0 %v4727
    %4915 = vmatpush.msra.mxu0 %v4724
    %4916 = vmatpush.msra.mxu0 %v4721
    %4917 = vmatpush.msra.mxu0 %v4718
    %4918 = vmatpush.msra.mxu0 %v4715
    %4919 = vmatmul.f32.gmra.mxu0 %v1485
    %v4920 = vpop.f32.mrf.mxu0
    %v4921 = vadd.f32 %v4898, %v4920
    %4922 = vmatmul.f32.gmra.mxu0 %v4520
    %v4923 = vpop.f32.mrf.mxu0
    %v4924 = vadd.f32 %v4901, %v4923
    %4925 = vdwg.mxu0
    %4926 = vmatpush.msra.mxu0 %v4808
    %4927 = vmatpush.msra.mxu0 %v4805
    %4928 = vmatpush.msra.mxu0 %v4802
    %4929 = vmatpush.msra.mxu0 %v4799
    %4930 = vmatpush.msra.mxu0 %v4796
    %4931 = vmatpush.msra.mxu0 %v4793
    %4932 = vmatpush.msra.mxu0 %v4790
    %4933 = vmatpush.msra.mxu0 %v4787
    %4934 = vmatpush.msra.mxu0 %v4784
    %4935 = vmatpush.msra.mxu0 %v4781
    %4936 = vmatpush.msra.mxu0 %v4778
    %4937 = vmatpush.msra.mxu0 %v4775
    %4938 = vmatpush.msra.mxu0 %v4772
    %4939 = vmatpush.msra.mxu0 %v4769
    %4940 = vmatpush.msra.mxu0 %v4766
    %4941 = vmatpush.msra.mxu0 %v4763
    %4942 = vmatmul.f32.gmra.mxu0 %v1486
    %v4943 = vpop.f32.mrf.mxu0
    %v4944 = vadd.f32 %v4921, %v4943
    %4945 = vmatmul.f32.gmra.mxu0 %v4521
    %v4946 = vpop.f32.mrf.mxu0
    %v4947 = vadd.f32 %v4924, %v4946
    %4948 = vdwg.mxu0
    %4949 = vmatpush.msra.mxu0 %v4569
    %4950 = vmatpush.msra.mxu0 %v4566
    %4951 = vmatpush.msra.mxu0 %v4563
    %4952 = vmatpush.msra.mxu0 %v4560
    %4953 = vmatpush.msra.mxu0 %v4557
    %4954 = vmatpush.msra.mxu0 %v4554
    %4955 = vmatpush.msra.mxu0 %v4551
    %4956 = vmatpush.msra.mxu0 %v4548
    %4957 = vmatpush.msra.mxu0 %v4545
    %4958 = vmatpush.msra.mxu0 %v4542
    %4959 = vmatpush.msra.mxu0 %v4539
    %4960 = vmatpush.msra.mxu0 %v4536
    %4961 = vmatpush.msra.mxu0 %v4533
    %4962 = vmatpush.msra.mxu0 %v4530
    %4963 = vmatpush.msra.mxu0 %v4527
    %4964 = vmatpush.msra.mxu0 %v4524
    %4965 = vmatmul.f32.gmra.mxu0 %v1481
    %v4966 = vpop.f32.mrf.mxu0
    %v4967 = vadd.f32 0.0, %v4966
    %4968 = vmatmul.f32.gmra.mxu0 %v4516
    %v4969 = vpop.f32.mrf.mxu0
    %v4970 = vadd.f32 0.0, %v4969
    %4971 = vdwg.mxu0
    %4972 = vmatpush.msra.mxu0 %v4617
    %4973 = vmatpush.msra.mxu0 %v4614
    %4974 = vmatpush.msra.mxu0 %v4611
    %4975 = vmatpush.msra.mxu0 %v4608
    %4976 = vmatpush.msra.mxu0 %v4605
    %4977 = vmatpush.msra.mxu0 %v4602
    %4978 = vmatpush.msra.mxu0 %v4599
    %4979 = vmatpush.msra.mxu0 %v4596
    %4980 = vmatpush.msra.mxu0 %v4593
    %4981 = vmatpush.msra.mxu0 %v4590
    %4982 = vmatpush.msra.mxu0 %v4587
    %4983 = vmatpush.msra.mxu0 %v4584
    %4984 = vmatpush.msra.mxu0 %v4581
    %4985 = vmatpush.msra.mxu0 %v4578
    %4986 = vmatpush.msra.mxu0 %v4575
    %4987 = vmatpush.msra.mxu0 %v4572
    %4988 = vmatmul.f32.gmra.mxu0 %v1482
    %v4989 = vpop.f32.mrf.mxu0
    %v4990 = vadd.f32 %v4967, %v4989
    %4991 = vmatmul.f32.gmra.mxu0 %v4517
    %v4992 = vpop.f32.mrf.mxu0
    %v4993 = vadd.f32 %v4970, %v4992
    %4994 = vdwg.mxu0
    %4995 = vmatpush.msra.mxu0 %v4665
    %4996 = vmatpush.msra.mxu0 %v4662
    %4997 = vmatpush.msra.mxu0 %v4659
    %4998 = vmatpush.msra.mxu0 %v4656
    %4999 = vmatpush.msra.mxu0 %v4653
    %5000 = vmatpush.msra.mxu0 %v4650
    %5001 = vmatpush.msra.mxu0 %v4647
    %5002 = vmatpush.msra.mxu0 %v4644
    %5003 = vmatpush.msra.mxu0 %v4641
    %5004 = vmatpush.msra.mxu0 %v4638
    %5005 = vmatpush.msra.mxu0 %v4635
    %5006 = vmatpush.msra.mxu0 %v4632
    %5007 = vmatpush.msra.mxu0 %v4629
    %5008 = vmatpush.msra.mxu0 %v4626
    %5009 = vmatpush.msra.mxu0 %v4623
    %5010 = vmatpush.msra.mxu0 %v4620
    %5011 = vmatmul.f32.gmra.mxu0 %v1483
    %v5012 = vpop.f32.mrf.mxu0
    %v5013 = vadd.f32 %v4990, %v5012
    %5014 = vmatmul.f32.gmra.mxu0 %v4518
    %v5015 = vpop.f32.mrf.mxu0
    %v5016 = vadd.f32 %v4993, %v5015
    %5017 = vdwg.mxu0
    %5018 = vmatpush.msra.mxu0 %v4713
    %5019 = vmatpush.msra.mxu0 %v4710
    %5020 = vmatpush.msra.mxu0 %v4707
    %5021 = vmatpush.msra.mxu0 %v4704
    %5022 = vmatpush.msra.mxu0 %v4701
    %5023 = vmatpush.msra.mxu0 %v4698
    %5024 = vmatpush.msra.mxu0 %v4695
    %5025 = vmatpush.msra.mxu0 %v4692
    %5026 = vmatpush.msra.mxu0 %v4689
    %5027 = vmatpush.msra.mxu0 %v4686
    %5028 = vmatpush.msra.mxu0 %v4683
    %5029 = vmatpush.msra.mxu0 %v4680
    %5030 = vmatpush.msra.mxu0 %v4677
    %5031 = vmatpush.msra.mxu0 %v4674
    %5032 = vmatpush.msra.mxu0 %v4671
    %5033 = vmatpush.msra.mxu0 %v4668
    %5034 = vmatmul.f32.gmra.mxu0 %v1484
    %v5035 = vpop.f32.mrf.mxu0
    %v5036 = vadd.f32 %v5013, %v5035
    %5037 = vmatmul.f32.gmra.mxu0 %v4519
    %v5038 = vpop.f32.mrf.mxu0
    %v5039 = vadd.f32 %v5016, %v5038
    %5040 = vdwg.mxu0
    %5041 = vmatpush.msra.mxu0 %v4761
    %5042 = vmatpush.msra.mxu0 %v4758
    %5043 = vmatpush.msra.mxu0 %v4755
    %5044 = vmatpush.msra.mxu0 %v4752
    %5045 = vmatpush.msra.mxu0 %v4749
    %5046 = vmatpush.msra.mxu0 %v4746
    %5047 = vmatpush.msra.mxu0 %v4743
    %5048 = vmatpush.msra.mxu0 %v4740
    %5049 = vmatpush.msra.mxu0 %v4737
    %5050 = vmatpush.msra.mxu0 %v4734
    %5051 = vmatpush.msra.mxu0 %v4731
    %5052 = vmatpush.msra.mxu0 %v4728
    %5053 = vmatpush.msra.mxu0 %v4725
    %5054 = vmatpush.msra.mxu0 %v4722
    %5055 = vmatpush.msra.mxu0 %v4719
    %5056 = vmatpush.msra.mxu0 %v4716
    %5057 = vmatmul.f32.gmra.mxu0 %v1485
    %v5058 = vpop.f32.mrf.mxu0
    %v5059 = vadd.f32 %v5036, %v5058
    %5060 = vmatmul.f32.gmra.mxu0 %v4520
    %v5061 = vpop.f32.mrf.mxu0
    %v5062 = vadd.f32 %v5039, %v5061
    %5063 = vdwg.mxu0
    %5064 = vmatpush.msra.mxu0 %v4809
    %5065 = vmatpush.msra.mxu0 %v4806
    %5066 = vmatpush.msra.mxu0 %v4803
    %5067 = vmatpush.msra.mxu0 %v4800
    %5068 = vmatpush.msra.mxu0 %v4797
    %5069 = vmatpush.msra.mxu0 %v4794
    %5070 = vmatpush.msra.mxu0 %v4791
    %5071 = vmatpush.msra.mxu0 %v4788
    %5072 = vmatpush.msra.mxu0 %v4785
    %5073 = vmatpush.msra.mxu0 %v4782
    %5074 = vmatpush.msra.mxu0 %v4779
    %5075 = vmatpush.msra.mxu0 %v4776
    %5076 = vmatpush.msra.mxu0 %v4773
    %5077 = vmatpush.msra.mxu0 %v4770
    %5078 = vmatpush.msra.mxu0 %v4767
    %5079 = vmatpush.msra.mxu0 %v4764
    %5080 = vmatmul.f32.gmra.mxu0 %v1486
    %v5081 = vpop.f32.mrf.mxu0
    %v5082 = vadd.f32 %v5059, %v5081
    %5083 = vmatmul.f32.gmra.mxu0 %v4521
    %v5084 = vpop.f32.mrf.mxu0
    %v5085 = vadd.f32 %v5062, %v5084
    %5086 = vdwg.mxu0
    %5087 = vmatpush.msra.mxu0 %v4570
    %5088 = vmatpush.msra.mxu0 %v4567
    %5089 = vmatpush.msra.mxu0 %v4564
    %5090 = vmatpush.msra.mxu0 %v4561
    %5091 = vmatpush.msra.mxu0 %v4558
    %5092 = vmatpush.msra.mxu0 %v4555
    %5093 = vmatpush.msra.mxu0 %v4552
    %5094 = vmatpush.msra.mxu0 %v4549
    %5095 = vmatpush.msra.mxu0 %v4546
    %5096 = vmatpush.msra.mxu0 %v4543
    %5097 = vmatpush.msra.mxu0 %v4540
    %5098 = vmatpush.msra.mxu0 %v4537
    %5099 = vmatpush.msra.mxu0 %v4534
    %5100 = vmatpush.msra.mxu0 %v4531
    %5101 = vmatpush.msra.mxu0 %v4528
    %5102 = vmatpush.msra.mxu0 %v4525
    %5103 = vmatmul.f32.gmra.mxu0 %v1481
    %v5104 = vpop.f32.mrf.mxu0
    %v5105 = vadd.f32 0.0, %v5104
    %5106 = vmatmul.f32.gmra.mxu0 %v4516
    %v5107 = vpop.f32.mrf.mxu0
    %v5108 = vadd.f32 0.0, %v5107
    %5109 = vdwg.mxu0
    %5110 = vmatpush.msra.mxu0 %v4618
    %5111 = vmatpush.msra.mxu0 %v4615
    %5112 = vmatpush.msra.mxu0 %v4612
    %5113 = vmatpush.msra.mxu0 %v4609
    %5114 = vmatpush.msra.mxu0 %v4606
    %5115 = vmatpush.msra.mxu0 %v4603
    %5116 = vmatpush.msra.mxu0 %v4600
    %5117 = vmatpush.msra.mxu0 %v4597
    %5118 = vmatpush.msra.mxu0 %v4594
    %5119 = vmatpush.msra.mxu0 %v4591
    %5120 = vmatpush.msra.mxu0 %v4588
    %5121 = vmatpush.msra.mxu0 %v4585
    %5122 = vmatpush.msra.mxu0 %v4582
    %5123 = vmatpush.msra.mxu0 %v4579
    %5124 = vmatpush.msra.mxu0 %v4576
    %5125 = vmatpush.msra.mxu0 %v4573
    %5126 = vmatmul.f32.gmra.mxu0 %v1482
    %v5127 = vpop.f32.mrf.mxu0
    %v5128 = vadd.f32 %v5105, %v5127
    %5129 = vmatmul.f32.gmra.mxu0 %v4517
    %v5130 = vpop.f32.mrf.mxu0
    %v5131 = vadd.f32 %v5108, %v5130
    %5132 = vdwg.mxu0
    %5133 = vmatpush.msra.mxu0 %v4666
    %5134 = vmatpush.msra.mxu0 %v4663
    %5135 = vmatpush.msra.mxu0 %v4660
    %5136 = vmatpush.msra.mxu0 %v4657
    %5137 = vmatpush.msra.mxu0 %v4654
    %5138 = vmatpush.msra.mxu0 %v4651
    %5139 = vmatpush.msra.mxu0 %v4648
    %5140 = vmatpush.msra.mxu0 %v4645
    %5141 = vmatpush.msra.mxu0 %v4642
    %5142 = vmatpush.msra.mxu0 %v4639
    %5143 = vmatpush.msra.mxu0 %v4636
    %5144 = vmatpush.msra.mxu0 %v4633
    %5145 = vmatpush.msra.mxu0 %v4630
    %5146 = vmatpush.msra.mxu0 %v4627
    %5147 = vmatpush.msra.mxu0 %v4624
    %5148 = vmatpush.msra.mxu0 %v4621
    %5149 = vmatmul.f32.gmra.mxu0 %v1483
    %v5150 = vpop.f32.mrf.mxu0
    %v5151 = vadd.f32 %v5128, %v5150
    %5152 = vmatmul.f32.gmra.mxu0 %v4518
    %v5153 = vpop.f32.mrf.mxu0
    %v5154 = vadd.f32 %v5131, %v5153
    %5155 = vdwg.mxu0
    %5156 = vmatpush.msra.mxu0 %v4714
    %5157 = vmatpush.msra.mxu0 %v4711
    %5158 = vmatpush.msra.mxu0 %v4708
    %5159 = vmatpush.msra.mxu0 %v4705
    %5160 = vmatpush.msra.mxu0 %v4702
    %5161 = vmatpush.msra.mxu0 %v4699
    %5162 = vmatpush.msra.mxu0 %v4696
    %5163 = vmatpush.msra.mxu0 %v4693
    %5164 = vmatpush.msra.mxu0 %v4690
    %5165 = vmatpush.msra.mxu0 %v4687
    %5166 = vmatpush.msra.mxu0 %v4684
    %5167 = vmatpush.msra.mxu0 %v4681
    %5168 = vmatpush.msra.mxu0 %v4678
    %5169 = vmatpush.msra.mxu0 %v4675
    %5170 = vmatpush.msra.mxu0 %v4672
    %5171 = vmatpush.msra.mxu0 %v4669
    %5172 = vmatmul.f32.gmra.mxu0 %v1484
    %v5173 = vpop.f32.mrf.mxu0
    %v5174 = vadd.f32 %v5151, %v5173
    %5175 = vmatmul.f32.gmra.mxu0 %v4519
    %v5176 = vpop.f32.mrf.mxu0
    %v5177 = vadd.f32 %v5154, %v5176
    %5178 = vdwg.mxu0
    %5179 = vmatpush.msra.mxu0 %v4762
    %5180 = vmatpush.msra.mxu0 %v4759
    %5181 = vmatpush.msra.mxu0 %v4756
    %5182 = vmatpush.msra.mxu0 %v4753
    %5183 = vmatpush.msra.mxu0 %v4750
    %5184 = vmatpush.msra.mxu0 %v4747
    %5185 = vmatpush.msra.mxu0 %v4744
    %5186 = vmatpush.msra.mxu0 %v4741
    %5187 = vmatpush.msra.mxu0 %v4738
    %5188 = vmatpush.msra.mxu0 %v4735
    %5189 = vmatpush.msra.mxu0 %v4732
    %5190 = vmatpush.msra.mxu0 %v4729
    %5191 = vmatpush.msra.mxu0 %v4726
    %5192 = vmatpush.msra.mxu0 %v4723
    %5193 = vmatpush.msra.mxu0 %v4720
    %5194 = vmatpush.msra.mxu0 %v4717
    %5195 = vmatmul.f32.gmra.mxu0 %v1485
    %v5196 = vpop.f32.mrf.mxu0
    %v5197 = vadd.f32 %v5174, %v5196
    %5198 = vmatmul.f32.gmra.mxu0 %v4520
    %v5199 = vpop.f32.mrf.mxu0
    %v5200 = vadd.f32 %v5177, %v5199
    %5201 = vdwg.mxu0
    %5202 = vmatpush.msra.mxu0 %v4810
    %5203 = vmatpush.msra.mxu0 %v4807
    %5204 = vmatpush.msra.mxu0 %v4804
    %5205 = vmatpush.msra.mxu0 %v4801
    %5206 = vmatpush.msra.mxu0 %v4798
    %5207 = vmatpush.msra.mxu0 %v4795
    %5208 = vmatpush.msra.mxu0 %v4792
    %5209 = vmatpush.msra.mxu0 %v4789
    %5210 = vmatpush.msra.mxu0 %v4786
    %5211 = vmatpush.msra.mxu0 %v4783
    %5212 = vmatpush.msra.mxu0 %v4780
    %5213 = vmatpush.msra.mxu0 %v4777
    %5214 = vmatpush.msra.mxu0 %v4774
    %5215 = vmatpush.msra.mxu0 %v4771
    %5216 = vmatpush.msra.mxu0 %v4768
    %5217 = vmatpush.msra.mxu0 %v4765
    %5218 = vmatmul.f32.gmra.mxu0 %v1486
    %v5219 = vpop.f32.mrf.mxu0
    %v5220 = vadd.f32 %v5197, %v5219
    %5221 = vmatmul.f32.gmra.mxu0 %v4521
    %v5222 = vpop.f32.mrf.mxu0
    %v5223 = vadd.f32 %v5200, %v5222
    %5224 = vdwg.mxu0
    %v5225 = vadd.f32 %v4510, %v4944
    %v5226 = vadd.f32 %v4511, %v5082
    %v5227 = vadd.f32 %v4512, %v5220
    %v5228 = vadd.f32 %v4513, %v4947
    %v5229 = vadd.f32 %v4514, %v5085
    %v5230 = vadd.f32 %v4515, %v5223
    %v5231 = vld [vmem:[#allocation3 + $0x30] sm:$0xfc]
    %v5232 = vld [vmem:[#allocation3 + $0x38] sm:$0xfc]
    %v5233 = vld [vmem:[#allocation3 + $0x40] sm:$0xfc]
    %v5234 = vld [vmem:[#allocation3 + $0x48] sm:$0xfc]
    %v5235 = vld [vmem:[#allocation3 + $0x50] sm:$0xfc]
    %v5236 = vld [vmem:[#allocation3 + $0x58] sm:$0xfc]
    %v5237 = vld [vmem:[#allocation3 + $0x60] sm:$0xff]
    %v5238 = vld [vmem:[#allocation3 + $0x68] sm:$0xff]
    %v5239 = vld [vmem:[#allocation3 + $0x70] sm:$0xff]
    %v5240 = vld [vmem:[#allocation3 + $0x78] sm:$0xff]
    %v5241 = vld [vmem:[#allocation3 + $0x80] sm:$0xff]
    %v5242 = vld [vmem:[#allocation3 + $0x88] sm:$0xff]
    %v5243 = vld [vmem:[#allocation3 + $0x90] sm:$0x3]
    %v5244 = vld [vmem:[#allocation3 + $0x98] sm:$0x3]
    %v5245 = vld [vmem:[#allocation3 + $0xa0] sm:$0x3]
    %v5246 = vld [vmem:[#allocation3 + $0xa8] sm:$0x3]
    %v5247 = vld [vmem:[#allocation3 + $0xb0] sm:$0x3]
    %v5248 = vld [vmem:[#allocation3 + $0xb8] sm:$0x3]
    %s5249 = scalar_lea.vmem [#allocation9], 11520
    %v5250 = vld [vmem:[%s5249] sm:$0xff]
    %v5251 = vld [vmem:[%s5249 + $0x8] sm:$0xff]
    %v5252 = vld [vmem:[%s5249 + $0x10] sm:$0xff]
    %v5253 = vld [vmem:[%s5249 + $0x18] sm:$0xff]
    %v5254 = vld [vmem:[%s5249 + $0x20] sm:$0xff]
    %v5255 = vld [vmem:[%s5249 + $0x28] sm:$0xff]
    %v5256 = vld [vmem:[%s5249 + $0x30] sm:$0xff]
    %v5257 = vld [vmem:[%s5249 + $0x38] sm:$0xff]
    %v5258 = vld [vmem:[%s5249 + $0x40] sm:$0xff]
    %v5259 = vld [vmem:[%s5249 + $0x48] sm:$0xff]
    %v5260 = vld [vmem:[%s5249 + $0x50] sm:$0xff]
    %v5261 = vld [vmem:[%s5249 + $0x58] sm:$0xff]
    %v5262 = vld [vmem:[%s5249 + $0x60] sm:$0xff]
    %v5263 = vld [vmem:[%s5249 + $0x68] sm:$0xff]
    %v5264 = vld [vmem:[%s5249 + $0x70] sm:$0xff]
    %v5265 = vld [vmem:[%s5249 + $0x78] sm:$0xff]
    %v5266 = vld [vmem:[%s5249 + $0x80] sm:$0xff]
    %v5267 = vld [vmem:[%s5249 + $0x88] sm:$0xff]
    %v5268 = vld [vmem:[%s5249 + $0x90] sm:$0xff]
    %v5269 = vld [vmem:[%s5249 + $0x98] sm:$0xff]
    %v5270 = vld [vmem:[%s5249 + $0xa0] sm:$0xff]
    %v5271 = vld [vmem:[%s5249 + $0xa8] sm:$0xff]
    %v5272 = vld [vmem:[%s5249 + $0xb0] sm:$0xff]
    %v5273 = vld [vmem:[%s5249 + $0xb8] sm:$0xff]
    %v5274 = vld [vmem:[%s5249 + $0xc0] sm:$0xff]
    %v5275 = vld [vmem:[%s5249 + $0xc8] sm:$0xff]
    %v5276 = vld [vmem:[%s5249 + $0xd0] sm:$0xff]
    %v5277 = vld [vmem:[%s5249 + $0xd8] sm:$0xff]
    %v5278 = vld [vmem:[%s5249 + $0xe0] sm:$0xff]
    %v5279 = vld [vmem:[%s5249 + $0xe8] sm:$0xff]
    %v5280 = vld [vmem:[%s5249 + $0xf0] sm:$0xff]
    %v5281 = vld [vmem:[%s5249 + $0xf8] sm:$0xff]
    %v5282 = vld [vmem:[%s5249 + $0x100] sm:$0xff]
    %v5283 = vld [vmem:[%s5249 + $0x108] sm:$0xff]
    %v5284 = vld [vmem:[%s5249 + $0x110] sm:$0xff]
    %v5285 = vld [vmem:[%s5249 + $0x118] sm:$0xff]
    %v5286 = vld [vmem:[%s5249 + $0x120] sm:$0xff]
    %v5287 = vld [vmem:[%s5249 + $0x128] sm:$0xff]
    %v5288 = vld [vmem:[%s5249 + $0x130] sm:$0xff]
    %v5289 = vld [vmem:[%s5249 + $0x138] sm:$0xff]
    %v5290 = vld [vmem:[%s5249 + $0x140] sm:$0xff]
    %v5291 = vld [vmem:[%s5249 + $0x148] sm:$0xff]
    %v5292 = vld [vmem:[%s5249 + $0x150] sm:$0xff]
    %v5293 = vld [vmem:[%s5249 + $0x158] sm:$0xff]
    %v5294 = vld [vmem:[%s5249 + $0x160] sm:$0xff]
    %v5295 = vld [vmem:[%s5249 + $0x168] sm:$0xff]
    %v5296 = vld [vmem:[%s5249 + $0x170] sm:$0xff]
    %v5297 = vld [vmem:[%s5249 + $0x178] sm:$0xff]
    %v5298 = vld [vmem:[%s5249 + $0x180] sm:$0xff]
    %v5299 = vld [vmem:[%s5249 + $0x188] sm:$0xff]
    %v5300 = vld [vmem:[%s5249 + $0x190] sm:$0xff]
    %v5301 = vld [vmem:[%s5249 + $0x198] sm:$0xff]
    %v5302 = vld [vmem:[%s5249 + $0x1a0] sm:$0xff]
    %v5303 = vld [vmem:[%s5249 + $0x1a8] sm:$0xff]
    %v5304 = vld [vmem:[%s5249 + $0x1b0] sm:$0xff]
    %v5305 = vld [vmem:[%s5249 + $0x1b8] sm:$0xff]
    %v5306 = vld [vmem:[%s5249 + $0x1c0] sm:$0xff]
    %v5307 = vld [vmem:[%s5249 + $0x1c8] sm:$0xff]
    %v5308 = vld [vmem:[%s5249 + $0x1d0] sm:$0xff]
    %v5309 = vld [vmem:[%s5249 + $0x1d8] sm:$0xff]
    %v5310 = vld [vmem:[%s5249 + $0x1e0] sm:$0xff]
    %v5311 = vld [vmem:[%s5249 + $0x1e8] sm:$0xff]
    %v5312 = vld [vmem:[%s5249 + $0x1f0] sm:$0xff]
    %v5313 = vld [vmem:[%s5249 + $0x1f8] sm:$0xff]
    %v5314 = vld [vmem:[%s5249 + $0x200] sm:$0xff]
    %v5315 = vld [vmem:[%s5249 + $0x208] sm:$0xff]
    %v5316 = vld [vmem:[%s5249 + $0x210] sm:$0xff]
    %v5317 = vld [vmem:[%s5249 + $0x218] sm:$0xff]
    %v5318 = vld [vmem:[%s5249 + $0x220] sm:$0xff]
    %v5319 = vld [vmem:[%s5249 + $0x228] sm:$0xff]
    %v5320 = vld [vmem:[%s5249 + $0x230] sm:$0xff]
    %v5321 = vld [vmem:[%s5249 + $0x238] sm:$0xff]
    %v5322 = vld [vmem:[%s5249 + $0x240] sm:$0xff]
    %v5323 = vld [vmem:[%s5249 + $0x248] sm:$0xff]
    %v5324 = vld [vmem:[%s5249 + $0x250] sm:$0xff]
    %v5325 = vld [vmem:[%s5249 + $0x258] sm:$0xff]
    %v5326 = vld [vmem:[%s5249 + $0x260] sm:$0xff]
    %v5327 = vld [vmem:[%s5249 + $0x268] sm:$0xff]
    %v5328 = vld [vmem:[%s5249 + $0x270] sm:$0xff]
    %v5329 = vld [vmem:[%s5249 + $0x278] sm:$0xff]
    %v5330 = vld [vmem:[%s5249 + $0x280] sm:$0xff]
    %v5331 = vld [vmem:[%s5249 + $0x288] sm:$0xff]
    %v5332 = vld [vmem:[%s5249 + $0x290] sm:$0xff]
    %v5333 = vld [vmem:[%s5249 + $0x298] sm:$0xff]
    %v5334 = vld [vmem:[%s5249 + $0x2a0] sm:$0xff]
    %v5335 = vld [vmem:[%s5249 + $0x2a8] sm:$0xff]
    %v5336 = vld [vmem:[%s5249 + $0x2b0] sm:$0xff]
    %v5337 = vld [vmem:[%s5249 + $0x2b8] sm:$0xff]
    %v5338 = vld [vmem:[%s5249 + $0x2c0] sm:$0xff]
    %v5339 = vld [vmem:[%s5249 + $0x2c8] sm:$0xff]
    %v5340 = vld [vmem:[%s5249 + $0x2d0] sm:$0xff]
    %v5341 = vld [vmem:[%s5249 + $0x2d8] sm:$0xff]
    %v5342 = vld [vmem:[%s5249 + $0x2e0] sm:$0xff]
    %v5343 = vld [vmem:[%s5249 + $0x2e8] sm:$0xff]
    %v5344 = vld [vmem:[%s5249 + $0x2f0] sm:$0xff]
    %v5345 = vld [vmem:[%s5249 + $0x2f8] sm:$0xff]
    %v5346 = vld [vmem:[%s5249 + $0x300] sm:$0xff]
    %v5347 = vld [vmem:[%s5249 + $0x308] sm:$0xff]
    %v5348 = vld [vmem:[%s5249 + $0x310] sm:$0xff]
    %v5349 = vld [vmem:[%s5249 + $0x318] sm:$0xff]
    %v5350 = vld [vmem:[%s5249 + $0x320] sm:$0xff]
    %v5351 = vld [vmem:[%s5249 + $0x328] sm:$0xff]
    %v5352 = vld [vmem:[%s5249 + $0x330] sm:$0xff]
    %v5353 = vld [vmem:[%s5249 + $0x338] sm:$0xff]
    %v5354 = vld [vmem:[%s5249 + $0x340] sm:$0xff]
    %v5355 = vld [vmem:[%s5249 + $0x348] sm:$0xff]
    %v5356 = vld [vmem:[%s5249 + $0x350] sm:$0xff]
    %v5357 = vld [vmem:[%s5249 + $0x358] sm:$0xff]
    %v5358 = vld [vmem:[%s5249 + $0x360] sm:$0xff]
    %v5359 = vld [vmem:[%s5249 + $0x368] sm:$0xff]
    %v5360 = vld [vmem:[%s5249 + $0x370] sm:$0xff]
    %v5361 = vld [vmem:[%s5249 + $0x378] sm:$0xff]
    %v5362 = vld [vmem:[%s5249 + $0x380] sm:$0xff]
    %v5363 = vld [vmem:[%s5249 + $0x388] sm:$0xff]
    %v5364 = vld [vmem:[%s5249 + $0x390] sm:$0xff]
    %v5365 = vld [vmem:[%s5249 + $0x398] sm:$0xff]
    %v5366 = vld [vmem:[%s5249 + $0x3a0] sm:$0xff]
    %v5367 = vld [vmem:[%s5249 + $0x3a8] sm:$0xff]
    %v5368 = vld [vmem:[%s5249 + $0x3b0] sm:$0xff]
    %v5369 = vld [vmem:[%s5249 + $0x3b8] sm:$0xff]
    %v5370 = vld [vmem:[%s5249 + $0x3c0] sm:$0xff]
    %v5371 = vld [vmem:[%s5249 + $0x3c8] sm:$0xff]
    %v5372 = vld [vmem:[%s5249 + $0x3d0] sm:$0xff]
    %v5373 = vld [vmem:[%s5249 + $0x3d8] sm:$0xff]
    %v5374 = vld [vmem:[%s5249 + $0x3e0] sm:$0xff]
    %v5375 = vld [vmem:[%s5249 + $0x3e8] sm:$0xff]
    %v5376 = vld [vmem:[%s5249 + $0x3f0] sm:$0xff]
    %v5377 = vld [vmem:[%s5249 + $0x3f8] sm:$0xff]
    %v5378 = vld [vmem:[%s5249 + $0x400] sm:$0xff]
    %v5379 = vld [vmem:[%s5249 + $0x408] sm:$0xff]
    %v5380 = vld [vmem:[%s5249 + $0x410] sm:$0xff]
    %v5381 = vld [vmem:[%s5249 + $0x418] sm:$0xff]
    %v5382 = vld [vmem:[%s5249 + $0x420] sm:$0xff]
    %v5383 = vld [vmem:[%s5249 + $0x428] sm:$0xff]
    %v5384 = vld [vmem:[%s5249 + $0x430] sm:$0xff]
    %v5385 = vld [vmem:[%s5249 + $0x438] sm:$0xff]
    %v5386 = vld [vmem:[%s5249 + $0x440] sm:$0xff]
    %v5387 = vld [vmem:[%s5249 + $0x448] sm:$0xff]
    %v5388 = vld [vmem:[%s5249 + $0x450] sm:$0xff]
    %v5389 = vld [vmem:[%s5249 + $0x458] sm:$0xff]
    %v5390 = vld [vmem:[%s5249 + $0x460] sm:$0xff]
    %v5391 = vld [vmem:[%s5249 + $0x468] sm:$0xff]
    %v5392 = vld [vmem:[%s5249 + $0x470] sm:$0xff]
    %v5393 = vld [vmem:[%s5249 + $0x478] sm:$0xff]
    %v5394 = vld [vmem:[%s5249 + $0x480] sm:$0xff]
    %v5395 = vld [vmem:[%s5249 + $0x488] sm:$0xff]
    %v5396 = vld [vmem:[%s5249 + $0x490] sm:$0xff]
    %v5397 = vld [vmem:[%s5249 + $0x498] sm:$0xff]
    %v5398 = vld [vmem:[%s5249 + $0x4a0] sm:$0xff]
    %v5399 = vld [vmem:[%s5249 + $0x4a8] sm:$0xff]
    %v5400 = vld [vmem:[%s5249 + $0x4b0] sm:$0xff]
    %v5401 = vld [vmem:[%s5249 + $0x4b8] sm:$0xff]
    %v5402 = vld [vmem:[%s5249 + $0x4c0] sm:$0xff]
    %v5403 = vld [vmem:[%s5249 + $0x4c8] sm:$0xff]
    %v5404 = vld [vmem:[%s5249 + $0x4d0] sm:$0xff]
    %v5405 = vld [vmem:[%s5249 + $0x4d8] sm:$0xff]
    %v5406 = vld [vmem:[%s5249 + $0x4e0] sm:$0xff]
    %v5407 = vld [vmem:[%s5249 + $0x4e8] sm:$0xff]
    %v5408 = vld [vmem:[%s5249 + $0x4f0] sm:$0xff]
    %v5409 = vld [vmem:[%s5249 + $0x4f8] sm:$0xff]
    %v5410 = vld [vmem:[%s5249 + $0x500] sm:$0xff]
    %v5411 = vld [vmem:[%s5249 + $0x508] sm:$0xff]
    %v5412 = vld [vmem:[%s5249 + $0x510] sm:$0xff]
    %v5413 = vld [vmem:[%s5249 + $0x518] sm:$0xff]
    %v5414 = vld [vmem:[%s5249 + $0x520] sm:$0xff]
    %v5415 = vld [vmem:[%s5249 + $0x528] sm:$0xff]
    %v5416 = vld [vmem:[%s5249 + $0x530] sm:$0xff]
    %v5417 = vld [vmem:[%s5249 + $0x538] sm:$0xff]
    %v5418 = vld [vmem:[%s5249 + $0x540] sm:$0xff]
    %v5419 = vld [vmem:[%s5249 + $0x548] sm:$0xff]
    %v5420 = vld [vmem:[%s5249 + $0x550] sm:$0xff]
    %v5421 = vld [vmem:[%s5249 + $0x558] sm:$0xff]
    %v5422 = vld [vmem:[%s5249 + $0x560] sm:$0xff]
    %v5423 = vld [vmem:[%s5249 + $0x568] sm:$0xff]
    %v5424 = vld [vmem:[%s5249 + $0x570] sm:$0xff]
    %v5425 = vld [vmem:[%s5249 + $0x578] sm:$0xff]
    %v5426 = vld [vmem:[%s5249 + $0x580] sm:$0xff]
    %v5427 = vld [vmem:[%s5249 + $0x588] sm:$0xff]
    %v5428 = vld [vmem:[%s5249 + $0x590] sm:$0xff]
    %v5429 = vld [vmem:[%s5249 + $0x598] sm:$0xff]
    %v5430 = vld [vmem:[%s5249 + $0x5a0] sm:$0xff]
    %v5431 = vld [vmem:[%s5249 + $0x5a8] sm:$0xff]
    %v5432 = vld [vmem:[%s5249 + $0x5b0] sm:$0xff]
    %v5433 = vld [vmem:[%s5249 + $0x5b8] sm:$0xff]
    %v5434 = vld [vmem:[%s5249 + $0x5c0] sm:$0xff]
    %v5435 = vld [vmem:[%s5249 + $0x5c8] sm:$0xff]
    %v5436 = vld [vmem:[%s5249 + $0x5d0] sm:$0xff]
    %v5437 = vld [vmem:[%s5249 + $0x5d8] sm:$0xff]
    %v5438 = vld [vmem:[%s5249 + $0x5e0] sm:$0xff]
    %v5439 = vld [vmem:[%s5249 + $0x5e8] sm:$0xff]
    %v5440 = vld [vmem:[%s5249 + $0x5f0] sm:$0xff]
    %v5441 = vld [vmem:[%s5249 + $0x5f8] sm:$0xff]
    %v5442 = vld [vmem:[%s5249 + $0x600] sm:$0xff]
    %v5443 = vld [vmem:[%s5249 + $0x608] sm:$0xff]
    %v5444 = vld [vmem:[%s5249 + $0x610] sm:$0xff]
    %v5445 = vld [vmem:[%s5249 + $0x618] sm:$0xff]
    %v5446 = vld [vmem:[%s5249 + $0x620] sm:$0xff]
    %v5447 = vld [vmem:[%s5249 + $0x628] sm:$0xff]
    %v5448 = vld [vmem:[%s5249 + $0x630] sm:$0xff]
    %v5449 = vld [vmem:[%s5249 + $0x638] sm:$0xff]
    %v5450 = vld [vmem:[%s5249 + $0x640] sm:$0xff]
    %v5451 = vld [vmem:[%s5249 + $0x648] sm:$0xff]
    %v5452 = vld [vmem:[%s5249 + $0x650] sm:$0xff]
    %v5453 = vld [vmem:[%s5249 + $0x658] sm:$0xff]
    %v5454 = vld [vmem:[%s5249 + $0x660] sm:$0xff]
    %v5455 = vld [vmem:[%s5249 + $0x668] sm:$0xff]
    %v5456 = vld [vmem:[%s5249 + $0x670] sm:$0xff]
    %v5457 = vld [vmem:[%s5249 + $0x678] sm:$0xff]
    %v5458 = vld [vmem:[%s5249 + $0x680] sm:$0xff]
    %v5459 = vld [vmem:[%s5249 + $0x688] sm:$0xff]
    %v5460 = vld [vmem:[%s5249 + $0x690] sm:$0xff]
    %v5461 = vld [vmem:[%s5249 + $0x698] sm:$0xff]
    %v5462 = vld [vmem:[%s5249 + $0x6a0] sm:$0xff]
    %v5463 = vld [vmem:[%s5249 + $0x6a8] sm:$0xff]
    %v5464 = vld [vmem:[%s5249 + $0x6b0] sm:$0xff]
    %v5465 = vld [vmem:[%s5249 + $0x6b8] sm:$0xff]
    %v5466 = vld [vmem:[%s5249 + $0x6c0] sm:$0xff]
    %v5467 = vld [vmem:[%s5249 + $0x6c8] sm:$0xff]
    %v5468 = vld [vmem:[%s5249 + $0x6d0] sm:$0xff]
    %v5469 = vld [vmem:[%s5249 + $0x6d8] sm:$0xff]
    %v5470 = vld [vmem:[%s5249 + $0x6e0] sm:$0xff]
    %v5471 = vld [vmem:[%s5249 + $0x6e8] sm:$0xff]
    %v5472 = vld [vmem:[%s5249 + $0x6f0] sm:$0xff]
    %v5473 = vld [vmem:[%s5249 + $0x6f8] sm:$0xff]
    %v5474 = vld [vmem:[%s5249 + $0x700] sm:$0xff]
    %v5475 = vld [vmem:[%s5249 + $0x708] sm:$0xff]
    %v5476 = vld [vmem:[%s5249 + $0x710] sm:$0xff]
    %v5477 = vld [vmem:[%s5249 + $0x718] sm:$0xff]
    %v5478 = vld [vmem:[%s5249 + $0x720] sm:$0xff]
    %v5479 = vld [vmem:[%s5249 + $0x728] sm:$0xff]
    %v5480 = vld [vmem:[%s5249 + $0x730] sm:$0xff]
    %v5481 = vld [vmem:[%s5249 + $0x738] sm:$0xff]
    %v5482 = vld [vmem:[%s5249 + $0x740] sm:$0xff]
    %v5483 = vld [vmem:[%s5249 + $0x748] sm:$0xff]
    %v5484 = vld [vmem:[%s5249 + $0x750] sm:$0xff]
    %v5485 = vld [vmem:[%s5249 + $0x758] sm:$0xff]
    %v5486 = vld [vmem:[%s5249 + $0x760] sm:$0xff]
    %v5487 = vld [vmem:[%s5249 + $0x768] sm:$0xff]
    %v5488 = vld [vmem:[%s5249 + $0x770] sm:$0xff]
    %v5489 = vld [vmem:[%s5249 + $0x778] sm:$0xff]
    %v5490 = vld [vmem:[%s5249 + $0x780] sm:$0xff]
    %v5491 = vld [vmem:[%s5249 + $0x788] sm:$0xff]
    %v5492 = vld [vmem:[%s5249 + $0x790] sm:$0xff]
    %v5493 = vld [vmem:[%s5249 + $0x798] sm:$0xff]
    %v5494 = vld [vmem:[%s5249 + $0x7a0] sm:$0xff]
    %v5495 = vld [vmem:[%s5249 + $0x7a8] sm:$0xff]
    %v5496 = vld [vmem:[%s5249 + $0x7b0] sm:$0xff]
    %v5497 = vld [vmem:[%s5249 + $0x7b8] sm:$0xff]
    %v5498 = vld [vmem:[%s5249 + $0x7c0] sm:$0xff]
    %v5499 = vld [vmem:[%s5249 + $0x7c8] sm:$0xff]
    %v5500 = vld [vmem:[%s5249 + $0x7d0] sm:$0xff]
    %v5501 = vld [vmem:[%s5249 + $0x7d8] sm:$0xff]
    %v5502 = vld [vmem:[%s5249 + $0x7e0] sm:$0xff]
    %v5503 = vld [vmem:[%s5249 + $0x7e8] sm:$0xff]
    %v5504 = vld [vmem:[%s5249 + $0x7f0] sm:$0xff]
    %v5505 = vld [vmem:[%s5249 + $0x7f8] sm:$0xff]
    %v5506 = vld [vmem:[%s5249 + $0x800] sm:$0xff]
    %v5507 = vld [vmem:[%s5249 + $0x808] sm:$0xff]
    %v5508 = vld [vmem:[%s5249 + $0x810] sm:$0xff]
    %v5509 = vld [vmem:[%s5249 + $0x818] sm:$0xff]
    %v5510 = vld [vmem:[%s5249 + $0x820] sm:$0xff]
    %v5511 = vld [vmem:[%s5249 + $0x828] sm:$0xff]
    %v5512 = vld [vmem:[%s5249 + $0x830] sm:$0xff]
    %v5513 = vld [vmem:[%s5249 + $0x838] sm:$0xff]
    %v5514 = vld [vmem:[%s5249 + $0x840] sm:$0xff]
    %v5515 = vld [vmem:[%s5249 + $0x848] sm:$0xff]
    %v5516 = vld [vmem:[%s5249 + $0x850] sm:$0xff]
    %v5517 = vld [vmem:[%s5249 + $0x858] sm:$0xff]
    %v5518 = vld [vmem:[%s5249 + $0x860] sm:$0xff]
    %v5519 = vld [vmem:[%s5249 + $0x868] sm:$0xff]
    %v5520 = vld [vmem:[%s5249 + $0x870] sm:$0xff]
    %v5521 = vld [vmem:[%s5249 + $0x878] sm:$0xff]
    %v5522 = vld [vmem:[%s5249 + $0x880] sm:$0xff]
    %v5523 = vld [vmem:[%s5249 + $0x888] sm:$0xff]
    %v5524 = vld [vmem:[%s5249 + $0x890] sm:$0xff]
    %v5525 = vld [vmem:[%s5249 + $0x898] sm:$0xff]
    %v5526 = vld [vmem:[%s5249 + $0x8a0] sm:$0xff]
    %v5527 = vld [vmem:[%s5249 + $0x8a8] sm:$0xff]
    %v5528 = vld [vmem:[%s5249 + $0x8b0] sm:$0xff]
    %v5529 = vld [vmem:[%s5249 + $0x8b8] sm:$0xff]
    %v5530 = vld [vmem:[%s5249 + $0x8c0] sm:$0xff]
    %v5531 = vld [vmem:[%s5249 + $0x8c8] sm:$0xff]
    %v5532 = vld [vmem:[%s5249 + $0x8d0] sm:$0xff]
    %v5533 = vld [vmem:[%s5249 + $0x8d8] sm:$0xff]
    %v5534 = vld [vmem:[%s5249 + $0x8e0] sm:$0xff]
    %v5535 = vld [vmem:[%s5249 + $0x8e8] sm:$0xff]
    %v5536 = vld [vmem:[%s5249 + $0x8f0] sm:$0xff]
    %v5537 = vld [vmem:[%s5249 + $0x8f8] sm:$0xff]
    %v5556 = vrot.slane %v5231, 2
    %v5557 = vrot.slane %v5237, 2
    %v5558 = vsel %vm1420, %v5556, %v5557
    %v5559 = vrot.slane %v5232, 2
    %v5560 = vrot.slane %v5238, 2
    %v5561 = vsel %vm1420, %v5559, %v5560
    %v5562 = vrot.slane %v5233, 2
    %v5563 = vrot.slane %v5239, 2
    %v5564 = vsel %vm1420, %v5562, %v5563
    %v5565 = vrot.slane %v5234, 2
    %v5566 = vrot.slane %v5240, 2
    %v5567 = vsel %vm1420, %v5565, %v5566
    %v5568 = vrot.slane %v5235, 2
    %v5569 = vrot.slane %v5241, 2
    %v5570 = vsel %vm1420, %v5568, %v5569
    %v5571 = vrot.slane %v5236, 2
    %v5572 = vrot.slane %v5242, 2
    %v5573 = vsel %vm1420, %v5571, %v5572
    %v5574 = vrot.slane %v5243, 2
    %v5575 = vsel %vm1420, %v5557, %v5574
    %v5576 = vrot.slane %v5244, 2
    %v5577 = vsel %vm1420, %v5560, %v5576
    %v5578 = vrot.slane %v5245, 2
    %v5579 = vsel %vm1420, %v5563, %v5578
    %v5580 = vrot.slane %v5246, 2
    %v5581 = vsel %vm1420, %v5566, %v5580
    %v5582 = vrot.slane %v5247, 2
    %v5583 = vsel %vm1420, %v5569, %v5582
    %v5584 = vrot.slane %v5248, 2
    %v5585 = vsel %vm1420, %v5572, %v5584
    %5598 = vmatpush.msra.mxu0 %v5295
    %5599 = vmatpush.msra.mxu0 %v5292
    %5600 = vmatpush.msra.mxu0 %v5289
    %5601 = vmatpush.msra.mxu0 %v5286
    %5602 = vmatpush.msra.mxu0 %v5283
    %5603 = vmatpush.msra.mxu0 %v5280
    %5604 = vmatpush.msra.mxu0 %v5277
    %5605 = vmatpush.msra.mxu0 %v5274
    %5606 = vmatpush.msra.mxu0 %v5271
    %5607 = vmatpush.msra.mxu0 %v5268
    %5608 = vmatpush.msra.mxu0 %v5265
    %5609 = vmatpush.msra.mxu0 %v5262
    %5610 = vmatpush.msra.mxu0 %v5259
    %5611 = vmatpush.msra.mxu0 %v5256
    %5612 = vmatpush.msra.mxu0 %v5253
    %5613 = vmatpush.msra.mxu0 %v5250
    %5614 = vmatmul.f32.gmra.mxu0 %v5558
    %v5615 = vpop.f32.mrf.mxu0
    %v5616 = vadd.f32 0.0, %v5615
    %5617 = vmatmul.f32.gmra.mxu0 %v5575
    %v5618 = vpop.f32.mrf.mxu0
    %v5619 = vadd.f32 0.0, %v5618
    %5620 = vdwg.mxu0
    %5621 = vmatpush.msra.mxu0 %v5343
    %5622 = vmatpush.msra.mxu0 %v5340
    %5623 = vmatpush.msra.mxu0 %v5337
    %5624 = vmatpush.msra.mxu0 %v5334
    %5625 = vmatpush.msra.mxu0 %v5331
    %5626 = vmatpush.msra.mxu0 %v5328
    %5627 = vmatpush.msra.mxu0 %v5325
    %5628 = vmatpush.msra.mxu0 %v5322
    %5629 = vmatpush.msra.mxu0 %v5319
    %5630 = vmatpush.msra.mxu0 %v5316
    %5631 = vmatpush.msra.mxu0 %v5313
    %5632 = vmatpush.msra.mxu0 %v5310
    %5633 = vmatpush.msra.mxu0 %v5307
    %5634 = vmatpush.msra.mxu0 %v5304
    %5635 = vmatpush.msra.mxu0 %v5301
    %5636 = vmatpush.msra.mxu0 %v5298
    %5637 = vmatmul.f32.gmra.mxu0 %v5561
    %v5638 = vpop.f32.mrf.mxu0
    %v5639 = vadd.f32 %v5616, %v5638
    %5640 = vmatmul.f32.gmra.mxu0 %v5577
    %v5641 = vpop.f32.mrf.mxu0
    %v5642 = vadd.f32 %v5619, %v5641
    %5643 = vdwg.mxu0
    %5644 = vmatpush.msra.mxu0 %v5391
    %5645 = vmatpush.msra.mxu0 %v5388
    %5646 = vmatpush.msra.mxu0 %v5385
    %5647 = vmatpush.msra.mxu0 %v5382
    %5648 = vmatpush.msra.mxu0 %v5379
    %5649 = vmatpush.msra.mxu0 %v5376
    %5650 = vmatpush.msra.mxu0 %v5373
    %5651 = vmatpush.msra.mxu0 %v5370
    %5652 = vmatpush.msra.mxu0 %v5367
    %5653 = vmatpush.msra.mxu0 %v5364
    %5654 = vmatpush.msra.mxu0 %v5361
    %5655 = vmatpush.msra.mxu0 %v5358
    %5656 = vmatpush.msra.mxu0 %v5355
    %5657 = vmatpush.msra.mxu0 %v5352
    %5658 = vmatpush.msra.mxu0 %v5349
    %5659 = vmatpush.msra.mxu0 %v5346
    %5660 = vmatmul.f32.gmra.mxu0 %v5564
    %v5661 = vpop.f32.mrf.mxu0
    %v5662 = vadd.f32 %v5639, %v5661
    %5663 = vmatmul.f32.gmra.mxu0 %v5579
    %v5664 = vpop.f32.mrf.mxu0
    %v5665 = vadd.f32 %v5642, %v5664
    %5666 = vdwg.mxu0
    %5667 = vmatpush.msra.mxu0 %v5439
    %5668 = vmatpush.msra.mxu0 %v5436
    %5669 = vmatpush.msra.mxu0 %v5433
    %5670 = vmatpush.msra.mxu0 %v5430
    %5671 = vmatpush.msra.mxu0 %v5427
    %5672 = vmatpush.msra.mxu0 %v5424
    %5673 = vmatpush.msra.mxu0 %v5421
    %5674 = vmatpush.msra.mxu0 %v5418
    %5675 = vmatpush.msra.mxu0 %v5415
    %5676 = vmatpush.msra.mxu0 %v5412
    %5677 = vmatpush.msra.mxu0 %v5409
    %5678 = vmatpush.msra.mxu0 %v5406
    %5679 = vmatpush.msra.mxu0 %v5403
    %5680 = vmatpush.msra.mxu0 %v5400
    %5681 = vmatpush.msra.mxu0 %v5397
    %5682 = vmatpush.msra.mxu0 %v5394
    %5683 = vmatmul.f32.gmra.mxu0 %v5567
    %v5684 = vpop.f32.mrf.mxu0
    %v5685 = vadd.f32 %v5662, %v5684
    %5686 = vmatmul.f32.gmra.mxu0 %v5581
    %v5687 = vpop.f32.mrf.mxu0
    %v5688 = vadd.f32 %v5665, %v5687
    %5689 = vdwg.mxu0
    %5690 = vmatpush.msra.mxu0 %v5487
    %5691 = vmatpush.msra.mxu0 %v5484
    %5692 = vmatpush.msra.mxu0 %v5481
    %5693 = vmatpush.msra.mxu0 %v5478
    %5694 = vmatpush.msra.mxu0 %v5475
    %5695 = vmatpush.msra.mxu0 %v5472
    %5696 = vmatpush.msra.mxu0 %v5469
    %5697 = vmatpush.msra.mxu0 %v5466
    %5698 = vmatpush.msra.mxu0 %v5463
    %5699 = vmatpush.msra.mxu0 %v5460
    %5700 = vmatpush.msra.mxu0 %v5457
    %5701 = vmatpush.msra.mxu0 %v5454
    %5702 = vmatpush.msra.mxu0 %v5451
    %5703 = vmatpush.msra.mxu0 %v5448
    %5704 = vmatpush.msra.mxu0 %v5445
    %5705 = vmatpush.msra.mxu0 %v5442
    %5706 = vmatmul.f32.gmra.mxu0 %v5570
    %v5707 = vpop.f32.mrf.mxu0
    %v5708 = vadd.f32 %v5685, %v5707
    %5709 = vmatmul.f32.gmra.mxu0 %v5583
    %v5710 = vpop.f32.mrf.mxu0
    %v5711 = vadd.f32 %v5688, %v5710
    %5712 = vdwg.mxu0
    %5713 = vmatpush.msra.mxu0 %v5535
    %5714 = vmatpush.msra.mxu0 %v5532
    %5715 = vmatpush.msra.mxu0 %v5529
    %5716 = vmatpush.msra.mxu0 %v5526
    %5717 = vmatpush.msra.mxu0 %v5523
    %5718 = vmatpush.msra.mxu0 %v5520
    %5719 = vmatpush.msra.mxu0 %v5517
    %5720 = vmatpush.msra.mxu0 %v5514
    %5721 = vmatpush.msra.mxu0 %v5511
    %5722 = vmatpush.msra.mxu0 %v5508
    %5723 = vmatpush.msra.mxu0 %v5505
    %5724 = vmatpush.msra.mxu0 %v5502
    %5725 = vmatpush.msra.mxu0 %v5499
    %5726 = vmatpush.msra.mxu0 %v5496
    %5727 = vmatpush.msra.mxu0 %v5493
    %5728 = vmatpush.msra.mxu0 %v5490
    %5729 = vmatmul.f32.gmra.mxu0 %v5573
    %v5730 = vpop.f32.mrf.mxu0
    %v5731 = vadd.f32 %v5708, %v5730
    %5732 = vmatmul.f32.gmra.mxu0 %v5585
    %v5733 = vpop.f32.mrf.mxu0
    %v5734 = vadd.f32 %v5711, %v5733
    %5735 = vdwg.mxu0
    %5736 = vmatpush.msra.mxu0 %v5296
    %5737 = vmatpush.msra.mxu0 %v5293
    %5738 = vmatpush.msra.mxu0 %v5290
    %5739 = vmatpush.msra.mxu0 %v5287
    %5740 = vmatpush.msra.mxu0 %v5284
    %5741 = vmatpush.msra.mxu0 %v5281
    %5742 = vmatpush.msra.mxu0 %v5278
    %5743 = vmatpush.msra.mxu0 %v5275
    %5744 = vmatpush.msra.mxu0 %v5272
    %5745 = vmatpush.msra.mxu0 %v5269
    %5746 = vmatpush.msra.mxu0 %v5266
    %5747 = vmatpush.msra.mxu0 %v5263
    %5748 = vmatpush.msra.mxu0 %v5260
    %5749 = vmatpush.msra.mxu0 %v5257
    %5750 = vmatpush.msra.mxu0 %v5254
    %5751 = vmatpush.msra.mxu0 %v5251
    %5752 = vmatmul.f32.gmra.mxu0 %v5558
    %v5753 = vpop.f32.mrf.mxu0
    %v5754 = vadd.f32 0.0, %v5753
    %5755 = vmatmul.f32.gmra.mxu0 %v5575
    %v5756 = vpop.f32.mrf.mxu0
    %v5757 = vadd.f32 0.0, %v5756
    %5758 = vdwg.mxu0
    %5759 = vmatpush.msra.mxu0 %v5344
    %5760 = vmatpush.msra.mxu0 %v5341
    %5761 = vmatpush.msra.mxu0 %v5338
    %5762 = vmatpush.msra.mxu0 %v5335
    %5763 = vmatpush.msra.mxu0 %v5332
    %5764 = vmatpush.msra.mxu0 %v5329
    %5765 = vmatpush.msra.mxu0 %v5326
    %5766 = vmatpush.msra.mxu0 %v5323
    %5767 = vmatpush.msra.mxu0 %v5320
    %5768 = vmatpush.msra.mxu0 %v5317
    %5769 = vmatpush.msra.mxu0 %v5314
    %5770 = vmatpush.msra.mxu0 %v5311
    %5771 = vmatpush.msra.mxu0 %v5308
    %5772 = vmatpush.msra.mxu0 %v5305
    %5773 = vmatpush.msra.mxu0 %v5302
    %5774 = vmatpush.msra.mxu0 %v5299
    %5775 = vmatmul.f32.gmra.mxu0 %v5561
    %v5776 = vpop.f32.mrf.mxu0
    %v5777 = vadd.f32 %v5754, %v5776
    %5778 = vmatmul.f32.gmra.mxu0 %v5577
    %v5779 = vpop.f32.mrf.mxu0
    %v5780 = vadd.f32 %v5757, %v5779
    %5781 = vdwg.mxu0
    %5782 = vmatpush.msra.mxu0 %v5392
    %5783 = vmatpush.msra.mxu0 %v5389
    %5784 = vmatpush.msra.mxu0 %v5386
    %5785 = vmatpush.msra.mxu0 %v5383
    %5786 = vmatpush.msra.mxu0 %v5380
    %5787 = vmatpush.msra.mxu0 %v5377
    %5788 = vmatpush.msra.mxu0 %v5374
    %5789 = vmatpush.msra.mxu0 %v5371
    %5790 = vmatpush.msra.mxu0 %v5368
    %5791 = vmatpush.msra.mxu0 %v5365
    %5792 = vmatpush.msra.mxu0 %v5362
    %5793 = vmatpush.msra.mxu0 %v5359
    %5794 = vmatpush.msra.mxu0 %v5356
    %5795 = vmatpush.msra.mxu0 %v5353
    %5796 = vmatpush.msra.mxu0 %v5350
    %5797 = vmatpush.msra.mxu0 %v5347
    %5798 = vmatmul.f32.gmra.mxu0 %v5564
    %v5799 = vpop.f32.mrf.mxu0
    %v5800 = vadd.f32 %v5777, %v5799
    %5801 = vmatmul.f32.gmra.mxu0 %v5579
    %v5802 = vpop.f32.mrf.mxu0
    %v5803 = vadd.f32 %v5780, %v5802
    %5804 = vdwg.mxu0
    %5805 = vmatpush.msra.mxu0 %v5440
    %5806 = vmatpush.msra.mxu0 %v5437
    %5807 = vmatpush.msra.mxu0 %v5434
    %5808 = vmatpush.msra.mxu0 %v5431
    %5809 = vmatpush.msra.mxu0 %v5428
    %5810 = vmatpush.msra.mxu0 %v5425
    %5811 = vmatpush.msra.mxu0 %v5422
    %5812 = vmatpush.msra.mxu0 %v5419
    %5813 = vmatpush.msra.mxu0 %v5416
    %5814 = vmatpush.msra.mxu0 %v5413
    %5815 = vmatpush.msra.mxu0 %v5410
    %5816 = vmatpush.msra.mxu0 %v5407
    %5817 = vmatpush.msra.mxu0 %v5404
    %5818 = vmatpush.msra.mxu0 %v5401
    %5819 = vmatpush.msra.mxu0 %v5398
    %5820 = vmatpush.msra.mxu0 %v5395
    %5821 = vmatmul.f32.gmra.mxu0 %v5567
    %v5822 = vpop.f32.mrf.mxu0
    %v5823 = vadd.f32 %v5800, %v5822
    %5824 = vmatmul.f32.gmra.mxu0 %v5581
    %v5825 = vpop.f32.mrf.mxu0
    %v5826 = vadd.f32 %v5803, %v5825
    %5827 = vdwg.mxu0
    %5828 = vmatpush.msra.mxu0 %v5488
    %5829 = vmatpush.msra.mxu0 %v5485
    %5830 = vmatpush.msra.mxu0 %v5482
    %5831 = vmatpush.msra.mxu0 %v5479
    %5832 = vmatpush.msra.mxu0 %v5476
    %5833 = vmatpush.msra.mxu0 %v5473
    %5834 = vmatpush.msra.mxu0 %v5470
    %5835 = vmatpush.msra.mxu0 %v5467
    %5836 = vmatpush.msra.mxu0 %v5464
    %5837 = vmatpush.msra.mxu0 %v5461
    %5838 = vmatpush.msra.mxu0 %v5458
    %5839 = vmatpush.msra.mxu0 %v5455
    %5840 = vmatpush.msra.mxu0 %v5452
    %5841 = vmatpush.msra.mxu0 %v5449
    %5842 = vmatpush.msra.mxu0 %v5446
    %5843 = vmatpush.msra.mxu0 %v5443
    %5844 = vmatmul.f32.gmra.mxu0 %v5570
    %v5845 = vpop.f32.mrf.mxu0
    %v5846 = vadd.f32 %v5823, %v5845
    %5847 = vmatmul.f32.gmra.mxu0 %v5583
    %v5848 = vpop.f32.mrf.mxu0
    %v5849 = vadd.f32 %v5826, %v5848
    %5850 = vdwg.mxu0
    %5851 = vmatpush.msra.mxu0 %v5536
    %5852 = vmatpush.msra.mxu0 %v5533
    %5853 = vmatpush.msra.mxu0 %v5530
    %5854 = vmatpush.msra.mxu0 %v5527
    %5855 = vmatpush.msra.mxu0 %v5524
    %5856 = vmatpush.msra.mxu0 %v5521
    %5857 = vmatpush.msra.mxu0 %v5518
    %5858 = vmatpush.msra.mxu0 %v5515
    %5859 = vmatpush.msra.mxu0 %v5512
    %5860 = vmatpush.msra.mxu0 %v5509
    %5861 = vmatpush.msra.mxu0 %v5506
    %5862 = vmatpush.msra.mxu0 %v5503
    %5863 = vmatpush.msra.mxu0 %v5500
    %5864 = vmatpush.msra.mxu0 %v5497
    %5865 = vmatpush.msra.mxu0 %v5494
    %5866 = vmatpush.msra.mxu0 %v5491
    %5867 = vmatmul.f32.gmra.mxu0 %v5573
    %v5868 = vpop.f32.mrf.mxu0
    %v5869 = vadd.f32 %v5846, %v5868
    %5870 = vmatmul.f32.gmra.mxu0 %v5585
    %v5871 = vpop.f32.mrf.mxu0
    %v5872 = vadd.f32 %v5849, %v5871
    %5873 = vdwg.mxu0
    %5874 = vmatpush.msra.mxu0 %v5297
    %5875 = vmatpush.msra.mxu0 %v5294
    %5876 = vmatpush.msra.mxu0 %v5291
    %5877 = vmatpush.msra.mxu0 %v5288
    %5878 = vmatpush.msra.mxu0 %v5285
    %5879 = vmatpush.msra.mxu0 %v5282
    %5880 = vmatpush.msra.mxu0 %v5279
    %5881 = vmatpush.msra.mxu0 %v5276
    %5882 = vmatpush.msra.mxu0 %v5273
    %5883 = vmatpush.msra.mxu0 %v5270
    %5884 = vmatpush.msra.mxu0 %v5267
    %5885 = vmatpush.msra.mxu0 %v5264
    %5886 = vmatpush.msra.mxu0 %v5261
    %5887 = vmatpush.msra.mxu0 %v5258
    %5888 = vmatpush.msra.mxu0 %v5255
    %5889 = vmatpush.msra.mxu0 %v5252
    %5890 = vmatmul.f32.gmra.mxu0 %v5558
    %v5891 = vpop.f32.mrf.mxu0
    %v5892 = vadd.f32 0.0, %v5891
    %5893 = vmatmul.f32.gmra.mxu0 %v5575
    %v5894 = vpop.f32.mrf.mxu0
    %v5895 = vadd.f32 0.0, %v5894
    %5896 = vdwg.mxu0
    %5897 = vmatpush.msra.mxu0 %v5345
    %5898 = vmatpush.msra.mxu0 %v5342
    %5899 = vmatpush.msra.mxu0 %v5339
    %5900 = vmatpush.msra.mxu0 %v5336
    %5901 = vmatpush.msra.mxu0 %v5333
    %5902 = vmatpush.msra.mxu0 %v5330
    %5903 = vmatpush.msra.mxu0 %v5327
    %5904 = vmatpush.msra.mxu0 %v5324
    %5905 = vmatpush.msra.mxu0 %v5321
    %5906 = vmatpush.msra.mxu0 %v5318
    %5907 = vmatpush.msra.mxu0 %v5315
    %5908 = vmatpush.msra.mxu0 %v5312
    %5909 = vmatpush.msra.mxu0 %v5309
    %5910 = vmatpush.msra.mxu0 %v5306
    %5911 = vmatpush.msra.mxu0 %v5303
    %5912 = vmatpush.msra.mxu0 %v5300
    %5913 = vmatmul.f32.gmra.mxu0 %v5561
    %v5914 = vpop.f32.mrf.mxu0
    %v5915 = vadd.f32 %v5892, %v5914
    %5916 = vmatmul.f32.gmra.mxu0 %v5577
    %v5917 = vpop.f32.mrf.mxu0
    %v5918 = vadd.f32 %v5895, %v5917
    %5919 = vdwg.mxu0
    %5920 = vmatpush.msra.mxu0 %v5393
    %5921 = vmatpush.msra.mxu0 %v5390
    %5922 = vmatpush.msra.mxu0 %v5387
    %5923 = vmatpush.msra.mxu0 %v5384
    %5924 = vmatpush.msra.mxu0 %v5381
    %5925 = vmatpush.msra.mxu0 %v5378
    %5926 = vmatpush.msra.mxu0 %v5375
    %5927 = vmatpush.msra.mxu0 %v5372
    %5928 = vmatpush.msra.mxu0 %v5369
    %5929 = vmatpush.msra.mxu0 %v5366
    %5930 = vmatpush.msra.mxu0 %v5363
    %5931 = vmatpush.msra.mxu0 %v5360
    %5932 = vmatpush.msra.mxu0 %v5357
    %5933 = vmatpush.msra.mxu0 %v5354
    %5934 = vmatpush.msra.mxu0 %v5351
    %5935 = vmatpush.msra.mxu0 %v5348
    %5936 = vmatmul.f32.gmra.mxu0 %v5564
    %v5937 = vpop.f32.mrf.mxu0
    %v5938 = vadd.f32 %v5915, %v5937
    %5939 = vmatmul.f32.gmra.mxu0 %v5579
    %v5940 = vpop.f32.mrf.mxu0
    %v5941 = vadd.f32 %v5918, %v5940
    %5942 = vdwg.mxu0
    %5943 = vmatpush.msra.mxu0 %v5441
    %5944 = vmatpush.msra.mxu0 %v5438
    %5945 = vmatpush.msra.mxu0 %v5435
    %5946 = vmatpush.msra.mxu0 %v5432
    %5947 = vmatpush.msra.mxu0 %v5429
    %5948 = vmatpush.msra.mxu0 %v5426
    %5949 = vmatpush.msra.mxu0 %v5423
    %5950 = vmatpush.msra.mxu0 %v5420
    %5951 = vmatpush.msra.mxu0 %v5417
    %5952 = vmatpush.msra.mxu0 %v5414
    %5953 = vmatpush.msra.mxu0 %v5411
    %5954 = vmatpush.msra.mxu0 %v5408
    %5955 = vmatpush.msra.mxu0 %v5405
    %5956 = vmatpush.msra.mxu0 %v5402
    %5957 = vmatpush.msra.mxu0 %v5399
    %5958 = vmatpush.msra.mxu0 %v5396
    %5959 = vmatmul.f32.gmra.mxu0 %v5567
    %v5960 = vpop.f32.mrf.mxu0
    %v5961 = vadd.f32 %v5938, %v5960
    %5962 = vmatmul.f32.gmra.mxu0 %v5581
    %v5963 = vpop.f32.mrf.mxu0
    %v5964 = vadd.f32 %v5941, %v5963
    %5965 = vdwg.mxu0
    %5966 = vmatpush.msra.mxu0 %v5489
    %5967 = vmatpush.msra.mxu0 %v5486
    %5968 = vmatpush.msra.mxu0 %v5483
    %5969 = vmatpush.msra.mxu0 %v5480
    %5970 = vmatpush.msra.mxu0 %v5477
    %5971 = vmatpush.msra.mxu0 %v5474
    %5972 = vmatpush.msra.mxu0 %v5471
    %5973 = vmatpush.msra.mxu0 %v5468
    %5974 = vmatpush.msra.mxu0 %v5465
    %5975 = vmatpush.msra.mxu0 %v5462
    %5976 = vmatpush.msra.mxu0 %v5459
    %5977 = vmatpush.msra.mxu0 %v5456
    %5978 = vmatpush.msra.mxu0 %v5453
    %5979 = vmatpush.msra.mxu0 %v5450
    %5980 = vmatpush.msra.mxu0 %v5447
    %5981 = vmatpush.msra.mxu0 %v5444
    %5982 = vmatmul.f32.gmra.mxu0 %v5570
    %v5983 = vpop.f32.mrf.mxu0
    %v5984 = vadd.f32 %v5961, %v5983
    %5985 = vmatmul.f32.gmra.mxu0 %v5583
    %v5986 = vpop.f32.mrf.mxu0
    %v5987 = vadd.f32 %v5964, %v5986
    %5988 = vdwg.mxu0
    %5989 = vmatpush.msra.mxu0 %v5537
    %5990 = vmatpush.msra.mxu0 %v5534
    %5991 = vmatpush.msra.mxu0 %v5531
    %5992 = vmatpush.msra.mxu0 %v5528
    %5993 = vmatpush.msra.mxu0 %v5525
    %5994 = vmatpush.msra.mxu0 %v5522
    %5995 = vmatpush.msra.mxu0 %v5519
    %5996 = vmatpush.msra.mxu0 %v5516
    %5997 = vmatpush.msra.mxu0 %v5513
    %5998 = vmatpush.msra.mxu0 %v5510
    %5999 = vmatpush.msra.mxu0 %v5507
    %6000 = vmatpush.msra.mxu0 %v5504
    %6001 = vmatpush.msra.mxu0 %v5501
    %6002 = vmatpush.msra.mxu0 %v5498
    %6003 = vmatpush.msra.mxu0 %v5495
    %6004 = vmatpush.msra.mxu0 %v5492
    %6005 = vmatmul.f32.gmra.mxu0 %v5573
    %v6006 = vpop.f32.mrf.mxu0
    %v6007 = vadd.f32 %v5984, %v6006
    %6008 = vmatmul.f32.gmra.mxu0 %v5585
    %v6009 = vpop.f32.mrf.mxu0
    %v6010 = vadd.f32 %v5987, %v6009
    %6011 = vdwg.mxu0
    %v6012 = vadd.f32 %v5225, %v5731
    %v6013 = vadd.f32 %v5226, %v5869
    %v6014 = vadd.f32 %v5227, %v6007
    %v6015 = vadd.f32 %v5228, %v5734
    %v6016 = vadd.f32 %v5229, %v5872
    %v6017 = vadd.f32 %v5230, %v6010
    %v6018 = vld [vmem:[#allocation3 + $0x30] sm:$0xf0]
    %v6019 = vld [vmem:[#allocation3 + $0x38] sm:$0xf0]
    %v6020 = vld [vmem:[#allocation3 + $0x40] sm:$0xf0]
    %v6021 = vld [vmem:[#allocation3 + $0x48] sm:$0xf0]
    %v6022 = vld [vmem:[#allocation3 + $0x50] sm:$0xf0]
    %v6023 = vld [vmem:[#allocation3 + $0x58] sm:$0xf0]
    %v6024 = vld [vmem:[#allocation3 + $0x90] sm:$0xf]
    %v6025 = vld [vmem:[#allocation3 + $0x98] sm:$0xf]
    %v6026 = vld [vmem:[#allocation3 + $0xa0] sm:$0xf]
    %v6027 = vld [vmem:[#allocation3 + $0xa8] sm:$0xf]
    %v6028 = vld [vmem:[#allocation3 + $0xb0] sm:$0xf]
    %v6029 = vld [vmem:[#allocation3 + $0xb8] sm:$0xf]
    %s6030 = scalar_lea.vmem [#allocation9], 13824
    %v6031 = vld [vmem:[%s6030] sm:$0xff]
    %v6032 = vld [vmem:[%s6030 + $0x8] sm:$0xff]
    %v6033 = vld [vmem:[%s6030 + $0x10] sm:$0xff]
    %v6034 = vld [vmem:[%s6030 + $0x18] sm:$0xff]
    %v6035 = vld [vmem:[%s6030 + $0x20] sm:$0xff]
    %v6036 = vld [vmem:[%s6030 + $0x28] sm:$0xff]
    %v6037 = vld [vmem:[%s6030 + $0x30] sm:$0xff]
    %v6038 = vld [vmem:[%s6030 + $0x38] sm:$0xff]
    %v6039 = vld [vmem:[%s6030 + $0x40] sm:$0xff]
    %v6040 = vld [vmem:[%s6030 + $0x48] sm:$0xff]
    %v6041 = vld [vmem:[%s6030 + $0x50] sm:$0xff]
    %v6042 = vld [vmem:[%s6030 + $0x58] sm:$0xff]
    %v6043 = vld [vmem:[%s6030 + $0x60] sm:$0xff]
    %v6044 = vld [vmem:[%s6030 + $0x68] sm:$0xff]
    %v6045 = vld [vmem:[%s6030 + $0x70] sm:$0xff]
    %v6046 = vld [vmem:[%s6030 + $0x78] sm:$0xff]
    %v6047 = vld [vmem:[%s6030 + $0x80] sm:$0xff]
    %v6048 = vld [vmem:[%s6030 + $0x88] sm:$0xff]
    %v6049 = vld [vmem:[%s6030 + $0x90] sm:$0xff]
    %v6050 = vld [vmem:[%s6030 + $0x98] sm:$0xff]
    %v6051 = vld [vmem:[%s6030 + $0xa0] sm:$0xff]
    %v6052 = vld [vmem:[%s6030 + $0xa8] sm:$0xff]
    %v6053 = vld [vmem:[%s6030 + $0xb0] sm:$0xff]
    %v6054 = vld [vmem:[%s6030 + $0xb8] sm:$0xff]
    %v6055 = vld [vmem:[%s6030 + $0xc0] sm:$0xff]
    %v6056 = vld [vmem:[%s6030 + $0xc8] sm:$0xff]
    %v6057 = vld [vmem:[%s6030 + $0xd0] sm:$0xff]
    %v6058 = vld [vmem:[%s6030 + $0xd8] sm:$0xff]
    %v6059 = vld [vmem:[%s6030 + $0xe0] sm:$0xff]
    %v6060 = vld [vmem:[%s6030 + $0xe8] sm:$0xff]
    %v6061 = vld [vmem:[%s6030 + $0xf0] sm:$0xff]
    %v6062 = vld [vmem:[%s6030 + $0xf8] sm:$0xff]
    %v6063 = vld [vmem:[%s6030 + $0x100] sm:$0xff]
    %v6064 = vld [vmem:[%s6030 + $0x108] sm:$0xff]
    %v6065 = vld [vmem:[%s6030 + $0x110] sm:$0xff]
    %v6066 = vld [vmem:[%s6030 + $0x118] sm:$0xff]
    %v6067 = vld [vmem:[%s6030 + $0x120] sm:$0xff]
    %v6068 = vld [vmem:[%s6030 + $0x128] sm:$0xff]
    %v6069 = vld [vmem:[%s6030 + $0x130] sm:$0xff]
    %v6070 = vld [vmem:[%s6030 + $0x138] sm:$0xff]
    %v6071 = vld [vmem:[%s6030 + $0x140] sm:$0xff]
    %v6072 = vld [vmem:[%s6030 + $0x148] sm:$0xff]
    %v6073 = vld [vmem:[%s6030 + $0x150] sm:$0xff]
    %v6074 = vld [vmem:[%s6030 + $0x158] sm:$0xff]
    %v6075 = vld [vmem:[%s6030 + $0x160] sm:$0xff]
    %v6076 = vld [vmem:[%s6030 + $0x168] sm:$0xff]
    %v6077 = vld [vmem:[%s6030 + $0x170] sm:$0xff]
    %v6078 = vld [vmem:[%s6030 + $0x178] sm:$0xff]
    %v6079 = vld [vmem:[%s6030 + $0x180] sm:$0xff]
    %v6080 = vld [vmem:[%s6030 + $0x188] sm:$0xff]
    %v6081 = vld [vmem:[%s6030 + $0x190] sm:$0xff]
    %v6082 = vld [vmem:[%s6030 + $0x198] sm:$0xff]
    %v6083 = vld [vmem:[%s6030 + $0x1a0] sm:$0xff]
    %v6084 = vld [vmem:[%s6030 + $0x1a8] sm:$0xff]
    %v6085 = vld [vmem:[%s6030 + $0x1b0] sm:$0xff]
    %v6086 = vld [vmem:[%s6030 + $0x1b8] sm:$0xff]
    %v6087 = vld [vmem:[%s6030 + $0x1c0] sm:$0xff]
    %v6088 = vld [vmem:[%s6030 + $0x1c8] sm:$0xff]
    %v6089 = vld [vmem:[%s6030 + $0x1d0] sm:$0xff]
    %v6090 = vld [vmem:[%s6030 + $0x1d8] sm:$0xff]
    %v6091 = vld [vmem:[%s6030 + $0x1e0] sm:$0xff]
    %v6092 = vld [vmem:[%s6030 + $0x1e8] sm:$0xff]
    %v6093 = vld [vmem:[%s6030 + $0x1f0] sm:$0xff]
    %v6094 = vld [vmem:[%s6030 + $0x1f8] sm:$0xff]
    %v6095 = vld [vmem:[%s6030 + $0x200] sm:$0xff]
    %v6096 = vld [vmem:[%s6030 + $0x208] sm:$0xff]
    %v6097 = vld [vmem:[%s6030 + $0x210] sm:$0xff]
    %v6098 = vld [vmem:[%s6030 + $0x218] sm:$0xff]
    %v6099 = vld [vmem:[%s6030 + $0x220] sm:$0xff]
    %v6100 = vld [vmem:[%s6030 + $0x228] sm:$0xff]
    %v6101 = vld [vmem:[%s6030 + $0x230] sm:$0xff]
    %v6102 = vld [vmem:[%s6030 + $0x238] sm:$0xff]
    %v6103 = vld [vmem:[%s6030 + $0x240] sm:$0xff]
    %v6104 = vld [vmem:[%s6030 + $0x248] sm:$0xff]
    %v6105 = vld [vmem:[%s6030 + $0x250] sm:$0xff]
    %v6106 = vld [vmem:[%s6030 + $0x258] sm:$0xff]
    %v6107 = vld [vmem:[%s6030 + $0x260] sm:$0xff]
    %v6108 = vld [vmem:[%s6030 + $0x268] sm:$0xff]
    %v6109 = vld [vmem:[%s6030 + $0x270] sm:$0xff]
    %v6110 = vld [vmem:[%s6030 + $0x278] sm:$0xff]
    %v6111 = vld [vmem:[%s6030 + $0x280] sm:$0xff]
    %v6112 = vld [vmem:[%s6030 + $0x288] sm:$0xff]
    %v6113 = vld [vmem:[%s6030 + $0x290] sm:$0xff]
    %v6114 = vld [vmem:[%s6030 + $0x298] sm:$0xff]
    %v6115 = vld [vmem:[%s6030 + $0x2a0] sm:$0xff]
    %v6116 = vld [vmem:[%s6030 + $0x2a8] sm:$0xff]
    %v6117 = vld [vmem:[%s6030 + $0x2b0] sm:$0xff]
    %v6118 = vld [vmem:[%s6030 + $0x2b8] sm:$0xff]
    %v6119 = vld [vmem:[%s6030 + $0x2c0] sm:$0xff]
    %v6120 = vld [vmem:[%s6030 + $0x2c8] sm:$0xff]
    %v6121 = vld [vmem:[%s6030 + $0x2d0] sm:$0xff]
    %v6122 = vld [vmem:[%s6030 + $0x2d8] sm:$0xff]
    %v6123 = vld [vmem:[%s6030 + $0x2e0] sm:$0xff]
    %v6124 = vld [vmem:[%s6030 + $0x2e8] sm:$0xff]
    %v6125 = vld [vmem:[%s6030 + $0x2f0] sm:$0xff]
    %v6126 = vld [vmem:[%s6030 + $0x2f8] sm:$0xff]
    %v6127 = vld [vmem:[%s6030 + $0x300] sm:$0xff]
    %v6128 = vld [vmem:[%s6030 + $0x308] sm:$0xff]
    %v6129 = vld [vmem:[%s6030 + $0x310] sm:$0xff]
    %v6130 = vld [vmem:[%s6030 + $0x318] sm:$0xff]
    %v6131 = vld [vmem:[%s6030 + $0x320] sm:$0xff]
    %v6132 = vld [vmem:[%s6030 + $0x328] sm:$0xff]
    %v6133 = vld [vmem:[%s6030 + $0x330] sm:$0xff]
    %v6134 = vld [vmem:[%s6030 + $0x338] sm:$0xff]
    %v6135 = vld [vmem:[%s6030 + $0x340] sm:$0xff]
    %v6136 = vld [vmem:[%s6030 + $0x348] sm:$0xff]
    %v6137 = vld [vmem:[%s6030 + $0x350] sm:$0xff]
    %v6138 = vld [vmem:[%s6030 + $0x358] sm:$0xff]
    %v6139 = vld [vmem:[%s6030 + $0x360] sm:$0xff]
    %v6140 = vld [vmem:[%s6030 + $0x368] sm:$0xff]
    %v6141 = vld [vmem:[%s6030 + $0x370] sm:$0xff]
    %v6142 = vld [vmem:[%s6030 + $0x378] sm:$0xff]
    %v6143 = vld [vmem:[%s6030 + $0x380] sm:$0xff]
    %v6144 = vld [vmem:[%s6030 + $0x388] sm:$0xff]
    %v6145 = vld [vmem:[%s6030 + $0x390] sm:$0xff]
    %v6146 = vld [vmem:[%s6030 + $0x398] sm:$0xff]
    %v6147 = vld [vmem:[%s6030 + $0x3a0] sm:$0xff]
    %v6148 = vld [vmem:[%s6030 + $0x3a8] sm:$0xff]
    %v6149 = vld [vmem:[%s6030 + $0x3b0] sm:$0xff]
    %v6150 = vld [vmem:[%s6030 + $0x3b8] sm:$0xff]
    %v6151 = vld [vmem:[%s6030 + $0x3c0] sm:$0xff]
    %v6152 = vld [vmem:[%s6030 + $0x3c8] sm:$0xff]
    %v6153 = vld [vmem:[%s6030 + $0x3d0] sm:$0xff]
    %v6154 = vld [vmem:[%s6030 + $0x3d8] sm:$0xff]
    %v6155 = vld [vmem:[%s6030 + $0x3e0] sm:$0xff]
    %v6156 = vld [vmem:[%s6030 + $0x3e8] sm:$0xff]
    %v6157 = vld [vmem:[%s6030 + $0x3f0] sm:$0xff]
    %v6158 = vld [vmem:[%s6030 + $0x3f8] sm:$0xff]
    %v6159 = vld [vmem:[%s6030 + $0x400] sm:$0xff]
    %v6160 = vld [vmem:[%s6030 + $0x408] sm:$0xff]
    %v6161 = vld [vmem:[%s6030 + $0x410] sm:$0xff]
    %v6162 = vld [vmem:[%s6030 + $0x418] sm:$0xff]
    %v6163 = vld [vmem:[%s6030 + $0x420] sm:$0xff]
    %v6164 = vld [vmem:[%s6030 + $0x428] sm:$0xff]
    %v6165 = vld [vmem:[%s6030 + $0x430] sm:$0xff]
    %v6166 = vld [vmem:[%s6030 + $0x438] sm:$0xff]
    %v6167 = vld [vmem:[%s6030 + $0x440] sm:$0xff]
    %v6168 = vld [vmem:[%s6030 + $0x448] sm:$0xff]
    %v6169 = vld [vmem:[%s6030 + $0x450] sm:$0xff]
    %v6170 = vld [vmem:[%s6030 + $0x458] sm:$0xff]
    %v6171 = vld [vmem:[%s6030 + $0x460] sm:$0xff]
    %v6172 = vld [vmem:[%s6030 + $0x468] sm:$0xff]
    %v6173 = vld [vmem:[%s6030 + $0x470] sm:$0xff]
    %v6174 = vld [vmem:[%s6030 + $0x478] sm:$0xff]
    %v6175 = vld [vmem:[%s6030 + $0x480] sm:$0xff]
    %v6176 = vld [vmem:[%s6030 + $0x488] sm:$0xff]
    %v6177 = vld [vmem:[%s6030 + $0x490] sm:$0xff]
    %v6178 = vld [vmem:[%s6030 + $0x498] sm:$0xff]
    %v6179 = vld [vmem:[%s6030 + $0x4a0] sm:$0xff]
    %v6180 = vld [vmem:[%s6030 + $0x4a8] sm:$0xff]
    %v6181 = vld [vmem:[%s6030 + $0x4b0] sm:$0xff]
    %v6182 = vld [vmem:[%s6030 + $0x4b8] sm:$0xff]
    %v6183 = vld [vmem:[%s6030 + $0x4c0] sm:$0xff]
    %v6184 = vld [vmem:[%s6030 + $0x4c8] sm:$0xff]
    %v6185 = vld [vmem:[%s6030 + $0x4d0] sm:$0xff]
    %v6186 = vld [vmem:[%s6030 + $0x4d8] sm:$0xff]
    %v6187 = vld [vmem:[%s6030 + $0x4e0] sm:$0xff]
    %v6188 = vld [vmem:[%s6030 + $0x4e8] sm:$0xff]
    %v6189 = vld [vmem:[%s6030 + $0x4f0] sm:$0xff]
    %v6190 = vld [vmem:[%s6030 + $0x4f8] sm:$0xff]
    %v6191 = vld [vmem:[%s6030 + $0x500] sm:$0xff]
    %v6192 = vld [vmem:[%s6030 + $0x508] sm:$0xff]
    %v6193 = vld [vmem:[%s6030 + $0x510] sm:$0xff]
    %v6194 = vld [vmem:[%s6030 + $0x518] sm:$0xff]
    %v6195 = vld [vmem:[%s6030 + $0x520] sm:$0xff]
    %v6196 = vld [vmem:[%s6030 + $0x528] sm:$0xff]
    %v6197 = vld [vmem:[%s6030 + $0x530] sm:$0xff]
    %v6198 = vld [vmem:[%s6030 + $0x538] sm:$0xff]
    %v6199 = vld [vmem:[%s6030 + $0x540] sm:$0xff]
    %v6200 = vld [vmem:[%s6030 + $0x548] sm:$0xff]
    %v6201 = vld [vmem:[%s6030 + $0x550] sm:$0xff]
    %v6202 = vld [vmem:[%s6030 + $0x558] sm:$0xff]
    %v6203 = vld [vmem:[%s6030 + $0x560] sm:$0xff]
    %v6204 = vld [vmem:[%s6030 + $0x568] sm:$0xff]
    %v6205 = vld [vmem:[%s6030 + $0x570] sm:$0xff]
    %v6206 = vld [vmem:[%s6030 + $0x578] sm:$0xff]
    %v6207 = vld [vmem:[%s6030 + $0x580] sm:$0xff]
    %v6208 = vld [vmem:[%s6030 + $0x588] sm:$0xff]
    %v6209 = vld [vmem:[%s6030 + $0x590] sm:$0xff]
    %v6210 = vld [vmem:[%s6030 + $0x598] sm:$0xff]
    %v6211 = vld [vmem:[%s6030 + $0x5a0] sm:$0xff]
    %v6212 = vld [vmem:[%s6030 + $0x5a8] sm:$0xff]
    %v6213 = vld [vmem:[%s6030 + $0x5b0] sm:$0xff]
    %v6214 = vld [vmem:[%s6030 + $0x5b8] sm:$0xff]
    %v6215 = vld [vmem:[%s6030 + $0x5c0] sm:$0xff]
    %v6216 = vld [vmem:[%s6030 + $0x5c8] sm:$0xff]
    %v6217 = vld [vmem:[%s6030 + $0x5d0] sm:$0xff]
    %v6218 = vld [vmem:[%s6030 + $0x5d8] sm:$0xff]
    %v6219 = vld [vmem:[%s6030 + $0x5e0] sm:$0xff]
    %v6220 = vld [vmem:[%s6030 + $0x5e8] sm:$0xff]
    %v6221 = vld [vmem:[%s6030 + $0x5f0] sm:$0xff]
    %v6222 = vld [vmem:[%s6030 + $0x5f8] sm:$0xff]
    %v6223 = vld [vmem:[%s6030 + $0x600] sm:$0xff]
    %v6224 = vld [vmem:[%s6030 + $0x608] sm:$0xff]
    %v6225 = vld [vmem:[%s6030 + $0x610] sm:$0xff]
    %v6226 = vld [vmem:[%s6030 + $0x618] sm:$0xff]
    %v6227 = vld [vmem:[%s6030 + $0x620] sm:$0xff]
    %v6228 = vld [vmem:[%s6030 + $0x628] sm:$0xff]
    %v6229 = vld [vmem:[%s6030 + $0x630] sm:$0xff]
    %v6230 = vld [vmem:[%s6030 + $0x638] sm:$0xff]
    %v6231 = vld [vmem:[%s6030 + $0x640] sm:$0xff]
    %v6232 = vld [vmem:[%s6030 + $0x648] sm:$0xff]
    %v6233 = vld [vmem:[%s6030 + $0x650] sm:$0xff]
    %v6234 = vld [vmem:[%s6030 + $0x658] sm:$0xff]
    %v6235 = vld [vmem:[%s6030 + $0x660] sm:$0xff]
    %v6236 = vld [vmem:[%s6030 + $0x668] sm:$0xff]
    %v6237 = vld [vmem:[%s6030 + $0x670] sm:$0xff]
    %v6238 = vld [vmem:[%s6030 + $0x678] sm:$0xff]
    %v6239 = vld [vmem:[%s6030 + $0x680] sm:$0xff]
    %v6240 = vld [vmem:[%s6030 + $0x688] sm:$0xff]
    %v6241 = vld [vmem:[%s6030 + $0x690] sm:$0xff]
    %v6242 = vld [vmem:[%s6030 + $0x698] sm:$0xff]
    %v6243 = vld [vmem:[%s6030 + $0x6a0] sm:$0xff]
    %v6244 = vld [vmem:[%s6030 + $0x6a8] sm:$0xff]
    %v6245 = vld [vmem:[%s6030 + $0x6b0] sm:$0xff]
    %v6246 = vld [vmem:[%s6030 + $0x6b8] sm:$0xff]
    %v6247 = vld [vmem:[%s6030 + $0x6c0] sm:$0xff]
    %v6248 = vld [vmem:[%s6030 + $0x6c8] sm:$0xff]
    %v6249 = vld [vmem:[%s6030 + $0x6d0] sm:$0xff]
    %v6250 = vld [vmem:[%s6030 + $0x6d8] sm:$0xff]
    %v6251 = vld [vmem:[%s6030 + $0x6e0] sm:$0xff]
    %v6252 = vld [vmem:[%s6030 + $0x6e8] sm:$0xff]
    %v6253 = vld [vmem:[%s6030 + $0x6f0] sm:$0xff]
    %v6254 = vld [vmem:[%s6030 + $0x6f8] sm:$0xff]
    %v6255 = vld [vmem:[%s6030 + $0x700] sm:$0xff]
    %v6256 = vld [vmem:[%s6030 + $0x708] sm:$0xff]
    %v6257 = vld [vmem:[%s6030 + $0x710] sm:$0xff]
    %v6258 = vld [vmem:[%s6030 + $0x718] sm:$0xff]
    %v6259 = vld [vmem:[%s6030 + $0x720] sm:$0xff]
    %v6260 = vld [vmem:[%s6030 + $0x728] sm:$0xff]
    %v6261 = vld [vmem:[%s6030 + $0x730] sm:$0xff]
    %v6262 = vld [vmem:[%s6030 + $0x738] sm:$0xff]
    %v6263 = vld [vmem:[%s6030 + $0x740] sm:$0xff]
    %v6264 = vld [vmem:[%s6030 + $0x748] sm:$0xff]
    %v6265 = vld [vmem:[%s6030 + $0x750] sm:$0xff]
    %v6266 = vld [vmem:[%s6030 + $0x758] sm:$0xff]
    %v6267 = vld [vmem:[%s6030 + $0x760] sm:$0xff]
    %v6268 = vld [vmem:[%s6030 + $0x768] sm:$0xff]
    %v6269 = vld [vmem:[%s6030 + $0x770] sm:$0xff]
    %v6270 = vld [vmem:[%s6030 + $0x778] sm:$0xff]
    %v6271 = vld [vmem:[%s6030 + $0x780] sm:$0xff]
    %v6272 = vld [vmem:[%s6030 + $0x788] sm:$0xff]
    %v6273 = vld [vmem:[%s6030 + $0x790] sm:$0xff]
    %v6274 = vld [vmem:[%s6030 + $0x798] sm:$0xff]
    %v6275 = vld [vmem:[%s6030 + $0x7a0] sm:$0xff]
    %v6276 = vld [vmem:[%s6030 + $0x7a8] sm:$0xff]
    %v6277 = vld [vmem:[%s6030 + $0x7b0] sm:$0xff]
    %v6278 = vld [vmem:[%s6030 + $0x7b8] sm:$0xff]
    %v6279 = vld [vmem:[%s6030 + $0x7c0] sm:$0xff]
    %v6280 = vld [vmem:[%s6030 + $0x7c8] sm:$0xff]
    %v6281 = vld [vmem:[%s6030 + $0x7d0] sm:$0xff]
    %v6282 = vld [vmem:[%s6030 + $0x7d8] sm:$0xff]
    %v6283 = vld [vmem:[%s6030 + $0x7e0] sm:$0xff]
    %v6284 = vld [vmem:[%s6030 + $0x7e8] sm:$0xff]
    %v6285 = vld [vmem:[%s6030 + $0x7f0] sm:$0xff]
    %v6286 = vld [vmem:[%s6030 + $0x7f8] sm:$0xff]
    %v6287 = vld [vmem:[%s6030 + $0x800] sm:$0xff]
    %v6288 = vld [vmem:[%s6030 + $0x808] sm:$0xff]
    %v6289 = vld [vmem:[%s6030 + $0x810] sm:$0xff]
    %v6290 = vld [vmem:[%s6030 + $0x818] sm:$0xff]
    %v6291 = vld [vmem:[%s6030 + $0x820] sm:$0xff]
    %v6292 = vld [vmem:[%s6030 + $0x828] sm:$0xff]
    %v6293 = vld [vmem:[%s6030 + $0x830] sm:$0xff]
    %v6294 = vld [vmem:[%s6030 + $0x838] sm:$0xff]
    %v6295 = vld [vmem:[%s6030 + $0x840] sm:$0xff]
    %v6296 = vld [vmem:[%s6030 + $0x848] sm:$0xff]
    %v6297 = vld [vmem:[%s6030 + $0x850] sm:$0xff]
    %v6298 = vld [vmem:[%s6030 + $0x858] sm:$0xff]
    %v6299 = vld [vmem:[%s6030 + $0x860] sm:$0xff]
    %v6300 = vld [vmem:[%s6030 + $0x868] sm:$0xff]
    %v6301 = vld [vmem:[%s6030 + $0x870] sm:$0xff]
    %v6302 = vld [vmem:[%s6030 + $0x878] sm:$0xff]
    %v6303 = vld [vmem:[%s6030 + $0x880] sm:$0xff]
    %v6304 = vld [vmem:[%s6030 + $0x888] sm:$0xff]
    %v6305 = vld [vmem:[%s6030 + $0x890] sm:$0xff]
    %v6306 = vld [vmem:[%s6030 + $0x898] sm:$0xff]
    %v6307 = vld [vmem:[%s6030 + $0x8a0] sm:$0xff]
    %v6308 = vld [vmem:[%s6030 + $0x8a8] sm:$0xff]
    %v6309 = vld [vmem:[%s6030 + $0x8b0] sm:$0xff]
    %v6310 = vld [vmem:[%s6030 + $0x8b8] sm:$0xff]
    %v6311 = vld [vmem:[%s6030 + $0x8c0] sm:$0xff]
    %v6312 = vld [vmem:[%s6030 + $0x8c8] sm:$0xff]
    %v6313 = vld [vmem:[%s6030 + $0x8d0] sm:$0xff]
    %v6314 = vld [vmem:[%s6030 + $0x8d8] sm:$0xff]
    %v6315 = vld [vmem:[%s6030 + $0x8e0] sm:$0xff]
    %v6316 = vld [vmem:[%s6030 + $0x8e8] sm:$0xff]
    %v6317 = vld [vmem:[%s6030 + $0x8f0] sm:$0xff]
    %v6318 = vld [vmem:[%s6030 + $0x8f8] sm:$0xff]
    %v6331 = vrot.slane %v6018, 4
    %v6332 = vrot.slane %v5237, 4
    %v6333 = vsel %vm3277, %v6331, %v6332
    %v6334 = vrot.slane %v6019, 4
    %v6335 = vrot.slane %v5238, 4
    %v6336 = vsel %vm3277, %v6334, %v6335
    %v6337 = vrot.slane %v6020, 4
    %v6338 = vrot.slane %v5239, 4
    %v6339 = vsel %vm3277, %v6337, %v6338
    %v6340 = vrot.slane %v6021, 4
    %v6341 = vrot.slane %v5240, 4
    %v6342 = vsel %vm3277, %v6340, %v6341
    %v6343 = vrot.slane %v6022, 4
    %v6344 = vrot.slane %v5241, 4
    %v6345 = vsel %vm3277, %v6343, %v6344
    %v6346 = vrot.slane %v6023, 4
    %v6347 = vrot.slane %v5242, 4
    %v6348 = vsel %vm3277, %v6346, %v6347
    %v6349 = vrot.slane %v6024, 4
    %v6350 = vsel %vm3277, %v6332, %v6349
    %v6351 = vrot.slane %v6025, 4
    %v6352 = vsel %vm3277, %v6335, %v6351
    %v6353 = vrot.slane %v6026, 4
    %v6354 = vsel %vm3277, %v6338, %v6353
    %v6355 = vrot.slane %v6027, 4
    %v6356 = vsel %vm3277, %v6341, %v6355
    %v6357 = vrot.slane %v6028, 4
    %v6358 = vsel %vm3277, %v6344, %v6357
    %v6359 = vrot.slane %v6029, 4
    %v6360 = vsel %vm3277, %v6347, %v6359
    %6373 = vmatpush.msra.mxu0 %v6076
    %6374 = vmatpush.msra.mxu0 %v6073
    %6375 = vmatpush.msra.mxu0 %v6070
    %6376 = vmatpush.msra.mxu0 %v6067
    %6377 = vmatpush.msra.mxu0 %v6064
    %6378 = vmatpush.msra.mxu0 %v6061
    %6379 = vmatpush.msra.mxu0 %v6058
    %6380 = vmatpush.msra.mxu0 %v6055
    %6381 = vmatpush.msra.mxu0 %v6052
    %6382 = vmatpush.msra.mxu0 %v6049
    %6383 = vmatpush.msra.mxu0 %v6046
    %6384 = vmatpush.msra.mxu0 %v6043
    %6385 = vmatpush.msra.mxu0 %v6040
    %6386 = vmatpush.msra.mxu0 %v6037
    %6387 = vmatpush.msra.mxu0 %v6034
    %6388 = vmatpush.msra.mxu0 %v6031
    %6389 = vmatmul.f32.gmra.mxu0 %v6333
    %v6390 = vpop.f32.mrf.mxu0
    %v6391 = vadd.f32 0.0, %v6390
    %6392 = vmatmul.f32.gmra.mxu0 %v6350
    %v6393 = vpop.f32.mrf.mxu0
    %v6394 = vadd.f32 0.0, %v6393
    %6395 = vdwg.mxu0
    %6396 = vmatpush.msra.mxu0 %v6124
    %6397 = vmatpush.msra.mxu0 %v6121
    %6398 = vmatpush.msra.mxu0 %v6118
    %6399 = vmatpush.msra.mxu0 %v6115
    %6400 = vmatpush.msra.mxu0 %v6112
    %6401 = vmatpush.msra.mxu0 %v6109
    %6402 = vmatpush.msra.mxu0 %v6106
    %6403 = vmatpush.msra.mxu0 %v6103
    %6404 = vmatpush.msra.mxu0 %v6100
    %6405 = vmatpush.msra.mxu0 %v6097
    %6406 = vmatpush.msra.mxu0 %v6094
    %6407 = vmatpush.msra.mxu0 %v6091
    %6408 = vmatpush.msra.mxu0 %v6088
    %6409 = vmatpush.msra.mxu0 %v6085
    %6410 = vmatpush.msra.mxu0 %v6082
    %6411 = vmatpush.msra.mxu0 %v6079
    %6412 = vmatmul.f32.gmra.mxu0 %v6336
    %v6413 = vpop.f32.mrf.mxu0
    %v6414 = vadd.f32 %v6391, %v6413
    %6415 = vmatmul.f32.gmra.mxu0 %v6352
    %v6416 = vpop.f32.mrf.mxu0
    %v6417 = vadd.f32 %v6394, %v6416
    %6418 = vdwg.mxu0
    %6419 = vmatpush.msra.mxu0 %v6172
    %6420 = vmatpush.msra.mxu0 %v6169
    %6421 = vmatpush.msra.mxu0 %v6166
    %6422 = vmatpush.msra.mxu0 %v6163
    %6423 = vmatpush.msra.mxu0 %v6160
    %6424 = vmatpush.msra.mxu0 %v6157
    %6425 = vmatpush.msra.mxu0 %v6154
    %6426 = vmatpush.msra.mxu0 %v6151
    %6427 = vmatpush.msra.mxu0 %v6148
    %6428 = vmatpush.msra.mxu0 %v6145
    %6429 = vmatpush.msra.mxu0 %v6142
    %6430 = vmatpush.msra.mxu0 %v6139
    %6431 = vmatpush.msra.mxu0 %v6136
    %6432 = vmatpush.msra.mxu0 %v6133
    %6433 = vmatpush.msra.mxu0 %v6130
    %6434 = vmatpush.msra.mxu0 %v6127
    %6435 = vmatmul.f32.gmra.mxu0 %v6339
    %v6436 = vpop.f32.mrf.mxu0
    %v6437 = vadd.f32 %v6414, %v6436
    %6438 = vmatmul.f32.gmra.mxu0 %v6354
    %v6439 = vpop.f32.mrf.mxu0
    %v6440 = vadd.f32 %v6417, %v6439
    %6441 = vdwg.mxu0
    %6442 = vmatpush.msra.mxu0 %v6220
    %6443 = vmatpush.msra.mxu0 %v6217
    %6444 = vmatpush.msra.mxu0 %v6214
    %6445 = vmatpush.msra.mxu0 %v6211
    %6446 = vmatpush.msra.mxu0 %v6208
    %6447 = vmatpush.msra.mxu0 %v6205
    %6448 = vmatpush.msra.mxu0 %v6202
    %6449 = vmatpush.msra.mxu0 %v6199
    %6450 = vmatpush.msra.mxu0 %v6196
    %6451 = vmatpush.msra.mxu0 %v6193
    %6452 = vmatpush.msra.mxu0 %v6190
    %6453 = vmatpush.msra.mxu0 %v6187
    %6454 = vmatpush.msra.mxu0 %v6184
    %6455 = vmatpush.msra.mxu0 %v6181
    %6456 = vmatpush.msra.mxu0 %v6178
    %6457 = vmatpush.msra.mxu0 %v6175
    %6458 = vmatmul.f32.gmra.mxu0 %v6342
    %v6459 = vpop.f32.mrf.mxu0
    %v6460 = vadd.f32 %v6437, %v6459
    %6461 = vmatmul.f32.gmra.mxu0 %v6356
    %v6462 = vpop.f32.mrf.mxu0
    %v6463 = vadd.f32 %v6440, %v6462
    %6464 = vdwg.mxu0
    %6465 = vmatpush.msra.mxu0 %v6268
    %6466 = vmatpush.msra.mxu0 %v6265
    %6467 = vmatpush.msra.mxu0 %v6262
    %6468 = vmatpush.msra.mxu0 %v6259
    %6469 = vmatpush.msra.mxu0 %v6256
    %6470 = vmatpush.msra.mxu0 %v6253
    %6471 = vmatpush.msra.mxu0 %v6250
    %6472 = vmatpush.msra.mxu0 %v6247
    %6473 = vmatpush.msra.mxu0 %v6244
    %6474 = vmatpush.msra.mxu0 %v6241
    %6475 = vmatpush.msra.mxu0 %v6238
    %6476 = vmatpush.msra.mxu0 %v6235
    %6477 = vmatpush.msra.mxu0 %v6232
    %6478 = vmatpush.msra.mxu0 %v6229
    %6479 = vmatpush.msra.mxu0 %v6226
    %6480 = vmatpush.msra.mxu0 %v6223
    %6481 = vmatmul.f32.gmra.mxu0 %v6345
    %v6482 = vpop.f32.mrf.mxu0
    %v6483 = vadd.f32 %v6460, %v6482
    %6484 = vmatmul.f32.gmra.mxu0 %v6358
    %v6485 = vpop.f32.mrf.mxu0
    %v6486 = vadd.f32 %v6463, %v6485
    %6487 = vdwg.mxu0
    %6488 = vmatpush.msra.mxu0 %v6316
    %6489 = vmatpush.msra.mxu0 %v6313
    %6490 = vmatpush.msra.mxu0 %v6310
    %6491 = vmatpush.msra.mxu0 %v6307
    %6492 = vmatpush.msra.mxu0 %v6304
    %6493 = vmatpush.msra.mxu0 %v6301
    %6494 = vmatpush.msra.mxu0 %v6298
    %6495 = vmatpush.msra.mxu0 %v6295
    %6496 = vmatpush.msra.mxu0 %v6292
    %6497 = vmatpush.msra.mxu0 %v6289
    %6498 = vmatpush.msra.mxu0 %v6286
    %6499 = vmatpush.msra.mxu0 %v6283
    %6500 = vmatpush.msra.mxu0 %v6280
    %6501 = vmatpush.msra.mxu0 %v6277
    %6502 = vmatpush.msra.mxu0 %v6274
    %6503 = vmatpush.msra.mxu0 %v6271
    %6504 = vmatmul.f32.gmra.mxu0 %v6348
    %v6505 = vpop.f32.mrf.mxu0
    %v6506 = vadd.f32 %v6483, %v6505
    %6507 = vmatmul.f32.gmra.mxu0 %v6360
    %v6508 = vpop.f32.mrf.mxu0
    %v6509 = vadd.f32 %v6486, %v6508
    %6510 = vdwg.mxu0
    %6511 = vmatpush.msra.mxu0 %v6077
    %6512 = vmatpush.msra.mxu0 %v6074
    %6513 = vmatpush.msra.mxu0 %v6071
    %6514 = vmatpush.msra.mxu0 %v6068
    %6515 = vmatpush.msra.mxu0 %v6065
    %6516 = vmatpush.msra.mxu0 %v6062
    %6517 = vmatpush.msra.mxu0 %v6059
    %6518 = vmatpush.msra.mxu0 %v6056
    %6519 = vmatpush.msra.mxu0 %v6053
    %6520 = vmatpush.msra.mxu0 %v6050
    %6521 = vmatpush.msra.mxu0 %v6047
    %6522 = vmatpush.msra.mxu0 %v6044
    %6523 = vmatpush.msra.mxu0 %v6041
    %6524 = vmatpush.msra.mxu0 %v6038
    %6525 = vmatpush.msra.mxu0 %v6035
    %6526 = vmatpush.msra.mxu0 %v6032
    %6527 = vmatmul.f32.gmra.mxu0 %v6333
    %v6528 = vpop.f32.mrf.mxu0
    %v6529 = vadd.f32 0.0, %v6528
    %6530 = vmatmul.f32.gmra.mxu0 %v6350
    %v6531 = vpop.f32.mrf.mxu0
    %v6532 = vadd.f32 0.0, %v6531
    %6533 = vdwg.mxu0
    %6534 = vmatpush.msra.mxu0 %v6125
    %6535 = vmatpush.msra.mxu0 %v6122
    %6536 = vmatpush.msra.mxu0 %v6119
    %6537 = vmatpush.msra.mxu0 %v6116
    %6538 = vmatpush.msra.mxu0 %v6113
    %6539 = vmatpush.msra.mxu0 %v6110
    %6540 = vmatpush.msra.mxu0 %v6107
    %6541 = vmatpush.msra.mxu0 %v6104
    %6542 = vmatpush.msra.mxu0 %v6101
    %6543 = vmatpush.msra.mxu0 %v6098
    %6544 = vmatpush.msra.mxu0 %v6095
    %6545 = vmatpush.msra.mxu0 %v6092
    %6546 = vmatpush.msra.mxu0 %v6089
    %6547 = vmatpush.msra.mxu0 %v6086
    %6548 = vmatpush.msra.mxu0 %v6083
    %6549 = vmatpush.msra.mxu0 %v6080
    %6550 = vmatmul.f32.gmra.mxu0 %v6336
    %v6551 = vpop.f32.mrf.mxu0
    %v6552 = vadd.f32 %v6529, %v6551
    %6553 = vmatmul.f32.gmra.mxu0 %v6352
    %v6554 = vpop.f32.mrf.mxu0
    %v6555 = vadd.f32 %v6532, %v6554
    %6556 = vdwg.mxu0
    %6557 = vmatpush.msra.mxu0 %v6173
    %6558 = vmatpush.msra.mxu0 %v6170
    %6559 = vmatpush.msra.mxu0 %v6167
    %6560 = vmatpush.msra.mxu0 %v6164
    %6561 = vmatpush.msra.mxu0 %v6161
    %6562 = vmatpush.msra.mxu0 %v6158
    %6563 = vmatpush.msra.mxu0 %v6155
    %6564 = vmatpush.msra.mxu0 %v6152
    %6565 = vmatpush.msra.mxu0 %v6149
    %6566 = vmatpush.msra.mxu0 %v6146
    %6567 = vmatpush.msra.mxu0 %v6143
    %6568 = vmatpush.msra.mxu0 %v6140
    %6569 = vmatpush.msra.mxu0 %v6137
    %6570 = vmatpush.msra.mxu0 %v6134
    %6571 = vmatpush.msra.mxu0 %v6131
    %6572 = vmatpush.msra.mxu0 %v6128
    %6573 = vmatmul.f32.gmra.mxu0 %v6339
    %v6574 = vpop.f32.mrf.mxu0
    %v6575 = vadd.f32 %v6552, %v6574
    %6576 = vmatmul.f32.gmra.mxu0 %v6354
    %v6577 = vpop.f32.mrf.mxu0
    %v6578 = vadd.f32 %v6555, %v6577
    %6579 = vdwg.mxu0
    %6580 = vmatpush.msra.mxu0 %v6221
    %6581 = vmatpush.msra.mxu0 %v6218
    %6582 = vmatpush.msra.mxu0 %v6215
    %6583 = vmatpush.msra.mxu0 %v6212
    %6584 = vmatpush.msra.mxu0 %v6209
    %6585 = vmatpush.msra.mxu0 %v6206
    %6586 = vmatpush.msra.mxu0 %v6203
    %6587 = vmatpush.msra.mxu0 %v6200
    %6588 = vmatpush.msra.mxu0 %v6197
    %6589 = vmatpush.msra.mxu0 %v6194
    %6590 = vmatpush.msra.mxu0 %v6191
    %6591 = vmatpush.msra.mxu0 %v6188
    %6592 = vmatpush.msra.mxu0 %v6185
    %6593 = vmatpush.msra.mxu0 %v6182
    %6594 = vmatpush.msra.mxu0 %v6179
    %6595 = vmatpush.msra.mxu0 %v6176
    %6596 = vmatmul.f32.gmra.mxu0 %v6342
    %v6597 = vpop.f32.mrf.mxu0
    %v6598 = vadd.f32 %v6575, %v6597
    %6599 = vmatmul.f32.gmra.mxu0 %v6356
    %v6600 = vpop.f32.mrf.mxu0
    %v6601 = vadd.f32 %v6578, %v6600
    %6602 = vdwg.mxu0
    %6603 = vmatpush.msra.mxu0 %v6269
    %6604 = vmatpush.msra.mxu0 %v6266
    %6605 = vmatpush.msra.mxu0 %v6263
    %6606 = vmatpush.msra.mxu0 %v6260
    %6607 = vmatpush.msra.mxu0 %v6257
    %6608 = vmatpush.msra.mxu0 %v6254
    %6609 = vmatpush.msra.mxu0 %v6251
    %6610 = vmatpush.msra.mxu0 %v6248
    %6611 = vmatpush.msra.mxu0 %v6245
    %6612 = vmatpush.msra.mxu0 %v6242
    %6613 = vmatpush.msra.mxu0 %v6239
    %6614 = vmatpush.msra.mxu0 %v6236
    %6615 = vmatpush.msra.mxu0 %v6233
    %6616 = vmatpush.msra.mxu0 %v6230
    %6617 = vmatpush.msra.mxu0 %v6227
    %6618 = vmatpush.msra.mxu0 %v6224
    %6619 = vmatmul.f32.gmra.mxu0 %v6345
    %v6620 = vpop.f32.mrf.mxu0
    %v6621 = vadd.f32 %v6598, %v6620
    %6622 = vmatmul.f32.gmra.mxu0 %v6358
    %v6623 = vpop.f32.mrf.mxu0
    %v6624 = vadd.f32 %v6601, %v6623
    %6625 = vdwg.mxu0
    %6626 = vmatpush.msra.mxu0 %v6317
    %6627 = vmatpush.msra.mxu0 %v6314
    %6628 = vmatpush.msra.mxu0 %v6311
    %6629 = vmatpush.msra.mxu0 %v6308
    %6630 = vmatpush.msra.mxu0 %v6305
    %6631 = vmatpush.msra.mxu0 %v6302
    %6632 = vmatpush.msra.mxu0 %v6299
    %6633 = vmatpush.msra.mxu0 %v6296
    %6634 = vmatpush.msra.mxu0 %v6293
    %6635 = vmatpush.msra.mxu0 %v6290
    %6636 = vmatpush.msra.mxu0 %v6287
    %6637 = vmatpush.msra.mxu0 %v6284
    %6638 = vmatpush.msra.mxu0 %v6281
    %6639 = vmatpush.msra.mxu0 %v6278
    %6640 = vmatpush.msra.mxu0 %v6275
    %6641 = vmatpush.msra.mxu0 %v6272
    %6642 = vmatmul.f32.gmra.mxu0 %v6348
    %v6643 = vpop.f32.mrf.mxu0
    %v6644 = vadd.f32 %v6621, %v6643
    %6645 = vmatmul.f32.gmra.mxu0 %v6360
    %v6646 = vpop.f32.mrf.mxu0
    %v6647 = vadd.f32 %v6624, %v6646
    %6648 = vdwg.mxu0
    %6649 = vmatpush.msra.mxu0 %v6078
    %6650 = vmatpush.msra.mxu0 %v6075
    %6651 = vmatpush.msra.mxu0 %v6072
    %6652 = vmatpush.msra.mxu0 %v6069
    %6653 = vmatpush.msra.mxu0 %v6066
    %6654 = vmatpush.msra.mxu0 %v6063
    %6655 = vmatpush.msra.mxu0 %v6060
    %6656 = vmatpush.msra.mxu0 %v6057
    %6657 = vmatpush.msra.mxu0 %v6054
    %6658 = vmatpush.msra.mxu0 %v6051
    %6659 = vmatpush.msra.mxu0 %v6048
    %6660 = vmatpush.msra.mxu0 %v6045
    %6661 = vmatpush.msra.mxu0 %v6042
    %6662 = vmatpush.msra.mxu0 %v6039
    %6663 = vmatpush.msra.mxu0 %v6036
    %6664 = vmatpush.msra.mxu0 %v6033
    %6665 = vmatmul.f32.gmra.mxu0 %v6333
    %v6666 = vpop.f32.mrf.mxu0
    %v6667 = vadd.f32 0.0, %v6666
    %6668 = vmatmul.f32.gmra.mxu0 %v6350
    %v6669 = vpop.f32.mrf.mxu0
    %v6670 = vadd.f32 0.0, %v6669
    %6671 = vdwg.mxu0
    %6672 = vmatpush.msra.mxu0 %v6126
    %6673 = vmatpush.msra.mxu0 %v6123
    %6674 = vmatpush.msra.mxu0 %v6120
    %6675 = vmatpush.msra.mxu0 %v6117
    %6676 = vmatpush.msra.mxu0 %v6114
    %6677 = vmatpush.msra.mxu0 %v6111
    %6678 = vmatpush.msra.mxu0 %v6108
    %6679 = vmatpush.msra.mxu0 %v6105
    %6680 = vmatpush.msra.mxu0 %v6102
    %6681 = vmatpush.msra.mxu0 %v6099
    %6682 = vmatpush.msra.mxu0 %v6096
    %6683 = vmatpush.msra.mxu0 %v6093
    %6684 = vmatpush.msra.mxu0 %v6090
    %6685 = vmatpush.msra.mxu0 %v6087
    %6686 = vmatpush.msra.mxu0 %v6084
    %6687 = vmatpush.msra.mxu0 %v6081
    %6688 = vmatmul.f32.gmra.mxu0 %v6336
    %v6689 = vpop.f32.mrf.mxu0
    %v6690 = vadd.f32 %v6667, %v6689
    %6691 = vmatmul.f32.gmra.mxu0 %v6352
    %v6692 = vpop.f32.mrf.mxu0
    %v6693 = vadd.f32 %v6670, %v6692
    %6694 = vdwg.mxu0
    %6695 = vmatpush.msra.mxu0 %v6174
    %6696 = vmatpush.msra.mxu0 %v6171
    %6697 = vmatpush.msra.mxu0 %v6168
    %6698 = vmatpush.msra.mxu0 %v6165
    %6699 = vmatpush.msra.mxu0 %v6162
    %6700 = vmatpush.msra.mxu0 %v6159
    %6701 = vmatpush.msra.mxu0 %v6156
    %6702 = vmatpush.msra.mxu0 %v6153
    %6703 = vmatpush.msra.mxu0 %v6150
    %6704 = vmatpush.msra.mxu0 %v6147
    %6705 = vmatpush.msra.mxu0 %v6144
    %6706 = vmatpush.msra.mxu0 %v6141
    %6707 = vmatpush.msra.mxu0 %v6138
    %6708 = vmatpush.msra.mxu0 %v6135
    %6709 = vmatpush.msra.mxu0 %v6132
    %6710 = vmatpush.msra.mxu0 %v6129
    %6711 = vmatmul.f32.gmra.mxu0 %v6339
    %v6712 = vpop.f32.mrf.mxu0
    %v6713 = vadd.f32 %v6690, %v6712
    %6714 = vmatmul.f32.gmra.mxu0 %v6354
    %v6715 = vpop.f32.mrf.mxu0
    %v6716 = vadd.f32 %v6693, %v6715
    %6717 = vdwg.mxu0
    %6718 = vmatpush.msra.mxu0 %v6222
    %6719 = vmatpush.msra.mxu0 %v6219
    %6720 = vmatpush.msra.mxu0 %v6216
    %6721 = vmatpush.msra.mxu0 %v6213
    %6722 = vmatpush.msra.mxu0 %v6210
    %6723 = vmatpush.msra.mxu0 %v6207
    %6724 = vmatpush.msra.mxu0 %v6204
    %6725 = vmatpush.msra.mxu0 %v6201
    %6726 = vmatpush.msra.mxu0 %v6198
    %6727 = vmatpush.msra.mxu0 %v6195
    %6728 = vmatpush.msra.mxu0 %v6192
    %6729 = vmatpush.msra.mxu0 %v6189
    %6730 = vmatpush.msra.mxu0 %v6186
    %6731 = vmatpush.msra.mxu0 %v6183
    %6732 = vmatpush.msra.mxu0 %v6180
    %6733 = vmatpush.msra.mxu0 %v6177
    %6734 = vmatmul.f32.gmra.mxu0 %v6342
    %v6735 = vpop.f32.mrf.mxu0
    %v6736 = vadd.f32 %v6713, %v6735
    %6737 = vmatmul.f32.gmra.mxu0 %v6356
    %v6738 = vpop.f32.mrf.mxu0
    %v6739 = vadd.f32 %v6716, %v6738
    %6740 = vdwg.mxu0
    %6741 = vmatpush.msra.mxu0 %v6270
    %6742 = vmatpush.msra.mxu0 %v6267
    %6743 = vmatpush.msra.mxu0 %v6264
    %6744 = vmatpush.msra.mxu0 %v6261
    %6745 = vmatpush.msra.mxu0 %v6258
    %6746 = vmatpush.msra.mxu0 %v6255
    %6747 = vmatpush.msra.mxu0 %v6252
    %6748 = vmatpush.msra.mxu0 %v6249
    %6749 = vmatpush.msra.mxu0 %v6246
    %6750 = vmatpush.msra.mxu0 %v6243
    %6751 = vmatpush.msra.mxu0 %v6240
    %6752 = vmatpush.msra.mxu0 %v6237
    %6753 = vmatpush.msra.mxu0 %v6234
    %6754 = vmatpush.msra.mxu0 %v6231
    %6755 = vmatpush.msra.mxu0 %v6228
    %6756 = vmatpush.msra.mxu0 %v6225
    %6757 = vmatmul.f32.gmra.mxu0 %v6345
    %v6758 = vpop.f32.mrf.mxu0
    %v6759 = vadd.f32 %v6736, %v6758
    %6760 = vmatmul.f32.gmra.mxu0 %v6358
    %v6761 = vpop.f32.mrf.mxu0
    %v6762 = vadd.f32 %v6739, %v6761
    %6763 = vdwg.mxu0
    %6764 = vmatpush.msra.mxu0 %v6318
    %6765 = vmatpush.msra.mxu0 %v6315
    %6766 = vmatpush.msra.mxu0 %v6312
    %6767 = vmatpush.msra.mxu0 %v6309
    %6768 = vmatpush.msra.mxu0 %v6306
    %6769 = vmatpush.msra.mxu0 %v6303
    %6770 = vmatpush.msra.mxu0 %v6300
    %6771 = vmatpush.msra.mxu0 %v6297
    %6772 = vmatpush.msra.mxu0 %v6294
    %6773 = vmatpush.msra.mxu0 %v6291
    %6774 = vmatpush.msra.mxu0 %v6288
    %6775 = vmatpush.msra.mxu0 %v6285
    %6776 = vmatpush.msra.mxu0 %v6282
    %6777 = vmatpush.msra.mxu0 %v6279
    %6778 = vmatpush.msra.mxu0 %v6276
    %6779 = vmatpush.msra.mxu0 %v6273
    %6780 = vmatmul.f32.gmra.mxu0 %v6348
    %v6781 = vpop.f32.mrf.mxu0
    %v6782 = vadd.f32 %v6759, %v6781
    %6783 = vmatmul.f32.gmra.mxu0 %v6360
    %v6784 = vpop.f32.mrf.mxu0
    %v6785 = vadd.f32 %v6762, %v6784
    %6786 = vdwg.mxu0
    %v6787 = vadd.f32 %v6012, %v6506
    %v6788 = vadd.f32 %v6013, %v6644
    %v6789 = vadd.f32 %v6014, %v6782
    %v6790 = vadd.f32 %v6015, %v6509
    %v6791 = vadd.f32 %v6016, %v6647
    %v6792 = vadd.f32 %v6017, %v6785
    %v6793 = vld [vmem:[#allocation10] sm:$0x7]
    %v6795 = vperm.slane %v6793, 0
    %v6796 = vperm.slane %v6793, 1
    %v6797 = vperm.slane %v6793, 2
    %v6801 = vadd.f32 %v6787, %v6795
    %v6802 = vadd.f32 %v6788, %v6796
    %v6803 = vadd.f32 %v6789, %v6797
    %v6804 = vadd.f32 %v6790, %v6795
    %v6805 = vadd.f32 %v6791, %v6796
    %v6806 = vadd.f32 %v6792, %v6797
    %v6807 = vmax.f32 %v6801, 0.0
    %v6808 = vmax.f32 %v6802, 0.0
    %v6809 = vmax.f32 %v6803, 0.0
    %v6810 = vmax.f32 %v6804, 0.0
    %v6811 = vmax.f32 %v6805, 0.0
    %v6812 = vmax.f32 %v6806, 0.0
    %v6813 = vmin.f32 %v6807, 6.0
    %v6814 = vmin.f32 %v6808, 6.0
    %v6815 = vmin.f32 %v6809, 6.0
    %v6816 = vmin.f32 %v6810, 6.0
    %v6817 = vmin.f32 %v6811, 6.0
    %v6818 = vmin.f32 %v6812, 6.0
    %v6822 = vrot.slane %v6813, 2
    %v6823 = vrot.slane %v6814, 2
    %v6824 = vrot.slane %v6815, 2
    %v6828 = vmax.f32 %v6813, %v6822
    %v6829 = vmax.f32 %v6814, %v6823
    %v6830 = vmax.f32 %v6815, %v6824
    %v6831 = vrot.slane %v6813, 4
    %v6832 = vrot.slane %v6814, 4
    %v6833 = vrot.slane %v6815, 4
    %v6837 = vmax.f32 %v6828, %v6831
    %v6838 = vmax.f32 %v6829, %v6832
    %v6839 = vmax.f32 %v6830, %v6833
    %v6840 = vrot.slane %v6813, 6
    %v6841 = vrot.slane %v6814, 6
    %v6842 = vrot.slane %v6815, 6
    %v6846 = vmax.f32 %v6837, %v6840
    %v6847 = vmax.f32 %v6838, %v6841
    %v6848 = vmax.f32 %v6839, %v6842
    %v6849 = vmax.f32 %v6846, %v6816
    %v6850 = vmax.f32 %v6847, %v6817
    %v6851 = vmax.f32 %v6848, %v6818
    %v6855 = vrot.slane %v6816, 2
    %v6856 = vrot.slane %v6817, 2
    %v6857 = vrot.slane %v6818, 2
    %v6861 = vmax.f32 %v6849, %v6855
    %v6862 = vmax.f32 %v6850, %v6856
    %v6863 = vmax.f32 %v6851, %v6857
    %v6864 = vrot.slane %v6816, 4
    %v6865 = vrot.slane %v6817, 4
    %v6866 = vrot.slane %v6818, 4
    %v6870 = vmax.f32 %v6861, %v6864
    %v6871 = vmax.f32 %v6862, %v6865
    %v6872 = vmax.f32 %v6863, %v6866
    %v6873 = vrot.slane %v6816, 6
    %v6874 = vrot.slane %v6817, 6
    %v6875 = vrot.slane %v6818, 6
    %v6879 = vmax.f32 %v6870, %v6873
    %v6880 = vmax.f32 %v6871, %v6874
    %v6881 = vmax.f32 %v6872, %v6875
    %v6882 = vld [vmem:[#allocation12] sm:$0xff]
    %v6883 = vld [vmem:[#allocation12 + $0x8] sm:$0xff]
    %v6884 = vld [vmem:[#allocation12 + $0x10] sm:$0xff]
    %v6885 = vld [vmem:[#allocation12 + $0x18] sm:$0xff]
    %v6886 = vld [vmem:[#allocation12 + $0x20] sm:$0xff]
    %v6887 = vld [vmem:[#allocation12 + $0x28] sm:$0xff]
    %v6888 = vld [vmem:[#allocation12 + $0x30] sm:$0xff]
    %v6889 = vld [vmem:[#allocation12 + $0x38] sm:$0xff]
    %v6890 = vld [vmem:[#allocation12 + $0x40] sm:$0xff]
    %v6891 = vld [vmem:[#allocation12 + $0x48] sm:$0xff]
    %v6892 = vld [vmem:[#allocation12 + $0x50] sm:$0xff]
    %v6893 = vld [vmem:[#allocation12 + $0x58] sm:$0xff]
    %v6894 = vld [vmem:[#allocation12 + $0x60] sm:$0xff]
    %v6895 = vld [vmem:[#allocation12 + $0x68] sm:$0xff]
    %v6896 = vld [vmem:[#allocation12 + $0x70] sm:$0xff]
    %v6897 = vld [vmem:[#allocation12 + $0x78] sm:$0xff]
    %v6898 = vld [vmem:[#allocation12 + $0x80] sm:$0xff]
    %v6899 = vld [vmem:[#allocation12 + $0x88] sm:$0xff]
    %v6900 = vld [vmem:[#allocation12 + $0x90] sm:$0xff]
    %v6901 = vld [vmem:[#allocation12 + $0x98] sm:$0xff]
    %v6902 = vld [vmem:[#allocation12 + $0xa0] sm:$0xff]
    %v6903 = vld [vmem:[#allocation12 + $0xa8] sm:$0xff]
    %v6904 = vld [vmem:[#allocation12 + $0xb0] sm:$0xff]
    %v6905 = vld [vmem:[#allocation12 + $0xb8] sm:$0xff]
    %v6906 = vld [vmem:[#allocation12 + $0xc0] sm:$0xff]
    %v6907 = vld [vmem:[#allocation12 + $0xc8] sm:$0xff]
    %v6908 = vld [vmem:[#allocation12 + $0xd0] sm:$0xff]
    %v6909 = vld [vmem:[#allocation12 + $0xd8] sm:$0xff]
    %v6910 = vld [vmem:[#allocation12 + $0xe0] sm:$0xff]
    %v6911 = vld [vmem:[#allocation12 + $0xe8] sm:$0xff]
    %v6912 = vld [vmem:[#allocation12 + $0xf0] sm:$0xff]
    %v6913 = vld [vmem:[#allocation12 + $0xf8] sm:$0xff]
    %v6914 = vld [vmem:[#allocation12 + $0x100] sm:$0xff]
    %v6915 = vld [vmem:[#allocation12 + $0x108] sm:$0xff]
    %v6916 = vld [vmem:[#allocation12 + $0x110] sm:$0xff]
    %v6917 = vld [vmem:[#allocation12 + $0x118] sm:$0xff]
    %v6918 = vld [vmem:[#allocation12 + $0x120] sm:$0xff]
    %v6919 = vld [vmem:[#allocation12 + $0x128] sm:$0xff]
    %v6920 = vld [vmem:[#allocation12 + $0x130] sm:$0xff]
    %v6921 = vld [vmem:[#allocation12 + $0x138] sm:$0xff]
    %v6922 = vld [vmem:[#allocation12 + $0x140] sm:$0xff]
    %v6923 = vld [vmem:[#allocation12 + $0x148] sm:$0xff]
    %v6924 = vld [vmem:[#allocation12 + $0x150] sm:$0xff]
    %v6925 = vld [vmem:[#allocation12 + $0x158] sm:$0xff]
    %v6926 = vld [vmem:[#allocation12 + $0x160] sm:$0xff]
    %v6927 = vld [vmem:[#allocation12 + $0x168] sm:$0xff]
    %v6928 = vld [vmem:[#allocation12 + $0x170] sm:$0xff]
    %v6929 = vld [vmem:[#allocation12 + $0x178] sm:$0xff]
    %v6930 = vld [vmem:[#allocation13] sm:$0x1]
    %v6932 = vperm.slane %v6930, 0
    %6934 = vmatpush.msra.mxu0 %v6897
    %6935 = vmatpush.msra.mxu0 %v6896
    %6936 = vmatpush.msra.mxu0 %v6895
    %6937 = vmatpush.msra.mxu0 %v6894
    %6938 = vmatpush.msra.mxu0 %v6893
    %6939 = vmatpush.msra.mxu0 %v6892
    %6940 = vmatpush.msra.mxu0 %v6891
    %6941 = vmatpush.msra.mxu0 %v6890
    %6942 = vmatpush.msra.mxu0 %v6889
    %6943 = vmatpush.msra.mxu0 %v6888
    %6944 = vmatpush.msra.mxu0 %v6887
    %6945 = vmatpush.msra.mxu0 %v6886
    %6946 = vmatpush.msra.mxu0 %v6885
    %6947 = vmatpush.msra.mxu0 %v6884
    %6948 = vmatpush.msra.mxu0 %v6883
    %6949 = vmatpush.msra.mxu0 %v6882
    %6950 = vmatmul.f32.gmra.mxu0 %v6879
    %v6951 = vpop.f32.mrf.mxu0
    %v6952 = vadd.f32 %v6932, %v6951
    %6953 = vdwg.mxu0
    %6954 = vmatpush.msra.mxu0 %v6913
    %6955 = vmatpush.msra.mxu0 %v6912
    %6956 = vmatpush.msra.mxu0 %v6911
    %6957 = vmatpush.msra.mxu0 %v6910
    %6958 = vmatpush.msra.mxu0 %v6909
    %6959 = vmatpush.msra.mxu0 %v6908
    %6960 = vmatpush.msra.mxu0 %v6907
    %6961 = vmatpush.msra.mxu0 %v6906
    %6962 = vmatpush.msra.mxu0 %v6905
    %6963 = vmatpush.msra.mxu0 %v6904
    %6964 = vmatpush.msra.mxu0 %v6903
    %6965 = vmatpush.msra.mxu0 %v6902
    %6966 = vmatpush.msra.mxu0 %v6901
    %6967 = vmatpush.msra.mxu0 %v6900
    %6968 = vmatpush.msra.mxu0 %v6899
    %6969 = vmatpush.msra.mxu0 %v6898
    %6970 = vmatmul.f32.gmra.mxu0 %v6880
    %v6971 = vpop.f32.mrf.mxu0
    %v6972 = vadd.f32 %v6952, %v6971
    %6973 = vdwg.mxu0
    %6974 = vmatpush.msra.mxu0 %v6929
    %6975 = vmatpush.msra.mxu0 %v6928
    %6976 = vmatpush.msra.mxu0 %v6927
    %6977 = vmatpush.msra.mxu0 %v6926
    %6978 = vmatpush.msra.mxu0 %v6925
    %6979 = vmatpush.msra.mxu0 %v6924
    %6980 = vmatpush.msra.mxu0 %v6923
    %6981 = vmatpush.msra.mxu0 %v6922
    %6982 = vmatpush.msra.mxu0 %v6921
    %6983 = vmatpush.msra.mxu0 %v6920
    %6984 = vmatpush.msra.mxu0 %v6919
    %6985 = vmatpush.msra.mxu0 %v6918
    %6986 = vmatpush.msra.mxu0 %v6917
    %6987 = vmatpush.msra.mxu0 %v6916
    %6988 = vmatpush.msra.mxu0 %v6915
    %6989 = vmatpush.msra.mxu0 %v6914
    %6990 = vmatmul.f32.gmra.mxu0 %v6881
    %v6991 = vpop.f32.mrf.mxu0
    %v6992 = vadd.f32 %v6972, %v6991
    %6993 = vdwg.mxu0
    %6994 = vst [vmem:[#allocation18] sm:$0x3] %v6992
    %v6995 = vmax.f32 %v6992, 0.0
    %v6996 = vld [vmem:[#allocation15] sm:$0xff]
    %v6997 = vld [vmem:[#allocation15 + $0x8] sm:$0xff]
    %v6998 = vld [vmem:[#allocation15 + $0x10] sm:$0xff]
    %v6999 = vld [vmem:[#allocation15 + $0x18] sm:$0xff]
    %v7000 = vld [vmem:[#allocation15 + $0x20] sm:$0xff]
    %v7001 = vld [vmem:[#allocation15 + $0x28] sm:$0xff]
    %v7002 = vld [vmem:[#allocation15 + $0x30] sm:$0xff]
    %v7003 = vld [vmem:[#allocation15 + $0x38] sm:$0xff]
    %v7004 = vld [vmem:[#allocation15 + $0x40] sm:$0xff]
    %v7005 = vld [vmem:[#allocation15 + $0x48] sm:$0xff]
    %v7006 = vld [vmem:[#allocation15 + $0x50] sm:$0xff]
    %v7007 = vld [vmem:[#allocation15 + $0x58] sm:$0xff]
    %v7008 = vld [vmem:[#allocation15 + $0x60] sm:$0xff]
    %v7009 = vld [vmem:[#allocation15 + $0x68] sm:$0xff]
    %v7010 = vld [vmem:[#allocation15 + $0x70] sm:$0xff]
    %v7011 = vld [vmem:[#allocation15 + $0x78] sm:$0xff]
    %v7012 = vld [vmem:[#allocation16] sm:$0x1]
    %v7014 = vperm.slane %v7012, 0
    %7016 = vmatpush.msra.mxu0 %v7011
    %7017 = vmatpush.msra.mxu0 %v7010
    %7018 = vmatpush.msra.mxu0 %v7009
    %7019 = vmatpush.msra.mxu0 %v7008
    %7020 = vmatpush.msra.mxu0 %v7007
    %7021 = vmatpush.msra.mxu0 %v7006
    %7022 = vmatpush.msra.mxu0 %v7005
    %7023 = vmatpush.msra.mxu0 %v7004
    %7024 = vmatpush.msra.mxu0 %v7003
    %7025 = vmatpush.msra.mxu0 %v7002
    %7026 = vmatpush.msra.mxu0 %v7001
    %7027 = vmatpush.msra.mxu0 %v7000
    %7028 = vmatpush.msra.mxu0 %v6999
    %7029 = vmatpush.msra.mxu0 %v6998
    %7030 = vmatpush.msra.mxu0 %v6997
    %7031 = vmatpush.msra.mxu0 %v6996
    %7032 = vmatmul.f32.gmra.mxu0 %v6995
    %v7033 = vpop.f32.mrf.mxu0
    %v7034 = vadd.f32 %v7014, %v7033
    %7035 = vdwg.mxu0
    %7036 = vst [vmem:[%s10] sm:$0x3] %v7034
    // Predicated region
    $region70: #{earthquake_cnn_forward.1} parent=1 // pred_check
      _
    $region71: #{earthquake_cnn_forward.1} parent=1 // pred_check_branch
      %7038 = sbr.rel (0) target = $region73
    $region72: #{earthquake_cnn_forward.1} parent=1 // pred_region
      %7040 = vsyncadd [#allocation6], 0
      %s7042 = sshll.u32 [#allocation18], 4
      %s7043 = int_to_ptr.vmem [resolvable:$true] %s7042
      %s7044 = sshll.u32 %s9, 4
      %s7045 = int_to_ptr.hbm [resolvable:$true] %s7044
      %7047 = dma.vmem_to_hbm [thread:$0]  %s7043, 32, %s7045, [#allocation6]
    $region73: #{earthquake_cnn_forward.1} parent=1 // pred_fallthru
      _
    // Predicated region
    $region74: #{earthquake_cnn_forward.1} parent=1 // pred_check
      _
    $region75: #{earthquake_cnn_forward.1} parent=1 // pred_check_branch
      %7049 = sbr.rel (0) target = $region77
    $region76: #{earthquake_cnn_forward.1} parent=1 // pred_region
      _
    $region77: #{earthquake_cnn_forward.1} parent=1 // pred_fallthru
      _
    // Predicated region
    $region78: #{earthquake_cnn_forward.1} parent=1 // pred_check
      _
    $region79: #{earthquake_cnn_forward.1} parent=1 // pred_check_branch
      %7051 = sbr.rel (0) target = $region81
    $region80: #{earthquake_cnn_forward.1} parent=1 // pred_region
      %7053 = dma.done [#allocation6], 32
    $region81: #{earthquake_cnn_forward.1} parent=1 // pred_fallthru
      _
    // Predicated region
    $region82: #{earthquake_cnn_forward.1} parent=1 // pred_check
      _
    $region83: #{earthquake_cnn_forward.1} parent=1 // pred_check_branch
      %7055 = sbr.rel (0) target = $region85
    $region84: #{earthquake_cnn_forward.1} parent=1 // pred_region
      _
    $region85: #{earthquake_cnn_forward.1} parent=1 // pred_fallthru
      _
    %7056 = vsyncpa [#allocation5], 1
    %7057 = vsyncpa [#allocation8], 1
    %7058 = vsyncpa [#allocation11], 1
    %7059 = vsyncpa [#allocation14], 1
    %7060 = vsyncpa [#allocation17], 1
    %7061 = vsyncpa [#allocation6], 1

</llo_original>
